<compile_context>
chip_gen: v6e
topology: v6e:2x2x1
jax: 0.10.0
libtpu: 0.0.40
codegen_flags: <defaults>
</compile_context>

<pallas_src>
import functools
from math import sqrt

import jax
import jax.numpy as jnp
from jax.experimental import pallas as pl
from jax.experimental.pallas import tpu as pltpu


# -----------------------------------------------------------------------------
# Fused Postnet kernel: all layers for one (batch, time-tile) grid cell.
# -----------------------------------------------------------------------------
def _postnet_fused_kernel(*refs, layer_meta, kernel_size, time_tile, seq_len, halo,
                          bf16_tanh):
    """refs = [x_tile, x_halo, w_0, shift_0, ..., w_{L-1}, shift_{L-1}, out]

      x_tile:  (1, C0, TT)        bf16, padded-time block t
      x_halo:  (1, C0, 128)       bf16, first 128 padded-time columns after block t
      w_0:     (C1, K*C0)         bf16, BN-scale folded, im2col layout (layer 0)
      w_i:     (K, C_out, C_in)   bf16, BN-scale folded, tap-major (layers 1..L-1)
      shift_i: (C_out, 1)         f32, (conv_bias - running_mean)*scale + beta
      out:     (1, C_last, TT)    f32
    """
    n_layers = len(layer_meta)
    x_ref, xh_ref = refs[0], refs[1]
    o_ref = refs[-1]
    layer_refs = refs[2:-1]

    K = kernel_size
    pad = (K - 1) // 2
    t = pl.program_id(1)

    # Haloed input window: padded-time columns [t*TT, t*TT + TT + 2*halo), i.e. global
    # (unpadded) columns [t*TT - halo, t*TT + TT + halo).  The halo is taken from the
    # first 2*halo columns of the 128-wide right-neighbour block.
    cur = jnp.concatenate([x_ref[0], xh_ref[0][:, : 2 * halo]], axis=1)  # (C0, TT+2*halo)

    # Hoisted lane-index row for the inter-layer zero-padding masks (JAX does not CSE
    # broadcast_in_dim, so materialize the iota once and reuse a prefix per layer).
    lane = jax.lax.broadcasted_iota(jnp.int32, (1, time_tile + 2 * halo), 1)

    start = -halo  # global time column of cur[:, 0] relative to t*TT
    for li, (apply_tanh, fuse_taps) in enumerate(layer_meta):
        w_ref = layer_refs[2 * li]
        s_ref = layer_refs[2 * li + 1]
        w_out = cur.shape[1] - 2 * pad

        if fuse_taps:
            # im2col: one MXU matmul with contraction depth K*C_in (layer 0, shallow C_in).
            cols = jnp.concatenate([cur[:, k:k + w_out] for k in range(K)], axis=0)
            acc = jnp.dot(w_ref[...], cols, preferred_element_type=jnp.float32)
        else:
            # TODO(synk): if a bundle dump shows the f32 tap-accumulation adds binding the
            #             VALU (v5e/v6e MRF pop + vadd), fold these layers into the same
            #             im2col single-dot form; v7x's MRB accumulates in place already.
            c_out = w_ref.shape[1]
            acc = jnp.zeros((c_out, w_out), jnp.float32)
            for k in range(K):  # K is small & static -> fully unrolled MXU matmuls
                acc = acc + jnp.dot(w_ref[k], cur[:, k:k + w_out],
                                    preferred_element_type=jnp.float32)

        y = acc + s_ref[...]          # folded conv-bias + eval-mode BatchNorm shift
        start += pad

        if li < n_layers - 1:
            if apply_tanh:
                # bf16 tanh on chips with a bf16 EUP (v6e/v7x); f32 elsewhere (v5e).
                y = jnp.tanh(y.astype(jnp.bfloat16)) if bf16_tanh else jnp.tanh(y)
            y = y.astype(jnp.bfloat16)   # bf16 inter-layer activations (VMEM only)
            # Window columns whose global index falls outside [0, seq_len) are the zero
            # padding of the NEXT layer's convolution in the reference -- re-zero them.
            lo = -(t * time_tile + start)            # lane >= lo  <=>  global col >= 0
            hi = seq_len - (t * time_tile + start)   # lane <  hi  <=>  global col <  T
            lw = lane[:, :w_out]
            cur = jnp.where((lw >= lo) & (lw < hi), y, jnp.zeros_like(y))
        else:
            if apply_tanh:
                y = jnp.tanh(y)
            cur = y

    # After L layers the window width has collapsed to exactly TT: lane-dense store.
    # Pallas masks the write-back of the (possibly partial) final time block.
    o_ref[0] = cur.astype(o_ref.dtype)


def _use_bf16_tanh():
    try:
        kind = jax.devices()[0].device_kind.lower()
    except Exception:
        return False
    return ("v6" in kind) or ("v7" in kind)


def postnet_forward(x, folded_params, *, time_tile=1024, bf16_tanh=None):
    """x: (B, n_mel, T) float32 -> (B, n_mel, T) float32 (eval-mode Postnet forward)."""
    B, C0, T = x.shape
    L = len(folded_params)
    K = folded_params[0]["w"].shape[-1]
    pad = (K - 1) // 2
    halo = pad * L
    if bf16_tanh is None:
        bf16_tanh = _use_bf16_tanh()

    TT = int(time_tile)
    assert TT % 128 == 0, "time_tile must be a multiple of 128 (lane-dense tiles)"
    TT = min(TT, 128 * pl.cdiv(T, 128))       # don't exceed the rounded-up sequence length
    if B == 1 and T > 128:
        # Keep >= 2 grid steps so both v7x TensorCores get work at batch 1.
        TT = min(TT, 128 * pl.cdiv(pl.cdiv(T, 2), 128))
    TT = max(TT, 128)
    assert TT >= 2 * halo, "time_tile must cover the fused-conv halo"
    NT = pl.cdiv(T, TT)

    # One-time zero pad of the (small) n_mel-channel input:
    #   [halo zeros | x | zeros up to NT*TT + 128]
    # so tile t's haloed window is covered by operand 0's block t plus the first 2*halo
    # columns of operand 1's 128-wide right-neighbour block.
    x_pad = jnp.pad(x.astype(jnp.bfloat16),
                    ((0, 0), (0, 0), (halo, NT * TT + 128 - T - halo)))

    right_blk = TT // 128
    x_specs = [
        pl.BlockSpec((1, C0, TT), lambda b, t: (b, 0, t)),                     # tile t
        pl.BlockSpec((1, C0, 128), lambda b, t: (b, 0, (t + 1) * right_blk)),  # halo block
    ]

    # Per-layer weights (BN scale folded in) and shifts.  They are grid-invariant, so they
    # are passed fully VMEM-resident (single copy, no double-buffering): the biggest VMEM
    # lever -- fits v5e's default scoped VMEM at emb=512 and frees headroom for TT=1024+
    # under v7x's 64 MiB physical VMEM.
    w_operands, vmem_specs, blocked_specs, layer_meta = [], [], [], []
    for li, p in enumerate(folded_params):
        w = p["w"]                                    # (C_out, C_in, K)
        c_out, c_in, _ = w.shape
        if li == 0:
            # (C_out, K*C_in) with columns ordered (k, c_in) to match the im2col stack.
            wk = jnp.transpose(w, (0, 2, 1)).reshape(c_out, K * c_in).astype(jnp.bfloat16)
            blocked = pl.BlockSpec((c_out, K * c_in), lambda b, t: (0, 0))
        else:
            wk = jnp.transpose(w, (2, 0, 1)).astype(jnp.bfloat16)   # (K, C_out, C_in)
            blocked = pl.BlockSpec((K, c_out, c_in), lambda b, t: (0, 0, 0))
        w_operands.append(wk)
        vmem_specs.append(pl.BlockSpec(memory_space=pltpu.MemorySpace.VMEM))
        blocked_specs.append(blocked)

        shift = p["shift"].astype(jnp.float32)        # (C_out, 1)
        w_operands.append(shift)
        vmem_specs.append(pl.BlockSpec(memory_space=pltpu.MemorySpace.VMEM))
        blocked_specs.append(pl.BlockSpec((c_out, 1), lambda b, t: (0, 0)))

        layer_meta.append((bool(p["apply_tanh"]), li == 0))

    c_last = folded_params[-1]["w"].shape[0]
    out_spec = pl.BlockSpec((1, c_last, TT), lambda b, t: (b, 0, t))

    kernel = functools.partial(
        _postnet_fused_kernel,
        layer_meta=tuple(layer_meta), kernel_size=K,
        time_tile=TT, seq_len=T, halo=halo, bf16_tanh=bool(bf16_tanh))

    def call(weight_specs):
        return pl.pallas_call(
            kernel,
            # Output allocated at the true length T: the final partial time block is
            # handled by Pallas' boundary masking (interior blocks stay unmasked).
            out_shape=jax.ShapeDtypeStruct((B, c_last, T), jnp.float32),
            grid_spec=pltpu.PrefetchScalarGridSpec(
                num_scalar_prefetch=0,
                grid=(B, NT),
                in_specs=x_specs + weight_specs,
                out_specs=out_spec,
            ),
            # Both grid axes independent -> shardable across v7x's two TensorCores.
            compiler_params=pltpu.CompilerParams(
                dimension_semantics=("parallel", "parallel"),
                vmem_limit_bytes=64 * 1024 * 1024,
            ),
        )(x_pad, x_pad, *w_operands)

    try:
        return call(vmem_specs)
    except Exception:
        # Fallback for jax versions without unblocked VMEM-resident operand support:
        # plain blocked (double-buffered) weight specs -- correct, ~2x the weight VMEM.
        return call(blocked_specs)


# -----------------------------------------------------------------------------
# Parameter construction (PyTorch-equivalent), BN folding, and a pure-JAX reference.
# -----------------------------------------------------------------------------
def make_postnet_params(key, n_mel, emb_dim, kernel_size, n_convs):
    """Raw per-layer params: ConvNorm (xavier-uniform) + BatchNorm1d eval statistics
    (statistics randomized here so the BN folding path is actually exercised)."""
    dims = ([(n_mel, emb_dim, True)]
            + [(emb_dim, emb_dim, True)] * (n_convs - 2)
            + [(emb_dim, n_mel, False)])
    params = []
    for c_in, c_out, apply_tanh in dims:
        key, kw, kb, kg, kbe, km, kv = jax.random.split(key, 7)
        gain = 5.0 / 3.0 if apply_tanh else 1.0          # torch gains for 'tanh' / 'linear'
        fan_in, fan_out = c_in * kernel_size, c_out * kernel_size
        bound = gain * sqrt(6.0 / (fan_in + fan_out))
        params.append(dict(
            w=jax.random.uniform(kw, (c_out, c_in, kernel_size), jnp.float32, -bound, bound),
            bias=jax.random.uniform(kb, (c_out,), jnp.float32,
                                    -1.0 / sqrt(fan_in), 1.0 / sqrt(fan_in)),
            gamma=jax.random.uniform(kg, (c_out,), jnp.float32, 0.7, 1.3),
            beta=0.1 * jax.random.normal(kbe, (c_out,), jnp.float32),
            mean=0.1 * jax.random.normal(km, (c_out,), jnp.float32),
            var=jax.random.uniform(kv, (c_out,), jnp.float32, 0.7, 1.3),
            apply_tanh=apply_tanh,
        ))
    return params


def fold_postnet_params(raw_params, eps=1e-5):
    """Fold eval-mode BatchNorm into the conv: w' = w*scale, shift = (b - mean)*scale + beta."""
    folded = []
    for p in raw_params:
        scale = p["gamma"] / jnp.sqrt(p["var"] + eps)                      # (C_out,)
        folded.append(dict(
            w=p["w"] * scale[:, None, None],                               # (C_out, C_in, K)
            shift=((p["bias"] - p["mean"]) * scale + p["beta"]).reshape(-1, 1),
            apply_tanh=p["apply_tanh"],
        ))
    return folded


def postnet_reference(x, raw_params, eps=1e-5):
    """Pure-JAX f32 reference with PyTorch semantics (Conv1d + eval BatchNorm1d + tanh)."""
    y = x
    for p in raw_params:
        K = p["w"].shape[-1]
        pad = (K - 1) // 2
        z = jax.lax.conv_general_dilated(
            y, p["w"], window_strides=(1,), padding=[(pad, pad)],
            dimension_numbers=("NCH", "OIH", "NCH"),
            precision=jax.lax.Precision.HIGHEST)
        z = z + p["bias"][None, :, None]
        z = (z - p["mean"][None, :, None]) / jnp.sqrt(p["var"][None, :, None] + eps)
        z = z * p["gamma"][None, :, None] + p["beta"][None, :, None]
        y = jnp.tanh(z) if p["apply_tanh"] else z
    return y


# -----------------------------------------------------------------------------
if __name__ == "__main__":
    # Small hparams consistent with the module (n_mel_channels, postnet_embedding_dim,
    # postnet_kernel_size, postnet_n_convolutions).  T=300 with time_tile=128 exercises
    # the multi-tile grid, halo/masking logic and the partial final output block.
    B, N_MEL, EMB, KSIZE, NCONV, T = 2, 16, 64, 5, 5, 300

    key = jax.random.PRNGKey(0)
    key, kx = jax.random.split(key)
    x = jax.random.normal(kx, (B, N_MEL, T), jnp.float32)   # (batch, n_mel_channels, time)

    raw_params = make_postnet_params(key, N_MEL, EMB, KSIZE, NCONV)
    folded_params = fold_postnet_params(raw_params)

    out = postnet_forward(x, folded_params, time_tile=128)  # grid = (2 batches, 3 tiles)
    out = jax.block_until_ready(out)
    assert out.shape == (B, N_MEL, T) and out.dtype == jnp.float32

    # Sanity check vs. the f32 reference (kernel uses bf16 MXU with f32 accumulation and
    # bf16 inter-layer activations, so a small numerical gap is expected; tiling/halo bugs
    # would show up as O(1) errors).
    ref = postnet_reference(x, raw_params)
    max_err = float(jnp.max(jnp.abs(out - ref)))
    assert max_err < 0.2, f"max abs error vs f32 reference: {max_err}"
    print("KERNEL_OK")
</pallas_src>

<mosaic_0001>
module attributes {stable_mosaic.version = 11 : i64} {
  func.func @_postnet_fused_kernel(%arg0: i32, %arg1: i32, %arg2: memref<1x16x128xbf16, #tpu.memory_space<vmem>>, %arg3: memref<1x16x128xbf16, #tpu.memory_space<vmem>>, %arg4: memref<64x80xbf16, #tpu.memory_space<vmem>>, %arg5: memref<64x1xf32, #tpu.memory_space<vmem>>, %arg6: memref<5x64x64xbf16, #tpu.memory_space<vmem>>, %arg7: memref<64x1xf32, #tpu.memory_space<vmem>>, %arg8: memref<5x64x64xbf16, #tpu.memory_space<vmem>>, %arg9: memref<64x1xf32, #tpu.memory_space<vmem>>, %arg10: memref<5x64x64xbf16, #tpu.memory_space<vmem>>, %arg11: memref<64x1xf32, #tpu.memory_space<vmem>>, %arg12: memref<5x16x64xbf16, #tpu.memory_space<vmem>>, %arg13: memref<16x1xf32, #tpu.memory_space<vmem>>, %arg14: memref<1x16x128xf32, #tpu.memory_space<vmem>>) attributes {dimension_semantics = [#tpu.dimension_semantics<parallel>, #tpu.dimension_semantics<parallel>], iteration_bounds = array<i64: 2, 3>, scalar_prefetch = 0 : i64, scratch_operands = 0 : i64, tpu.core_type = #tpu.core_type<tc>, window_params = [{transform_indices = @transform_0, window_bounds = array<i64: 1, 16, 128>}, {transform_indices = @transform_1, window_bounds = array<i64: 1, 16, 128>}, {pipeline_mode = #tpu.pipeline_mode<synchronous>, transform_indices = @transform_2, window_bounds = array<i64: 64, 80>}, {pipeline_mode = #tpu.pipeline_mode<synchronous>, transform_indices = @transform_3, window_bounds = array<i64: 64, 1>}, {pipeline_mode = #tpu.pipeline_mode<synchronous>, transform_indices = @transform_4, window_bounds = array<i64: 5, 64, 64>}, {pipeline_mode = #tpu.pipeline_mode<synchronous>, transform_indices = @transform_5, window_bounds = array<i64: 64, 1>}, {pipeline_mode = #tpu.pipeline_mode<synchronous>, transform_indices = @transform_6, window_bounds = array<i64: 5, 64, 64>}, {pipeline_mode = #tpu.pipeline_mode<synchronous>, transform_indices = @transform_7, window_bounds = array<i64: 64, 1>}, {pipeline_mode = #tpu.pipeline_mode<synchronous>, transform_indices = @transform_8, window_bounds = array<i64: 5, 64, 64>}, {pipeline_mode = #tpu.pipeline_mode<synchronous>, transform_indices = @transform_9, window_bounds = array<i64: 64, 1>}, {pipeline_mode = #tpu.pipeline_mode<synchronous>, transform_indices = @transform_10, window_bounds = array<i64: 5, 16, 64>}, {pipeline_mode = #tpu.pipeline_mode<synchronous>, transform_indices = @transform_11, window_bounds = array<i64: 16, 1>}, {transform_indices = @transform_12, window_bounds = array<i64: 1, 16, 128>}]} {
    %c0 = arith.constant 0 : index
    %c0_0 = arith.constant 0 : index
    %c0_1 = arith.constant 0 : index
    %0 = vector.load %arg2[%c0, %c0_0, %c0_1] : memref<1x16x128xbf16, #tpu.memory_space<vmem>>, vector<1x16x128xbf16>
    %1 = vector.shape_cast %0 : vector<1x16x128xbf16> to vector<16x128xbf16>
    %c0_2 = arith.constant 0 : index
    %c0_3 = arith.constant 0 : index
    %c0_4 = arith.constant 0 : index
    %2 = vector.load %arg3[%c0_2, %c0_3, %c0_4] : memref<1x16x128xbf16, #tpu.memory_space<vmem>>, vector<1x16x128xbf16>
    %3 = vector.shape_cast %2 : vector<1x16x128xbf16> to vector<16x128xbf16>
    %4 = vector.extract_strided_slice %3 {offsets = [0, 0], sizes = [16, 20], strides = [1, 1]} : vector<16x128xbf16> to vector<16x20xbf16>
    %5 = tpu.concatenate %1, %4 in 1 : vector<16x128xbf16>, vector<16x20xbf16> -> vector<16x148xbf16>
    %6 = tpu.iota {dimensions = array<i32: 1>} : vector<1x148xi32>
    %7 = vector.extract_strided_slice %5 {offsets = [0, 0], sizes = [16, 144], strides = [1, 1]} : vector<16x148xbf16> to vector<16x144xbf16>
    %8 = vector.extract_strided_slice %5 {offsets = [0, 1], sizes = [16, 144], strides = [1, 1]} : vector<16x148xbf16> to vector<16x144xbf16>
    %9 = vector.extract_strided_slice %5 {offsets = [0, 2], sizes = [16, 144], strides = [1, 1]} : vector<16x148xbf16> to vector<16x144xbf16>
    %10 = vector.extract_strided_slice %5 {offsets = [0, 3], sizes = [16, 144], strides = [1, 1]} : vector<16x148xbf16> to vector<16x144xbf16>
    %11 = vector.extract_strided_slice %5 {offsets = [0, 4], sizes = [16, 144], strides = [1, 1]} : vector<16x148xbf16> to vector<16x144xbf16>
    %12 = tpu.concatenate %7, %8, %9, %10, %11 in 0 : vector<16x144xbf16>, vector<16x144xbf16>, vector<16x144xbf16>, vector<16x144xbf16>, vector<16x144xbf16> -> vector<80x144xbf16>
    %c0_5 = arith.constant 0 : index
    %c0_6 = arith.constant 0 : index
    %13 = vector.load %arg4[%c0_5, %c0_6] : memref<64x80xbf16, #tpu.memory_space<vmem>>, vector<64x80xbf16>
    %cst = arith.constant dense<0.000000e+00> : vector<64x144xf32>
    %14 = tpu.matmul %13, %12, %cst {dimension_numbers = #tpu.dot_dimension_numbers<[1], [0], [0], [1], [0, 0, 1, 1], [], []>} : vector<64x80xbf16>, vector<80x144xbf16>, vector<64x144xf32> -> vector<64x144xf32>
    %c0_7 = arith.constant 0 : index
    %c0_8 = arith.constant 0 : index
    %15 = vector.load %arg5[%c0_7, %c0_8] : memref<64x1xf32, #tpu.memory_space<vmem>>, vector<64x1xf32>
    %16 = vector.broadcast %15 : vector<64x1xf32> to vector<64x144xf32>
    %17 = arith.addf %14, %16 : vector<64x144xf32>
    %18 = math.tanh %17 : vector<64x144xf32>
    %19 = arith.truncf %18 : vector<64x144xf32> to vector<64x144xbf16>
    %c128_i32 = arith.constant 128 : i32
    %20 = arith.muli %arg1, %c128_i32 : i32
    %c-8_i32 = arith.constant -8 : i32
    %21 = arith.addi %20, %c-8_i32 : i32
    %c0_i32 = arith.constant 0 : i32
    %22 = arith.subi %c0_i32, %21 : i32
    %c128_i32_9 = arith.constant 128 : i32
    %23 = arith.muli %arg1, %c128_i32_9 : i32
    %c-8_i32_10 = arith.constant -8 : i32
    %24 = arith.addi %23, %c-8_i32_10 : i32
    %c300_i32 = arith.constant 300 : i32
    %25 = arith.subi %c300_i32, %24 : i32
    %26 = vector.extract_strided_slice %6 {offsets = [0, 0], sizes = [1, 144], strides = [1, 1]} : vector<1x148xi32> to vector<1x144xi32>
    %27 = vector.broadcast %22 : i32 to vector<1x144xi32>
    %28 = arith.cmpi sge, %26, %27 : vector<1x144xi32>
    %29 = vector.broadcast %25 : i32 to vector<1x144xi32>
    %30 = arith.cmpi slt, %26, %29 : vector<1x144xi32>
    %31 = arith.andi %28, %30 : vector<1x144xi1>
    %cst_11 = arith.constant 0.000000e+00 : bf16
    %32 = vector.broadcast %cst_11 : bf16 to vector<64x144xbf16>
    %33 = vector.shape_cast %31 : vector<1x144xi1> to vector<1x144xi1>
    %34 = vector.broadcast %33 : vector<1x144xi1> to vector<64x144xi1>
    %35 = arith.select %34, %19, %32 : vector<64x144xi1>, vector<64x144xbf16>
    %cst_12 = arith.constant 0.000000e+00 : f32
    %36 = vector.broadcast %cst_12 : f32 to vector<64x140xf32>
    %c0_13 = arith.constant 0 : index
    %c0_14 = arith.constant 0 : index
    %c0_15 = arith.constant 0 : index
    %37 = vector.load %arg6[%c0_13, %c0_14, %c0_15] : memref<5x64x64xbf16, #tpu.memory_space<vmem>>, vector<1x64x64xbf16>
    %38 = vector.shape_cast %37 : vector<1x64x64xbf16> to vector<64x64xbf16>
    %39 = vector.extract_strided_slice %35 {offsets = [0, 0], sizes = [64, 140], strides = [1, 1]} : vector<64x144xbf16> to vector<64x140xbf16>
    %cst_16 = arith.constant dense<0.000000e+00> : vector<64x140xf32>
    %40 = tpu.matmul %38, %39, %cst_16 {dimension_numbers = #tpu.dot_dimension_numbers<[1], [0], [0], [1], [0, 0, 1, 1], [], []>} : vector<64x64xbf16>, vector<64x140xbf16>, vector<64x140xf32> -> vector<64x140xf32>
    %41 = arith.addf %36, %40 : vector<64x140xf32>
    %c1 = arith.constant 1 : index
    %c0_17 = arith.constant 0 : index
    %c0_18 = arith.constant 0 : index
    %42 = vector.load %arg6[%c1, %c0_17, %c0_18] : memref<5x64x64xbf16, #tpu.memory_space<vmem>>, vector<1x64x64xbf16>
    %43 = vector.shape_cast %42 : vector<1x64x64xbf16> to vector<64x64xbf16>
    %44 = vector.extract_strided_slice %35 {offsets = [0, 1], sizes = [64, 140], strides = [1, 1]} : vector<64x144xbf16> to vector<64x140xbf16>
    %cst_19 = arith.constant dense<0.000000e+00> : vector<64x140xf32>
    %45 = tpu.matmul %43, %44, %cst_19 {dimension_numbers = #tpu.dot_dimension_numbers<[1], [0], [0], [1], [0, 0, 1, 1], [], []>} : vector<64x64xbf16>, vector<64x140xbf16>, vector<64x140xf32> -> vector<64x140xf32>
    %46 = arith.addf %41, %45 : vector<64x140xf32>
    %c2 = arith.constant 2 : index
    %c0_20 = arith.constant 0 : index
    %c0_21 = arith.constant 0 : index
    %47 = vector.load %arg6[%c2, %c0_20, %c0_21] : memref<5x64x64xbf16, #tpu.memory_space<vmem>>, vector<1x64x64xbf16>
    %48 = vector.shape_cast %47 : vector<1x64x64xbf16> to vector<64x64xbf16>
    %49 = vector.extract_strided_slice %35 {offsets = [0, 2], sizes = [64, 140], strides = [1, 1]} : vector<64x144xbf16> to vector<64x140xbf16>
    %cst_22 = arith.constant dense<0.000000e+00> : vector<64x140xf32>
    %50 = tpu.matmul %48, %49, %cst_22 {dimension_numbers = #tpu.dot_dimension_numbers<[1], [0], [0], [1], [0, 0, 1, 1], [], []>} : vector<64x64xbf16>, vector<64x140xbf16>, vector<64x140xf32> -> vector<64x140xf32>
    %51 = arith.addf %46, %50 : vector<64x140xf32>
    %c3 = arith.constant 3 : index
    %c0_23 = arith.constant 0 : index
    %c0_24 = arith.constant 0 : index
    %52 = vector.load %arg6[%c3, %c0_23, %c0_24] : memref<5x64x64xbf16, #tpu.memory_space<vmem>>, vector<1x64x64xbf16>
    %53 = vector.shape_cast %52 : vector<1x64x64xbf16> to vector<64x64xbf16>
    %54 = vector.extract_strided_slice %35 {offsets = [0, 3], sizes = [64, 140], strides = [1, 1]} : vector<64x144xbf16> to vector<64x140xbf16>
    %cst_25 = arith.constant dense<0.000000e+00> : vector<64x140xf32>
    %55 = tpu.matmul %53, %54, %cst_25 {dimension_numbers = #tpu.dot_dimension_numbers<[1], [0], [0], [1], [0, 0, 1, 1], [], []>} : vector<64x64xbf16>, vector<64x140xbf16>, vector<64x140xf32> -> vector<64x140xf32>
    %56 = arith.addf %51, %55 : vector<64x140xf32>
    %c4 = arith.constant 4 : index
    %c0_26 = arith.constant 0 : index
    %c0_27 = arith.constant 0 : index
    %57 = vector.load %arg6[%c4, %c0_26, %c0_27] : memref<5x64x64xbf16, #tpu.memory_space<vmem>>, vector<1x64x64xbf16>
    %58 = vector.shape_cast %57 : vector<1x64x64xbf16> to vector<64x64xbf16>
    %59 = vector.extract_strided_slice %35 {offsets = [0, 4], sizes = [64, 140], strides = [1, 1]} : vector<64x144xbf16> to vector<64x140xbf16>
    %cst_28 = arith.constant dense<0.000000e+00> : vector<64x140xf32>
    %60 = tpu.matmul %58, %59, %cst_28 {dimension_numbers = #tpu.dot_dimension_numbers<[1], [0], [0], [1], [0, 0, 1, 1], [], []>} : vector<64x64xbf16>, vector<64x140xbf16>, vector<64x140xf32> -> vector<64x140xf32>
    %61 = arith.addf %56, %60 : vector<64x140xf32>
    %c0_29 = arith.constant 0 : index
    %c0_30 = arith.constant 0 : index
    %62 = vector.load %arg7[%c0_29, %c0_30] : memref<64x1xf32, #tpu.memory_space<vmem>>, vector<64x1xf32>
    %63 = vector.broadcast %62 : vector<64x1xf32> to vector<64x140xf32>
    %64 = arith.addf %61, %63 : vector<64x140xf32>
    %65 = math.tanh %64 : vector<64x140xf32>
    %66 = arith.truncf %65 : vector<64x140xf32> to vector<64x140xbf16>
    %c128_i32_31 = arith.constant 128 : i32
    %67 = arith.muli %arg1, %c128_i32_31 : i32
    %c-6_i32 = arith.constant -6 : i32
    %68 = arith.addi %67, %c-6_i32 : i32
    %c0_i32_32 = arith.constant 0 : i32
    %69 = arith.subi %c0_i32_32, %68 : i32
    %c128_i32_33 = arith.constant 128 : i32
    %70 = arith.muli %arg1, %c128_i32_33 : i32
    %c-6_i32_34 = arith.constant -6 : i32
    %71 = arith.addi %70, %c-6_i32_34 : i32
    %c300_i32_35 = arith.constant 300 : i32
    %72 = arith.subi %c300_i32_35, %71 : i32
    %73 = vector.extract_strided_slice %6 {offsets = [0, 0], sizes = [1, 140], strides = [1, 1]} : vector<1x148xi32> to vector<1x140xi32>
    %74 = vector.broadcast %69 : i32 to vector<1x140xi32>
    %75 = arith.cmpi sge, %73, %74 : vector<1x140xi32>
    %76 = vector.broadcast %72 : i32 to vector<1x140xi32>
    %77 = arith.cmpi slt, %73, %76 : vector<1x140xi32>
    %78 = arith.andi %75, %77 : vector<1x140xi1>
    %cst_36 = arith.constant 0.000000e+00 : bf16
    %79 = vector.broadcast %cst_36 : bf16 to vector<64x140xbf16>
    %80 = vector.shape_cast %78 : vector<1x140xi1> to vector<1x140xi1>
    %81 = vector.broadcast %80 : vector<1x140xi1> to vector<64x140xi1>
    %82 = arith.select %81, %66, %79 : vector<64x140xi1>, vector<64x140xbf16>
    %cst_37 = arith.constant 0.000000e+00 : f32
    %83 = vector.broadcast %cst_37 : f32 to vector<64x136xf32>
    %c0_38 = arith.constant 0 : index
    %c0_39 = arith.constant 0 : index
    %c0_40 = arith.constant 0 : index
    %84 = vector.load %arg8[%c0_38, %c0_39, %c0_40] : memref<5x64x64xbf16, #tpu.memory_space<vmem>>, vector<1x64x64xbf16>
    %85 = vector.shape_cast %84 : vector<1x64x64xbf16> to vector<64x64xbf16>
    %86 = vector.extract_strided_slice %82 {offsets = [0, 0], sizes = [64, 136], strides = [1, 1]} : vector<64x140xbf16> to vector<64x136xbf16>
    %cst_41 = arith.constant dense<0.000000e+00> : vector<64x136xf32>
    %87 = tpu.matmul %85, %86, %cst_41 {dimension_numbers = #tpu.dot_dimension_numbers<[1], [0], [0], [1], [0, 0, 1, 1], [], []>} : vector<64x64xbf16>, vector<64x136xbf16>, vector<64x136xf32> -> vector<64x136xf32>
    %88 = arith.addf %83, %87 : vector<64x136xf32>
    %c1_42 = arith.constant 1 : index
    %c0_43 = arith.constant 0 : index
    %c0_44 = arith.constant 0 : index
    %89 = vector.load %arg8[%c1_42, %c0_43, %c0_44] : memref<5x64x64xbf16, #tpu.memory_space<vmem>>, vector<1x64x64xbf16>
    %90 = vector.shape_cast %89 : vector<1x64x64xbf16> to vector<64x64xbf16>
    %91 = vector.extract_strided_slice %82 {offsets = [0, 1], sizes = [64, 136], strides = [1, 1]} : vector<64x140xbf16> to vector<64x136xbf16>
    %cst_45 = arith.constant dense<0.000000e+00> : vector<64x136xf32>
    %92 = tpu.matmul %90, %91, %cst_45 {dimension_numbers = #tpu.dot_dimension_numbers<[1], [0], [0], [1], [0, 0, 1, 1], [], []>} : vector<64x64xbf16>, vector<64x136xbf16>, vector<64x136xf32> -> vector<64x136xf32>
    %93 = arith.addf %88, %92 : vector<64x136xf32>
    %c2_46 = arith.constant 2 : index
    %c0_47 = arith.constant 0 : index
    %c0_48 = arith.constant 0 : index
    %94 = vector.load %arg8[%c2_46, %c0_47, %c0_48] : memref<5x64x64xbf16, #tpu.memory_space<vmem>>, vector<1x64x64xbf16>
    %95 = vector.shape_cast %94 : vector<1x64x64xbf16> to vector<64x64xbf16>
    %96 = vector.extract_strided_slice %82 {offsets = [0, 2], sizes = [64, 136], strides = [1, 1]} : vector<64x140xbf16> to vector<64x136xbf16>
    %cst_49 = arith.constant dense<0.000000e+00> : vector<64x136xf32>
    %97 = tpu.matmul %95, %96, %cst_49 {dimension_numbers = #tpu.dot_dimension_numbers<[1], [0], [0], [1], [0, 0, 1, 1], [], []>} : vector<64x64xbf16>, vector<64x136xbf16>, vector<64x136xf32> -> vector<64x136xf32>
    %98 = arith.addf %93, %97 : vector<64x136xf32>
    %c3_50 = arith.constant 3 : index
    %c0_51 = arith.constant 0 : index
    %c0_52 = arith.constant 0 : index
    %99 = vector.load %arg8[%c3_50, %c0_51, %c0_52] : memref<5x64x64xbf16, #tpu.memory_space<vmem>>, vector<1x64x64xbf16>
    %100 = vector.shape_cast %99 : vector<1x64x64xbf16> to vector<64x64xbf16>
    %101 = vector.extract_strided_slice %82 {offsets = [0, 3], sizes = [64, 136], strides = [1, 1]} : vector<64x140xbf16> to vector<64x136xbf16>
    %cst_53 = arith.constant dense<0.000000e+00> : vector<64x136xf32>
    %102 = tpu.matmul %100, %101, %cst_53 {dimension_numbers = #tpu.dot_dimension_numbers<[1], [0], [0], [1], [0, 0, 1, 1], [], []>} : vector<64x64xbf16>, vector<64x136xbf16>, vector<64x136xf32> -> vector<64x136xf32>
    %103 = arith.addf %98, %102 : vector<64x136xf32>
    %c4_54 = arith.constant 4 : index
    %c0_55 = arith.constant 0 : index
    %c0_56 = arith.constant 0 : index
    %104 = vector.load %arg8[%c4_54, %c0_55, %c0_56] : memref<5x64x64xbf16, #tpu.memory_space<vmem>>, vector<1x64x64xbf16>
    %105 = vector.shape_cast %104 : vector<1x64x64xbf16> to vector<64x64xbf16>
    %106 = vector.extract_strided_slice %82 {offsets = [0, 4], sizes = [64, 136], strides = [1, 1]} : vector<64x140xbf16> to vector<64x136xbf16>
    %cst_57 = arith.constant dense<0.000000e+00> : vector<64x136xf32>
    %107 = tpu.matmul %105, %106, %cst_57 {dimension_numbers = #tpu.dot_dimension_numbers<[1], [0], [0], [1], [0, 0, 1, 1], [], []>} : vector<64x64xbf16>, vector<64x136xbf16>, vector<64x136xf32> -> vector<64x136xf32>
    %108 = arith.addf %103, %107 : vector<64x136xf32>
    %c0_58 = arith.constant 0 : index
    %c0_59 = arith.constant 0 : index
    %109 = vector.load %arg9[%c0_58, %c0_59] : memref<64x1xf32, #tpu.memory_space<vmem>>, vector<64x1xf32>
    %110 = vector.broadcast %109 : vector<64x1xf32> to vector<64x136xf32>
    %111 = arith.addf %108, %110 : vector<64x136xf32>
    %112 = math.tanh %111 : vector<64x136xf32>
    %113 = arith.truncf %112 : vector<64x136xf32> to vector<64x136xbf16>
    %c128_i32_60 = arith.constant 128 : i32
    %114 = arith.muli %arg1, %c128_i32_60 : i32
    %c-4_i32 = arith.constant -4 : i32
    %115 = arith.addi %114, %c-4_i32 : i32
    %c0_i32_61 = arith.constant 0 : i32
    %116 = arith.subi %c0_i32_61, %115 : i32
    %c128_i32_62 = arith.constant 128 : i32
    %117 = arith.muli %arg1, %c128_i32_62 : i32
    %c-4_i32_63 = arith.constant -4 : i32
    %118 = arith.addi %117, %c-4_i32_63 : i32
    %c300_i32_64 = arith.constant 300 : i32
    %119 = arith.subi %c300_i32_64, %118 : i32
    %120 = vector.extract_strided_slice %6 {offsets = [0, 0], sizes = [1, 136], strides = [1, 1]} : vector<1x148xi32> to vector<1x136xi32>
    %121 = vector.broadcast %116 : i32 to vector<1x136xi32>
    %122 = arith.cmpi sge, %120, %121 : vector<1x136xi32>
    %123 = vector.broadcast %119 : i32 to vector<1x136xi32>
    %124 = arith.cmpi slt, %120, %123 : vector<1x136xi32>
    %125 = arith.andi %122, %124 : vector<1x136xi1>
    %cst_65 = arith.constant 0.000000e+00 : bf16
    %126 = vector.broadcast %cst_65 : bf16 to vector<64x136xbf16>
    %127 = vector.shape_cast %125 : vector<1x136xi1> to vector<1x136xi1>
    %128 = vector.broadcast %127 : vector<1x136xi1> to vector<64x136xi1>
    %129 = arith.select %128, %113, %126 : vector<64x136xi1>, vector<64x136xbf16>
    %cst_66 = arith.constant 0.000000e+00 : f32
    %130 = vector.broadcast %cst_66 : f32 to vector<64x132xf32>
    %c0_67 = arith.constant 0 : index
    %c0_68 = arith.constant 0 : index
    %c0_69 = arith.constant 0 : index
    %131 = vector.load %arg10[%c0_67, %c0_68, %c0_69] : memref<5x64x64xbf16, #tpu.memory_space<vmem>>, vector<1x64x64xbf16>
    %132 = vector.shape_cast %131 : vector<1x64x64xbf16> to vector<64x64xbf16>
    %133 = vector.extract_strided_slice %129 {offsets = [0, 0], sizes = [64, 132], strides = [1, 1]} : vector<64x136xbf16> to vector<64x132xbf16>
    %cst_70 = arith.constant dense<0.000000e+00> : vector<64x132xf32>
    %134 = tpu.matmul %132, %133, %cst_70 {dimension_numbers = #tpu.dot_dimension_numbers<[1], [0], [0], [1], [0, 0, 1, 1], [], []>} : vector<64x64xbf16>, vector<64x132xbf16>, vector<64x132xf32> -> vector<64x132xf32>
    %135 = arith.addf %130, %134 : vector<64x132xf32>
    %c1_71 = arith.constant 1 : index
    %c0_72 = arith.constant 0 : index
    %c0_73 = arith.constant 0 : index
    %136 = vector.load %arg10[%c1_71, %c0_72, %c0_73] : memref<5x64x64xbf16, #tpu.memory_space<vmem>>, vector<1x64x64xbf16>
    %137 = vector.shape_cast %136 : vector<1x64x64xbf16> to vector<64x64xbf16>
    %138 = vector.extract_strided_slice %129 {offsets = [0, 1], sizes = [64, 132], strides = [1, 1]} : vector<64x136xbf16> to vector<64x132xbf16>
    %cst_74 = arith.constant dense<0.000000e+00> : vector<64x132xf32>
    %139 = tpu.matmul %137, %138, %cst_74 {dimension_numbers = #tpu.dot_dimension_numbers<[1], [0], [0], [1], [0, 0, 1, 1], [], []>} : vector<64x64xbf16>, vector<64x132xbf16>, vector<64x132xf32> -> vector<64x132xf32>
    %140 = arith.addf %135, %139 : vector<64x132xf32>
    %c2_75 = arith.constant 2 : index
    %c0_76 = arith.constant 0 : index
    %c0_77 = arith.constant 0 : index
    %141 = vector.load %arg10[%c2_75, %c0_76, %c0_77] : memref<5x64x64xbf16, #tpu.memory_space<vmem>>, vector<1x64x64xbf16>
    %142 = vector.shape_cast %141 : vector<1x64x64xbf16> to vector<64x64xbf16>
    %143 = vector.extract_strided_slice %129 {offsets = [0, 2], sizes = [64, 132], strides = [1, 1]} : vector<64x136xbf16> to vector<64x132xbf16>
    %cst_78 = arith.constant dense<0.000000e+00> : vector<64x132xf32>
    %144 = tpu.matmul %142, %143, %cst_78 {dimension_numbers = #tpu.dot_dimension_numbers<[1], [0], [0], [1], [0, 0, 1, 1], [], []>} : vector<64x64xbf16>, vector<64x132xbf16>, vector<64x132xf32> -> vector<64x132xf32>
    %145 = arith.addf %140, %144 : vector<64x132xf32>
    %c3_79 = arith.constant 3 : index
    %c0_80 = arith.constant 0 : index
    %c0_81 = arith.constant 0 : index
    %146 = vector.load %arg10[%c3_79, %c0_80, %c0_81] : memref<5x64x64xbf16, #tpu.memory_space<vmem>>, vector<1x64x64xbf16>
    %147 = vector.shape_cast %146 : vector<1x64x64xbf16> to vector<64x64xbf16>
    %148 = vector.extract_strided_slice %129 {offsets = [0, 3], sizes = [64, 132], strides = [1, 1]} : vector<64x136xbf16> to vector<64x132xbf16>
    %cst_82 = arith.constant dense<0.000000e+00> : vector<64x132xf32>
    %149 = tpu.matmul %147, %148, %cst_82 {dimension_numbers = #tpu.dot_dimension_numbers<[1], [0], [0], [1], [0, 0, 1, 1], [], []>} : vector<64x64xbf16>, vector<64x132xbf16>, vector<64x132xf32> -> vector<64x132xf32>
    %150 = arith.addf %145, %149 : vector<64x132xf32>
    %c4_83 = arith.constant 4 : index
    %c0_84 = arith.constant 0 : index
    %c0_85 = arith.constant 0 : index
    %151 = vector.load %arg10[%c4_83, %c0_84, %c0_85] : memref<5x64x64xbf16, #tpu.memory_space<vmem>>, vector<1x64x64xbf16>
    %152 = vector.shape_cast %151 : vector<1x64x64xbf16> to vector<64x64xbf16>
    %153 = vector.extract_strided_slice %129 {offsets = [0, 4], sizes = [64, 132], strides = [1, 1]} : vector<64x136xbf16> to vector<64x132xbf16>
    %cst_86 = arith.constant dense<0.000000e+00> : vector<64x132xf32>
    %154 = tpu.matmul %152, %153, %cst_86 {dimension_numbers = #tpu.dot_dimension_numbers<[1], [0], [0], [1], [0, 0, 1, 1], [], []>} : vector<64x64xbf16>, vector<64x132xbf16>, vector<64x132xf32> -> vector<64x132xf32>
    %155 = arith.addf %150, %154 : vector<64x132xf32>
    %c0_87 = arith.constant 0 : index
    %c0_88 = arith.constant 0 : index
    %156 = vector.load %arg11[%c0_87, %c0_88] : memref<64x1xf32, #tpu.memory_space<vmem>>, vector<64x1xf32>
    %157 = vector.broadcast %156 : vector<64x1xf32> to vector<64x132xf32>
    %158 = arith.addf %155, %157 : vector<64x132xf32>
    %159 = math.tanh %158 : vector<64x132xf32>
    %160 = arith.truncf %159 : vector<64x132xf32> to vector<64x132xbf16>
    %c128_i32_89 = arith.constant 128 : i32
    %161 = arith.muli %arg1, %c128_i32_89 : i32
    %c-2_i32 = arith.constant -2 : i32
    %162 = arith.addi %161, %c-2_i32 : i32
    %c0_i32_90 = arith.constant 0 : i32
    %163 = arith.subi %c0_i32_90, %162 : i32
    %c128_i32_91 = arith.constant 128 : i32
    %164 = arith.muli %arg1, %c128_i32_91 : i32
    %c-2_i32_92 = arith.constant -2 : i32
    %165 = arith.addi %164, %c-2_i32_92 : i32
    %c300_i32_93 = arith.constant 300 : i32
    %166 = arith.subi %c300_i32_93, %165 : i32
    %167 = vector.extract_strided_slice %6 {offsets = [0, 0], sizes = [1, 132], strides = [1, 1]} : vector<1x148xi32> to vector<1x132xi32>
    %168 = vector.broadcast %163 : i32 to vector<1x132xi32>
    %169 = arith.cmpi sge, %167, %168 : vector<1x132xi32>
    %170 = vector.broadcast %166 : i32 to vector<1x132xi32>
    %171 = arith.cmpi slt, %167, %170 : vector<1x132xi32>
    %172 = arith.andi %169, %171 : vector<1x132xi1>
    %cst_94 = arith.constant 0.000000e+00 : bf16
    %173 = vector.broadcast %cst_94 : bf16 to vector<64x132xbf16>
    %174 = vector.shape_cast %172 : vector<1x132xi1> to vector<1x132xi1>
    %175 = vector.broadcast %174 : vector<1x132xi1> to vector<64x132xi1>
    %176 = arith.select %175, %160, %173 : vector<64x132xi1>, vector<64x132xbf16>
    %cst_95 = arith.constant 0.000000e+00 : f32
    %177 = vector.broadcast %cst_95 : f32 to vector<16x128xf32>
    %c0_96 = arith.constant 0 : index
    %c0_97 = arith.constant 0 : index
    %c0_98 = arith.constant 0 : index
    %178 = vector.load %arg12[%c0_96, %c0_97, %c0_98] : memref<5x16x64xbf16, #tpu.memory_space<vmem>>, vector<1x16x64xbf16>
    %179 = vector.shape_cast %178 : vector<1x16x64xbf16> to vector<16x64xbf16>
    %180 = vector.extract_strided_slice %176 {offsets = [0, 0], sizes = [64, 128], strides = [1, 1]} : vector<64x132xbf16> to vector<64x128xbf16>
    %cst_99 = arith.constant dense<0.000000e+00> : vector<16x128xf32>
    %181 = tpu.matmul %179, %180, %cst_99 {dimension_numbers = #tpu.dot_dimension_numbers<[1], [0], [0], [1], [0, 0, 1, 1], [], []>} : vector<16x64xbf16>, vector<64x128xbf16>, vector<16x128xf32> -> vector<16x128xf32>
    %182 = arith.addf %177, %181 : vector<16x128xf32>
    %c1_100 = arith.constant 1 : index
    %c0_101 = arith.constant 0 : index
    %c0_102 = arith.constant 0 : index
    %183 = vector.load %arg12[%c1_100, %c0_101, %c0_102] : memref<5x16x64xbf16, #tpu.memory_space<vmem>>, vector<1x16x64xbf16>
    %184 = vector.shape_cast %183 : vector<1x16x64xbf16> to vector<16x64xbf16>
    %185 = vector.extract_strided_slice %176 {offsets = [0, 1], sizes = [64, 128], strides = [1, 1]} : vector<64x132xbf16> to vector<64x128xbf16>
    %cst_103 = arith.constant dense<0.000000e+00> : vector<16x128xf32>
    %186 = tpu.matmul %184, %185, %cst_103 {dimension_numbers = #tpu.dot_dimension_numbers<[1], [0], [0], [1], [0, 0, 1, 1], [], []>} : vector<16x64xbf16>, vector<64x128xbf16>, vector<16x128xf32> -> vector<16x128xf32>
    %187 = arith.addf %182, %186 : vector<16x128xf32>
    %c2_104 = arith.constant 2 : index
    %c0_105 = arith.constant 0 : index
    %c0_106 = arith.constant 0 : index
    %188 = vector.load %arg12[%c2_104, %c0_105, %c0_106] : memref<5x16x64xbf16, #tpu.memory_space<vmem>>, vector<1x16x64xbf16>
    %189 = vector.shape_cast %188 : vector<1x16x64xbf16> to vector<16x64xbf16>
    %190 = vector.extract_strided_slice %176 {offsets = [0, 2], sizes = [64, 128], strides = [1, 1]} : vector<64x132xbf16> to vector<64x128xbf16>
    %cst_107 = arith.constant dense<0.000000e+00> : vector<16x128xf32>
    %191 = tpu.matmul %189, %190, %cst_107 {dimension_numbers = #tpu.dot_dimension_numbers<[1], [0], [0], [1], [0, 0, 1, 1], [], []>} : vector<16x64xbf16>, vector<64x128xbf16>, vector<16x128xf32> -> vector<16x128xf32>
    %192 = arith.addf %187, %191 : vector<16x128xf32>
    %c3_108 = arith.constant 3 : index
    %c0_109 = arith.constant 0 : index
    %c0_110 = arith.constant 0 : index
    %193 = vector.load %arg12[%c3_108, %c0_109, %c0_110] : memref<5x16x64xbf16, #tpu.memory_space<vmem>>, vector<1x16x64xbf16>
    %194 = vector.shape_cast %193 : vector<1x16x64xbf16> to vector<16x64xbf16>
    %195 = vector.extract_strided_slice %176 {offsets = [0, 3], sizes = [64, 128], strides = [1, 1]} : vector<64x132xbf16> to vector<64x128xbf16>
    %cst_111 = arith.constant dense<0.000000e+00> : vector<16x128xf32>
    %196 = tpu.matmul %194, %195, %cst_111 {dimension_numbers = #tpu.dot_dimension_numbers<[1], [0], [0], [1], [0, 0, 1, 1], [], []>} : vector<16x64xbf16>, vector<64x128xbf16>, vector<16x128xf32> -> vector<16x128xf32>
    %197 = arith.addf %192, %196 : vector<16x128xf32>
    %c4_112 = arith.constant 4 : index
    %c0_113 = arith.constant 0 : index
    %c0_114 = arith.constant 0 : index
    %198 = vector.load %arg12[%c4_112, %c0_113, %c0_114] : memref<5x16x64xbf16, #tpu.memory_space<vmem>>, vector<1x16x64xbf16>
    %199 = vector.shape_cast %198 : vector<1x16x64xbf16> to vector<16x64xbf16>
    %200 = vector.extract_strided_slice %176 {offsets = [0, 4], sizes = [64, 128], strides = [1, 1]} : vector<64x132xbf16> to vector<64x128xbf16>
    %cst_115 = arith.constant dense<0.000000e+00> : vector<16x128xf32>
    %201 = tpu.matmul %199, %200, %cst_115 {dimension_numbers = #tpu.dot_dimension_numbers<[1], [0], [0], [1], [0, 0, 1, 1], [], []>} : vector<16x64xbf16>, vector<64x128xbf16>, vector<16x128xf32> -> vector<16x128xf32>
    %202 = arith.addf %197, %201 : vector<16x128xf32>
    %c0_116 = arith.constant 0 : index
    %c0_117 = arith.constant 0 : index
    %203 = vector.load %arg13[%c0_116, %c0_117] : memref<16x1xf32, #tpu.memory_space<vmem>>, vector<16x1xf32>
    %204 = vector.broadcast %203 : vector<16x1xf32> to vector<16x128xf32>
    %205 = arith.addf %202, %204 : vector<16x128xf32>
    %c0_118 = arith.constant 0 : index
    %c0_119 = arith.constant 0 : index
    %c0_120 = arith.constant 0 : index
    %206 = vector.load %arg14[%c0_118, %c0_119, %c0_120] : memref<1x16x128xf32, #tpu.memory_space<vmem>>, vector<1x16x128xf32>
    %207 = vector.shape_cast %206 : vector<1x16x128xf32> to vector<16x128xf32>
    %208 = vector.shape_cast %205 : vector<16x128xf32> to vector<1x16x128xf32>
    tpu.vector_store %arg14[%c0_118, %c0_119, %c0_120], %208 {strides = array<i32>} : memref<1x16x128xf32, #tpu.memory_space<vmem>>, vector<1x16x128xf32>,
    return
  }
  func.func @transform_0(%arg0: i32, %arg1: i32) -> (i32, i32, i32) {
    %c0_i32 = arith.constant 0 : i32
    %c0_i32_0 = arith.constant 0 : i32
    return %arg0, %c0_i32, %arg1 : i32, i32, i32
  }
  func.func @transform_1(%arg0: i32, %arg1: i32) -> (i32, i32, i32) {
    %c1_i32 = arith.constant 1 : i32
    %0 = arith.addi %arg1, %c1_i32 : i32
    %c1_i32_0 = arith.constant 1 : i32
    %1 = arith.muli %0, %c1_i32_0 : i32
    %c0_i32 = arith.constant 0 : i32
    %c0_i32_1 = arith.constant 0 : i32
    return %arg0, %c0_i32, %1 : i32, i32, i32
  }
  func.func @transform_2(%arg0: i32, %arg1: i32) -> (i32, i32) {
    %c0_i32 = arith.constant 0 : i32
    %c0_i32_0 = arith.constant 0 : i32
    %c0_i32_1 = arith.constant 0 : i32
    return %c0_i32, %c0_i32_0 : i32, i32
  }
  func.func @transform_3(%arg0: i32, %arg1: i32) -> (i32, i32) {
    %c0_i32 = arith.constant 0 : i32
    %c0_i32_0 = arith.constant 0 : i32
    %c0_i32_1 = arith.constant 0 : i32
    return %c0_i32, %c0_i32_0 : i32, i32
  }
  func.func @transform_4(%arg0: i32, %arg1: i32) -> (i32, i32, i32) {
    %c0_i32 = arith.constant 0 : i32
    %c0_i32_0 = arith.constant 0 : i32
    %c0_i32_1 = arith.constant 0 : i32
    %c0_i32_2 = arith.constant 0 : i32
    return %c0_i32, %c0_i32_0, %c0_i32_1 : i32, i32, i32
  }
  func.func @transform_5(%arg0: i32, %arg1: i32) -> (i32, i32) {
    %c0_i32 = arith.constant 0 : i32
    %c0_i32_0 = arith.constant 0 : i32
    %c0_i32_1 = arith.constant 0 : i32
    return %c0_i32, %c0_i32_0 : i32, i32
  }
  func.func @transform_6(%arg0: i32, %arg1: i32) -> (i32, i32, i32) {
    %c0_i32 = arith.constant 0 : i32
    %c0_i32_0 = arith.constant 0 : i32
    %c0_i32_1 = arith.constant 0 : i32
    %c0_i32_2 = arith.constant 0 : i32
    return %c0_i32, %c0_i32_0, %c0_i32_1 : i32, i32, i32
  }
  func.func @transform_7(%arg0: i32, %arg1: i32) -> (i32, i32) {
    %c0_i32 = arith.constant 0 : i32
    %c0_i32_0 = arith.constant 0 : i32
    %c0_i32_1 = arith.constant 0 : i32
    return %c0_i32, %c0_i32_0 : i32, i32
  }
  func.func @transform_8(%arg0: i32, %arg1: i32) -> (i32, i32, i32) {
    %c0_i32 = arith.constant 0 : i32
    %c0_i32_0 = arith.constant 0 : i32
    %c0_i32_1 = arith.constant 0 : i32
    %c0_i32_2 = arith.constant 0 : i32
    return %c0_i32, %c0_i32_0, %c0_i32_1 : i32, i32, i32
  }
  func.func @transform_9(%arg0: i32, %arg1: i32) -> (i32, i32) {
    %c0_i32 = arith.constant 0 : i32
    %c0_i32_0 = arith.constant 0 : i32
    %c0_i32_1 = arith.constant 0 : i32
    return %c0_i32, %c0_i32_0 : i32, i32
  }
  func.func @transform_10(%arg0: i32, %arg1: i32) -> (i32, i32, i32) {
    %c0_i32 = arith.constant 0 : i32
    %c0_i32_0 = arith.constant 0 : i32
    %c0_i32_1 = arith.constant 0 : i32
    %c0_i32_2 = arith.constant 0 : i32
    return %c0_i32, %c0_i32_0, %c0_i32_1 : i32, i32, i32
  }
  func.func @transform_11(%arg0: i32, %arg1: i32) -> (i32, i32) {
    %c0_i32 = arith.constant 0 : i32
    %c0_i32_0 = arith.constant 0 : i32
    %c0_i32_1 = arith.constant 0 : i32
    return %c0_i32, %c0_i32_0 : i32, i32
  }
  func.func @transform_12(%arg0: i32, %arg1: i32) -> (i32, i32, i32) {
    %c0_i32 = arith.constant 0 : i32
    %c0_i32_0 = arith.constant 0 : i32
    return %arg0, %c0_i32, %arg1 : i32, i32, i32
  }
}

module attributes {stable_mosaic.version = 11 : i64} {
  func.func @_postnet_fused_kernel(%arg0: i32, %arg1: i32, %arg2: memref<1x16x128xbf16, #tpu.memory_space<vmem>>, %arg3: memref<1x16x128xbf16, #tpu.memory_space<vmem>>, %arg4: memref<64x80xbf16, #tpu.memory_space<vmem>>, %arg5: memref<64x1xf32, #tpu.memory_space<vmem>>, %arg6: memref<5x64x64xbf16, #tpu.memory_space<vmem>>, %arg7: memref<64x1xf32, #tpu.memory_space<vmem>>, %arg8: memref<5x64x64xbf16, #tpu.memory_space<vmem>>, %arg9: memref<64x1xf32, #tpu.memory_space<vmem>>, %arg10: memref<5x64x64xbf16, #tpu.memory_space<vmem>>, %arg11: memref<64x1xf32, #tpu.memory_space<vmem>>, %arg12: memref<5x16x64xbf16, #tpu.memory_space<vmem>>, %arg13: memref<16x1xf32, #tpu.memory_space<vmem>>, %arg14: memref<1x16x128xf32, #tpu.memory_space<vmem>>) attributes {dimension_semantics = [#tpu.dimension_semantics<parallel>, #tpu.dimension_semantics<parallel>], iteration_bounds = array<i64: 2, 3>, scalar_prefetch = 0 : i64, scratch_operands = 0 : i64, tpu.core_type = #tpu.core_type<tc>, window_params = [{transform_indices = @transform_0, window_bounds = array<i64: 1, 16, 128>}, {transform_indices = @transform_1, window_bounds = array<i64: 1, 16, 128>}, {pipeline_mode = #tpu.pipeline_mode<synchronous>, transform_indices = @transform_2, window_bounds = array<i64: 64, 80>}, {pipeline_mode = #tpu.pipeline_mode<synchronous>, transform_indices = @transform_3, window_bounds = array<i64: 64, 1>}, {pipeline_mode = #tpu.pipeline_mode<synchronous>, transform_indices = @transform_4, window_bounds = array<i64: 5, 64, 64>}, {pipeline_mode = #tpu.pipeline_mode<synchronous>, transform_indices = @transform_5, window_bounds = array<i64: 64, 1>}, {pipeline_mode = #tpu.pipeline_mode<synchronous>, transform_indices = @transform_6, window_bounds = array<i64: 5, 64, 64>}, {pipeline_mode = #tpu.pipeline_mode<synchronous>, transform_indices = @transform_7, window_bounds = array<i64: 64, 1>}, {pipeline_mode = #tpu.pipeline_mode<synchronous>, transform_indices = @transform_8, window_bounds = array<i64: 5, 64, 64>}, {pipeline_mode = #tpu.pipeline_mode<synchronous>, transform_indices = @transform_9, window_bounds = array<i64: 64, 1>}, {pipeline_mode = #tpu.pipeline_mode<synchronous>, transform_indices = @transform_10, window_bounds = array<i64: 5, 16, 64>}, {pipeline_mode = #tpu.pipeline_mode<synchronous>, transform_indices = @transform_11, window_bounds = array<i64: 16, 1>}, {transform_indices = @transform_12, window_bounds = array<i64: 1, 16, 128>}]} {
    %c0 = arith.constant 0 : index
    %c0_0 = arith.constant 0 : index
    %c0_1 = arith.constant 0 : index
    %0 = vector.load %arg2[%c0, %c0_0, %c0_1] : memref<1x16x128xbf16, #tpu.memory_space<vmem>>, vector<1x16x128xbf16>
    %1 = vector.shape_cast %0 : vector<1x16x128xbf16> to vector<16x128xbf16>
    %c0_2 = arith.constant 0 : index
    %c0_3 = arith.constant 0 : index
    %c0_4 = arith.constant 0 : index
    %2 = vector.load %arg3[%c0_2, %c0_3, %c0_4] : memref<1x16x128xbf16, #tpu.memory_space<vmem>>, vector<1x16x128xbf16>
    %3 = vector.shape_cast %2 : vector<1x16x128xbf16> to vector<16x128xbf16>
    %4 = vector.extract_strided_slice %3 {offsets = [0, 0], sizes = [16, 20], strides = [1, 1]} : vector<16x128xbf16> to vector<16x20xbf16>
    %5 = tpu.concatenate %1, %4 in 1 : vector<16x128xbf16>, vector<16x20xbf16> -> vector<16x148xbf16>
    %6 = tpu.iota {dimensions = array<i32: 1>} : vector<1x148xi32>
    %7 = vector.extract_strided_slice %5 {offsets = [0, 0], sizes = [16, 144], strides = [1, 1]} : vector<16x148xbf16> to vector<16x144xbf16>
    %8 = vector.extract_strided_slice %5 {offsets = [0, 1], sizes = [16, 144], strides = [1, 1]} : vector<16x148xbf16> to vector<16x144xbf16>
    %9 = vector.extract_strided_slice %5 {offsets = [0, 2], sizes = [16, 144], strides = [1, 1]} : vector<16x148xbf16> to vector<16x144xbf16>
    %10 = vector.extract_strided_slice %5 {offsets = [0, 3], sizes = [16, 144], strides = [1, 1]} : vector<16x148xbf16> to vector<16x144xbf16>
    %11 = vector.extract_strided_slice %5 {offsets = [0, 4], sizes = [16, 144], strides = [1, 1]} : vector<16x148xbf16> to vector<16x144xbf16>
    %12 = tpu.concatenate %7, %8, %9, %10, %11 in 0 : vector<16x144xbf16>, vector<16x144xbf16>, vector<16x144xbf16>, vector<16x144xbf16>, vector<16x144xbf16> -> vector<80x144xbf16>
    %c0_5 = arith.constant 0 : index
    %c0_6 = arith.constant 0 : index
    %13 = vector.load %arg4[%c0_5, %c0_6] : memref<64x80xbf16, #tpu.memory_space<vmem>>, vector<64x80xbf16>
    %cst = arith.constant dense<0.000000e+00> : vector<64x144xf32>
    %14 = tpu.matmul %13, %12, %cst {dimension_numbers = #tpu.dot_dimension_numbers<[1], [0], [0], [1], [0, 0, 1, 1], [], []>} : vector<64x80xbf16>, vector<80x144xbf16>, vector<64x144xf32> -> vector<64x144xf32>
    %c0_7 = arith.constant 0 : index
    %c0_8 = arith.constant 0 : index
    %15 = vector.load %arg5[%c0_7, %c0_8] : memref<64x1xf32, #tpu.memory_space<vmem>>, vector<64x1xf32>
    %16 = vector.broadcast %15 : vector<64x1xf32> to vector<64x144xf32>
    %17 = arith.addf %14, %16 : vector<64x144xf32>
    %18 = math.tanh %17 : vector<64x144xf32>
    %19 = arith.truncf %18 : vector<64x144xf32> to vector<64x144xbf16>
    %c128_i32 = arith.constant 128 : i32
    %20 = arith.muli %arg1, %c128_i32 : i32
    %c-8_i32 = arith.constant -8 : i32
    %21 = arith.addi %20, %c-8_i32 : i32
    %c0_i32 = arith.constant 0 : i32
    %22 = arith.subi %c0_i32, %21 : i32
    %c128_i32_9 = arith.constant 128 : i32
    %23 = arith.muli %arg1, %c128_i32_9 : i32
    %c-8_i32_10 = arith.constant -8 : i32
    %24 = arith.addi %23, %c-8_i32_10 : i32
    %c300_i32 = arith.constant 300 : i32
    %25 = arith.subi %c300_i32, %24 : i32
    %26 = vector.extract_strided_slice %6 {offsets = [0, 0], sizes = [1, 144], strides = [1, 1]} : vector<1x148xi32> to vector<1x144xi32>
    %27 = vector.broadcast %22 : i32 to vector<1x144xi32>
    %28 = arith.cmpi sge, %26, %27 : vector<1x144xi32>
    %29 = vector.broadcast %25 : i32 to vector<1x144xi32>
    %30 = arith.cmpi slt, %26, %29 : vector<1x144xi32>
    %31 = arith.andi %28, %30 : vector<1x144xi1>
    %cst_11 = arith.constant 0.000000e+00 : bf16
    %32 = vector.broadcast %cst_11 : bf16 to vector<64x144xbf16>
    %33 = vector.shape_cast %31 : vector<1x144xi1> to vector<1x144xi1>
    %34 = vector.broadcast %33 : vector<1x144xi1> to vector<64x144xi1>
    %35 = arith.select %34, %19, %32 : vector<64x144xi1>, vector<64x144xbf16>
    %cst_12 = arith.constant 0.000000e+00 : f32
    %36 = vector.broadcast %cst_12 : f32 to vector<64x140xf32>
    %c0_13 = arith.constant 0 : index
    %c0_14 = arith.constant 0 : index
    %c0_15 = arith.constant 0 : index
    %37 = vector.load %arg6[%c0_13, %c0_14, %c0_15] : memref<5x64x64xbf16, #tpu.memory_space<vmem>>, vector<1x64x64xbf16>
    %38 = vector.shape_cast %37 : vector<1x64x64xbf16> to vector<64x64xbf16>
    %39 = vector.extract_strided_slice %35 {offsets = [0, 0], sizes = [64, 140], strides = [1, 1]} : vector<64x144xbf16> to vector<64x140xbf16>
    %cst_16 = arith.constant dense<0.000000e+00> : vector<64x140xf32>
    %40 = tpu.matmul %38, %39, %cst_16 {dimension_numbers = #tpu.dot_dimension_numbers<[1], [0], [0], [1], [0, 0, 1, 1], [], []>} : vector<64x64xbf16>, vector<64x140xbf16>, vector<64x140xf32> -> vector<64x140xf32>
    %41 = arith.addf %36, %40 : vector<64x140xf32>
    %c1 = arith.constant 1 : index
    %c0_17 = arith.constant 0 : index
    %c0_18 = arith.constant 0 : index
    %42 = vector.load %arg6[%c1, %c0_17, %c0_18] : memref<5x64x64xbf16, #tpu.memory_space<vmem>>, vector<1x64x64xbf16>
    %43 = vector.shape_cast %42 : vector<1x64x64xbf16> to vector<64x64xbf16>
    %44 = vector.extract_strided_slice %35 {offsets = [0, 1], sizes = [64, 140], strides = [1, 1]} : vector<64x144xbf16> to vector<64x140xbf16>
    %cst_19 = arith.constant dense<0.000000e+00> : vector<64x140xf32>
    %45 = tpu.matmul %43, %44, %cst_19 {dimension_numbers = #tpu.dot_dimension_numbers<[1], [0], [0], [1], [0, 0, 1, 1], [], []>} : vector<64x64xbf16>, vector<64x140xbf16>, vector<64x140xf32> -> vector<64x140xf32>
    %46 = arith.addf %41, %45 : vector<64x140xf32>
    %c2 = arith.constant 2 : index
    %c0_20 = arith.constant 0 : index
    %c0_21 = arith.constant 0 : index
    %47 = vector.load %arg6[%c2, %c0_20, %c0_21] : memref<5x64x64xbf16, #tpu.memory_space<vmem>>, vector<1x64x64xbf16>
    %48 = vector.shape_cast %47 : vector<1x64x64xbf16> to vector<64x64xbf16>
    %49 = vector.extract_strided_slice %35 {offsets = [0, 2], sizes = [64, 140], strides = [1, 1]} : vector<64x144xbf16> to vector<64x140xbf16>
    %cst_22 = arith.constant dense<0.000000e+00> : vector<64x140xf32>
    %50 = tpu.matmul %48, %49, %cst_22 {dimension_numbers = #tpu.dot_dimension_numbers<[1], [0], [0], [1], [0, 0, 1, 1], [], []>} : vector<64x64xbf16>, vector<64x140xbf16>, vector<64x140xf32> -> vector<64x140xf32>
    %51 = arith.addf %46, %50 : vector<64x140xf32>
    %c3 = arith.constant 3 : index
    %c0_23 = arith.constant 0 : index
    %c0_24 = arith.constant 0 : index
    %52 = vector.load %arg6[%c3, %c0_23, %c0_24] : memref<5x64x64xbf16, #tpu.memory_space<vmem>>, vector<1x64x64xbf16>
    %53 = vector.shape_cast %52 : vector<1x64x64xbf16> to vector<64x64xbf16>
    %54 = vector.extract_strided_slice %35 {offsets = [0, 3], sizes = [64, 140], strides = [1, 1]} : vector<64x144xbf16> to vector<64x140xbf16>
    %cst_25 = arith.constant dense<0.000000e+00> : vector<64x140xf32>
    %55 = tpu.matmul %53, %54, %cst_25 {dimension_numbers = #tpu.dot_dimension_numbers<[1], [0], [0], [1], [0, 0, 1, 1], [], []>} : vector<64x64xbf16>, vector<64x140xbf16>, vector<64x140xf32> -> vector<64x140xf32>
    %56 = arith.addf %51, %55 : vector<64x140xf32>
    %c4 = arith.constant 4 : index
    %c0_26 = arith.constant 0 : index
    %c0_27 = arith.constant 0 : index
    %57 = vector.load %arg6[%c4, %c0_26, %c0_27] : memref<5x64x64xbf16, #tpu.memory_space<vmem>>, vector<1x64x64xbf16>
    %58 = vector.shape_cast %57 : vector<1x64x64xbf16> to vector<64x64xbf16>
    %59 = vector.extract_strided_slice %35 {offsets = [0, 4], sizes = [64, 140], strides = [1, 1]} : vector<64x144xbf16> to vector<64x140xbf16>
    %cst_28 = arith.constant dense<0.000000e+00> : vector<64x140xf32>
    %60 = tpu.matmul %58, %59, %cst_28 {dimension_numbers = #tpu.dot_dimension_numbers<[1], [0], [0], [1], [0, 0, 1, 1], [], []>} : vector<64x64xbf16>, vector<64x140xbf16>, vector<64x140xf32> -> vector<64x140xf32>
    %61 = arith.addf %56, %60 : vector<64x140xf32>
    %c0_29 = arith.constant 0 : index
    %c0_30 = arith.constant 0 : index
    %62 = vector.load %arg7[%c0_29, %c0_30] : memref<64x1xf32, #tpu.memory_space<vmem>>, vector<64x1xf32>
    %63 = vector.broadcast %62 : vector<64x1xf32> to vector<64x140xf32>
    %64 = arith.addf %61, %63 : vector<64x140xf32>
    %65 = math.tanh %64 : vector<64x140xf32>
    %66 = arith.truncf %65 : vector<64x140xf32> to vector<64x140xbf16>
    %c128_i32_31 = arith.constant 128 : i32
    %67 = arith.muli %arg1, %c128_i32_31 : i32
    %c-6_i32 = arith.constant -6 : i32
    %68 = arith.addi %67, %c-6_i32 : i32
    %c0_i32_32 = arith.constant 0 : i32
    %69 = arith.subi %c0_i32_32, %68 : i32
    %c128_i32_33 = arith.constant 128 : i32
    %70 = arith.muli %arg1, %c128_i32_33 : i32
    %c-6_i32_34 = arith.constant -6 : i32
    %71 = arith.addi %70, %c-6_i32_34 : i32
    %c300_i32_35 = arith.constant 300 : i32
    %72 = arith.subi %c300_i32_35, %71 : i32
    %73 = vector.extract_strided_slice %6 {offsets = [0, 0], sizes = [1, 140], strides = [1, 1]} : vector<1x148xi32> to vector<1x140xi32>
    %74 = vector.broadcast %69 : i32 to vector<1x140xi32>
    %75 = arith.cmpi sge, %73, %74 : vector<1x140xi32>
    %76 = vector.broadcast %72 : i32 to vector<1x140xi32>
    %77 = arith.cmpi slt, %73, %76 : vector<1x140xi32>
    %78 = arith.andi %75, %77 : vector<1x140xi1>
    %cst_36 = arith.constant 0.000000e+00 : bf16
    %79 = vector.broadcast %cst_36 : bf16 to vector<64x140xbf16>
    %80 = vector.shape_cast %78 : vector<1x140xi1> to vector<1x140xi1>
    %81 = vector.broadcast %80 : vector<1x140xi1> to vector<64x140xi1>
    %82 = arith.select %81, %66, %79 : vector<64x140xi1>, vector<64x140xbf16>
    %cst_37 = arith.constant 0.000000e+00 : f32
    %83 = vector.broadcast %cst_37 : f32 to vector<64x136xf32>
    %c0_38 = arith.constant 0 : index
    %c0_39 = arith.constant 0 : index
    %c0_40 = arith.constant 0 : index
    %84 = vector.load %arg8[%c0_38, %c0_39, %c0_40] : memref<5x64x64xbf16, #tpu.memory_space<vmem>>, vector<1x64x64xbf16>
    %85 = vector.shape_cast %84 : vector<1x64x64xbf16> to vector<64x64xbf16>
    %86 = vector.extract_strided_slice %82 {offsets = [0, 0], sizes = [64, 136], strides = [1, 1]} : vector<64x140xbf16> to vector<64x136xbf16>
    %cst_41 = arith.constant dense<0.000000e+00> : vector<64x136xf32>
    %87 = tpu.matmul %85, %86, %cst_41 {dimension_numbers = #tpu.dot_dimension_numbers<[1], [0], [0], [1], [0, 0, 1, 1], [], []>} : vector<64x64xbf16>, vector<64x136xbf16>, vector<64x136xf32> -> vector<64x136xf32>
    %88 = arith.addf %83, %87 : vector<64x136xf32>
    %c1_42 = arith.constant 1 : index
    %c0_43 = arith.constant 0 : index
    %c0_44 = arith.constant 0 : index
    %89 = vector.load %arg8[%c1_42, %c0_43, %c0_44] : memref<5x64x64xbf16, #tpu.memory_space<vmem>>, vector<1x64x64xbf16>
    %90 = vector.shape_cast %89 : vector<1x64x64xbf16> to vector<64x64xbf16>
    %91 = vector.extract_strided_slice %82 {offsets = [0, 1], sizes = [64, 136], strides = [1, 1]} : vector<64x140xbf16> to vector<64x136xbf16>
    %cst_45 = arith.constant dense<0.000000e+00> : vector<64x136xf32>
    %92 = tpu.matmul %90, %91, %cst_45 {dimension_numbers = #tpu.dot_dimension_numbers<[1], [0], [0], [1], [0, 0, 1, 1], [], []>} : vector<64x64xbf16>, vector<64x136xbf16>, vector<64x136xf32> -> vector<64x136xf32>
    %93 = arith.addf %88, %92 : vector<64x136xf32>
    %c2_46 = arith.constant 2 : index
    %c0_47 = arith.constant 0 : index
    %c0_48 = arith.constant 0 : index
    %94 = vector.load %arg8[%c2_46, %c0_47, %c0_48] : memref<5x64x64xbf16, #tpu.memory_space<vmem>>, vector<1x64x64xbf16>
    %95 = vector.shape_cast %94 : vector<1x64x64xbf16> to vector<64x64xbf16>
    %96 = vector.extract_strided_slice %82 {offsets = [0, 2], sizes = [64, 136], strides = [1, 1]} : vector<64x140xbf16> to vector<64x136xbf16>
    %cst_49 = arith.constant dense<0.000000e+00> : vector<64x136xf32>
    %97 = tpu.matmul %95, %96, %cst_49 {dimension_numbers = #tpu.dot_dimension_numbers<[1], [0], [0], [1], [0, 0, 1, 1], [], []>} : vector<64x64xbf16>, vector<64x136xbf16>, vector<64x136xf32> -> vector<64x136xf32>
    %98 = arith.addf %93, %97 : vector<64x136xf32>
    %c3_50 = arith.constant 3 : index
    %c0_51 = arith.constant 0 : index
    %c0_52 = arith.constant 0 : index
    %99 = vector.load %arg8[%c3_50, %c0_51, %c0_52] : memref<5x64x64xbf16, #tpu.memory_space<vmem>>, vector<1x64x64xbf16>
    %100 = vector.shape_cast %99 : vector<1x64x64xbf16> to vector<64x64xbf16>
    %101 = vector.extract_strided_slice %82 {offsets = [0, 3], sizes = [64, 136], strides = [1, 1]} : vector<64x140xbf16> to vector<64x136xbf16>
    %cst_53 = arith.constant dense<0.000000e+00> : vector<64x136xf32>
    %102 = tpu.matmul %100, %101, %cst_53 {dimension_numbers = #tpu.dot_dimension_numbers<[1], [0], [0], [1], [0, 0, 1, 1], [], []>} : vector<64x64xbf16>, vector<64x136xbf16>, vector<64x136xf32> -> vector<64x136xf32>
    %103 = arith.addf %98, %102 : vector<64x136xf32>
    %c4_54 = arith.constant 4 : index
    %c0_55 = arith.constant 0 : index
    %c0_56 = arith.constant 0 : index
    %104 = vector.load %arg8[%c4_54, %c0_55, %c0_56] : memref<5x64x64xbf16, #tpu.memory_space<vmem>>, vector<1x64x64xbf16>
    %105 = vector.shape_cast %104 : vector<1x64x64xbf16> to vector<64x64xbf16>
    %106 = vector.extract_strided_slice %82 {offsets = [0, 4], sizes = [64, 136], strides = [1, 1]} : vector<64x140xbf16> to vector<64x136xbf16>
    %cst_57 = arith.constant dense<0.000000e+00> : vector<64x136xf32>
    %107 = tpu.matmul %105, %106, %cst_57 {dimension_numbers = #tpu.dot_dimension_numbers<[1], [0], [0], [1], [0, 0, 1, 1], [], []>} : vector<64x64xbf16>, vector<64x136xbf16>, vector<64x136xf32> -> vector<64x136xf32>
    %108 = arith.addf %103, %107 : vector<64x136xf32>
    %c0_58 = arith.constant 0 : index
    %c0_59 = arith.constant 0 : index
    %109 = vector.load %arg9[%c0_58, %c0_59] : memref<64x1xf32, #tpu.memory_space<vmem>>, vector<64x1xf32>
    %110 = vector.broadcast %109 : vector<64x1xf32> to vector<64x136xf32>
    %111 = arith.addf %108, %110 : vector<64x136xf32>
    %112 = math.tanh %111 : vector<64x136xf32>
    %113 = arith.truncf %112 : vector<64x136xf32> to vector<64x136xbf16>
    %c128_i32_60 = arith.constant 128 : i32
    %114 = arith.muli %arg1, %c128_i32_60 : i32
    %c-4_i32 = arith.constant -4 : i32
    %115 = arith.addi %114, %c-4_i32 : i32
    %c0_i32_61 = arith.constant 0 : i32
    %116 = arith.subi %c0_i32_61, %115 : i32
    %c128_i32_62 = arith.constant 128 : i32
    %117 = arith.muli %arg1, %c128_i32_62 : i32
    %c-4_i32_63 = arith.constant -4 : i32
    %118 = arith.addi %117, %c-4_i32_63 : i32
    %c300_i32_64 = arith.constant 300 : i32
    %119 = arith.subi %c300_i32_64, %118 : i32
    %120 = vector.extract_strided_slice %6 {offsets = [0, 0], sizes = [1, 136], strides = [1, 1]} : vector<1x148xi32> to vector<1x136xi32>
    %121 = vector.broadcast %116 : i32 to vector<1x136xi32>
    %122 = arith.cmpi sge, %120, %121 : vector<1x136xi32>
    %123 = vector.broadcast %119 : i32 to vector<1x136xi32>
    %124 = arith.cmpi slt, %120, %123 : vector<1x136xi32>
    %125 = arith.andi %122, %124 : vector<1x136xi1>
    %cst_65 = arith.constant 0.000000e+00 : bf16
    %126 = vector.broadcast %cst_65 : bf16 to vector<64x136xbf16>
    %127 = vector.shape_cast %125 : vector<1x136xi1> to vector<1x136xi1>
    %128 = vector.broadcast %127 : vector<1x136xi1> to vector<64x136xi1>
    %129 = arith.select %128, %113, %126 : vector<64x136xi1>, vector<64x136xbf16>
    %cst_66 = arith.constant 0.000000e+00 : f32
    %130 = vector.broadcast %cst_66 : f32 to vector<64x132xf32>
    %c0_67 = arith.constant 0 : index
    %c0_68 = arith.constant 0 : index
    %c0_69 = arith.constant 0 : index
    %131 = vector.load %arg10[%c0_67, %c0_68, %c0_69] : memref<5x64x64xbf16, #tpu.memory_space<vmem>>, vector<1x64x64xbf16>
    %132 = vector.shape_cast %131 : vector<1x64x64xbf16> to vector<64x64xbf16>
    %133 = vector.extract_strided_slice %129 {offsets = [0, 0], sizes = [64, 132], strides = [1, 1]} : vector<64x136xbf16> to vector<64x132xbf16>
    %cst_70 = arith.constant dense<0.000000e+00> : vector<64x132xf32>
    %134 = tpu.matmul %132, %133, %cst_70 {dimension_numbers = #tpu.dot_dimension_numbers<[1], [0], [0], [1], [0, 0, 1, 1], [], []>} : vector<64x64xbf16>, vector<64x132xbf16>, vector<64x132xf32> -> vector<64x132xf32>
    %135 = arith.addf %130, %134 : vector<64x132xf32>
    %c1_71 = arith.constant 1 : index
    %c0_72 = arith.constant 0 : index
    %c0_73 = arith.constant 0 : index
    %136 = vector.load %arg10[%c1_71, %c0_72, %c0_73] : memref<5x64x64xbf16, #tpu.memory_space<vmem>>, vector<1x64x64xbf16>
    %137 = vector.shape_cast %136 : vector<1x64x64xbf16> to vector<64x64xbf16>
    %138 = vector.extract_strided_slice %129 {offsets = [0, 1], sizes = [64, 132], strides = [1, 1]} : vector<64x136xbf16> to vector<64x132xbf16>
    %cst_74 = arith.constant dense<0.000000e+00> : vector<64x132xf32>
    %139 = tpu.matmul %137, %138, %cst_74 {dimension_numbers = #tpu.dot_dimension_numbers<[1], [0], [0], [1], [0, 0, 1, 1], [], []>} : vector<64x64xbf16>, vector<64x132xbf16>, vector<64x132xf32> -> vector<64x132xf32>
    %140 = arith.addf %135, %139 : vector<64x132xf32>
    %c2_75 = arith.constant 2 : index
    %c0_76 = arith.constant 0 : index
    %c0_77 = arith.constant 0 : index
    %141 = vector.load %arg10[%c2_75, %c0_76, %c0_77] : memref<5x64x64xbf16, #tpu.memory_space<vmem>>, vector<1x64x64xbf16>
    %142 = vector.shape_cast %141 : vector<1x64x64xbf16> to vector<64x64xbf16>
    %143 = vector.extract_strided_slice %129 {offsets = [0, 2], sizes = [64, 132], strides = [1, 1]} : vector<64x136xbf16> to vector<64x132xbf16>
    %cst_78 = arith.constant dense<0.000000e+00> : vector<64x132xf32>
    %144 = tpu.matmul %142, %143, %cst_78 {dimension_numbers = #tpu.dot_dimension_numbers<[1], [0], [0], [1], [0, 0, 1, 1], [], []>} : vector<64x64xbf16>, vector<64x132xbf16>, vector<64x132xf32> -> vector<64x132xf32>
    %145 = arith.addf %140, %144 : vector<64x132xf32>
    %c3_79 = arith.constant 3 : index
    %c0_80 = arith.constant 0 : index
    %c0_81 = arith.constant 0 : index
    %146 = vector.load %arg10[%c3_79, %c0_80, %c0_81] : memref<5x64x64xbf16, #tpu.memory_space<vmem>>, vector<1x64x64xbf16>
    %147 = vector.shape_cast %146 : vector<1x64x64xbf16> to vector<64x64xbf16>
    %148 = vector.extract_strided_slice %129 {offsets = [0, 3], sizes = [64, 132], strides = [1, 1]} : vector<64x136xbf16> to vector<64x132xbf16>
    %cst_82 = arith.constant dense<0.000000e+00> : vector<64x132xf32>
    %149 = tpu.matmul %147, %148, %cst_82 {dimension_numbers = #tpu.dot_dimension_numbers<[1], [0], [0], [1], [0, 0, 1, 1], [], []>} : vector<64x64xbf16>, vector<64x132xbf16>, vector<64x132xf32> -> vector<64x132xf32>
    %150 = arith.addf %145, %149 : vector<64x132xf32>
    %c4_83 = arith.constant 4 : index
    %c0_84 = arith.constant 0 : index
    %c0_85 = arith.constant 0 : index
    %151 = vector.load %arg10[%c4_83, %c0_84, %c0_85] : memref<5x64x64xbf16, #tpu.memory_space<vmem>>, vector<1x64x64xbf16>
    %152 = vector.shape_cast %151 : vector<1x64x64xbf16> to vector<64x64xbf16>
    %153 = vector.extract_strided_slice %129 {offsets = [0, 4], sizes = [64, 132], strides = [1, 1]} : vector<64x136xbf16> to vector<64x132xbf16>
    %cst_86 = arith.constant dense<0.000000e+00> : vector<64x132xf32>
    %154 = tpu.matmul %152, %153, %cst_86 {dimension_numbers = #tpu.dot_dimension_numbers<[1], [0], [0], [1], [0, 0, 1, 1], [], []>} : vector<64x64xbf16>, vector<64x132xbf16>, vector<64x132xf32> -> vector<64x132xf32>
    %155 = arith.addf %150, %154 : vector<64x132xf32>
    %c0_87 = arith.constant 0 : index
    %c0_88 = arith.constant 0 : index
    %156 = vector.load %arg11[%c0_87, %c0_88] : memref<64x1xf32, #tpu.memory_space<vmem>>, vector<64x1xf32>
    %157 = vector.broadcast %156 : vector<64x1xf32> to vector<64x132xf32>
    %158 = arith.addf %155, %157 : vector<64x132xf32>
    %159 = math.tanh %158 : vector<64x132xf32>
    %160 = arith.truncf %159 : vector<64x132xf32> to vector<64x132xbf16>
    %c128_i32_89 = arith.constant 128 : i32
    %161 = arith.muli %arg1, %c128_i32_89 : i32
    %c-2_i32 = arith.constant -2 : i32
    %162 = arith.addi %161, %c-2_i32 : i32
    %c0_i32_90 = arith.constant 0 : i32
    %163 = arith.subi %c0_i32_90, %162 : i32
    %c128_i32_91 = arith.constant 128 : i32
    %164 = arith.muli %arg1, %c128_i32_91 : i32
    %c-2_i32_92 = arith.constant -2 : i32
    %165 = arith.addi %164, %c-2_i32_92 : i32
    %c300_i32_93 = arith.constant 300 : i32
    %166 = arith.subi %c300_i32_93, %165 : i32
    %167 = vector.extract_strided_slice %6 {offsets = [0, 0], sizes = [1, 132], strides = [1, 1]} : vector<1x148xi32> to vector<1x132xi32>
    %168 = vector.broadcast %163 : i32 to vector<1x132xi32>
    %169 = arith.cmpi sge, %167, %168 : vector<1x132xi32>
    %170 = vector.broadcast %166 : i32 to vector<1x132xi32>
    %171 = arith.cmpi slt, %167, %170 : vector<1x132xi32>
    %172 = arith.andi %169, %171 : vector<1x132xi1>
    %cst_94 = arith.constant 0.000000e+00 : bf16
    %173 = vector.broadcast %cst_94 : bf16 to vector<64x132xbf16>
    %174 = vector.shape_cast %172 : vector<1x132xi1> to vector<1x132xi1>
    %175 = vector.broadcast %174 : vector<1x132xi1> to vector<64x132xi1>
    %176 = arith.select %175, %160, %173 : vector<64x132xi1>, vector<64x132xbf16>
    %cst_95 = arith.constant 0.000000e+00 : f32
    %177 = vector.broadcast %cst_95 : f32 to vector<16x128xf32>
    %c0_96 = arith.constant 0 : index
    %c0_97 = arith.constant 0 : index
    %c0_98 = arith.constant 0 : index
    %178 = vector.load %arg12[%c0_96, %c0_97, %c0_98] : memref<5x16x64xbf16, #tpu.memory_space<vmem>>, vector<1x16x64xbf16>
    %179 = vector.shape_cast %178 : vector<1x16x64xbf16> to vector<16x64xbf16>
    %180 = vector.extract_strided_slice %176 {offsets = [0, 0], sizes = [64, 128], strides = [1, 1]} : vector<64x132xbf16> to vector<64x128xbf16>
    %cst_99 = arith.constant dense<0.000000e+00> : vector<16x128xf32>
    %181 = tpu.matmul %179, %180, %cst_99 {dimension_numbers = #tpu.dot_dimension_numbers<[1], [0], [0], [1], [0, 0, 1, 1], [], []>} : vector<16x64xbf16>, vector<64x128xbf16>, vector<16x128xf32> -> vector<16x128xf32>
    %182 = arith.addf %177, %181 : vector<16x128xf32>
    %c1_100 = arith.constant 1 : index
    %c0_101 = arith.constant 0 : index
    %c0_102 = arith.constant 0 : index
    %183 = vector.load %arg12[%c1_100, %c0_101, %c0_102] : memref<5x16x64xbf16, #tpu.memory_space<vmem>>, vector<1x16x64xbf16>
    %184 = vector.shape_cast %183 : vector<1x16x64xbf16> to vector<16x64xbf16>
    %185 = vector.extract_strided_slice %176 {offsets = [0, 1], sizes = [64, 128], strides = [1, 1]} : vector<64x132xbf16> to vector<64x128xbf16>
    %cst_103 = arith.constant dense<0.000000e+00> : vector<16x128xf32>
    %186 = tpu.matmul %184, %185, %cst_103 {dimension_numbers = #tpu.dot_dimension_numbers<[1], [0], [0], [1], [0, 0, 1, 1], [], []>} : vector<16x64xbf16>, vector<64x128xbf16>, vector<16x128xf32> -> vector<16x128xf32>
    %187 = arith.addf %182, %186 : vector<16x128xf32>
    %c2_104 = arith.constant 2 : index
    %c0_105 = arith.constant 0 : index
    %c0_106 = arith.constant 0 : index
    %188 = vector.load %arg12[%c2_104, %c0_105, %c0_106] : memref<5x16x64xbf16, #tpu.memory_space<vmem>>, vector<1x16x64xbf16>
    %189 = vector.shape_cast %188 : vector<1x16x64xbf16> to vector<16x64xbf16>
    %190 = vector.extract_strided_slice %176 {offsets = [0, 2], sizes = [64, 128], strides = [1, 1]} : vector<64x132xbf16> to vector<64x128xbf16>
    %cst_107 = arith.constant dense<0.000000e+00> : vector<16x128xf32>
    %191 = tpu.matmul %189, %190, %cst_107 {dimension_numbers = #tpu.dot_dimension_numbers<[1], [0], [0], [1], [0, 0, 1, 1], [], []>} : vector<16x64xbf16>, vector<64x128xbf16>, vector<16x128xf32> -> vector<16x128xf32>
    %192 = arith.addf %187, %191 : vector<16x128xf32>
    %c3_108 = arith.constant 3 : index
    %c0_109 = arith.constant 0 : index
    %c0_110 = arith.constant 0 : index
    %193 = vector.load %arg12[%c3_108, %c0_109, %c0_110] : memref<5x16x64xbf16, #tpu.memory_space<vmem>>, vector<1x16x64xbf16>
    %194 = vector.shape_cast %193 : vector<1x16x64xbf16> to vector<16x64xbf16>
    %195 = vector.extract_strided_slice %176 {offsets = [0, 3], sizes = [64, 128], strides = [1, 1]} : vector<64x132xbf16> to vector<64x128xbf16>
    %cst_111 = arith.constant dense<0.000000e+00> : vector<16x128xf32>
    %196 = tpu.matmul %194, %195, %cst_111 {dimension_numbers = #tpu.dot_dimension_numbers<[1], [0], [0], [1], [0, 0, 1, 1], [], []>} : vector<16x64xbf16>, vector<64x128xbf16>, vector<16x128xf32> -> vector<16x128xf32>
    %197 = arith.addf %192, %196 : vector<16x128xf32>
    %c4_112 = arith.constant 4 : index
    %c0_113 = arith.constant 0 : index
    %c0_114 = arith.constant 0 : index
    %198 = vector.load %arg12[%c4_112, %c0_113, %c0_114] : memref<5x16x64xbf16, #tpu.memory_space<vmem>>, vector<1x16x64xbf16>
    %199 = vector.shape_cast %198 : vector<1x16x64xbf16> to vector<16x64xbf16>
    %200 = vector.extract_strided_slice %176 {offsets = [0, 4], sizes = [64, 128], strides = [1, 1]} : vector<64x132xbf16> to vector<64x128xbf16>
    %cst_115 = arith.constant dense<0.000000e+00> : vector<16x128xf32>
    %201 = tpu.matmul %199, %200, %cst_115 {dimension_numbers = #tpu.dot_dimension_numbers<[1], [0], [0], [1], [0, 0, 1, 1], [], []>} : vector<16x64xbf16>, vector<64x128xbf16>, vector<16x128xf32> -> vector<16x128xf32>
    %202 = arith.addf %197, %201 : vector<16x128xf32>
    %c0_116 = arith.constant 0 : index
    %c0_117 = arith.constant 0 : index
    %203 = vector.load %arg13[%c0_116, %c0_117] : memref<16x1xf32, #tpu.memory_space<vmem>>, vector<16x1xf32>
    %204 = vector.broadcast %203 : vector<16x1xf32> to vector<16x128xf32>
    %205 = arith.addf %202, %204 : vector<16x128xf32>
    %c0_118 = arith.constant 0 : index
    %c0_119 = arith.constant 0 : index
    %c0_120 = arith.constant 0 : index
    %206 = vector.load %arg14[%c0_118, %c0_119, %c0_120] : memref<1x16x128xf32, #tpu.memory_space<vmem>>, vector<1x16x128xf32>
    %207 = vector.shape_cast %206 : vector<1x16x128xf32> to vector<16x128xf32>
    %208 = vector.shape_cast %205 : vector<16x128xf32> to vector<1x16x128xf32>
    tpu.vector_store %arg14[%c0_118, %c0_119, %c0_120], %208 {strides = array<i32>} : memref<1x16x128xf32, #tpu.memory_space<vmem>>, vector<1x16x128xf32>,
    return
  }
  func.func @transform_0(%arg0: i32, %arg1: i32) -> (i32, i32, i32) {
    %c0_i32 = arith.constant 0 : i32
    %c0_i32_0 = arith.constant 0 : i32
    return %arg0, %c0_i32, %arg1 : i32, i32, i32
  }
  func.func @transform_1(%arg0: i32, %arg1: i32) -> (i32, i32, i32) {
    %c1_i32 = arith.constant 1 : i32
    %0 = arith.addi %arg1, %c1_i32 : i32
    %c1_i32_0 = arith.constant 1 : i32
    %1 = arith.muli %0, %c1_i32_0 : i32
    %c0_i32 = arith.constant 0 : i32
    %c0_i32_1 = arith.constant 0 : i32
    return %arg0, %c0_i32, %1 : i32, i32, i32
  }
  func.func @transform_2(%arg0: i32, %arg1: i32) -> (i32, i32) {
    %c0_i32 = arith.constant 0 : i32
    %c0_i32_0 = arith.constant 0 : i32
    %c0_i32_1 = arith.constant 0 : i32
    return %c0_i32, %c0_i32_0 : i32, i32
  }
  func.func @transform_3(%arg0: i32, %arg1: i32) -> (i32, i32) {
    %c0_i32 = arith.constant 0 : i32
    %c0_i32_0 = arith.constant 0 : i32
    %c0_i32_1 = arith.constant 0 : i32
    return %c0_i32, %c0_i32_0 : i32, i32
  }
  func.func @transform_4(%arg0: i32, %arg1: i32) -> (i32, i32, i32) {
    %c0_i32 = arith.constant 0 : i32
    %c0_i32_0 = arith.constant 0 : i32
    %c0_i32_1 = arith.constant 0 : i32
    %c0_i32_2 = arith.constant 0 : i32
    return %c0_i32, %c0_i32_0, %c0_i32_1 : i32, i32, i32
  }
  func.func @transform_5(%arg0: i32, %arg1: i32) -> (i32, i32) {
    %c0_i32 = arith.constant 0 : i32
    %c0_i32_0 = arith.constant 0 : i32
    %c0_i32_1 = arith.constant 0 : i32
    return %c0_i32, %c0_i32_0 : i32, i32
  }
  func.func @transform_6(%arg0: i32, %arg1: i32) -> (i32, i32, i32) {
    %c0_i32 = arith.constant 0 : i32
    %c0_i32_0 = arith.constant 0 : i32
    %c0_i32_1 = arith.constant 0 : i32
    %c0_i32_2 = arith.constant 0 : i32
    return %c0_i32, %c0_i32_0, %c0_i32_1 : i32, i32, i32
  }
  func.func @transform_7(%arg0: i32, %arg1: i32) -> (i32, i32) {
    %c0_i32 = arith.constant 0 : i32
    %c0_i32_0 = arith.constant 0 : i32
    %c0_i32_1 = arith.constant 0 : i32
    return %c0_i32, %c0_i32_0 : i32, i32
  }
  func.func @transform_8(%arg0: i32, %arg1: i32) -> (i32, i32, i32) {
    %c0_i32 = arith.constant 0 : i32
    %c0_i32_0 = arith.constant 0 : i32
    %c0_i32_1 = arith.constant 0 : i32
    %c0_i32_2 = arith.constant 0 : i32
    return %c0_i32, %c0_i32_0, %c0_i32_1 : i32, i32, i32
  }
  func.func @transform_9(%arg0: i32, %arg1: i32) -> (i32, i32) {
    %c0_i32 = arith.constant 0 : i32
    %c0_i32_0 = arith.constant 0 : i32
    %c0_i32_1 = arith.constant 0 : i32
    return %c0_i32, %c0_i32_0 : i32, i32
  }
  func.func @transform_10(%arg0: i32, %arg1: i32) -> (i32, i32, i32) {
    %c0_i32 = arith.constant 0 : i32
    %c0_i32_0 = arith.constant 0 : i32
    %c0_i32_1 = arith.constant 0 : i32
    %c0_i32_2 = arith.constant 0 : i32
    return %c0_i32, %c0_i32_0, %c0_i32_1 : i32, i32, i32
  }
  func.func @transform_11(%arg0: i32, %arg1: i32) -> (i32, i32) {
    %c0_i32 = arith.constant 0 : i32
    %c0_i32_0 = arith.constant 0 : i32
    %c0_i32_1 = arith.constant 0 : i32
    return %c0_i32, %c0_i32_0 : i32, i32
  }
  func.func @transform_12(%arg0: i32, %arg1: i32) -> (i32, i32, i32) {
    %c0_i32 = arith.constant 0 : i32
    %c0_i32_0 = arith.constant 0 : i32
    return %arg0, %c0_i32, %arg1 : i32, i32, i32
  }
}

</mosaic_0001>

<llo_original>
// kernel: tpu_custom_call.1
$region0: #{tpu_custom_call.1}
  #allocation0 [shape = 'u32[]', space=smem, size = 0x4, offset = 0x4, fixed_abs, tag = 'smem constant byte address 0x4 - core index']
  #allocation1 [shape = 'u32[144,128]{1,0:T(1,128)}', space=vmem, size = 0x12000, scoped, tag = 'internal scratch']
  %s0 = inlined_call_operand.vmem [shape: bf16[2,16,512], index: 0, kind: input, shape index: {}]
  %s1 = inlined_call_operand.hbm [shape: bf16[2,16,512], index: 1, kind: input, shape index: {}]
  %s2 = inlined_call_operand.hbm [shape: bf16[64,80], index: 2, kind: input, shape index: {}]
  %s3 = inlined_call_operand.vmem [shape: f32[64,1], index: 3, kind: input, shape index: {}]
  %s4 = inlined_call_operand.vmem [shape: bf16[5,64,64], index: 4, kind: input, shape index: {}]
  %s5 = inlined_call_operand.vmem [shape: f32[64,1], index: 5, kind: input, shape index: {}]
  %s6 = inlined_call_operand.hbm [shape: bf16[5,64,64], index: 6, kind: input, shape index: {}]
  %s7 = inlined_call_operand.vmem [shape: f32[64,1], index: 7, kind: input, shape index: {}]
  %s8 = inlined_call_operand.hbm [shape: bf16[5,64,64], index: 8, kind: input, shape index: {}]
  %s9 = inlined_call_operand.vmem [shape: f32[64,1], index: 9, kind: input, shape index: {}]
  %s10 = inlined_call_operand.vmem [shape: bf16[5,16,64], index: 10, kind: input, shape index: {}]
  %s11 = inlined_call_operand.vmem [shape: f32[16,1], index: 11, kind: input, shape index: {}]
  %s12 = inlined_call_operand.hbm [shape: f32[2,16,300], index: 12, kind: output, shape index: {}]
  %s13 = sld [smem:[#allocation0]]
  $region138: #{tpu_custom_call.1} parent=0
    _
  %s15 = ssub.s32 1, %s13
  %s16 = scalar_select 0, %s15, %s13
  $region1: #{tpu_custom_call.1} parent=0
    #allocation2 [shape = 'u8[8192]{0}', space=vmem, size = 0x2000, scoped, tag = 'input window, operand 0']
    #allocation3 [shape = 'u8[8192]{0}', space=vmem, size = 0x2000, scoped, tag = 'input window, operand 1']
    #allocation4 [shape = 's32[2]{0}', space=sflag, size = 0x8, scoped, tag = 'scoped memory for tpu_custom_call.1']
    #allocation5 [shape = 's32[2]{0}', space=sflag, size = 0x8, scoped, tag = 'scoped memory for tpu_custom_call.1']
    #allocation6 [shape = 'u8[16384]{0}', space=vmem, size = 0x4000, scoped, tag = 'input window, operand 2, single buffered']
    #allocation7 [shape = 's32[1]{0}', space=sflag, size = 0x4, scoped, tag = 'scoped memory for tpu_custom_call.1']
    #allocation8 [shape = 'u8[81920]{0}', space=vmem, size = 0x14000, scoped, tag = 'input window, operand 6, single buffered']
    #allocation9 [shape = 'u8[81920]{0}', space=vmem, size = 0x14000, scoped, tag = 'input window, operand 8, single buffered']
    #allocation10 [shape = 's32[1]{0}', space=sflag, size = 0x4, scoped, tag = 'scoped memory for tpu_custom_call.1']
    #allocation11 [shape = 'u8[16384]{0}', space=vmem, size = 0x4000, scoped, tag = 'output window, operand 0']
    %17 = vsyncpa [#allocation4], 0
    %s18 = scalar_lea.sflag [#allocation4], 1
    %19 = vsyncpa %s18, 0
    %20 = vsyncpa [#allocation7], 0
    %21 = vsyncpa [#allocation10], 0
    %22 = vsyncpa [#allocation5], 0
    %s23 = scalar_lea.sflag [#allocation5], 1
    %24 = vsyncpa %s23, 0
    loop: start=0, step=1, limit=8
    $region2: #{tpu_custom_call.1} parent=1 // loop_pre_header
      _
    $region3: #{tpu_custom_call.1} parent=1 // loop_header
      %s26 = sphi 0, %s30
      %p27 = scmp.ge.s32.totalorder %s26, 8
      %s33 = sphi 0, %s45
      %s34 = sphi 0, %s41
      %s35 = sphi 0, %s33
      %s36 = sphi 0, %s34
      %s37 = sphi 0, %s35
      %s38 = sphi 0, %s36
      %s50 = sphi 0, %s52
      %s53 = sphi 0, %s50
      %s54 = sphi 0, %s53
      %s70 = sphi 0, %s54
      %s80 = sphi 0, %s82
      %s83 = sphi 0, %s80
      %s84 = sphi 0, %s83
      %s100 = sphi 0, %s84
      %s104 = sphi 0, %s104
      %s106 = sphi 0, %s104
      %s107 = sphi 0, %s106
      %s121 = sphi 0, %s107
      %s125 = sphi 0, %s125
      %s127 = sphi 0, %s125
      %s128 = sphi 0, %s127
      %s142 = sphi 0, %s128
      %s146 = sphi 0, %s146
      %s148 = sphi 0, %s146
      %s149 = sphi 0, %s148
      %s163 = sphi 0, %s149
      %s167 = sphi 0, %s167
      %s169 = sphi 0, %s167
      %s170 = sphi 0, %s169
      %s184 = sphi 0, %s170
      %s188 = sphi 0, %s188
      %s190 = sphi 0, %s188
      %s191 = sphi 0, %s190
      %s205 = sphi 0, %s191
      %s209 = sphi 0, %s209
      %s211 = sphi 0, %s209
      %s212 = sphi 0, %s211
      %s226 = sphi 0, %s212
      %s230 = sphi 0, %s230
      %s232 = sphi 0, %s230
      %s233 = sphi 0, %s232
      %s247 = sphi 0, %s233
      %s251 = sphi 0, %s251
      %s253 = sphi 0, %s251
      %s254 = sphi 0, %s253
      %s268 = sphi 0, %s254
      %s272 = sphi 0, %s272
      %s274 = sphi 0, %s272
      %s275 = sphi 0, %s274
      %s289 = sphi 0, %s275
      %s293 = sphi 0, %s293
      %s295 = sphi 0, %s293
      %s296 = sphi 0, %s295
      %s310 = sphi 0, %s296
      %s318 = sphi 0, %s320
      %s321 = sphi 0, %s318
      %s322 = sphi 0, %s321
      %s338 = sphi 0, %s322
    $region4: #{tpu_custom_call.1} parent=1 // loop_header_branch
      %29 = sbr.rel (%p27) target = $region8
    $region5: #{tpu_custom_call.1} parent=1 // loop_body
      %s31 = ssub.s32 %s26, 1
      %s32 = ssub.s32 %s26, 2
      %s39 = sadd.s32 1, %s34
      %p40 = scmp.ge.s32.totalorder %s39, 3
      %s41 = scalar_select %p40, 0, %s39
      %s42 = sadd.s32 1, %s33
      %s43 = scalar_select %p40, %s42, %s33
      %p44 = scmp.ge.s32.totalorder %s43, 2
      %s45 = scalar_select %p44, 0, %s43
      %s46 = ssub.s32 %s33, %s45
      %s47 = ssub.s32 %s34, %s41
      %s48 = sor.u32 %s46, %s47
      %p49 = scmp.eq.s32.totalorder %s48, 0
      %s51 = sadd.s32 %s50, 1
      %s52 = scalar_select %p49, %s50, %s51
      %p55 = pneg %p49
      %p56 = scmp.eq.s32.totalorder %s26, 5
      %p57 = por %p55, %p56
      %p58 = scmp.ne.s32.totalorder %s50, %s53
      %p59 = scmp.eq.s32.totalorder %s26, 0
      %p60 = por %p58, %p59
      %p61 = scmp.ne.s32.totalorder %s50, %s53
      %p62 = scmp.eq.s32.totalorder %s31, 5
      %p63 = por %p61, %p62
      %p64 = scmp.ne.s32.totalorder %s53, %s54
      %p65 = scmp.eq.s32.totalorder %s31, 0
      %p66 = por %p64, %p65
      %p67 = scmp.ne.s32.totalorder %s53, %s54
      %p68 = scmp.eq.s32.totalorder %s32, 5
      %p69 = por %p67, %p68
      %p71 = scmp.ne.s32.totalorder %s54, %s70
      %p72 = scmp.eq.s32.totalorder %s32, 0
      %p73 = por %p71, %p72
      %s74 = sadd.s32 %s34, 1
      %s75 = sadd.s32 %s41, 1
      %s76 = ssub.s32 %s33, %s45
      %s77 = ssub.s32 %s74, %s75
      %s78 = sor.u32 %s76, %s77
      %p79 = scmp.eq.s32.totalorder %s78, 0
      %s81 = sadd.s32 %s80, 1
      %s82 = scalar_select %p79, %s80, %s81
      %p85 = pneg %p79
      %p86 = scmp.eq.s32.totalorder %s26, 5
      %p87 = por %p85, %p86
      %p88 = scmp.ne.s32.totalorder %s80, %s83
      %p89 = scmp.eq.s32.totalorder %s26, 0
      %p90 = por %p88, %p89
      %p91 = scmp.ne.s32.totalorder %s80, %s83
      %p92 = scmp.eq.s32.totalorder %s31, 5
      %p93 = por %p91, %p92
      %p94 = scmp.ne.s32.totalorder %s83, %s84
      %p95 = scmp.eq.s32.totalorder %s31, 0
      %p96 = por %p94, %p95
      %p97 = scmp.ne.s32.totalorder %s83, %s84
      %p98 = scmp.eq.s32.totalorder %s32, 5
      %p99 = por %p97, %p98
      %p101 = scmp.ne.s32.totalorder %s84, %s100
      %p102 = scmp.eq.s32.totalorder %s32, 0
      %p103 = por %p101, %p102
      %s105 = sadd.s32 %s104, 1
      %p108 = scmp.eq.s32.totalorder %s26, 5
      %p109 = scmp.ne.s32.totalorder %s104, %s106
      %p110 = scmp.eq.s32.totalorder %s26, 0
      %p111 = por %p109, %p110
      %p112 = scmp.ne.s32.totalorder %s104, %s106
      %p113 = scmp.eq.s32.totalorder %s31, 5
      %p114 = por %p112, %p113
      %p115 = scmp.ne.s32.totalorder %s106, %s107
      %p116 = scmp.eq.s32.totalorder %s31, 0
      %p117 = por %p115, %p116
      %p118 = scmp.ne.s32.totalorder %s106, %s107
      %p119 = scmp.eq.s32.totalorder %s32, 5
      %p120 = por %p118, %p119
      %p122 = scmp.ne.s32.totalorder %s107, %s121
      %p123 = scmp.eq.s32.totalorder %s32, 0
      %p124 = por %p122, %p123
      %s126 = sadd.s32 %s125, 1
      %p129 = scmp.eq.s32.totalorder %s26, 5
      %p130 = scmp.ne.s32.totalorder %s125, %s127
      %p131 = scmp.eq.s32.totalorder %s26, 0
      %p132 = por %p130, %p131
      %p133 = scmp.ne.s32.totalorder %s125, %s127
      %p134 = scmp.eq.s32.totalorder %s31, 5
      %p135 = por %p133, %p134
      %p136 = scmp.ne.s32.totalorder %s127, %s128
      %p137 = scmp.eq.s32.totalorder %s31, 0
      %p138 = por %p136, %p137
      %p139 = scmp.ne.s32.totalorder %s127, %s128
      %p140 = scmp.eq.s32.totalorder %s32, 5
      %p141 = por %p139, %p140
      %p143 = scmp.ne.s32.totalorder %s128, %s142
      %p144 = scmp.eq.s32.totalorder %s32, 0
      %p145 = por %p143, %p144
      %s147 = sadd.s32 %s146, 1
      %p150 = scmp.eq.s32.totalorder %s26, 5
      %p151 = scmp.ne.s32.totalorder %s146, %s148
      %p152 = scmp.eq.s32.totalorder %s26, 0
      %p153 = por %p151, %p152
      %p154 = scmp.ne.s32.totalorder %s146, %s148
      %p155 = scmp.eq.s32.totalorder %s31, 5
      %p156 = por %p154, %p155
      %p157 = scmp.ne.s32.totalorder %s148, %s149
      %p158 = scmp.eq.s32.totalorder %s31, 0
      %p159 = por %p157, %p158
      %p160 = scmp.ne.s32.totalorder %s148, %s149
      %p161 = scmp.eq.s32.totalorder %s32, 5
      %p162 = por %p160, %p161
      %p164 = scmp.ne.s32.totalorder %s149, %s163
      %p165 = scmp.eq.s32.totalorder %s32, 0
      %p166 = por %p164, %p165
      %s168 = sadd.s32 %s167, 1
      %p171 = scmp.eq.s32.totalorder %s26, 5
      %p172 = scmp.ne.s32.totalorder %s167, %s169
      %p173 = scmp.eq.s32.totalorder %s26, 0
      %p174 = por %p172, %p173
      %p175 = scmp.ne.s32.totalorder %s167, %s169
      %p176 = scmp.eq.s32.totalorder %s31, 5
      %p177 = por %p175, %p176
      %p178 = scmp.ne.s32.totalorder %s169, %s170
      %p179 = scmp.eq.s32.totalorder %s31, 0
      %p180 = por %p178, %p179
      %p181 = scmp.ne.s32.totalorder %s169, %s170
      %p182 = scmp.eq.s32.totalorder %s32, 5
      %p183 = por %p181, %p182
      %p185 = scmp.ne.s32.totalorder %s170, %s184
      %p186 = scmp.eq.s32.totalorder %s32, 0
      %p187 = por %p185, %p186
      %s189 = sadd.s32 %s188, 1
      %p192 = scmp.eq.s32.totalorder %s26, 5
      %p193 = scmp.ne.s32.totalorder %s188, %s190
      %p194 = scmp.eq.s32.totalorder %s26, 0
      %p195 = por %p193, %p194
      %p196 = scmp.ne.s32.totalorder %s188, %s190
      %p197 = scmp.eq.s32.totalorder %s31, 5
      %p198 = por %p196, %p197
      %p199 = scmp.ne.s32.totalorder %s190, %s191
      %p200 = scmp.eq.s32.totalorder %s31, 0
      %p201 = por %p199, %p200
      %p202 = scmp.ne.s32.totalorder %s190, %s191
      %p203 = scmp.eq.s32.totalorder %s32, 5
      %p204 = por %p202, %p203
      %p206 = scmp.ne.s32.totalorder %s191, %s205
      %p207 = scmp.eq.s32.totalorder %s32, 0
      %p208 = por %p206, %p207
      %s210 = sadd.s32 %s209, 1
      %p213 = scmp.eq.s32.totalorder %s26, 5
      %p214 = scmp.ne.s32.totalorder %s209, %s211
      %p215 = scmp.eq.s32.totalorder %s26, 0
      %p216 = por %p214, %p215
      %p217 = scmp.ne.s32.totalorder %s209, %s211
      %p218 = scmp.eq.s32.totalorder %s31, 5
      %p219 = por %p217, %p218
      %p220 = scmp.ne.s32.totalorder %s211, %s212
      %p221 = scmp.eq.s32.totalorder %s31, 0
      %p222 = por %p220, %p221
      %p223 = scmp.ne.s32.totalorder %s211, %s212
      %p224 = scmp.eq.s32.totalorder %s32, 5
      %p225 = por %p223, %p224
      %p227 = scmp.ne.s32.totalorder %s212, %s226
      %p228 = scmp.eq.s32.totalorder %s32, 0
      %p229 = por %p227, %p228
      %s231 = sadd.s32 %s230, 1
      %p234 = scmp.eq.s32.totalorder %s26, 5
      %p235 = scmp.ne.s32.totalorder %s230, %s232
      %p236 = scmp.eq.s32.totalorder %s26, 0
      %p237 = por %p235, %p236
      %p238 = scmp.ne.s32.totalorder %s230, %s232
      %p239 = scmp.eq.s32.totalorder %s31, 5
      %p240 = por %p238, %p239
      %p241 = scmp.ne.s32.totalorder %s232, %s233
      %p242 = scmp.eq.s32.totalorder %s31, 0
      %p243 = por %p241, %p242
      %p244 = scmp.ne.s32.totalorder %s232, %s233
      %p245 = scmp.eq.s32.totalorder %s32, 5
      %p246 = por %p244, %p245
      %p248 = scmp.ne.s32.totalorder %s233, %s247
      %p249 = scmp.eq.s32.totalorder %s32, 0
      %p250 = por %p248, %p249
      %s252 = sadd.s32 %s251, 1
      %p255 = scmp.eq.s32.totalorder %s26, 5
      %p256 = scmp.ne.s32.totalorder %s251, %s253
      %p257 = scmp.eq.s32.totalorder %s26, 0
      %p258 = por %p256, %p257
      %p259 = scmp.ne.s32.totalorder %s251, %s253
      %p260 = scmp.eq.s32.totalorder %s31, 5
      %p261 = por %p259, %p260
      %p262 = scmp.ne.s32.totalorder %s253, %s254
      %p263 = scmp.eq.s32.totalorder %s31, 0
      %p264 = por %p262, %p263
      %p265 = scmp.ne.s32.totalorder %s253, %s254
      %p266 = scmp.eq.s32.totalorder %s32, 5
      %p267 = por %p265, %p266
      %p269 = scmp.ne.s32.totalorder %s254, %s268
      %p270 = scmp.eq.s32.totalorder %s32, 0
      %p271 = por %p269, %p270
      %s273 = sadd.s32 %s272, 1
      %p276 = scmp.eq.s32.totalorder %s26, 5
      %p277 = scmp.ne.s32.totalorder %s272, %s274
      %p278 = scmp.eq.s32.totalorder %s26, 0
      %p279 = por %p277, %p278
      %p280 = scmp.ne.s32.totalorder %s272, %s274
      %p281 = scmp.eq.s32.totalorder %s31, 5
      %p282 = por %p280, %p281
      %p283 = scmp.ne.s32.totalorder %s274, %s275
      %p284 = scmp.eq.s32.totalorder %s31, 0
      %p285 = por %p283, %p284
      %p286 = scmp.ne.s32.totalorder %s274, %s275
      %p287 = scmp.eq.s32.totalorder %s32, 5
      %p288 = por %p286, %p287
      %p290 = scmp.ne.s32.totalorder %s275, %s289
      %p291 = scmp.eq.s32.totalorder %s32, 0
      %p292 = por %p290, %p291
      %s294 = sadd.s32 %s293, 1
      %p297 = scmp.eq.s32.totalorder %s26, 5
      %p298 = scmp.ne.s32.totalorder %s293, %s295
      %p299 = scmp.eq.s32.totalorder %s26, 0
      %p300 = por %p298, %p299
      %p301 = scmp.ne.s32.totalorder %s293, %s295
      %p302 = scmp.eq.s32.totalorder %s31, 5
      %p303 = por %p301, %p302
      %p304 = scmp.ne.s32.totalorder %s295, %s296
      %p305 = scmp.eq.s32.totalorder %s31, 0
      %p306 = por %p304, %p305
      %p307 = scmp.ne.s32.totalorder %s295, %s296
      %p308 = scmp.eq.s32.totalorder %s32, 5
      %p309 = por %p307, %p308
      %p311 = scmp.ne.s32.totalorder %s296, %s310
      %p312 = scmp.eq.s32.totalorder %s32, 0
      %p313 = por %p311, %p312
      %s314 = ssub.s32 %s33, %s45
      %s315 = ssub.s32 %s34, %s41
      %s316 = sor.u32 %s314, %s315
      %p317 = scmp.eq.s32.totalorder %s316, 0
      %s319 = sadd.s32 %s318, 1
      %s320 = scalar_select %p317, %s318, %s319
      %p323 = pneg %p317
      %p324 = scmp.eq.s32.totalorder %s26, 5
      %p325 = por %p323, %p324
      %p326 = scmp.ne.s32.totalorder %s318, %s321
      %p327 = scmp.eq.s32.totalorder %s26, 0
      %p328 = por %p326, %p327
      %p329 = scmp.ne.s32.totalorder %s318, %s321
      %p330 = scmp.eq.s32.totalorder %s31, 5
      %p331 = por %p329, %p330
      %p332 = scmp.ne.s32.totalorder %s321, %s322
      %p333 = scmp.eq.s32.totalorder %s31, 0
      %p334 = por %p332, %p333
      %p335 = scmp.ne.s32.totalorder %s321, %s322
      %p336 = scmp.eq.s32.totalorder %s32, 5
      %p337 = por %p335, %p336
      %p339 = scmp.ne.s32.totalorder %s322, %s338
      %p340 = scmp.eq.s32.totalorder %s32, 0
      %p341 = por %p339, %p340
      %p342 = scmp.le.s32.totalorder 1, %s26
      %p343 = scmp.lt.s32.totalorder %s26, 7
      %p344 = pnand %p342, %p343
      %p345 = pneg %p344
      // Predicated region
      $region9: #{tpu_custom_call.1} parent=5 // pred_check
        _
      $region10: #{tpu_custom_call.1} parent=5 // pred_check_branch
        %347 = sbr.rel (%p344) target = $region12
      $region11: #{tpu_custom_call.1} parent=5 // pred_region
        %s348 = ssub.s32 %s26, 1
        // Predicated region
        $region13: #{tpu_custom_call.1} parent=11 // pred_check
          %p349 = pneg %p117
        $region14: #{tpu_custom_call.1} parent=11 // pred_check_branch
          %351 = sbr.rel (%p349) target = $region16
        $region15: #{tpu_custom_call.1} parent=11 // pred_region
          %s353 = ssub.s32 512, 512
          %354 = vsyncadd [#allocation7], %s353
          %s355 = sshll.u32 [#allocation6], 4
          %s356 = int_to_ptr.vmem [resolvable:$true] %s355
          %361 = dma.hbm_to_vmem [thread:$0]  %s2, 512, %s356, [#allocation7], 64, 64, 4
        $region16: #{tpu_custom_call.1} parent=11 // pred_fallthru
          _
        // Predicated region
        $region17: #{tpu_custom_call.1} parent=11 // pred_check
          %p362 = pneg %p138
        $region18: #{tpu_custom_call.1} parent=11 // pred_check_branch
          %364 = sbr.rel (%p362) target = $region20
        $region19: #{tpu_custom_call.1} parent=11 // pred_region
          _
        $region20: #{tpu_custom_call.1} parent=11 // pred_fallthru
          _
        // Predicated region
        $region21: #{tpu_custom_call.1} parent=11 // pred_check
          %p365 = pneg %p159
        $region22: #{tpu_custom_call.1} parent=11 // pred_check_branch
          %367 = sbr.rel (%p365) target = $region24
        $region23: #{tpu_custom_call.1} parent=11 // pred_region
          _
        $region24: #{tpu_custom_call.1} parent=11 // pred_fallthru
          _
        // Predicated region
        $region25: #{tpu_custom_call.1} parent=11 // pred_check
          %p368 = pneg %p180
        $region26: #{tpu_custom_call.1} parent=11 // pred_check_branch
          %370 = sbr.rel (%p368) target = $region28
        $region27: #{tpu_custom_call.1} parent=11 // pred_region
          _
        $region28: #{tpu_custom_call.1} parent=11 // pred_fallthru
          _
        // Predicated region
        $region29: #{tpu_custom_call.1} parent=11 // pred_check
          %p371 = pneg %p201
        $region30: #{tpu_custom_call.1} parent=11 // pred_check_branch
          %373 = sbr.rel (%p371) target = $region32
        $region31: #{tpu_custom_call.1} parent=11 // pred_region
          %s375 = ssub.s32 2560, 2560
          %376 = vsyncadd [#allocation7], %s375
          %s377 = sshll.u32 [#allocation8], 4
          %s378 = int_to_ptr.vmem [resolvable:$true] %s377
          %383 = dma.hbm_to_vmem [thread:$0]  %s6, 2560, %s378, [#allocation7], 64, 64, 4
        $region32: #{tpu_custom_call.1} parent=11 // pred_fallthru
          _
        // Predicated region
        $region33: #{tpu_custom_call.1} parent=11 // pred_check
          %p384 = pneg %p222
        $region34: #{tpu_custom_call.1} parent=11 // pred_check_branch
          %386 = sbr.rel (%p384) target = $region36
        $region35: #{tpu_custom_call.1} parent=11 // pred_region
          _
        $region36: #{tpu_custom_call.1} parent=11 // pred_fallthru
          _
        // Predicated region
        $region37: #{tpu_custom_call.1} parent=11 // pred_check
          %p387 = pneg %p243
        $region38: #{tpu_custom_call.1} parent=11 // pred_check_branch
          %389 = sbr.rel (%p387) target = $region40
        $region39: #{tpu_custom_call.1} parent=11 // pred_region
          %s391 = ssub.s32 2560, 2560
          %392 = vsyncadd [#allocation10], %s391
          %s393 = sshll.u32 [#allocation9], 4
          %s394 = int_to_ptr.vmem [resolvable:$true] %s393
          %399 = dma.hbm_to_vmem [thread:$0]  %s8, 2560, %s394, [#allocation10], 64, 64, 4
        $region40: #{tpu_custom_call.1} parent=11 // pred_fallthru
          _
        // Predicated region
        $region41: #{tpu_custom_call.1} parent=11 // pred_check
          %p400 = pneg %p264
        $region42: #{tpu_custom_call.1} parent=11 // pred_check_branch
          %402 = sbr.rel (%p400) target = $region44
        $region43: #{tpu_custom_call.1} parent=11 // pred_region
          _
        $region44: #{tpu_custom_call.1} parent=11 // pred_fallthru
          _
        // Predicated region
        $region45: #{tpu_custom_call.1} parent=11 // pred_check
          %p403 = pneg %p285
        $region46: #{tpu_custom_call.1} parent=11 // pred_check_branch
          %405 = sbr.rel (%p403) target = $region48
        $region47: #{tpu_custom_call.1} parent=11 // pred_region
          _
        $region48: #{tpu_custom_call.1} parent=11 // pred_fallthru
          _
        // Predicated region
        $region49: #{tpu_custom_call.1} parent=11 // pred_check
          %p406 = pneg %p306
        $region50: #{tpu_custom_call.1} parent=11 // pred_check_branch
          %408 = sbr.rel (%p406) target = $region52
        $region51: #{tpu_custom_call.1} parent=11 // pred_region
          _
        $region52: #{tpu_custom_call.1} parent=11 // pred_fallthru
          _
      $region12: #{tpu_custom_call.1} parent=5 // pred_fallthru
        _
      %p409 = scmp.lt.s32.totalorder %s26, 6
      // Predicated region
      $region53: #{tpu_custom_call.1} parent=5 // pred_check
        %p410 = pneg %p409
      $region54: #{tpu_custom_call.1} parent=5 // pred_check_branch
        %412 = sbr.rel (%p410) target = $region56
      $region55: #{tpu_custom_call.1} parent=5 // pred_region
        // Predicated region
        $region57: #{tpu_custom_call.1} parent=55 // pred_check
          %p413 = pneg %p60
        $region58: #{tpu_custom_call.1} parent=55 // pred_check_branch
          %415 = sbr.rel (%p413) target = $region60
        $region59: #{tpu_custom_call.1} parent=55 // pred_region
          %s416 = sand.u32 %s50, 1
          %s417 = sand.u32 %s50, 1
          %s418 = smul.addr %s417, 8
          %s419 = scalar_lea.vmem [#allocation2], %s418
          %s420 = smul.addr %s33, 8
          %s421 = sadd.s32 %s34, %s420
          %s422 = smul.addr %s421, 4
          %s423 = scalar_lea.vmem %s0, %s422
          // Predicated region
          $region61: #{tpu_custom_call.1} parent=59 // pred_check
            _
          $region62: #{tpu_custom_call.1} parent=59 // pred_check_branch
            %425 = sbr.rel (0) target = $region64
          $region63: #{tpu_custom_call.1} parent=59 // pred_region
            // Predicated region
            $region65: #{tpu_custom_call.1} parent=63 // pred_check
              _
            $region66: #{tpu_custom_call.1} parent=63 // pred_check_branch
              %427 = sbr.rel target = $region68
            $region67: #{tpu_custom_call.1} parent=63 // pred_region
              // Predicated region
              $region80: #{tpu_custom_call.1} parent=67 // pred_check
                _
              $region81: #{tpu_custom_call.1} parent=67 // pred_check_branch
                %445 = sbr.rel (0) target = $region83
              $region82: #{tpu_custom_call.1} parent=67 // pred_region
                loop: start=0, step=1, limit=1
                $region84: #{tpu_custom_call.1} parent=82 // loop_pre_header
                  _
                $region85: #{tpu_custom_call.1} parent=82 // loop_header
                  %s447 = sphi 0, %s451
                  %p448 = scmp.ge.s32.totalorder %s447, 1
                  %s452 = sphi %s423, %s423
                  %s453 = sphi %s419, %s419
                $region86: #{tpu_custom_call.1} parent=82 // loop_header_branch
                  %450 = sbr.rel (%p448) target = $region90
                $region87: #{tpu_custom_call.1} parent=82 // loop_body
                  _
                $region88: #{tpu_custom_call.1} parent=82 // loop_footer
                  %s451 = sadd.s32 1, %s447
                $region89: #{tpu_custom_call.1} parent=82 // loop_footer_branch
                  %446 = sbr.rel target = $region85
                $region90: #{tpu_custom_call.1} parent=82 // loop_exit
                  _
                %s455 = ssub.s32 16, 1
                loop: start=0, step=1, limit=1
                $region91: #{tpu_custom_call.1} parent=82 // loop_pre_header
                  _
                $region92: #{tpu_custom_call.1} parent=82 // loop_header
                  %s457 = sphi 0, %s461
                  %p458 = scmp.ge.s32.totalorder %s457, 1
                  %s462 = sphi %s423, %s423
                  %s463 = sphi %s419, %s419
                $region93: #{tpu_custom_call.1} parent=82 // loop_header_branch
                  %460 = sbr.rel (%p458) target = $region97
                $region94: #{tpu_custom_call.1} parent=82 // loop_body
                  %v464 = vld [vmem:[%s462] sm:%s455]
                  %465 = vst [vmem:[%s463] sm:%s455] %v464
                  %v466 = vld [vmem:[%s462 + $0x10] sm:%s455]
                  %467 = vst [vmem:[%s463 + $0x4] sm:%s455] %v466
                $region95: #{tpu_custom_call.1} parent=82 // loop_footer
                  %s461 = sadd.s32 1, %s457
                $region96: #{tpu_custom_call.1} parent=82 // loop_footer_branch
                  %456 = sbr.rel target = $region92
                $region97: #{tpu_custom_call.1} parent=82 // loop_exit
                  _
              $region83: #{tpu_custom_call.1} parent=67 // pred_fallthru
                _
            $region68: #{tpu_custom_call.1} parent=63 // pred_fallthru
              _
            // Predicated region
            $region69: #{tpu_custom_call.1} parent=63 // pred_check
              _
            $region70: #{tpu_custom_call.1} parent=63 // pred_check_branch
              %429 = sbr.rel (0) target = $region72
            $region71: #{tpu_custom_call.1} parent=63 // pred_region
              %s431 = ssub.s32 16, 1
              loop: start=0, step=1, limit=1
              $region73: #{tpu_custom_call.1} parent=71 // loop_pre_header
                _
              $region74: #{tpu_custom_call.1} parent=71 // loop_header
                %s433 = sphi 0, %s437
                %p434 = scmp.ge.s32.totalorder %s433, 1
                %s438 = sphi %s423, %s423
                %s439 = sphi %s419, %s419
              $region75: #{tpu_custom_call.1} parent=71 // loop_header_branch
                %436 = sbr.rel (%p434) target = $region79
              $region76: #{tpu_custom_call.1} parent=71 // loop_body
                %v440 = vld [vmem:[%s438] sm:%s431]
                %441 = vst [vmem:[%s439] sm:%s431] %v440
                %v442 = vld [vmem:[%s438 + $0x10] sm:%s431]
                %443 = vst [vmem:[%s439 + $0x4] sm:%s431] %v442
              $region77: #{tpu_custom_call.1} parent=71 // loop_footer
                %s437 = sadd.s32 1, %s433
              $region78: #{tpu_custom_call.1} parent=71 // loop_footer_branch
                %432 = sbr.rel target = $region74
              $region79: #{tpu_custom_call.1} parent=71 // loop_exit
                _
            $region72: #{tpu_custom_call.1} parent=63 // pred_fallthru
              _
          $region64: #{tpu_custom_call.1} parent=59 // pred_fallthru
            _
          %468 = vnop
        $region60: #{tpu_custom_call.1} parent=55 // pred_fallthru
          _
        // Predicated region
        $region98: #{tpu_custom_call.1} parent=55 // pred_check
          %p469 = pneg %p90
        $region99: #{tpu_custom_call.1} parent=55 // pred_check_branch
          %471 = sbr.rel (%p469) target = $region101
        $region100: #{tpu_custom_call.1} parent=55 // pred_region
          %s472 = sand.u32 %s80, 1
          %s473 = scalar_lea.sflag [#allocation4], %s472
          %s474 = sand.u32 %s80, 1
          %s475 = smul.addr %s474, 8
          %s476 = scalar_lea.vmem [#allocation3], %s475
          %s477 = sadd.s32 %s34, 1
          %s479 = ssub.s32 128, 128
          %480 = vsyncadd %s473, %s479
          %s481 = smul.addr %s33, 8
          %s482 = sadd.s32 %s477, %s481
          %s483 = smul.addr %s482, 64
          %s484 = scalar_lea.hbm %s1, %s483
          %s485 = sshll.u32 %s476, 4
          %s486 = int_to_ptr.vmem [resolvable:$true] %s485
          %491 = dma.hbm_to_vmem [thread:$0]  %s484, 128, %s486, %s473, 256, 64, 4
        $region101: #{tpu_custom_call.1} parent=55 // pred_fallthru
          _
      $region56: #{tpu_custom_call.1} parent=5 // pred_fallthru
        _
      %p492 = scmp.le.s32.totalorder 1, %s26
      %p493 = scmp.lt.s32.totalorder %s26, 7
      %p494 = pnand %p492, %p493
      %p495 = pneg %p494
      // Predicated region
      $region102: #{tpu_custom_call.1} parent=5 // pred_check
        _
      $region103: #{tpu_custom_call.1} parent=5 // pred_check_branch
        %497 = sbr.rel (%p494) target = $region105
      $region104: #{tpu_custom_call.1} parent=5 // pred_region
        %s498 = ssub.s32 %s26, 1
        %s499 = sand.u32 %s53, 1
        %s500 = sand.u32 %s53, 1
        %s501 = smul.addr %s500, 8
        %s502 = scalar_lea.vmem [#allocation2], %s501
        // Predicated region
        $region106: #{tpu_custom_call.1} parent=104 // pred_check
          %p503 = pneg %p66
        $region107: #{tpu_custom_call.1} parent=104 // pred_check_branch
          %505 = sbr.rel (%p503) target = $region109
        $region108: #{tpu_custom_call.1} parent=104 // pred_region
          _
        $region109: #{tpu_custom_call.1} parent=104 // pred_fallthru
          _
        %s506 = sand.u32 %s83, 1
        %s507 = scalar_lea.sflag [#allocation4], %s506
        %s508 = sand.u32 %s83, 1
        %s509 = smul.addr %s508, 8
        %s510 = scalar_lea.vmem [#allocation3], %s509
        // Predicated region
        $region110: #{tpu_custom_call.1} parent=104 // pred_check
          %p511 = pneg %p96
        $region111: #{tpu_custom_call.1} parent=104 // pred_check_branch
          %513 = sbr.rel (%p511) target = $region113
        $region112: #{tpu_custom_call.1} parent=104 // pred_region
          %514 = dma.done %s507, 128
        $region113: #{tpu_custom_call.1} parent=104 // pred_fallthru
          _
        // Predicated region
        $region114: #{tpu_custom_call.1} parent=104 // pred_check
          %p515 = pneg %p117
        $region115: #{tpu_custom_call.1} parent=104 // pred_check_branch
          %517 = sbr.rel (%p515) target = $region117
        $region116: #{tpu_custom_call.1} parent=104 // pred_region
          %518 = dma.done [#allocation7], 512
        $region117: #{tpu_custom_call.1} parent=104 // pred_fallthru
          _
        // Predicated region
        $region118: #{tpu_custom_call.1} parent=104 // pred_check
          %p519 = pneg %p201
        $region119: #{tpu_custom_call.1} parent=104 // pred_check_branch
          %521 = sbr.rel (%p519) target = $region121
        $region120: #{tpu_custom_call.1} parent=104 // pred_region
          %522 = dma.done [#allocation7], 2560
        $region121: #{tpu_custom_call.1} parent=104 // pred_fallthru
          _
        // Predicated region
        $region122: #{tpu_custom_call.1} parent=104 // pred_check
          %p523 = pneg %p243
        $region123: #{tpu_custom_call.1} parent=104 // pred_check_branch
          %525 = sbr.rel (%p523) target = $region125
        $region124: #{tpu_custom_call.1} parent=104 // pred_region
          %526 = dma.done [#allocation10], 2560
        $region125: #{tpu_custom_call.1} parent=104 // pred_fallthru
          _
        %s527 = sand.u32 %s53, 1
        %s528 = sand.u32 %s53, 1
        %s529 = smul.addr %s528, 8
        %s530 = scalar_lea.vmem [#allocation2], %s529
        %p531 = pneg %p66
        %p532 = pneg %p63
        %s533 = sand.u32 %s83, 1
        %s534 = scalar_lea.sflag [#allocation4], %s533
        %s535 = sand.u32 %s83, 1
        %s536 = smul.addr %s535, 8
        %s537 = scalar_lea.vmem [#allocation3], %s536
        %p538 = pneg %p96
        %p539 = pneg %p93
        %p540 = pneg %p117
        %p541 = pneg %p114
        %p542 = pneg %p138
        %p543 = pneg %p135
        %p544 = pneg %p159
        %p545 = pneg %p156
        %p546 = pneg %p180
        %p547 = pneg %p177
        %p548 = pneg %p201
        %p549 = pneg %p198
        %p550 = pneg %p222
        %p551 = pneg %p219
        %p552 = pneg %p243
        %p553 = pneg %p240
        %p554 = pneg %p264
        %p555 = pneg %p261
        %p556 = pneg %p285
        %p557 = pneg %p282
        %p558 = pneg %p306
        %p559 = pneg %p303
        %p560 = pneg %p334
        %p561 = pneg %p331
        %s562 = sand.u32 %s321, 1
        %s563 = scalar_lea.sflag [#allocation5], %s562
        %s564 = sand.u32 %s321, 1
        %s565 = smul.addr %s564, 16
        %s566 = scalar_lea.vmem [#allocation11], %s565
        %s567 = sadd.s32 %s36, 1
        %v571 = vld [vmem:[%s502] sm:$0xf]
        %v572 = vld [vmem:[%s502 + $0x4] sm:$0xf]
        %v573 = vld [vmem:[%s510] sm:$0xf]
        %v574 = vld [vmem:[%s510 + $0x4] sm:$0xf]
        %v577 = vunpack.c.l.b16 %v571
        %v578 = vunpack.c.l.b16 %v572
        %v579 = vpack.c.b16 %v578, %v577
        %v583 = vunpack.c.l.b16 %v573
        %v584 = vunpack.c.l.b16 %v574
        %v585 = vpack.c.b16 %v584, %v583
        %v587 = vlaneseq
        %v588 = vand.u32 %v587, 127
        %v589 = vadd.s32 %v588, 128
        %590 = vrot.lane.b32.xlu0 %v579, 127
        %v591 = vpop.permute.xlu0 %590
        %592 = vrot.lane.b32.xlu0 %v585, 127
        %v593 = vpop.permute.xlu0 %592
        %vm594 = vcmask 1039360
        %v595 = vsel %vm594, %v591, %v593
        %598 = vrot.lane.b32.xlu0 %v579, 126
        %v599 = vpop.permute.xlu0 %598
        %600 = vrot.lane.b32.xlu0 %v585, 126
        %v601 = vpop.permute.xlu0 %600
        %vm602 = vcmask 1031168
        %v603 = vsel %vm602, %v599, %v601
        %606 = vrot.lane.b32.xlu0 %v579, 125
        %v607 = vpop.permute.xlu0 %606
        %608 = vrot.lane.b32.xlu0 %v585, 125
        %v609 = vpop.permute.xlu0 %608
        %vm610 = vcmask 1022976
        %v611 = vsel %vm610, %v607, %v609
        %614 = vrot.lane.b32.xlu0 %v579, 124
        %v615 = vpop.permute.xlu0 %614
        %616 = vrot.lane.b32.xlu0 %v585, 124
        %v617 = vpop.permute.xlu0 %616
        %vm618 = vcmask 1014784
        %v619 = vsel %vm618, %v615, %v617
        %v622 = vld [vmem:[#allocation6] sm:$0xf]
        %v623 = vld [vmem:[#allocation6 + $0x4] sm:$0xf]
        %v624 = vld [vmem:[#allocation6 + $0x8] sm:$0xf]
        %v625 = vld [vmem:[#allocation6 + $0xc] sm:$0xf]
        %v626 = vld [vmem:[#allocation6 + $0x10] sm:$0xf]
        %v627 = vld [vmem:[#allocation6 + $0x14] sm:$0xf]
        %v628 = vld [vmem:[#allocation6 + $0x18] sm:$0xf]
        %v629 = vld [vmem:[#allocation6 + $0x1c] sm:$0xf]
        %v630 = vld [vmem:[%s3] sm:$0xff]
        %v631 = vld [vmem:[%s3 + $0x8] sm:$0xff]
        %v632 = vld [vmem:[%s3 + $0x10] sm:$0xff]
        %v633 = vld [vmem:[%s3 + $0x18] sm:$0xff]
        %v634 = vld [vmem:[%s3 + $0x20] sm:$0xff]
        %v635 = vld [vmem:[%s3 + $0x28] sm:$0xff]
        %v636 = vld [vmem:[%s3 + $0x30] sm:$0xff]
        %v637 = vld [vmem:[%s3 + $0x38] sm:$0xff]
        %639 = vset.pattern.permute.xlu0 0
        %640 = vperm.xlu0 %639, %v630
        %v641 = vpop.permute.xlu0 %640
        %644 = vset.pattern.permute.xlu0 0
        %645 = vperm.xlu0 %644, %v631
        %v646 = vpop.permute.xlu0 %645
        %649 = vset.pattern.permute.xlu0 0
        %650 = vperm.xlu0 %649, %v632
        %v651 = vpop.permute.xlu0 %650
        %654 = vset.pattern.permute.xlu0 0
        %655 = vperm.xlu0 %654, %v633
        %v656 = vpop.permute.xlu0 %655
        %659 = vset.pattern.permute.xlu0 0
        %660 = vperm.xlu0 %659, %v634
        %v661 = vpop.permute.xlu0 %660
        %664 = vset.pattern.permute.xlu0 0
        %665 = vperm.xlu0 %664, %v635
        %v666 = vpop.permute.xlu0 %665
        %669 = vset.pattern.permute.xlu0 0
        %670 = vperm.xlu0 %669, %v636
        %v671 = vpop.permute.xlu0 %670
        %674 = vset.pattern.permute.xlu0 0
        %675 = vperm.xlu0 %674, %v637
        %v676 = vpop.permute.xlu0 %675
        %v686 = vunpack.c.l.b16 %v622
        %v687 = vunpack.c.l.b16 %v623
        %v688 = vunpack.c.l.b16 %v624
        %v689 = vunpack.c.l.b16 %v625
        %v690 = vunpack.c.l.b16 %v626
        %v691 = vunpack.c.l.b16 %v627
        %v692 = vunpack.c.l.b16 %v628
        %v693 = vunpack.c.l.b16 %v629
        %v694 = vpack.c.b16 %v687, %v686
        %v695 = vpack.c.b16 %v689, %v688
        %v696 = vpack.c.b16 %v691, %v690
        %v697 = vpack.c.b16 %v693, %v692
        %vm698 = vcmask 654336
        %v700 = vsel %vm698, %v694, 0
        %v703 = vsel %vm698, %v695, 0
        %v706 = vsel %vm698, %v696, 0
        %v709 = vsel %vm698, %v697, 0
        %711 = vmatprep.subr.bf16.mxu0 0
        %712 = vmatpush1.bf16.msra.mxu0 0
        %713 = vmatprep.subr.bf16.mxu0 0
        %714 = vmatpush1.bf16.msra.mxu0 0
        %715 = vmatprep.subr.bf16.mxu0 0
        %716 = vmatpush1.bf16.msra.mxu0 0
        %717 = vmatprep.subr.bf16.mxu0 %v617
        %718 = vmatpush1.bf16.msra.mxu0 %v619
        %719 = vmatprep.subr.bf16.mxu0 %v609
        %720 = vmatpush1.bf16.msra.mxu0 %v611
        %721 = vmatprep.subr.bf16.mxu0 %v601
        %722 = vmatpush1.bf16.msra.mxu0 %v603
        %723 = vmatprep.subr.bf16.mxu0 %v593
        %724 = vmatpush1.bf16.msra.mxu0 %v595
        %725 = vmatprep.subr.bf16.mxu0 %v585
        %726 = vmatpush1.bf16.msra.mxu0 %v579
        %727 = vmatprep.subr.bf16.mxu0 0
        %728 = vmatpush2.bf16.msra.mxu0 0
        %729 = vmatprep.subr.bf16.mxu0 0
        %730 = vmatpush2.bf16.msra.mxu0 0
        %731 = vmatprep.subr.bf16.mxu0 0
        %732 = vmatpush2.bf16.msra.mxu0 0
        %733 = vmatprep.subr.bf16.mxu0 0
        %734 = vmatpush2.bf16.msra.mxu0 0
        %735 = vmatprep.subr.bf16.mxu0 0
        %736 = vmatpush2.bf16.msra.mxu0 0
        %737 = vmatprep.subr.bf16.mxu0 0
        %738 = vmatpush2.bf16.msra.mxu0 0
        %739 = vmatprep.subr.bf16.mxu0 0
        %740 = vmatpush2.bf16.msra.mxu0 0
        %741 = vmatprep.subr.bf16.mxu0 0
        %742 = vmatpush2.bf16.msra.mxu0 0
        %743 = vmatprep.mubr.bf16.mxu0 0
        %744 = vmatmul.mubr.bf16.gmra.mxu0 %v700
        %v745 = vpop.f32.mrf.mxu0
        %v746 = vadd.f32 %v641, %v745
        %v747 = vpop.f32.mrf.mxu0
        %v748 = vadd.f32 %v641, %v747
        %v749 = vpop.f32.mrf.mxu0
        %v750 = vadd.f32 %v646, %v749
        %v751 = vpop.f32.mrf.mxu0
        %v752 = vadd.f32 %v646, %v751
        %753 = vmatprep.mubr.bf16.mxu0 0
        %754 = vmatmul.mubr.bf16.gmra.mxu0 %v703
        %v755 = vpop.f32.mrf.mxu0
        %v756 = vadd.f32 %v651, %v755
        %v757 = vpop.f32.mrf.mxu0
        %v758 = vadd.f32 %v651, %v757
        %v759 = vpop.f32.mrf.mxu0
        %v760 = vadd.f32 %v656, %v759
        %v761 = vpop.f32.mrf.mxu0
        %v762 = vadd.f32 %v656, %v761
        %763 = vmatprep.mubr.bf16.mxu0 0
        %764 = vmatmul.mubr.bf16.gmra.mxu0 %v706
        %v765 = vpop.f32.mrf.mxu0
        %v766 = vadd.f32 %v661, %v765
        %v767 = vpop.f32.mrf.mxu0
        %v768 = vadd.f32 %v661, %v767
        %v769 = vpop.f32.mrf.mxu0
        %v770 = vadd.f32 %v666, %v769
        %v771 = vpop.f32.mrf.mxu0
        %v772 = vadd.f32 %v666, %v771
        %773 = vmatprep.mubr.bf16.mxu0 0
        %774 = vmatmul.mubr.bf16.gmra.mxu0 %v709
        %v775 = vpop.f32.mrf.mxu0
        %v776 = vadd.f32 %v671, %v775
        %v777 = vpop.f32.mrf.mxu0
        %v778 = vadd.f32 %v671, %v777
        %v779 = vpop.f32.mrf.mxu0
        %v780 = vadd.f32 %v676, %v779
        %v781 = vpop.f32.mrf.mxu0
        %v782 = vadd.f32 %v676, %v781
        %783 = vdwg.mxu0
        %v784 = vtanh.pop %v746
        %v785 = vtanh.pop %v748
        %v786 = vtanh.pop %v750
        %v787 = vtanh.pop %v752
        %v788 = vtanh.pop %v756
        %v789 = vtanh.pop %v758
        %v790 = vtanh.pop %v760
        %v791 = vtanh.pop %v762
        %v792 = vtanh.pop %v766
        %v793 = vtanh.pop %v768
        %v794 = vtanh.pop %v770
        %v795 = vtanh.pop %v772
        %v796 = vtanh.pop %v776
        %v797 = vtanh.pop %v778
        %v798 = vtanh.pop %v780
        %v799 = vtanh.pop %v782
        %v800 = vpack.c.bf16 %v786, %v784
        %v801 = vpack.c.bf16 %v787, %v785
        %v802 = vpack.c.bf16 %v790, %v788
        %v803 = vpack.c.bf16 %v791, %v789
        %v804 = vpack.c.bf16 %v794, %v792
        %v805 = vpack.c.bf16 %v795, %v793
        %v806 = vpack.c.bf16 %v798, %v796
        %v807 = vpack.c.bf16 %v799, %v797
        %s808 = smul.u32 %s36, 128
        %s809 = ssub.s32 8, %s808
        %s810 = ssub.s32 308, %s808
        %v811 = vstv %s809
        %vm812 = vcmp.ge.s32.totalorder %v588, %v811
        %vm813 = vcmp.ge.s32.totalorder %v589, %v811
        %v814 = vstv %s810
        %vm815 = vcmp.lt.s32.totalorder %v588, %v814
        %vm816 = vcmp.lt.s32.totalorder %v589, %v814
        %vm817 = vmand %vm812, %vm815
        %vm818 = vmand %vm813, %vm816
        %v819 = vsel %vm817, 1, 0
        %v820 = vsel %vm818, 1, 0
        %vm821 = vcmp.eq.s32.totalorder %v819, 1
        %vm822 = vcmp.eq.s32.totalorder %v820, 1
        %vm823 = vmpackc.low %vm822, %vm821
        %v824 = vsel %vm823, 65537, 0
        %v825 = vlaneseq
        %v826 = vshrl.u32 %v825, 7
        %v827 = vsub.s32 0, %v826
        %v828 = vrot.slane %v824, %v827
        %v829 = vlaneseq
        %v830 = vshrl.u32 %v829, 7
        %v831 = vsub.s32 4, %v830
        %v832 = vrot.slane %v824, %v831
        %vm833 = vcmp.ne.s16.totalorder %v828, 0
        %vm834 = vcmp.ne.s16.totalorder %v832, 0
        %v835 = vsel %vm833, %v800, 0
        %v836 = vsel %vm834, %v801, 0
        %v837 = vsel %vm833, %v802, 0
        %v838 = vsel %vm834, %v803, 0
        %v839 = vsel %vm833, %v804, 0
        %v840 = vsel %vm834, %v805, 0
        %v841 = vsel %vm833, %v806, 0
        %v842 = vsel %vm834, %v807, 0
        %v843 = vld [vmem:[%s4] sm:$0xf]
        %v844 = vld [vmem:[%s4 + $0x4] sm:$0xf]
        %v845 = vld [vmem:[%s4 + $0x8] sm:$0xf]
        %v846 = vld [vmem:[%s4 + $0xc] sm:$0xf]
        %v847 = vld [vmem:[%s4 + $0x10] sm:$0xf]
        %v848 = vld [vmem:[%s4 + $0x14] sm:$0xf]
        %v849 = vld [vmem:[%s4 + $0x18] sm:$0xf]
        %v850 = vld [vmem:[%s4 + $0x1c] sm:$0xf]
        %s851 = scalar_lea.vmem %s4, 32
        %v852 = vld [vmem:[%s851] sm:$0xf]
        %v853 = vld [vmem:[%s851 + $0x4] sm:$0xf]
        %v854 = vld [vmem:[%s851 + $0x8] sm:$0xf]
        %v855 = vld [vmem:[%s851 + $0xc] sm:$0xf]
        %v856 = vld [vmem:[%s851 + $0x10] sm:$0xf]
        %v857 = vld [vmem:[%s851 + $0x14] sm:$0xf]
        %v858 = vld [vmem:[%s851 + $0x18] sm:$0xf]
        %v859 = vld [vmem:[%s851 + $0x1c] sm:$0xf]
        %v868 = vunpack.c.l.b16 %v852
        %v869 = vunpack.c.l.b16 %v853
        %v870 = vunpack.c.l.b16 %v854
        %v871 = vunpack.c.l.b16 %v855
        %v872 = vunpack.c.l.b16 %v856
        %v873 = vunpack.c.l.b16 %v857
        %v874 = vunpack.c.l.b16 %v858
        %v875 = vunpack.c.l.b16 %v859
        %v876 = vpack.c.b16 %v869, %v868
        %v877 = vpack.c.b16 %v871, %v870
        %v878 = vpack.c.b16 %v873, %v872
        %v879 = vpack.c.b16 %v875, %v874
        %888 = vrot.lane.b32.xlu0 %v835, 127
        %v889 = vpop.permute.xlu0 %888
        %890 = vrot.lane.b32.xlu0 %v836, 127
        %v891 = vpop.permute.xlu0 %890
        %892 = vrot.lane.b32.xlu0 %v837, 127
        %v893 = vpop.permute.xlu0 %892
        %894 = vrot.lane.b32.xlu0 %v838, 127
        %v895 = vpop.permute.xlu0 %894
        %896 = vrot.lane.b32.xlu0 %v839, 127
        %v897 = vpop.permute.xlu0 %896
        %898 = vrot.lane.b32.xlu0 %v840, 127
        %v899 = vpop.permute.xlu0 %898
        %900 = vrot.lane.b32.xlu0 %v841, 127
        %v901 = vpop.permute.xlu0 %900
        %902 = vrot.lane.b32.xlu0 %v842, 127
        %v903 = vpop.permute.xlu0 %902
        %v904 = vsel %vm594, %v889, %v891
        %v905 = vsel %vm594, %v893, %v895
        %v906 = vsel %vm594, %v897, %v899
        %v907 = vsel %vm594, %v901, %v903
        %vm916 = vcmask 523264
        %v918 = vsel %vm916, %v876, 0
        %v921 = vsel %vm916, %v877, 0
        %v924 = vsel %vm916, %v878, 0
        %v927 = vsel %vm916, %v879, 0
        %929 = vmatprep.subr.bf16.mxu0 0
        %930 = vmatpush1.bf16.msra.mxu0 0
        %931 = vmatprep.subr.bf16.mxu0 0
        %932 = vmatpush1.bf16.msra.mxu0 0
        %933 = vmatprep.subr.bf16.mxu0 0
        %934 = vmatpush1.bf16.msra.mxu0 0
        %935 = vmatprep.subr.bf16.mxu0 0
        %936 = vmatpush1.bf16.msra.mxu0 0
        %937 = vmatprep.subr.bf16.mxu0 %v903
        %938 = vmatpush1.bf16.msra.mxu0 %v907
        %939 = vmatprep.subr.bf16.mxu0 %v899
        %940 = vmatpush1.bf16.msra.mxu0 %v906
        %941 = vmatprep.subr.bf16.mxu0 %v895
        %942 = vmatpush1.bf16.msra.mxu0 %v905
        %943 = vmatprep.subr.bf16.mxu0 %v891
        %944 = vmatpush1.bf16.msra.mxu0 %v904
        %945 = vmatprep.subr.bf16.mxu0 0
        %946 = vmatpush2.bf16.msra.mxu0 0
        %947 = vmatprep.subr.bf16.mxu0 0
        %948 = vmatpush2.bf16.msra.mxu0 0
        %949 = vmatprep.subr.bf16.mxu0 0
        %950 = vmatpush2.bf16.msra.mxu0 0
        %951 = vmatprep.subr.bf16.mxu0 0
        %952 = vmatpush2.bf16.msra.mxu0 0
        %953 = vmatprep.subr.bf16.mxu0 0
        %954 = vmatpush2.bf16.msra.mxu0 0
        %955 = vmatprep.subr.bf16.mxu0 0
        %956 = vmatpush2.bf16.msra.mxu0 0
        %957 = vmatprep.subr.bf16.mxu0 0
        %958 = vmatpush2.bf16.msra.mxu0 0
        %959 = vmatprep.subr.bf16.mxu0 0
        %960 = vmatpush2.bf16.msra.mxu0 0
        %961 = vmatprep.mubr.bf16.mxu0 0
        %962 = vmatmul.mubr.bf16.gmra.mxu0 %v918
        %v963 = vpop.f32.mrf.mxu0
        %v964 = vadd.f32 0.0, %v963
        %v965 = vpop.f32.mrf.mxu0
        %v966 = vadd.f32 0.0, %v965
        %v967 = vpop.f32.mrf.mxu0
        %v968 = vadd.f32 0.0, %v967
        %v969 = vpop.f32.mrf.mxu0
        %v970 = vadd.f32 0.0, %v969
        %971 = vmatprep.mubr.bf16.mxu0 0
        %972 = vmatmul.mubr.bf16.gmra.mxu0 %v921
        %v973 = vpop.f32.mrf.mxu0
        %v974 = vadd.f32 0.0, %v973
        %v975 = vpop.f32.mrf.mxu0
        %v976 = vadd.f32 0.0, %v975
        %v977 = vpop.f32.mrf.mxu0
        %v978 = vadd.f32 0.0, %v977
        %v979 = vpop.f32.mrf.mxu0
        %v980 = vadd.f32 0.0, %v979
        %981 = vmatprep.mubr.bf16.mxu0 0
        %982 = vmatmul.mubr.bf16.gmra.mxu0 %v924
        %v983 = vpop.f32.mrf.mxu0
        %v984 = vadd.f32 0.0, %v983
        %v985 = vpop.f32.mrf.mxu0
        %v986 = vadd.f32 0.0, %v985
        %v987 = vpop.f32.mrf.mxu0
        %v988 = vadd.f32 0.0, %v987
        %v989 = vpop.f32.mrf.mxu0
        %v990 = vadd.f32 0.0, %v989
        %991 = vmatprep.mubr.bf16.mxu0 0
        %992 = vmatmul.mubr.bf16.gmra.mxu0 %v927
        %v993 = vpop.f32.mrf.mxu0
        %v994 = vadd.f32 0.0, %v993
        %v995 = vpop.f32.mrf.mxu0
        %v996 = vadd.f32 0.0, %v995
        %v997 = vpop.f32.mrf.mxu0
        %v998 = vadd.f32 0.0, %v997
        %v999 = vpop.f32.mrf.mxu0
        %v1000 = vadd.f32 0.0, %v999
        %1001 = vdwg.mxu0
        %v1010 = vunpack.c.l.b16 %v843
        %v1011 = vunpack.c.l.b16 %v844
        %v1012 = vunpack.c.l.b16 %v845
        %v1013 = vunpack.c.l.b16 %v846
        %v1014 = vunpack.c.l.b16 %v847
        %v1015 = vunpack.c.l.b16 %v848
        %v1016 = vunpack.c.l.b16 %v849
        %v1017 = vunpack.c.l.b16 %v850
        %v1018 = vpack.c.b16 %v1011, %v1010
        %v1019 = vpack.c.b16 %v1013, %v1012
        %v1020 = vpack.c.b16 %v1015, %v1014
        %v1021 = vpack.c.b16 %v1017, %v1016
        %v1023 = vsel %vm916, %v1018, 0
        %v1026 = vsel %vm916, %v1019, 0
        %v1029 = vsel %vm916, %v1020, 0
        %v1032 = vsel %vm916, %v1021, 0
        %1034 = vmatprep.subr.bf16.mxu0 0
        %1035 = vmatpush1.bf16.msra.mxu0 0
        %1036 = vmatprep.subr.bf16.mxu0 0
        %1037 = vmatpush1.bf16.msra.mxu0 0
        %1038 = vmatprep.subr.bf16.mxu0 0
        %1039 = vmatpush1.bf16.msra.mxu0 0
        %1040 = vmatprep.subr.bf16.mxu0 0
        %1041 = vmatpush1.bf16.msra.mxu0 0
        %1042 = vmatprep.subr.bf16.mxu0 %v842
        %1043 = vmatpush1.bf16.msra.mxu0 %v841
        %1044 = vmatprep.subr.bf16.mxu0 %v840
        %1045 = vmatpush1.bf16.msra.mxu0 %v839
        %1046 = vmatprep.subr.bf16.mxu0 %v838
        %1047 = vmatpush1.bf16.msra.mxu0 %v837
        %1048 = vmatprep.subr.bf16.mxu0 %v836
        %1049 = vmatpush1.bf16.msra.mxu0 %v835
        %1050 = vmatprep.subr.bf16.mxu0 0
        %1051 = vmatpush2.bf16.msra.mxu0 0
        %1052 = vmatprep.subr.bf16.mxu0 0
        %1053 = vmatpush2.bf16.msra.mxu0 0
        %1054 = vmatprep.subr.bf16.mxu0 0
        %1055 = vmatpush2.bf16.msra.mxu0 0
        %1056 = vmatprep.subr.bf16.mxu0 0
        %1057 = vmatpush2.bf16.msra.mxu0 0
        %1058 = vmatprep.subr.bf16.mxu0 0
        %1059 = vmatpush2.bf16.msra.mxu0 0
        %1060 = vmatprep.subr.bf16.mxu0 0
        %1061 = vmatpush2.bf16.msra.mxu0 0
        %1062 = vmatprep.subr.bf16.mxu0 0
        %1063 = vmatpush2.bf16.msra.mxu0 0
        %1064 = vmatprep.subr.bf16.mxu0 0
        %1065 = vmatpush2.bf16.msra.mxu0 0
        %1066 = vmatprep.mubr.bf16.mxu0 0
        %1067 = vmatmul.mubr.bf16.gmra.mxu0 %v1023
        %v1068 = vpop.f32.mrf.mxu0
        %v1069 = vadd.f32 %v964, %v1068
        %v1070 = vpop.f32.mrf.mxu0
        %v1071 = vadd.f32 %v966, %v1070
        %v1072 = vpop.f32.mrf.mxu0
        %v1073 = vadd.f32 %v968, %v1072
        %v1074 = vpop.f32.mrf.mxu0
        %v1075 = vadd.f32 %v970, %v1074
        %1076 = vmatprep.mubr.bf16.mxu0 0
        %1077 = vmatmul.mubr.bf16.gmra.mxu0 %v1026
        %v1078 = vpop.f32.mrf.mxu0
        %v1079 = vadd.f32 %v974, %v1078
        %v1080 = vpop.f32.mrf.mxu0
        %v1081 = vadd.f32 %v976, %v1080
        %v1082 = vpop.f32.mrf.mxu0
        %v1083 = vadd.f32 %v978, %v1082
        %v1084 = vpop.f32.mrf.mxu0
        %v1085 = vadd.f32 %v980, %v1084
        %1086 = vmatprep.mubr.bf16.mxu0 0
        %1087 = vmatmul.mubr.bf16.gmra.mxu0 %v1029
        %v1088 = vpop.f32.mrf.mxu0
        %v1089 = vadd.f32 %v984, %v1088
        %v1090 = vpop.f32.mrf.mxu0
        %v1091 = vadd.f32 %v986, %v1090
        %v1092 = vpop.f32.mrf.mxu0
        %v1093 = vadd.f32 %v988, %v1092
        %v1094 = vpop.f32.mrf.mxu0
        %v1095 = vadd.f32 %v990, %v1094
        %1096 = vmatprep.mubr.bf16.mxu0 0
        %1097 = vmatmul.mubr.bf16.gmra.mxu0 %v1032
        %v1098 = vpop.f32.mrf.mxu0
        %v1099 = vadd.f32 %v994, %v1098
        %v1100 = vpop.f32.mrf.mxu0
        %v1101 = vadd.f32 %v996, %v1100
        %v1102 = vpop.f32.mrf.mxu0
        %v1103 = vadd.f32 %v998, %v1102
        %v1104 = vpop.f32.mrf.mxu0
        %v1105 = vadd.f32 %v1000, %v1104
        %1106 = vdwg.mxu0
        %s1107 = scalar_lea.vmem %s4, 64
        %v1108 = vld [vmem:[%s1107] sm:$0xf]
        %v1109 = vld [vmem:[%s1107 + $0x4] sm:$0xf]
        %v1110 = vld [vmem:[%s1107 + $0x8] sm:$0xf]
        %v1111 = vld [vmem:[%s1107 + $0xc] sm:$0xf]
        %v1112 = vld [vmem:[%s1107 + $0x10] sm:$0xf]
        %v1113 = vld [vmem:[%s1107 + $0x14] sm:$0xf]
        %v1114 = vld [vmem:[%s1107 + $0x18] sm:$0xf]
        %v1115 = vld [vmem:[%s1107 + $0x1c] sm:$0xf]
        %v1124 = vunpack.c.l.b16 %v1108
        %v1125 = vunpack.c.l.b16 %v1109
        %v1126 = vunpack.c.l.b16 %v1110
        %v1127 = vunpack.c.l.b16 %v1111
        %v1128 = vunpack.c.l.b16 %v1112
        %v1129 = vunpack.c.l.b16 %v1113
        %v1130 = vunpack.c.l.b16 %v1114
        %v1131 = vunpack.c.l.b16 %v1115
        %v1132 = vpack.c.b16 %v1125, %v1124
        %v1133 = vpack.c.b16 %v1127, %v1126
        %v1134 = vpack.c.b16 %v1129, %v1128
        %v1135 = vpack.c.b16 %v1131, %v1130
        %1136 = vrot.lane.b32.xlu0 %v835, 126
        %v1137 = vpop.permute.xlu0 %1136
        %1138 = vrot.lane.b32.xlu0 %v836, 126
        %v1139 = vpop.permute.xlu0 %1138
        %1140 = vrot.lane.b32.xlu0 %v837, 126
        %v1141 = vpop.permute.xlu0 %1140
        %1142 = vrot.lane.b32.xlu0 %v838, 126
        %v1143 = vpop.permute.xlu0 %1142
        %1144 = vrot.lane.b32.xlu0 %v839, 126
        %v1145 = vpop.permute.xlu0 %1144
        %1146 = vrot.lane.b32.xlu0 %v840, 126
        %v1147 = vpop.permute.xlu0 %1146
        %1148 = vrot.lane.b32.xlu0 %v841, 126
        %v1149 = vpop.permute.xlu0 %1148
        %1150 = vrot.lane.b32.xlu0 %v842, 126
        %v1151 = vpop.permute.xlu0 %1150
        %v1152 = vsel %vm602, %v1137, %v1139
        %v1153 = vsel %vm602, %v1141, %v1143
        %v1154 = vsel %vm602, %v1145, %v1147
        %v1155 = vsel %vm602, %v1149, %v1151
        %v1165 = vsel %vm916, %v1132, 0
        %v1168 = vsel %vm916, %v1133, 0
        %v1171 = vsel %vm916, %v1134, 0
        %v1174 = vsel %vm916, %v1135, 0
        %1176 = vmatprep.subr.bf16.mxu0 0
        %1177 = vmatpush1.bf16.msra.mxu0 0
        %1178 = vmatprep.subr.bf16.mxu0 0
        %1179 = vmatpush1.bf16.msra.mxu0 0
        %1180 = vmatprep.subr.bf16.mxu0 0
        %1181 = vmatpush1.bf16.msra.mxu0 0
        %1182 = vmatprep.subr.bf16.mxu0 0
        %1183 = vmatpush1.bf16.msra.mxu0 0
        %1184 = vmatprep.subr.bf16.mxu0 %v1151
        %1185 = vmatpush1.bf16.msra.mxu0 %v1155
        %1186 = vmatprep.subr.bf16.mxu0 %v1147
        %1187 = vmatpush1.bf16.msra.mxu0 %v1154
        %1188 = vmatprep.subr.bf16.mxu0 %v1143
        %1189 = vmatpush1.bf16.msra.mxu0 %v1153
        %1190 = vmatprep.subr.bf16.mxu0 %v1139
        %1191 = vmatpush1.bf16.msra.mxu0 %v1152
        %1192 = vmatprep.subr.bf16.mxu0 0
        %1193 = vmatpush2.bf16.msra.mxu0 0
        %1194 = vmatprep.subr.bf16.mxu0 0
        %1195 = vmatpush2.bf16.msra.mxu0 0
        %1196 = vmatprep.subr.bf16.mxu0 0
        %1197 = vmatpush2.bf16.msra.mxu0 0
        %1198 = vmatprep.subr.bf16.mxu0 0
        %1199 = vmatpush2.bf16.msra.mxu0 0
        %1200 = vmatprep.subr.bf16.mxu0 0
        %1201 = vmatpush2.bf16.msra.mxu0 0
        %1202 = vmatprep.subr.bf16.mxu0 0
        %1203 = vmatpush2.bf16.msra.mxu0 0
        %1204 = vmatprep.subr.bf16.mxu0 0
        %1205 = vmatpush2.bf16.msra.mxu0 0
        %1206 = vmatprep.subr.bf16.mxu0 0
        %1207 = vmatpush2.bf16.msra.mxu0 0
        %1208 = vmatprep.mubr.bf16.mxu0 0
        %1209 = vmatmul.mubr.bf16.gmra.mxu0 %v1165
        %v1210 = vpop.f32.mrf.mxu0
        %v1211 = vadd.f32 0.0, %v1210
        %v1212 = vpop.f32.mrf.mxu0
        %v1213 = vadd.f32 0.0, %v1212
        %v1214 = vpop.f32.mrf.mxu0
        %v1215 = vadd.f32 0.0, %v1214
        %v1216 = vpop.f32.mrf.mxu0
        %v1217 = vadd.f32 0.0, %v1216
        %1218 = vmatprep.mubr.bf16.mxu0 0
        %1219 = vmatmul.mubr.bf16.gmra.mxu0 %v1168
        %v1220 = vpop.f32.mrf.mxu0
        %v1221 = vadd.f32 0.0, %v1220
        %v1222 = vpop.f32.mrf.mxu0
        %v1223 = vadd.f32 0.0, %v1222
        %v1224 = vpop.f32.mrf.mxu0
        %v1225 = vadd.f32 0.0, %v1224
        %v1226 = vpop.f32.mrf.mxu0
        %v1227 = vadd.f32 0.0, %v1226
        %1228 = vmatprep.mubr.bf16.mxu0 0
        %1229 = vmatmul.mubr.bf16.gmra.mxu0 %v1171
        %v1230 = vpop.f32.mrf.mxu0
        %v1231 = vadd.f32 0.0, %v1230
        %v1232 = vpop.f32.mrf.mxu0
        %v1233 = vadd.f32 0.0, %v1232
        %v1234 = vpop.f32.mrf.mxu0
        %v1235 = vadd.f32 0.0, %v1234
        %v1236 = vpop.f32.mrf.mxu0
        %v1237 = vadd.f32 0.0, %v1236
        %1238 = vmatprep.mubr.bf16.mxu0 0
        %1239 = vmatmul.mubr.bf16.gmra.mxu0 %v1174
        %v1240 = vpop.f32.mrf.mxu0
        %v1241 = vadd.f32 0.0, %v1240
        %v1242 = vpop.f32.mrf.mxu0
        %v1243 = vadd.f32 0.0, %v1242
        %v1244 = vpop.f32.mrf.mxu0
        %v1245 = vadd.f32 0.0, %v1244
        %v1246 = vpop.f32.mrf.mxu0
        %v1247 = vadd.f32 0.0, %v1246
        %1248 = vdwg.mxu0
        %v1249 = vadd.f32 %v1069, %v1211
        %v1250 = vadd.f32 %v1071, %v1213
        %v1251 = vadd.f32 %v1073, %v1215
        %v1252 = vadd.f32 %v1075, %v1217
        %v1253 = vadd.f32 %v1079, %v1221
        %v1254 = vadd.f32 %v1081, %v1223
        %v1255 = vadd.f32 %v1083, %v1225
        %v1256 = vadd.f32 %v1085, %v1227
        %v1257 = vadd.f32 %v1089, %v1231
        %v1258 = vadd.f32 %v1091, %v1233
        %v1259 = vadd.f32 %v1093, %v1235
        %v1260 = vadd.f32 %v1095, %v1237
        %v1261 = vadd.f32 %v1099, %v1241
        %v1262 = vadd.f32 %v1101, %v1243
        %v1263 = vadd.f32 %v1103, %v1245
        %v1264 = vadd.f32 %v1105, %v1247
        %s1265 = scalar_lea.vmem %s4, 96
        %v1266 = vld [vmem:[%s1265] sm:$0xf]
        %v1267 = vld [vmem:[%s1265 + $0x4] sm:$0xf]
        %v1268 = vld [vmem:[%s1265 + $0x8] sm:$0xf]
        %v1269 = vld [vmem:[%s1265 + $0xc] sm:$0xf]
        %v1270 = vld [vmem:[%s1265 + $0x10] sm:$0xf]
        %v1271 = vld [vmem:[%s1265 + $0x14] sm:$0xf]
        %v1272 = vld [vmem:[%s1265 + $0x18] sm:$0xf]
        %v1273 = vld [vmem:[%s1265 + $0x1c] sm:$0xf]
        %v1282 = vunpack.c.l.b16 %v1266
        %v1283 = vunpack.c.l.b16 %v1267
        %v1284 = vunpack.c.l.b16 %v1268
        %v1285 = vunpack.c.l.b16 %v1269
        %v1286 = vunpack.c.l.b16 %v1270
        %v1287 = vunpack.c.l.b16 %v1271
        %v1288 = vunpack.c.l.b16 %v1272
        %v1289 = vunpack.c.l.b16 %v1273
        %v1290 = vpack.c.b16 %v1283, %v1282
        %v1291 = vpack.c.b16 %v1285, %v1284
        %v1292 = vpack.c.b16 %v1287, %v1286
        %v1293 = vpack.c.b16 %v1289, %v1288
        %1294 = vrot.lane.b32.xlu0 %v835, 125
        %v1295 = vpop.permute.xlu0 %1294
        %1296 = vrot.lane.b32.xlu0 %v836, 125
        %v1297 = vpop.permute.xlu0 %1296
        %1298 = vrot.lane.b32.xlu0 %v837, 125
        %v1299 = vpop.permute.xlu0 %1298
        %1300 = vrot.lane.b32.xlu0 %v838, 125
        %v1301 = vpop.permute.xlu0 %1300
        %1302 = vrot.lane.b32.xlu0 %v839, 125
        %v1303 = vpop.permute.xlu0 %1302
        %1304 = vrot.lane.b32.xlu0 %v840, 125
        %v1305 = vpop.permute.xlu0 %1304
        %1306 = vrot.lane.b32.xlu0 %v841, 125
        %v1307 = vpop.permute.xlu0 %1306
        %1308 = vrot.lane.b32.xlu0 %v842, 125
        %v1309 = vpop.permute.xlu0 %1308
        %v1310 = vsel %vm610, %v1295, %v1297
        %v1311 = vsel %vm610, %v1299, %v1301
        %v1312 = vsel %vm610, %v1303, %v1305
        %v1313 = vsel %vm610, %v1307, %v1309
        %v1323 = vsel %vm916, %v1290, 0
        %v1326 = vsel %vm916, %v1291, 0
        %v1329 = vsel %vm916, %v1292, 0
        %v1332 = vsel %vm916, %v1293, 0
        %1334 = vmatprep.subr.bf16.mxu0 0
        %1335 = vmatpush1.bf16.msra.mxu0 0
        %1336 = vmatprep.subr.bf16.mxu0 0
        %1337 = vmatpush1.bf16.msra.mxu0 0
        %1338 = vmatprep.subr.bf16.mxu0 0
        %1339 = vmatpush1.bf16.msra.mxu0 0
        %1340 = vmatprep.subr.bf16.mxu0 0
        %1341 = vmatpush1.bf16.msra.mxu0 0
        %1342 = vmatprep.subr.bf16.mxu0 %v1309
        %1343 = vmatpush1.bf16.msra.mxu0 %v1313
        %1344 = vmatprep.subr.bf16.mxu0 %v1305
        %1345 = vmatpush1.bf16.msra.mxu0 %v1312
        %1346 = vmatprep.subr.bf16.mxu0 %v1301
        %1347 = vmatpush1.bf16.msra.mxu0 %v1311
        %1348 = vmatprep.subr.bf16.mxu0 %v1297
        %1349 = vmatpush1.bf16.msra.mxu0 %v1310
        %1350 = vmatprep.subr.bf16.mxu0 0
        %1351 = vmatpush2.bf16.msra.mxu0 0
        %1352 = vmatprep.subr.bf16.mxu0 0
        %1353 = vmatpush2.bf16.msra.mxu0 0
        %1354 = vmatprep.subr.bf16.mxu0 0
        %1355 = vmatpush2.bf16.msra.mxu0 0
        %1356 = vmatprep.subr.bf16.mxu0 0
        %1357 = vmatpush2.bf16.msra.mxu0 0
        %1358 = vmatprep.subr.bf16.mxu0 0
        %1359 = vmatpush2.bf16.msra.mxu0 0
        %1360 = vmatprep.subr.bf16.mxu0 0
        %1361 = vmatpush2.bf16.msra.mxu0 0
        %1362 = vmatprep.subr.bf16.mxu0 0
        %1363 = vmatpush2.bf16.msra.mxu0 0
        %1364 = vmatprep.subr.bf16.mxu0 0
        %1365 = vmatpush2.bf16.msra.mxu0 0
        %1366 = vmatprep.mubr.bf16.mxu0 0
        %1367 = vmatmul.mubr.bf16.gmra.mxu0 %v1323
        %v1368 = vpop.f32.mrf.mxu0
        %v1369 = vadd.f32 0.0, %v1368
        %v1370 = vpop.f32.mrf.mxu0
        %v1371 = vadd.f32 0.0, %v1370
        %v1372 = vpop.f32.mrf.mxu0
        %v1373 = vadd.f32 0.0, %v1372
        %v1374 = vpop.f32.mrf.mxu0
        %v1375 = vadd.f32 0.0, %v1374
        %1376 = vmatprep.mubr.bf16.mxu0 0
        %1377 = vmatmul.mubr.bf16.gmra.mxu0 %v1326
        %v1378 = vpop.f32.mrf.mxu0
        %v1379 = vadd.f32 0.0, %v1378
        %v1380 = vpop.f32.mrf.mxu0
        %v1381 = vadd.f32 0.0, %v1380
        %v1382 = vpop.f32.mrf.mxu0
        %v1383 = vadd.f32 0.0, %v1382
        %v1384 = vpop.f32.mrf.mxu0
        %v1385 = vadd.f32 0.0, %v1384
        %1386 = vmatprep.mubr.bf16.mxu0 0
        %1387 = vmatmul.mubr.bf16.gmra.mxu0 %v1329
        %v1388 = vpop.f32.mrf.mxu0
        %v1389 = vadd.f32 0.0, %v1388
        %v1390 = vpop.f32.mrf.mxu0
        %v1391 = vadd.f32 0.0, %v1390
        %v1392 = vpop.f32.mrf.mxu0
        %v1393 = vadd.f32 0.0, %v1392
        %v1394 = vpop.f32.mrf.mxu0
        %v1395 = vadd.f32 0.0, %v1394
        %1396 = vmatprep.mubr.bf16.mxu0 0
        %1397 = vmatmul.mubr.bf16.gmra.mxu0 %v1332
        %v1398 = vpop.f32.mrf.mxu0
        %v1399 = vadd.f32 0.0, %v1398
        %v1400 = vpop.f32.mrf.mxu0
        %v1401 = vadd.f32 0.0, %v1400
        %v1402 = vpop.f32.mrf.mxu0
        %v1403 = vadd.f32 0.0, %v1402
        %v1404 = vpop.f32.mrf.mxu0
        %v1405 = vadd.f32 0.0, %v1404
        %1406 = vdwg.mxu0
        %v1407 = vadd.f32 %v1249, %v1369
        %v1408 = vadd.f32 %v1250, %v1371
        %v1409 = vadd.f32 %v1251, %v1373
        %v1410 = vadd.f32 %v1252, %v1375
        %v1411 = vadd.f32 %v1253, %v1379
        %v1412 = vadd.f32 %v1254, %v1381
        %v1413 = vadd.f32 %v1255, %v1383
        %v1414 = vadd.f32 %v1256, %v1385
        %v1415 = vadd.f32 %v1257, %v1389
        %v1416 = vadd.f32 %v1258, %v1391
        %v1417 = vadd.f32 %v1259, %v1393
        %v1418 = vadd.f32 %v1260, %v1395
        %v1419 = vadd.f32 %v1261, %v1399
        %v1420 = vadd.f32 %v1262, %v1401
        %v1421 = vadd.f32 %v1263, %v1403
        %v1422 = vadd.f32 %v1264, %v1405
        %s1423 = scalar_lea.vmem %s4, 128
        %v1424 = vld [vmem:[%s1423] sm:$0xf]
        %v1425 = vld [vmem:[%s1423 + $0x4] sm:$0xf]
        %v1426 = vld [vmem:[%s1423 + $0x8] sm:$0xf]
        %v1427 = vld [vmem:[%s1423 + $0xc] sm:$0xf]
        %v1428 = vld [vmem:[%s1423 + $0x10] sm:$0xf]
        %v1429 = vld [vmem:[%s1423 + $0x14] sm:$0xf]
        %v1430 = vld [vmem:[%s1423 + $0x18] sm:$0xf]
        %v1431 = vld [vmem:[%s1423 + $0x1c] sm:$0xf]
        %v1440 = vunpack.c.l.b16 %v1424
        %v1441 = vunpack.c.l.b16 %v1425
        %v1442 = vunpack.c.l.b16 %v1426
        %v1443 = vunpack.c.l.b16 %v1427
        %v1444 = vunpack.c.l.b16 %v1428
        %v1445 = vunpack.c.l.b16 %v1429
        %v1446 = vunpack.c.l.b16 %v1430
        %v1447 = vunpack.c.l.b16 %v1431
        %v1448 = vpack.c.b16 %v1441, %v1440
        %v1449 = vpack.c.b16 %v1443, %v1442
        %v1450 = vpack.c.b16 %v1445, %v1444
        %v1451 = vpack.c.b16 %v1447, %v1446
        %1452 = vrot.lane.b32.xlu0 %v835, 124
        %v1453 = vpop.permute.xlu0 %1452
        %1454 = vrot.lane.b32.xlu0 %v836, 124
        %v1455 = vpop.permute.xlu0 %1454
        %1456 = vrot.lane.b32.xlu0 %v837, 124
        %v1457 = vpop.permute.xlu0 %1456
        %1458 = vrot.lane.b32.xlu0 %v838, 124
        %v1459 = vpop.permute.xlu0 %1458
        %1460 = vrot.lane.b32.xlu0 %v839, 124
        %v1461 = vpop.permute.xlu0 %1460
        %1462 = vrot.lane.b32.xlu0 %v840, 124
        %v1463 = vpop.permute.xlu0 %1462
        %1464 = vrot.lane.b32.xlu0 %v841, 124
        %v1465 = vpop.permute.xlu0 %1464
        %1466 = vrot.lane.b32.xlu0 %v842, 124
        %v1467 = vpop.permute.xlu0 %1466
        %v1468 = vsel %vm618, %v1453, %v1455
        %v1469 = vsel %vm618, %v1457, %v1459
        %v1470 = vsel %vm618, %v1461, %v1463
        %v1471 = vsel %vm618, %v1465, %v1467
        %v1481 = vsel %vm916, %v1448, 0
        %v1484 = vsel %vm916, %v1449, 0
        %v1487 = vsel %vm916, %v1450, 0
        %v1490 = vsel %vm916, %v1451, 0
        %1492 = vmatprep.subr.bf16.mxu0 0
        %1493 = vmatpush1.bf16.msra.mxu0 0
        %1494 = vmatprep.subr.bf16.mxu0 0
        %1495 = vmatpush1.bf16.msra.mxu0 0
        %1496 = vmatprep.subr.bf16.mxu0 0
        %1497 = vmatpush1.bf16.msra.mxu0 0
        %1498 = vmatprep.subr.bf16.mxu0 0
        %1499 = vmatpush1.bf16.msra.mxu0 0
        %1500 = vmatprep.subr.bf16.mxu0 %v1467
        %1501 = vmatpush1.bf16.msra.mxu0 %v1471
        %1502 = vmatprep.subr.bf16.mxu0 %v1463
        %1503 = vmatpush1.bf16.msra.mxu0 %v1470
        %1504 = vmatprep.subr.bf16.mxu0 %v1459
        %1505 = vmatpush1.bf16.msra.mxu0 %v1469
        %1506 = vmatprep.subr.bf16.mxu0 %v1455
        %1507 = vmatpush1.bf16.msra.mxu0 %v1468
        %1508 = vmatprep.subr.bf16.mxu0 0
        %1509 = vmatpush2.bf16.msra.mxu0 0
        %1510 = vmatprep.subr.bf16.mxu0 0
        %1511 = vmatpush2.bf16.msra.mxu0 0
        %1512 = vmatprep.subr.bf16.mxu0 0
        %1513 = vmatpush2.bf16.msra.mxu0 0
        %1514 = vmatprep.subr.bf16.mxu0 0
        %1515 = vmatpush2.bf16.msra.mxu0 0
        %1516 = vmatprep.subr.bf16.mxu0 0
        %1517 = vmatpush2.bf16.msra.mxu0 0
        %1518 = vmatprep.subr.bf16.mxu0 0
        %1519 = vmatpush2.bf16.msra.mxu0 0
        %1520 = vmatprep.subr.bf16.mxu0 0
        %1521 = vmatpush2.bf16.msra.mxu0 0
        %1522 = vmatprep.subr.bf16.mxu0 0
        %1523 = vmatpush2.bf16.msra.mxu0 0
        %1524 = vmatprep.mubr.bf16.mxu0 0
        %1525 = vmatmul.mubr.bf16.gmra.mxu0 %v1481
        %v1526 = vpop.f32.mrf.mxu0
        %v1527 = vadd.f32 0.0, %v1526
        %v1528 = vpop.f32.mrf.mxu0
        %v1529 = vadd.f32 0.0, %v1528
        %v1530 = vpop.f32.mrf.mxu0
        %v1531 = vadd.f32 0.0, %v1530
        %v1532 = vpop.f32.mrf.mxu0
        %v1533 = vadd.f32 0.0, %v1532
        %1534 = vmatprep.mubr.bf16.mxu0 0
        %1535 = vmatmul.mubr.bf16.gmra.mxu0 %v1484
        %v1536 = vpop.f32.mrf.mxu0
        %v1537 = vadd.f32 0.0, %v1536
        %v1538 = vpop.f32.mrf.mxu0
        %v1539 = vadd.f32 0.0, %v1538
        %v1540 = vpop.f32.mrf.mxu0
        %v1541 = vadd.f32 0.0, %v1540
        %v1542 = vpop.f32.mrf.mxu0
        %v1543 = vadd.f32 0.0, %v1542
        %1544 = vmatprep.mubr.bf16.mxu0 0
        %1545 = vmatmul.mubr.bf16.gmra.mxu0 %v1487
        %v1546 = vpop.f32.mrf.mxu0
        %v1547 = vadd.f32 0.0, %v1546
        %v1548 = vpop.f32.mrf.mxu0
        %v1549 = vadd.f32 0.0, %v1548
        %v1550 = vpop.f32.mrf.mxu0
        %v1551 = vadd.f32 0.0, %v1550
        %v1552 = vpop.f32.mrf.mxu0
        %v1553 = vadd.f32 0.0, %v1552
        %1554 = vmatprep.mubr.bf16.mxu0 0
        %1555 = vmatmul.mubr.bf16.gmra.mxu0 %v1490
        %v1556 = vpop.f32.mrf.mxu0
        %v1557 = vadd.f32 0.0, %v1556
        %v1558 = vpop.f32.mrf.mxu0
        %v1559 = vadd.f32 0.0, %v1558
        %v1560 = vpop.f32.mrf.mxu0
        %v1561 = vadd.f32 0.0, %v1560
        %v1562 = vpop.f32.mrf.mxu0
        %v1563 = vadd.f32 0.0, %v1562
        %1564 = vdwg.mxu0
        %v1565 = vadd.f32 %v1407, %v1527
        %v1566 = vadd.f32 %v1408, %v1529
        %v1567 = vadd.f32 %v1409, %v1531
        %v1568 = vadd.f32 %v1410, %v1533
        %v1569 = vadd.f32 %v1411, %v1537
        %v1570 = vadd.f32 %v1412, %v1539
        %v1571 = vadd.f32 %v1413, %v1541
        %v1572 = vadd.f32 %v1414, %v1543
        %v1573 = vadd.f32 %v1415, %v1547
        %v1574 = vadd.f32 %v1416, %v1549
        %v1575 = vadd.f32 %v1417, %v1551
        %v1576 = vadd.f32 %v1418, %v1553
        %v1577 = vadd.f32 %v1419, %v1557
        %v1578 = vadd.f32 %v1420, %v1559
        %v1579 = vadd.f32 %v1421, %v1561
        %v1580 = vadd.f32 %v1422, %v1563
        %v1581 = vld [vmem:[%s5] sm:$0xff]
        %v1582 = vld [vmem:[%s5 + $0x8] sm:$0xff]
        %v1583 = vld [vmem:[%s5 + $0x10] sm:$0xff]
        %v1584 = vld [vmem:[%s5 + $0x18] sm:$0xff]
        %v1585 = vld [vmem:[%s5 + $0x20] sm:$0xff]
        %v1586 = vld [vmem:[%s5 + $0x28] sm:$0xff]
        %v1587 = vld [vmem:[%s5 + $0x30] sm:$0xff]
        %v1588 = vld [vmem:[%s5 + $0x38] sm:$0xff]
        %1590 = vset.pattern.permute.xlu0 0
        %1591 = vperm.xlu0 %1590, %v1581
        %v1592 = vpop.permute.xlu0 %1591
        %1595 = vset.pattern.permute.xlu0 0
        %1596 = vperm.xlu0 %1595, %v1582
        %v1597 = vpop.permute.xlu0 %1596
        %1600 = vset.pattern.permute.xlu0 0
        %1601 = vperm.xlu0 %1600, %v1583
        %v1602 = vpop.permute.xlu0 %1601
        %1605 = vset.pattern.permute.xlu0 0
        %1606 = vperm.xlu0 %1605, %v1584
        %v1607 = vpop.permute.xlu0 %1606
        %1610 = vset.pattern.permute.xlu0 0
        %1611 = vperm.xlu0 %1610, %v1585
        %v1612 = vpop.permute.xlu0 %1611
        %1615 = vset.pattern.permute.xlu0 0
        %1616 = vperm.xlu0 %1615, %v1586
        %v1617 = vpop.permute.xlu0 %1616
        %1620 = vset.pattern.permute.xlu0 0
        %1621 = vperm.xlu0 %1620, %v1587
        %v1622 = vpop.permute.xlu0 %1621
        %1625 = vset.pattern.permute.xlu0 0
        %1626 = vperm.xlu0 %1625, %v1588
        %v1627 = vpop.permute.xlu0 %1626
        %v1629 = vadd.f32 %v1565, %v1592
        %v1630 = vadd.f32 %v1566, %v1592
        %v1631 = vadd.f32 %v1567, %v1597
        %v1632 = vadd.f32 %v1568, %v1597
        %v1633 = vadd.f32 %v1569, %v1602
        %v1634 = vadd.f32 %v1570, %v1602
        %v1635 = vadd.f32 %v1571, %v1607
        %v1636 = vadd.f32 %v1572, %v1607
        %v1637 = vadd.f32 %v1573, %v1612
        %v1638 = vadd.f32 %v1574, %v1612
        %v1639 = vadd.f32 %v1575, %v1617
        %v1640 = vadd.f32 %v1576, %v1617
        %v1641 = vadd.f32 %v1577, %v1622
        %v1642 = vadd.f32 %v1578, %v1622
        %v1643 = vadd.f32 %v1579, %v1627
        %v1644 = vadd.f32 %v1580, %v1627
        %v1645 = vtanh.pop %v1629
        %v1646 = vtanh.pop %v1630
        %v1647 = vtanh.pop %v1631
        %v1648 = vtanh.pop %v1632
        %v1649 = vtanh.pop %v1633
        %v1650 = vtanh.pop %v1634
        %v1651 = vtanh.pop %v1635
        %v1652 = vtanh.pop %v1636
        %v1653 = vtanh.pop %v1637
        %v1654 = vtanh.pop %v1638
        %v1655 = vtanh.pop %v1639
        %v1656 = vtanh.pop %v1640
        %v1657 = vtanh.pop %v1641
        %v1658 = vtanh.pop %v1642
        %v1659 = vtanh.pop %v1643
        %v1660 = vtanh.pop %v1644
        %v1661 = vpack.c.bf16 %v1647, %v1645
        %v1662 = vpack.c.bf16 %v1648, %v1646
        %v1663 = vpack.c.bf16 %v1651, %v1649
        %v1664 = vpack.c.bf16 %v1652, %v1650
        %v1665 = vpack.c.bf16 %v1655, %v1653
        %v1666 = vpack.c.bf16 %v1656, %v1654
        %v1667 = vpack.c.bf16 %v1659, %v1657
        %v1668 = vpack.c.bf16 %v1660, %v1658
        %s1669 = ssub.s32 6, %s808
        %s1670 = ssub.s32 306, %s808
        %v1671 = vstv %s1669
        %vm1672 = vcmp.ge.s32.totalorder %v588, %v1671
        %vm1673 = vcmp.ge.s32.totalorder %v589, %v1671
        %v1674 = vstv %s1670
        %vm1675 = vcmp.lt.s32.totalorder %v588, %v1674
        %vm1676 = vcmp.lt.s32.totalorder %v589, %v1674
        %vm1677 = vmand %vm1672, %vm1675
        %vm1678 = vmand %vm1673, %vm1676
        %v1679 = vsel %vm1677, 1, 0
        %v1680 = vsel %vm1678, 1, 0
        %vm1681 = vcmp.eq.s32.totalorder %v1679, 1
        %vm1682 = vcmp.eq.s32.totalorder %v1680, 1
        %vm1683 = vmpackc.low %vm1682, %vm1681
        %v1684 = vsel %vm1683, 65537, 0
        %v1685 = vlaneseq
        %v1686 = vshrl.u32 %v1685, 7
        %v1687 = vsub.s32 0, %v1686
        %v1688 = vrot.slane %v1684, %v1687
        %v1689 = vlaneseq
        %v1690 = vshrl.u32 %v1689, 7
        %v1691 = vsub.s32 4, %v1690
        %v1692 = vrot.slane %v1684, %v1691
        %vm1693 = vcmp.ne.s16.totalorder %v1688, 0
        %vm1694 = vcmp.ne.s16.totalorder %v1692, 0
        %v1695 = vsel %vm1693, %v1661, 0
        %v1696 = vsel %vm1694, %v1662, 0
        %v1697 = vsel %vm1693, %v1663, 0
        %v1698 = vsel %vm1694, %v1664, 0
        %v1699 = vsel %vm1693, %v1665, 0
        %v1700 = vsel %vm1694, %v1666, 0
        %v1701 = vsel %vm1693, %v1667, 0
        %v1702 = vsel %vm1694, %v1668, 0
        %v1703 = vld [vmem:[#allocation8] sm:$0xf]
        %v1704 = vld [vmem:[#allocation8 + $0x4] sm:$0xf]
        %v1705 = vld [vmem:[#allocation8 + $0x8] sm:$0xf]
        %v1706 = vld [vmem:[#allocation8 + $0xc] sm:$0xf]
        %v1707 = vld [vmem:[#allocation8 + $0x10] sm:$0xf]
        %v1708 = vld [vmem:[#allocation8 + $0x14] sm:$0xf]
        %v1709 = vld [vmem:[#allocation8 + $0x18] sm:$0xf]
        %v1710 = vld [vmem:[#allocation8 + $0x1c] sm:$0xf]
        %s1711 = scalar_lea.vmem [#allocation8], 32
        %v1712 = vld [vmem:[%s1711] sm:$0xf]
        %v1713 = vld [vmem:[%s1711 + $0x4] sm:$0xf]
        %v1714 = vld [vmem:[%s1711 + $0x8] sm:$0xf]
        %v1715 = vld [vmem:[%s1711 + $0xc] sm:$0xf]
        %v1716 = vld [vmem:[%s1711 + $0x10] sm:$0xf]
        %v1717 = vld [vmem:[%s1711 + $0x14] sm:$0xf]
        %v1718 = vld [vmem:[%s1711 + $0x18] sm:$0xf]
        %v1719 = vld [vmem:[%s1711 + $0x1c] sm:$0xf]
        %v1728 = vunpack.c.l.b16 %v1712
        %v1729 = vunpack.c.l.b16 %v1713
        %v1730 = vunpack.c.l.b16 %v1714
        %v1731 = vunpack.c.l.b16 %v1715
        %v1732 = vunpack.c.l.b16 %v1716
        %v1733 = vunpack.c.l.b16 %v1717
        %v1734 = vunpack.c.l.b16 %v1718
        %v1735 = vunpack.c.l.b16 %v1719
        %v1736 = vpack.c.b16 %v1729, %v1728
        %v1737 = vpack.c.b16 %v1731, %v1730
        %v1738 = vpack.c.b16 %v1733, %v1732
        %v1739 = vpack.c.b16 %v1735, %v1734
        %1748 = vrot.lane.b32.xlu0 %v1695, 127
        %v1749 = vpop.permute.xlu0 %1748
        %1750 = vrot.lane.b32.xlu0 %v1696, 127
        %v1751 = vpop.permute.xlu0 %1750
        %1752 = vrot.lane.b32.xlu0 %v1697, 127
        %v1753 = vpop.permute.xlu0 %1752
        %1754 = vrot.lane.b32.xlu0 %v1698, 127
        %v1755 = vpop.permute.xlu0 %1754
        %1756 = vrot.lane.b32.xlu0 %v1699, 127
        %v1757 = vpop.permute.xlu0 %1756
        %1758 = vrot.lane.b32.xlu0 %v1700, 127
        %v1759 = vpop.permute.xlu0 %1758
        %1760 = vrot.lane.b32.xlu0 %v1701, 127
        %v1761 = vpop.permute.xlu0 %1760
        %1762 = vrot.lane.b32.xlu0 %v1702, 127
        %v1763 = vpop.permute.xlu0 %1762
        %v1764 = vsel %vm594, %v1749, %v1751
        %v1765 = vsel %vm594, %v1753, %v1755
        %v1766 = vsel %vm594, %v1757, %v1759
        %v1767 = vsel %vm594, %v1761, %v1763
        %v1777 = vsel %vm916, %v1736, 0
        %v1780 = vsel %vm916, %v1737, 0
        %v1783 = vsel %vm916, %v1738, 0
        %v1786 = vsel %vm916, %v1739, 0
        %1788 = vmatprep.subr.bf16.mxu0 0
        %1789 = vmatpush1.bf16.msra.mxu0 0
        %1790 = vmatprep.subr.bf16.mxu0 0
        %1791 = vmatpush1.bf16.msra.mxu0 0
        %1792 = vmatprep.subr.bf16.mxu0 0
        %1793 = vmatpush1.bf16.msra.mxu0 0
        %1794 = vmatprep.subr.bf16.mxu0 0
        %1795 = vmatpush1.bf16.msra.mxu0 0
        %1796 = vmatprep.subr.bf16.mxu0 %v1763
        %1797 = vmatpush1.bf16.msra.mxu0 %v1767
        %1798 = vmatprep.subr.bf16.mxu0 %v1759
        %1799 = vmatpush1.bf16.msra.mxu0 %v1766
        %1800 = vmatprep.subr.bf16.mxu0 %v1755
        %1801 = vmatpush1.bf16.msra.mxu0 %v1765
        %1802 = vmatprep.subr.bf16.mxu0 %v1751
        %1803 = vmatpush1.bf16.msra.mxu0 %v1764
        %1804 = vmatprep.subr.bf16.mxu0 0
        %1805 = vmatpush2.bf16.msra.mxu0 0
        %1806 = vmatprep.subr.bf16.mxu0 0
        %1807 = vmatpush2.bf16.msra.mxu0 0
        %1808 = vmatprep.subr.bf16.mxu0 0
        %1809 = vmatpush2.bf16.msra.mxu0 0
        %1810 = vmatprep.subr.bf16.mxu0 0
        %1811 = vmatpush2.bf16.msra.mxu0 0
        %1812 = vmatprep.subr.bf16.mxu0 0
        %1813 = vmatpush2.bf16.msra.mxu0 0
        %1814 = vmatprep.subr.bf16.mxu0 0
        %1815 = vmatpush2.bf16.msra.mxu0 0
        %1816 = vmatprep.subr.bf16.mxu0 0
        %1817 = vmatpush2.bf16.msra.mxu0 0
        %1818 = vmatprep.subr.bf16.mxu0 0
        %1819 = vmatpush2.bf16.msra.mxu0 0
        %1820 = vmatprep.mubr.bf16.mxu0 0
        %1821 = vmatmul.mubr.bf16.gmra.mxu0 %v1777
        %v1822 = vpop.f32.mrf.mxu0
        %v1823 = vadd.f32 0.0, %v1822
        %v1824 = vpop.f32.mrf.mxu0
        %v1825 = vadd.f32 0.0, %v1824
        %v1826 = vpop.f32.mrf.mxu0
        %v1827 = vadd.f32 0.0, %v1826
        %v1828 = vpop.f32.mrf.mxu0
        %v1829 = vadd.f32 0.0, %v1828
        %1830 = vmatprep.mubr.bf16.mxu0 0
        %1831 = vmatmul.mubr.bf16.gmra.mxu0 %v1780
        %v1832 = vpop.f32.mrf.mxu0
        %v1833 = vadd.f32 0.0, %v1832
        %v1834 = vpop.f32.mrf.mxu0
        %v1835 = vadd.f32 0.0, %v1834
        %v1836 = vpop.f32.mrf.mxu0
        %v1837 = vadd.f32 0.0, %v1836
        %v1838 = vpop.f32.mrf.mxu0
        %v1839 = vadd.f32 0.0, %v1838
        %1840 = vmatprep.mubr.bf16.mxu0 0
        %1841 = vmatmul.mubr.bf16.gmra.mxu0 %v1783
        %v1842 = vpop.f32.mrf.mxu0
        %v1843 = vadd.f32 0.0, %v1842
        %v1844 = vpop.f32.mrf.mxu0
        %v1845 = vadd.f32 0.0, %v1844
        %v1846 = vpop.f32.mrf.mxu0
        %v1847 = vadd.f32 0.0, %v1846
        %v1848 = vpop.f32.mrf.mxu0
        %v1849 = vadd.f32 0.0, %v1848
        %1850 = vmatprep.mubr.bf16.mxu0 0
        %1851 = vmatmul.mubr.bf16.gmra.mxu0 %v1786
        %v1852 = vpop.f32.mrf.mxu0
        %v1853 = vadd.f32 0.0, %v1852
        %v1854 = vpop.f32.mrf.mxu0
        %v1855 = vadd.f32 0.0, %v1854
        %v1856 = vpop.f32.mrf.mxu0
        %v1857 = vadd.f32 0.0, %v1856
        %v1858 = vpop.f32.mrf.mxu0
        %v1859 = vadd.f32 0.0, %v1858
        %1860 = vdwg.mxu0
        %v1869 = vunpack.c.l.b16 %v1703
        %v1870 = vunpack.c.l.b16 %v1704
        %v1871 = vunpack.c.l.b16 %v1705
        %v1872 = vunpack.c.l.b16 %v1706
        %v1873 = vunpack.c.l.b16 %v1707
        %v1874 = vunpack.c.l.b16 %v1708
        %v1875 = vunpack.c.l.b16 %v1709
        %v1876 = vunpack.c.l.b16 %v1710
        %v1877 = vpack.c.b16 %v1870, %v1869
        %v1878 = vpack.c.b16 %v1872, %v1871
        %v1879 = vpack.c.b16 %v1874, %v1873
        %v1880 = vpack.c.b16 %v1876, %v1875
        %v1882 = vsel %vm916, %v1877, 0
        %v1885 = vsel %vm916, %v1878, 0
        %v1888 = vsel %vm916, %v1879, 0
        %v1891 = vsel %vm916, %v1880, 0
        %1893 = vmatprep.subr.bf16.mxu0 0
        %1894 = vmatpush1.bf16.msra.mxu0 0
        %1895 = vmatprep.subr.bf16.mxu0 0
        %1896 = vmatpush1.bf16.msra.mxu0 0
        %1897 = vmatprep.subr.bf16.mxu0 0
        %1898 = vmatpush1.bf16.msra.mxu0 0
        %1899 = vmatprep.subr.bf16.mxu0 0
        %1900 = vmatpush1.bf16.msra.mxu0 0
        %1901 = vmatprep.subr.bf16.mxu0 %v1702
        %1902 = vmatpush1.bf16.msra.mxu0 %v1701
        %1903 = vmatprep.subr.bf16.mxu0 %v1700
        %1904 = vmatpush1.bf16.msra.mxu0 %v1699
        %1905 = vmatprep.subr.bf16.mxu0 %v1698
        %1906 = vmatpush1.bf16.msra.mxu0 %v1697
        %1907 = vmatprep.subr.bf16.mxu0 %v1696
        %1908 = vmatpush1.bf16.msra.mxu0 %v1695
        %1909 = vmatprep.subr.bf16.mxu0 0
        %1910 = vmatpush2.bf16.msra.mxu0 0
        %1911 = vmatprep.subr.bf16.mxu0 0
        %1912 = vmatpush2.bf16.msra.mxu0 0
        %1913 = vmatprep.subr.bf16.mxu0 0
        %1914 = vmatpush2.bf16.msra.mxu0 0
        %1915 = vmatprep.subr.bf16.mxu0 0
        %1916 = vmatpush2.bf16.msra.mxu0 0
        %1917 = vmatprep.subr.bf16.mxu0 0
        %1918 = vmatpush2.bf16.msra.mxu0 0
        %1919 = vmatprep.subr.bf16.mxu0 0
        %1920 = vmatpush2.bf16.msra.mxu0 0
        %1921 = vmatprep.subr.bf16.mxu0 0
        %1922 = vmatpush2.bf16.msra.mxu0 0
        %1923 = vmatprep.subr.bf16.mxu0 0
        %1924 = vmatpush2.bf16.msra.mxu0 0
        %1925 = vmatprep.mubr.bf16.mxu0 0
        %1926 = vmatmul.mubr.bf16.gmra.mxu0 %v1882
        %v1927 = vpop.f32.mrf.mxu0
        %v1928 = vadd.f32 %v1823, %v1927
        %v1929 = vpop.f32.mrf.mxu0
        %v1930 = vadd.f32 %v1825, %v1929
        %v1931 = vpop.f32.mrf.mxu0
        %v1932 = vadd.f32 %v1827, %v1931
        %v1933 = vpop.f32.mrf.mxu0
        %v1934 = vadd.f32 %v1829, %v1933
        %1935 = vmatprep.mubr.bf16.mxu0 0
        %1936 = vmatmul.mubr.bf16.gmra.mxu0 %v1885
        %v1937 = vpop.f32.mrf.mxu0
        %v1938 = vadd.f32 %v1833, %v1937
        %v1939 = vpop.f32.mrf.mxu0
        %v1940 = vadd.f32 %v1835, %v1939
        %v1941 = vpop.f32.mrf.mxu0
        %v1942 = vadd.f32 %v1837, %v1941
        %v1943 = vpop.f32.mrf.mxu0
        %v1944 = vadd.f32 %v1839, %v1943
        %1945 = vmatprep.mubr.bf16.mxu0 0
        %1946 = vmatmul.mubr.bf16.gmra.mxu0 %v1888
        %v1947 = vpop.f32.mrf.mxu0
        %v1948 = vadd.f32 %v1843, %v1947
        %v1949 = vpop.f32.mrf.mxu0
        %v1950 = vadd.f32 %v1845, %v1949
        %v1951 = vpop.f32.mrf.mxu0
        %v1952 = vadd.f32 %v1847, %v1951
        %v1953 = vpop.f32.mrf.mxu0
        %v1954 = vadd.f32 %v1849, %v1953
        %1955 = vmatprep.mubr.bf16.mxu0 0
        %1956 = vmatmul.mubr.bf16.gmra.mxu0 %v1891
        %v1957 = vpop.f32.mrf.mxu0
        %v1958 = vadd.f32 %v1853, %v1957
        %v1959 = vpop.f32.mrf.mxu0
        %v1960 = vadd.f32 %v1855, %v1959
        %v1961 = vpop.f32.mrf.mxu0
        %v1962 = vadd.f32 %v1857, %v1961
        %v1963 = vpop.f32.mrf.mxu0
        %v1964 = vadd.f32 %v1859, %v1963
        %1965 = vdwg.mxu0
        %s1966 = scalar_lea.vmem [#allocation8], 64
        %v1967 = vld [vmem:[%s1966] sm:$0xf]
        %v1968 = vld [vmem:[%s1966 + $0x4] sm:$0xf]
        %v1969 = vld [vmem:[%s1966 + $0x8] sm:$0xf]
        %v1970 = vld [vmem:[%s1966 + $0xc] sm:$0xf]
        %v1971 = vld [vmem:[%s1966 + $0x10] sm:$0xf]
        %v1972 = vld [vmem:[%s1966 + $0x14] sm:$0xf]
        %v1973 = vld [vmem:[%s1966 + $0x18] sm:$0xf]
        %v1974 = vld [vmem:[%s1966 + $0x1c] sm:$0xf]
        %v1983 = vunpack.c.l.b16 %v1967
        %v1984 = vunpack.c.l.b16 %v1968
        %v1985 = vunpack.c.l.b16 %v1969
        %v1986 = vunpack.c.l.b16 %v1970
        %v1987 = vunpack.c.l.b16 %v1971
        %v1988 = vunpack.c.l.b16 %v1972
        %v1989 = vunpack.c.l.b16 %v1973
        %v1990 = vunpack.c.l.b16 %v1974
        %v1991 = vpack.c.b16 %v1984, %v1983
        %v1992 = vpack.c.b16 %v1986, %v1985
        %v1993 = vpack.c.b16 %v1988, %v1987
        %v1994 = vpack.c.b16 %v1990, %v1989
        %1995 = vrot.lane.b32.xlu0 %v1695, 126
        %v1996 = vpop.permute.xlu0 %1995
        %1997 = vrot.lane.b32.xlu0 %v1696, 126
        %v1998 = vpop.permute.xlu0 %1997
        %1999 = vrot.lane.b32.xlu0 %v1697, 126
        %v2000 = vpop.permute.xlu0 %1999
        %2001 = vrot.lane.b32.xlu0 %v1698, 126
        %v2002 = vpop.permute.xlu0 %2001
        %2003 = vrot.lane.b32.xlu0 %v1699, 126
        %v2004 = vpop.permute.xlu0 %2003
        %2005 = vrot.lane.b32.xlu0 %v1700, 126
        %v2006 = vpop.permute.xlu0 %2005
        %2007 = vrot.lane.b32.xlu0 %v1701, 126
        %v2008 = vpop.permute.xlu0 %2007
        %2009 = vrot.lane.b32.xlu0 %v1702, 126
        %v2010 = vpop.permute.xlu0 %2009
        %v2011 = vsel %vm602, %v1996, %v1998
        %v2012 = vsel %vm602, %v2000, %v2002
        %v2013 = vsel %vm602, %v2004, %v2006
        %v2014 = vsel %vm602, %v2008, %v2010
        %v2024 = vsel %vm916, %v1991, 0
        %v2027 = vsel %vm916, %v1992, 0
        %v2030 = vsel %vm916, %v1993, 0
        %v2033 = vsel %vm916, %v1994, 0
        %2035 = vmatprep.subr.bf16.mxu0 0
        %2036 = vmatpush1.bf16.msra.mxu0 0
        %2037 = vmatprep.subr.bf16.mxu0 0
        %2038 = vmatpush1.bf16.msra.mxu0 0
        %2039 = vmatprep.subr.bf16.mxu0 0
        %2040 = vmatpush1.bf16.msra.mxu0 0
        %2041 = vmatprep.subr.bf16.mxu0 0
        %2042 = vmatpush1.bf16.msra.mxu0 0
        %2043 = vmatprep.subr.bf16.mxu0 %v2010
        %2044 = vmatpush1.bf16.msra.mxu0 %v2014
        %2045 = vmatprep.subr.bf16.mxu0 %v2006
        %2046 = vmatpush1.bf16.msra.mxu0 %v2013
        %2047 = vmatprep.subr.bf16.mxu0 %v2002
        %2048 = vmatpush1.bf16.msra.mxu0 %v2012
        %2049 = vmatprep.subr.bf16.mxu0 %v1998
        %2050 = vmatpush1.bf16.msra.mxu0 %v2011
        %2051 = vmatprep.subr.bf16.mxu0 0
        %2052 = vmatpush2.bf16.msra.mxu0 0
        %2053 = vmatprep.subr.bf16.mxu0 0
        %2054 = vmatpush2.bf16.msra.mxu0 0
        %2055 = vmatprep.subr.bf16.mxu0 0
        %2056 = vmatpush2.bf16.msra.mxu0 0
        %2057 = vmatprep.subr.bf16.mxu0 0
        %2058 = vmatpush2.bf16.msra.mxu0 0
        %2059 = vmatprep.subr.bf16.mxu0 0
        %2060 = vmatpush2.bf16.msra.mxu0 0
        %2061 = vmatprep.subr.bf16.mxu0 0
        %2062 = vmatpush2.bf16.msra.mxu0 0
        %2063 = vmatprep.subr.bf16.mxu0 0
        %2064 = vmatpush2.bf16.msra.mxu0 0
        %2065 = vmatprep.subr.bf16.mxu0 0
        %2066 = vmatpush2.bf16.msra.mxu0 0
        %2067 = vmatprep.mubr.bf16.mxu0 0
        %2068 = vmatmul.mubr.bf16.gmra.mxu0 %v2024
        %v2069 = vpop.f32.mrf.mxu0
        %v2070 = vadd.f32 0.0, %v2069
        %v2071 = vpop.f32.mrf.mxu0
        %v2072 = vadd.f32 0.0, %v2071
        %v2073 = vpop.f32.mrf.mxu0
        %v2074 = vadd.f32 0.0, %v2073
        %v2075 = vpop.f32.mrf.mxu0
        %v2076 = vadd.f32 0.0, %v2075
        %2077 = vmatprep.mubr.bf16.mxu0 0
        %2078 = vmatmul.mubr.bf16.gmra.mxu0 %v2027
        %v2079 = vpop.f32.mrf.mxu0
        %v2080 = vadd.f32 0.0, %v2079
        %v2081 = vpop.f32.mrf.mxu0
        %v2082 = vadd.f32 0.0, %v2081
        %v2083 = vpop.f32.mrf.mxu0
        %v2084 = vadd.f32 0.0, %v2083
        %v2085 = vpop.f32.mrf.mxu0
        %v2086 = vadd.f32 0.0, %v2085
        %2087 = vmatprep.mubr.bf16.mxu0 0
        %2088 = vmatmul.mubr.bf16.gmra.mxu0 %v2030
        %v2089 = vpop.f32.mrf.mxu0
        %v2090 = vadd.f32 0.0, %v2089
        %v2091 = vpop.f32.mrf.mxu0
        %v2092 = vadd.f32 0.0, %v2091
        %v2093 = vpop.f32.mrf.mxu0
        %v2094 = vadd.f32 0.0, %v2093
        %v2095 = vpop.f32.mrf.mxu0
        %v2096 = vadd.f32 0.0, %v2095
        %2097 = vmatprep.mubr.bf16.mxu0 0
        %2098 = vmatmul.mubr.bf16.gmra.mxu0 %v2033
        %v2099 = vpop.f32.mrf.mxu0
        %v2100 = vadd.f32 0.0, %v2099
        %v2101 = vpop.f32.mrf.mxu0
        %v2102 = vadd.f32 0.0, %v2101
        %v2103 = vpop.f32.mrf.mxu0
        %v2104 = vadd.f32 0.0, %v2103
        %v2105 = vpop.f32.mrf.mxu0
        %v2106 = vadd.f32 0.0, %v2105
        %2107 = vdwg.mxu0
        %v2108 = vadd.f32 %v1928, %v2070
        %v2109 = vadd.f32 %v1930, %v2072
        %v2110 = vadd.f32 %v1932, %v2074
        %v2111 = vadd.f32 %v1934, %v2076
        %v2112 = vadd.f32 %v1938, %v2080
        %v2113 = vadd.f32 %v1940, %v2082
        %v2114 = vadd.f32 %v1942, %v2084
        %v2115 = vadd.f32 %v1944, %v2086
        %v2116 = vadd.f32 %v1948, %v2090
        %v2117 = vadd.f32 %v1950, %v2092
        %v2118 = vadd.f32 %v1952, %v2094
        %v2119 = vadd.f32 %v1954, %v2096
        %v2120 = vadd.f32 %v1958, %v2100
        %v2121 = vadd.f32 %v1960, %v2102
        %v2122 = vadd.f32 %v1962, %v2104
        %v2123 = vadd.f32 %v1964, %v2106
        %s2124 = scalar_lea.vmem [#allocation8], 96
        %v2125 = vld [vmem:[%s2124] sm:$0xf]
        %v2126 = vld [vmem:[%s2124 + $0x4] sm:$0xf]
        %v2127 = vld [vmem:[%s2124 + $0x8] sm:$0xf]
        %v2128 = vld [vmem:[%s2124 + $0xc] sm:$0xf]
        %v2129 = vld [vmem:[%s2124 + $0x10] sm:$0xf]
        %v2130 = vld [vmem:[%s2124 + $0x14] sm:$0xf]
        %v2131 = vld [vmem:[%s2124 + $0x18] sm:$0xf]
        %v2132 = vld [vmem:[%s2124 + $0x1c] sm:$0xf]
        %v2141 = vunpack.c.l.b16 %v2125
        %v2142 = vunpack.c.l.b16 %v2126
        %v2143 = vunpack.c.l.b16 %v2127
        %v2144 = vunpack.c.l.b16 %v2128
        %v2145 = vunpack.c.l.b16 %v2129
        %v2146 = vunpack.c.l.b16 %v2130
        %v2147 = vunpack.c.l.b16 %v2131
        %v2148 = vunpack.c.l.b16 %v2132
        %v2149 = vpack.c.b16 %v2142, %v2141
        %v2150 = vpack.c.b16 %v2144, %v2143
        %v2151 = vpack.c.b16 %v2146, %v2145
        %v2152 = vpack.c.b16 %v2148, %v2147
        %2153 = vrot.lane.b32.xlu0 %v1695, 125
        %v2154 = vpop.permute.xlu0 %2153
        %2155 = vrot.lane.b32.xlu0 %v1696, 125
        %v2156 = vpop.permute.xlu0 %2155
        %2157 = vrot.lane.b32.xlu0 %v1697, 125
        %v2158 = vpop.permute.xlu0 %2157
        %2159 = vrot.lane.b32.xlu0 %v1698, 125
        %v2160 = vpop.permute.xlu0 %2159
        %2161 = vrot.lane.b32.xlu0 %v1699, 125
        %v2162 = vpop.permute.xlu0 %2161
        %2163 = vrot.lane.b32.xlu0 %v1700, 125
        %v2164 = vpop.permute.xlu0 %2163
        %2165 = vrot.lane.b32.xlu0 %v1701, 125
        %v2166 = vpop.permute.xlu0 %2165
        %2167 = vrot.lane.b32.xlu0 %v1702, 125
        %v2168 = vpop.permute.xlu0 %2167
        %v2169 = vsel %vm610, %v2154, %v2156
        %v2170 = vsel %vm610, %v2158, %v2160
        %v2171 = vsel %vm610, %v2162, %v2164
        %v2172 = vsel %vm610, %v2166, %v2168
        %v2182 = vsel %vm916, %v2149, 0
        %v2185 = vsel %vm916, %v2150, 0
        %v2188 = vsel %vm916, %v2151, 0
        %v2191 = vsel %vm916, %v2152, 0
        %2193 = vmatprep.subr.bf16.mxu0 0
        %2194 = vmatpush1.bf16.msra.mxu0 0
        %2195 = vmatprep.subr.bf16.mxu0 0
        %2196 = vmatpush1.bf16.msra.mxu0 0
        %2197 = vmatprep.subr.bf16.mxu0 0
        %2198 = vmatpush1.bf16.msra.mxu0 0
        %2199 = vmatprep.subr.bf16.mxu0 0
        %2200 = vmatpush1.bf16.msra.mxu0 0
        %2201 = vmatprep.subr.bf16.mxu0 %v2168
        %2202 = vmatpush1.bf16.msra.mxu0 %v2172
        %2203 = vmatprep.subr.bf16.mxu0 %v2164
        %2204 = vmatpush1.bf16.msra.mxu0 %v2171
        %2205 = vmatprep.subr.bf16.mxu0 %v2160
        %2206 = vmatpush1.bf16.msra.mxu0 %v2170
        %2207 = vmatprep.subr.bf16.mxu0 %v2156
        %2208 = vmatpush1.bf16.msra.mxu0 %v2169
        %2209 = vmatprep.subr.bf16.mxu0 0
        %2210 = vmatpush2.bf16.msra.mxu0 0
        %2211 = vmatprep.subr.bf16.mxu0 0
        %2212 = vmatpush2.bf16.msra.mxu0 0
        %2213 = vmatprep.subr.bf16.mxu0 0
        %2214 = vmatpush2.bf16.msra.mxu0 0
        %2215 = vmatprep.subr.bf16.mxu0 0
        %2216 = vmatpush2.bf16.msra.mxu0 0
        %2217 = vmatprep.subr.bf16.mxu0 0
        %2218 = vmatpush2.bf16.msra.mxu0 0
        %2219 = vmatprep.subr.bf16.mxu0 0
        %2220 = vmatpush2.bf16.msra.mxu0 0
        %2221 = vmatprep.subr.bf16.mxu0 0
        %2222 = vmatpush2.bf16.msra.mxu0 0
        %2223 = vmatprep.subr.bf16.mxu0 0
        %2224 = vmatpush2.bf16.msra.mxu0 0
        %2225 = vmatprep.mubr.bf16.mxu0 0
        %2226 = vmatmul.mubr.bf16.gmra.mxu0 %v2182
        %v2227 = vpop.f32.mrf.mxu0
        %v2228 = vadd.f32 0.0, %v2227
        %v2229 = vpop.f32.mrf.mxu0
        %v2230 = vadd.f32 0.0, %v2229
        %v2231 = vpop.f32.mrf.mxu0
        %v2232 = vadd.f32 0.0, %v2231
        %v2233 = vpop.f32.mrf.mxu0
        %v2234 = vadd.f32 0.0, %v2233
        %2235 = vmatprep.mubr.bf16.mxu0 0
        %2236 = vmatmul.mubr.bf16.gmra.mxu0 %v2185
        %v2237 = vpop.f32.mrf.mxu0
        %v2238 = vadd.f32 0.0, %v2237
        %v2239 = vpop.f32.mrf.mxu0
        %v2240 = vadd.f32 0.0, %v2239
        %v2241 = vpop.f32.mrf.mxu0
        %v2242 = vadd.f32 0.0, %v2241
        %v2243 = vpop.f32.mrf.mxu0
        %v2244 = vadd.f32 0.0, %v2243
        %2245 = vmatprep.mubr.bf16.mxu0 0
        %2246 = vmatmul.mubr.bf16.gmra.mxu0 %v2188
        %v2247 = vpop.f32.mrf.mxu0
        %v2248 = vadd.f32 0.0, %v2247
        %v2249 = vpop.f32.mrf.mxu0
        %v2250 = vadd.f32 0.0, %v2249
        %v2251 = vpop.f32.mrf.mxu0
        %v2252 = vadd.f32 0.0, %v2251
        %v2253 = vpop.f32.mrf.mxu0
        %v2254 = vadd.f32 0.0, %v2253
        %2255 = vmatprep.mubr.bf16.mxu0 0
        %2256 = vmatmul.mubr.bf16.gmra.mxu0 %v2191
        %v2257 = vpop.f32.mrf.mxu0
        %v2258 = vadd.f32 0.0, %v2257
        %v2259 = vpop.f32.mrf.mxu0
        %v2260 = vadd.f32 0.0, %v2259
        %v2261 = vpop.f32.mrf.mxu0
        %v2262 = vadd.f32 0.0, %v2261
        %v2263 = vpop.f32.mrf.mxu0
        %v2264 = vadd.f32 0.0, %v2263
        %2265 = vdwg.mxu0
        %v2266 = vadd.f32 %v2108, %v2228
        %v2267 = vadd.f32 %v2109, %v2230
        %v2268 = vadd.f32 %v2110, %v2232
        %v2269 = vadd.f32 %v2111, %v2234
        %v2270 = vadd.f32 %v2112, %v2238
        %v2271 = vadd.f32 %v2113, %v2240
        %v2272 = vadd.f32 %v2114, %v2242
        %v2273 = vadd.f32 %v2115, %v2244
        %v2274 = vadd.f32 %v2116, %v2248
        %v2275 = vadd.f32 %v2117, %v2250
        %v2276 = vadd.f32 %v2118, %v2252
        %v2277 = vadd.f32 %v2119, %v2254
        %v2278 = vadd.f32 %v2120, %v2258
        %v2279 = vadd.f32 %v2121, %v2260
        %v2280 = vadd.f32 %v2122, %v2262
        %v2281 = vadd.f32 %v2123, %v2264
        %s2282 = scalar_lea.vmem [#allocation8], 128
        %v2283 = vld [vmem:[%s2282] sm:$0xf]
        %v2284 = vld [vmem:[%s2282 + $0x4] sm:$0xf]
        %v2285 = vld [vmem:[%s2282 + $0x8] sm:$0xf]
        %v2286 = vld [vmem:[%s2282 + $0xc] sm:$0xf]
        %v2287 = vld [vmem:[%s2282 + $0x10] sm:$0xf]
        %v2288 = vld [vmem:[%s2282 + $0x14] sm:$0xf]
        %v2289 = vld [vmem:[%s2282 + $0x18] sm:$0xf]
        %v2290 = vld [vmem:[%s2282 + $0x1c] sm:$0xf]
        %v2299 = vunpack.c.l.b16 %v2283
        %v2300 = vunpack.c.l.b16 %v2284
        %v2301 = vunpack.c.l.b16 %v2285
        %v2302 = vunpack.c.l.b16 %v2286
        %v2303 = vunpack.c.l.b16 %v2287
        %v2304 = vunpack.c.l.b16 %v2288
        %v2305 = vunpack.c.l.b16 %v2289
        %v2306 = vunpack.c.l.b16 %v2290
        %v2307 = vpack.c.b16 %v2300, %v2299
        %v2308 = vpack.c.b16 %v2302, %v2301
        %v2309 = vpack.c.b16 %v2304, %v2303
        %v2310 = vpack.c.b16 %v2306, %v2305
        %2311 = vrot.lane.b32.xlu0 %v1695, 124
        %v2312 = vpop.permute.xlu0 %2311
        %2313 = vrot.lane.b32.xlu0 %v1696, 124
        %v2314 = vpop.permute.xlu0 %2313
        %2315 = vrot.lane.b32.xlu0 %v1697, 124
        %v2316 = vpop.permute.xlu0 %2315
        %2317 = vrot.lane.b32.xlu0 %v1698, 124
        %v2318 = vpop.permute.xlu0 %2317
        %2319 = vrot.lane.b32.xlu0 %v1699, 124
        %v2320 = vpop.permute.xlu0 %2319
        %2321 = vrot.lane.b32.xlu0 %v1700, 124
        %v2322 = vpop.permute.xlu0 %2321
        %2323 = vrot.lane.b32.xlu0 %v1701, 124
        %v2324 = vpop.permute.xlu0 %2323
        %2325 = vrot.lane.b32.xlu0 %v1702, 124
        %v2326 = vpop.permute.xlu0 %2325
        %v2327 = vsel %vm618, %v2312, %v2314
        %v2328 = vsel %vm618, %v2316, %v2318
        %v2329 = vsel %vm618, %v2320, %v2322
        %v2330 = vsel %vm618, %v2324, %v2326
        %v2340 = vsel %vm916, %v2307, 0
        %v2343 = vsel %vm916, %v2308, 0
        %v2346 = vsel %vm916, %v2309, 0
        %v2349 = vsel %vm916, %v2310, 0
        %2351 = vmatprep.subr.bf16.mxu0 0
        %2352 = vmatpush1.bf16.msra.mxu0 0
        %2353 = vmatprep.subr.bf16.mxu0 0
        %2354 = vmatpush1.bf16.msra.mxu0 0
        %2355 = vmatprep.subr.bf16.mxu0 0
        %2356 = vmatpush1.bf16.msra.mxu0 0
        %2357 = vmatprep.subr.bf16.mxu0 0
        %2358 = vmatpush1.bf16.msra.mxu0 0
        %2359 = vmatprep.subr.bf16.mxu0 %v2326
        %2360 = vmatpush1.bf16.msra.mxu0 %v2330
        %2361 = vmatprep.subr.bf16.mxu0 %v2322
        %2362 = vmatpush1.bf16.msra.mxu0 %v2329
        %2363 = vmatprep.subr.bf16.mxu0 %v2318
        %2364 = vmatpush1.bf16.msra.mxu0 %v2328
        %2365 = vmatprep.subr.bf16.mxu0 %v2314
        %2366 = vmatpush1.bf16.msra.mxu0 %v2327
        %2367 = vmatprep.subr.bf16.mxu0 0
        %2368 = vmatpush2.bf16.msra.mxu0 0
        %2369 = vmatprep.subr.bf16.mxu0 0
        %2370 = vmatpush2.bf16.msra.mxu0 0
        %2371 = vmatprep.subr.bf16.mxu0 0
        %2372 = vmatpush2.bf16.msra.mxu0 0
        %2373 = vmatprep.subr.bf16.mxu0 0
        %2374 = vmatpush2.bf16.msra.mxu0 0
        %2375 = vmatprep.subr.bf16.mxu0 0
        %2376 = vmatpush2.bf16.msra.mxu0 0
        %2377 = vmatprep.subr.bf16.mxu0 0
        %2378 = vmatpush2.bf16.msra.mxu0 0
        %2379 = vmatprep.subr.bf16.mxu0 0
        %2380 = vmatpush2.bf16.msra.mxu0 0
        %2381 = vmatprep.subr.bf16.mxu0 0
        %2382 = vmatpush2.bf16.msra.mxu0 0
        %2383 = vmatprep.mubr.bf16.mxu0 0
        %2384 = vmatmul.mubr.bf16.gmra.mxu0 %v2340
        %v2385 = vpop.f32.mrf.mxu0
        %v2386 = vadd.f32 0.0, %v2385
        %v2387 = vpop.f32.mrf.mxu0
        %v2388 = vadd.f32 0.0, %v2387
        %v2389 = vpop.f32.mrf.mxu0
        %v2390 = vadd.f32 0.0, %v2389
        %v2391 = vpop.f32.mrf.mxu0
        %v2392 = vadd.f32 0.0, %v2391
        %2393 = vmatprep.mubr.bf16.mxu0 0
        %2394 = vmatmul.mubr.bf16.gmra.mxu0 %v2343
        %v2395 = vpop.f32.mrf.mxu0
        %v2396 = vadd.f32 0.0, %v2395
        %v2397 = vpop.f32.mrf.mxu0
        %v2398 = vadd.f32 0.0, %v2397
        %v2399 = vpop.f32.mrf.mxu0
        %v2400 = vadd.f32 0.0, %v2399
        %v2401 = vpop.f32.mrf.mxu0
        %v2402 = vadd.f32 0.0, %v2401
        %2403 = vmatprep.mubr.bf16.mxu0 0
        %2404 = vmatmul.mubr.bf16.gmra.mxu0 %v2346
        %v2405 = vpop.f32.mrf.mxu0
        %v2406 = vadd.f32 0.0, %v2405
        %v2407 = vpop.f32.mrf.mxu0
        %v2408 = vadd.f32 0.0, %v2407
        %v2409 = vpop.f32.mrf.mxu0
        %v2410 = vadd.f32 0.0, %v2409
        %v2411 = vpop.f32.mrf.mxu0
        %v2412 = vadd.f32 0.0, %v2411
        %2413 = vmatprep.mubr.bf16.mxu0 0
        %2414 = vmatmul.mubr.bf16.gmra.mxu0 %v2349
        %v2415 = vpop.f32.mrf.mxu0
        %v2416 = vadd.f32 0.0, %v2415
        %v2417 = vpop.f32.mrf.mxu0
        %v2418 = vadd.f32 0.0, %v2417
        %v2419 = vpop.f32.mrf.mxu0
        %v2420 = vadd.f32 0.0, %v2419
        %v2421 = vpop.f32.mrf.mxu0
        %v2422 = vadd.f32 0.0, %v2421
        %2423 = vdwg.mxu0
        %v2424 = vadd.f32 %v2266, %v2386
        %v2425 = vadd.f32 %v2267, %v2388
        %v2426 = vadd.f32 %v2268, %v2390
        %v2427 = vadd.f32 %v2269, %v2392
        %v2428 = vadd.f32 %v2270, %v2396
        %v2429 = vadd.f32 %v2271, %v2398
        %v2430 = vadd.f32 %v2272, %v2400
        %v2431 = vadd.f32 %v2273, %v2402
        %v2432 = vadd.f32 %v2274, %v2406
        %v2433 = vadd.f32 %v2275, %v2408
        %v2434 = vadd.f32 %v2276, %v2410
        %v2435 = vadd.f32 %v2277, %v2412
        %v2436 = vadd.f32 %v2278, %v2416
        %v2437 = vadd.f32 %v2279, %v2418
        %v2438 = vadd.f32 %v2280, %v2420
        %v2439 = vadd.f32 %v2281, %v2422
        %v2440 = vld [vmem:[%s7] sm:$0xff]
        %v2441 = vld [vmem:[%s7 + $0x8] sm:$0xff]
        %v2442 = vld [vmem:[%s7 + $0x10] sm:$0xff]
        %v2443 = vld [vmem:[%s7 + $0x18] sm:$0xff]
        %v2444 = vld [vmem:[%s7 + $0x20] sm:$0xff]
        %v2445 = vld [vmem:[%s7 + $0x28] sm:$0xff]
        %v2446 = vld [vmem:[%s7 + $0x30] sm:$0xff]
        %v2447 = vld [vmem:[%s7 + $0x38] sm:$0xff]
        %2449 = vset.pattern.permute.xlu0 0
        %2450 = vperm.xlu0 %2449, %v2440
        %v2451 = vpop.permute.xlu0 %2450
        %2454 = vset.pattern.permute.xlu0 0
        %2455 = vperm.xlu0 %2454, %v2441
        %v2456 = vpop.permute.xlu0 %2455
        %2459 = vset.pattern.permute.xlu0 0
        %2460 = vperm.xlu0 %2459, %v2442
        %v2461 = vpop.permute.xlu0 %2460
        %2464 = vset.pattern.permute.xlu0 0
        %2465 = vperm.xlu0 %2464, %v2443
        %v2466 = vpop.permute.xlu0 %2465
        %2469 = vset.pattern.permute.xlu0 0
        %2470 = vperm.xlu0 %2469, %v2444
        %v2471 = vpop.permute.xlu0 %2470
        %2474 = vset.pattern.permute.xlu0 0
        %2475 = vperm.xlu0 %2474, %v2445
        %v2476 = vpop.permute.xlu0 %2475
        %2479 = vset.pattern.permute.xlu0 0
        %2480 = vperm.xlu0 %2479, %v2446
        %v2481 = vpop.permute.xlu0 %2480
        %2484 = vset.pattern.permute.xlu0 0
        %2485 = vperm.xlu0 %2484, %v2447
        %v2486 = vpop.permute.xlu0 %2485
        %v2488 = vadd.f32 %v2424, %v2451
        %v2489 = vadd.f32 %v2425, %v2451
        %v2490 = vadd.f32 %v2426, %v2456
        %v2491 = vadd.f32 %v2427, %v2456
        %v2492 = vadd.f32 %v2428, %v2461
        %v2493 = vadd.f32 %v2429, %v2461
        %v2494 = vadd.f32 %v2430, %v2466
        %v2495 = vadd.f32 %v2431, %v2466
        %v2496 = vadd.f32 %v2432, %v2471
        %v2497 = vadd.f32 %v2433, %v2471
        %v2498 = vadd.f32 %v2434, %v2476
        %v2499 = vadd.f32 %v2435, %v2476
        %v2500 = vadd.f32 %v2436, %v2481
        %v2501 = vadd.f32 %v2437, %v2481
        %v2502 = vadd.f32 %v2438, %v2486
        %v2503 = vadd.f32 %v2439, %v2486
        %v2504 = vtanh.pop %v2488
        %v2505 = vtanh.pop %v2489
        %v2506 = vtanh.pop %v2490
        %v2507 = vtanh.pop %v2491
        %v2508 = vtanh.pop %v2492
        %v2509 = vtanh.pop %v2493
        %v2510 = vtanh.pop %v2494
        %v2511 = vtanh.pop %v2495
        %v2512 = vtanh.pop %v2496
        %v2513 = vtanh.pop %v2497
        %v2514 = vtanh.pop %v2498
        %v2515 = vtanh.pop %v2499
        %v2516 = vtanh.pop %v2500
        %v2517 = vtanh.pop %v2501
        %v2518 = vtanh.pop %v2502
        %v2519 = vtanh.pop %v2503
        %v2520 = vpack.c.bf16 %v2506, %v2504
        %v2521 = vpack.c.bf16 %v2507, %v2505
        %v2522 = vpack.c.bf16 %v2510, %v2508
        %v2523 = vpack.c.bf16 %v2511, %v2509
        %v2524 = vpack.c.bf16 %v2514, %v2512
        %v2525 = vpack.c.bf16 %v2515, %v2513
        %v2526 = vpack.c.bf16 %v2518, %v2516
        %v2527 = vpack.c.bf16 %v2519, %v2517
        %s2528 = ssub.s32 4, %s808
        %s2529 = ssub.s32 304, %s808
        %v2530 = vstv %s2528
        %vm2531 = vcmp.ge.s32.totalorder %v588, %v2530
        %vm2532 = vcmp.ge.s32.totalorder %v589, %v2530
        %v2533 = vstv %s2529
        %vm2534 = vcmp.lt.s32.totalorder %v588, %v2533
        %vm2535 = vcmp.lt.s32.totalorder %v589, %v2533
        %vm2536 = vmand %vm2531, %vm2534
        %vm2537 = vmand %vm2532, %vm2535
        %v2538 = vsel %vm2536, 1, 0
        %v2539 = vsel %vm2537, 1, 0
        %vm2540 = vcmp.eq.s32.totalorder %v2538, 1
        %vm2541 = vcmp.eq.s32.totalorder %v2539, 1
        %vm2542 = vmpackc.low %vm2541, %vm2540
        %v2543 = vsel %vm2542, 65537, 0
        %v2544 = vlaneseq
        %v2545 = vshrl.u32 %v2544, 7
        %v2546 = vsub.s32 0, %v2545
        %v2547 = vrot.slane %v2543, %v2546
        %v2548 = vlaneseq
        %v2549 = vshrl.u32 %v2548, 7
        %v2550 = vsub.s32 4, %v2549
        %v2551 = vrot.slane %v2543, %v2550
        %vm2552 = vcmp.ne.s16.totalorder %v2547, 0
        %vm2553 = vcmp.ne.s16.totalorder %v2551, 0
        %v2554 = vsel %vm2552, %v2520, 0
        %v2555 = vsel %vm2553, %v2521, 0
        %v2556 = vsel %vm2552, %v2522, 0
        %v2557 = vsel %vm2553, %v2523, 0
        %v2558 = vsel %vm2552, %v2524, 0
        %v2559 = vsel %vm2553, %v2525, 0
        %v2560 = vsel %vm2552, %v2526, 0
        %v2561 = vsel %vm2553, %v2527, 0
        %v2562 = vld [vmem:[#allocation9] sm:$0xf]
        %v2563 = vld [vmem:[#allocation9 + $0x4] sm:$0xf]
        %v2564 = vld [vmem:[#allocation9 + $0x8] sm:$0xf]
        %v2565 = vld [vmem:[#allocation9 + $0xc] sm:$0xf]
        %v2566 = vld [vmem:[#allocation9 + $0x10] sm:$0xf]
        %v2567 = vld [vmem:[#allocation9 + $0x14] sm:$0xf]
        %v2568 = vld [vmem:[#allocation9 + $0x18] sm:$0xf]
        %v2569 = vld [vmem:[#allocation9 + $0x1c] sm:$0xf]
        %s2570 = scalar_lea.vmem [#allocation9], 32
        %v2571 = vld [vmem:[%s2570] sm:$0xf]
        %v2572 = vld [vmem:[%s2570 + $0x4] sm:$0xf]
        %v2573 = vld [vmem:[%s2570 + $0x8] sm:$0xf]
        %v2574 = vld [vmem:[%s2570 + $0xc] sm:$0xf]
        %v2575 = vld [vmem:[%s2570 + $0x10] sm:$0xf]
        %v2576 = vld [vmem:[%s2570 + $0x14] sm:$0xf]
        %v2577 = vld [vmem:[%s2570 + $0x18] sm:$0xf]
        %v2578 = vld [vmem:[%s2570 + $0x1c] sm:$0xf]
        %v2587 = vunpack.c.l.b16 %v2571
        %v2588 = vunpack.c.l.b16 %v2572
        %v2589 = vunpack.c.l.b16 %v2573
        %v2590 = vunpack.c.l.b16 %v2574
        %v2591 = vunpack.c.l.b16 %v2575
        %v2592 = vunpack.c.l.b16 %v2576
        %v2593 = vunpack.c.l.b16 %v2577
        %v2594 = vunpack.c.l.b16 %v2578
        %v2595 = vpack.c.b16 %v2588, %v2587
        %v2596 = vpack.c.b16 %v2590, %v2589
        %v2597 = vpack.c.b16 %v2592, %v2591
        %v2598 = vpack.c.b16 %v2594, %v2593
        %2607 = vrot.lane.b32.xlu0 %v2554, 127
        %v2608 = vpop.permute.xlu0 %2607
        %2609 = vrot.lane.b32.xlu0 %v2555, 127
        %v2610 = vpop.permute.xlu0 %2609
        %2611 = vrot.lane.b32.xlu0 %v2556, 127
        %v2612 = vpop.permute.xlu0 %2611
        %2613 = vrot.lane.b32.xlu0 %v2557, 127
        %v2614 = vpop.permute.xlu0 %2613
        %2615 = vrot.lane.b32.xlu0 %v2558, 127
        %v2616 = vpop.permute.xlu0 %2615
        %2617 = vrot.lane.b32.xlu0 %v2559, 127
        %v2618 = vpop.permute.xlu0 %2617
        %2619 = vrot.lane.b32.xlu0 %v2560, 127
        %v2620 = vpop.permute.xlu0 %2619
        %2621 = vrot.lane.b32.xlu0 %v2561, 127
        %v2622 = vpop.permute.xlu0 %2621
        %v2623 = vsel %vm594, %v2608, %v2610
        %v2624 = vsel %vm594, %v2612, %v2614
        %v2625 = vsel %vm594, %v2616, %v2618
        %v2626 = vsel %vm594, %v2620, %v2622
        %v2636 = vsel %vm916, %v2595, 0
        %v2639 = vsel %vm916, %v2596, 0
        %v2642 = vsel %vm916, %v2597, 0
        %v2645 = vsel %vm916, %v2598, 0
        %2647 = vmatprep.subr.bf16.mxu0 0
        %2648 = vmatpush1.bf16.msra.mxu0 0
        %2649 = vmatprep.subr.bf16.mxu0 0
        %2650 = vmatpush1.bf16.msra.mxu0 0
        %2651 = vmatprep.subr.bf16.mxu0 0
        %2652 = vmatpush1.bf16.msra.mxu0 0
        %2653 = vmatprep.subr.bf16.mxu0 0
        %2654 = vmatpush1.bf16.msra.mxu0 0
        %2655 = vmatprep.subr.bf16.mxu0 %v2622
        %2656 = vmatpush1.bf16.msra.mxu0 %v2626
        %2657 = vmatprep.subr.bf16.mxu0 %v2618
        %2658 = vmatpush1.bf16.msra.mxu0 %v2625
        %2659 = vmatprep.subr.bf16.mxu0 %v2614
        %2660 = vmatpush1.bf16.msra.mxu0 %v2624
        %2661 = vmatprep.subr.bf16.mxu0 %v2610
        %2662 = vmatpush1.bf16.msra.mxu0 %v2623
        %2663 = vmatprep.subr.bf16.mxu0 0
        %2664 = vmatpush2.bf16.msra.mxu0 0
        %2665 = vmatprep.subr.bf16.mxu0 0
        %2666 = vmatpush2.bf16.msra.mxu0 0
        %2667 = vmatprep.subr.bf16.mxu0 0
        %2668 = vmatpush2.bf16.msra.mxu0 0
        %2669 = vmatprep.subr.bf16.mxu0 0
        %2670 = vmatpush2.bf16.msra.mxu0 0
        %2671 = vmatprep.subr.bf16.mxu0 0
        %2672 = vmatpush2.bf16.msra.mxu0 0
        %2673 = vmatprep.subr.bf16.mxu0 0
        %2674 = vmatpush2.bf16.msra.mxu0 0
        %2675 = vmatprep.subr.bf16.mxu0 0
        %2676 = vmatpush2.bf16.msra.mxu0 0
        %2677 = vmatprep.subr.bf16.mxu0 0
        %2678 = vmatpush2.bf16.msra.mxu0 0
        %2679 = vmatprep.mubr.bf16.mxu0 0
        %2680 = vmatmul.mubr.bf16.gmra.mxu0 %v2636
        %v2681 = vpop.f32.mrf.mxu0
        %v2682 = vadd.f32 0.0, %v2681
        %v2683 = vpop.f32.mrf.mxu0
        %v2684 = vadd.f32 0.0, %v2683
        %v2685 = vpop.f32.mrf.mxu0
        %v2686 = vadd.f32 0.0, %v2685
        %v2687 = vpop.f32.mrf.mxu0
        %v2688 = vadd.f32 0.0, %v2687
        %2689 = vmatprep.mubr.bf16.mxu0 0
        %2690 = vmatmul.mubr.bf16.gmra.mxu0 %v2639
        %v2691 = vpop.f32.mrf.mxu0
        %v2692 = vadd.f32 0.0, %v2691
        %v2693 = vpop.f32.mrf.mxu0
        %v2694 = vadd.f32 0.0, %v2693
        %v2695 = vpop.f32.mrf.mxu0
        %v2696 = vadd.f32 0.0, %v2695
        %v2697 = vpop.f32.mrf.mxu0
        %v2698 = vadd.f32 0.0, %v2697
        %2699 = vmatprep.mubr.bf16.mxu0 0
        %2700 = vmatmul.mubr.bf16.gmra.mxu0 %v2642
        %v2701 = vpop.f32.mrf.mxu0
        %v2702 = vadd.f32 0.0, %v2701
        %v2703 = vpop.f32.mrf.mxu0
        %v2704 = vadd.f32 0.0, %v2703
        %v2705 = vpop.f32.mrf.mxu0
        %v2706 = vadd.f32 0.0, %v2705
        %v2707 = vpop.f32.mrf.mxu0
        %v2708 = vadd.f32 0.0, %v2707
        %2709 = vmatprep.mubr.bf16.mxu0 0
        %2710 = vmatmul.mubr.bf16.gmra.mxu0 %v2645
        %v2711 = vpop.f32.mrf.mxu0
        %v2712 = vadd.f32 0.0, %v2711
        %v2713 = vpop.f32.mrf.mxu0
        %v2714 = vadd.f32 0.0, %v2713
        %v2715 = vpop.f32.mrf.mxu0
        %v2716 = vadd.f32 0.0, %v2715
        %v2717 = vpop.f32.mrf.mxu0
        %v2718 = vadd.f32 0.0, %v2717
        %2719 = vdwg.mxu0
        %v2728 = vunpack.c.l.b16 %v2562
        %v2729 = vunpack.c.l.b16 %v2563
        %v2730 = vunpack.c.l.b16 %v2564
        %v2731 = vunpack.c.l.b16 %v2565
        %v2732 = vunpack.c.l.b16 %v2566
        %v2733 = vunpack.c.l.b16 %v2567
        %v2734 = vunpack.c.l.b16 %v2568
        %v2735 = vunpack.c.l.b16 %v2569
        %v2736 = vpack.c.b16 %v2729, %v2728
        %v2737 = vpack.c.b16 %v2731, %v2730
        %v2738 = vpack.c.b16 %v2733, %v2732
        %v2739 = vpack.c.b16 %v2735, %v2734
        %v2741 = vsel %vm916, %v2736, 0
        %v2744 = vsel %vm916, %v2737, 0
        %v2747 = vsel %vm916, %v2738, 0
        %v2750 = vsel %vm916, %v2739, 0
        %2752 = vmatprep.subr.bf16.mxu0 0
        %2753 = vmatpush1.bf16.msra.mxu0 0
        %2754 = vmatprep.subr.bf16.mxu0 0
        %2755 = vmatpush1.bf16.msra.mxu0 0
        %2756 = vmatprep.subr.bf16.mxu0 0
        %2757 = vmatpush1.bf16.msra.mxu0 0
        %2758 = vmatprep.subr.bf16.mxu0 0
        %2759 = vmatpush1.bf16.msra.mxu0 0
        %2760 = vmatprep.subr.bf16.mxu0 %v2561
        %2761 = vmatpush1.bf16.msra.mxu0 %v2560
        %2762 = vmatprep.subr.bf16.mxu0 %v2559
        %2763 = vmatpush1.bf16.msra.mxu0 %v2558
        %2764 = vmatprep.subr.bf16.mxu0 %v2557
        %2765 = vmatpush1.bf16.msra.mxu0 %v2556
        %2766 = vmatprep.subr.bf16.mxu0 %v2555
        %2767 = vmatpush1.bf16.msra.mxu0 %v2554
        %2768 = vmatprep.subr.bf16.mxu0 0
        %2769 = vmatpush2.bf16.msra.mxu0 0
        %2770 = vmatprep.subr.bf16.mxu0 0
        %2771 = vmatpush2.bf16.msra.mxu0 0
        %2772 = vmatprep.subr.bf16.mxu0 0
        %2773 = vmatpush2.bf16.msra.mxu0 0
        %2774 = vmatprep.subr.bf16.mxu0 0
        %2775 = vmatpush2.bf16.msra.mxu0 0
        %2776 = vmatprep.subr.bf16.mxu0 0
        %2777 = vmatpush2.bf16.msra.mxu0 0
        %2778 = vmatprep.subr.bf16.mxu0 0
        %2779 = vmatpush2.bf16.msra.mxu0 0
        %2780 = vmatprep.subr.bf16.mxu0 0
        %2781 = vmatpush2.bf16.msra.mxu0 0
        %2782 = vmatprep.subr.bf16.mxu0 0
        %2783 = vmatpush2.bf16.msra.mxu0 0
        %2784 = vmatprep.mubr.bf16.mxu0 0
        %2785 = vmatmul.mubr.bf16.gmra.mxu0 %v2741
        %v2786 = vpop.f32.mrf.mxu0
        %v2787 = vadd.f32 %v2682, %v2786
        %v2788 = vpop.f32.mrf.mxu0
        %v2789 = vadd.f32 %v2684, %v2788
        %v2790 = vpop.f32.mrf.mxu0
        %v2791 = vadd.f32 %v2686, %v2790
        %v2792 = vpop.f32.mrf.mxu0
        %v2793 = vadd.f32 %v2688, %v2792
        %2794 = vmatprep.mubr.bf16.mxu0 0
        %2795 = vmatmul.mubr.bf16.gmra.mxu0 %v2744
        %v2796 = vpop.f32.mrf.mxu0
        %v2797 = vadd.f32 %v2692, %v2796
        %v2798 = vpop.f32.mrf.mxu0
        %v2799 = vadd.f32 %v2694, %v2798
        %v2800 = vpop.f32.mrf.mxu0
        %v2801 = vadd.f32 %v2696, %v2800
        %v2802 = vpop.f32.mrf.mxu0
        %v2803 = vadd.f32 %v2698, %v2802
        %2804 = vmatprep.mubr.bf16.mxu0 0
        %2805 = vmatmul.mubr.bf16.gmra.mxu0 %v2747
        %v2806 = vpop.f32.mrf.mxu0
        %v2807 = vadd.f32 %v2702, %v2806
        %v2808 = vpop.f32.mrf.mxu0
        %v2809 = vadd.f32 %v2704, %v2808
        %v2810 = vpop.f32.mrf.mxu0
        %v2811 = vadd.f32 %v2706, %v2810
        %v2812 = vpop.f32.mrf.mxu0
        %v2813 = vadd.f32 %v2708, %v2812
        %2814 = vmatprep.mubr.bf16.mxu0 0
        %2815 = vmatmul.mubr.bf16.gmra.mxu0 %v2750
        %v2816 = vpop.f32.mrf.mxu0
        %v2817 = vadd.f32 %v2712, %v2816
        %v2818 = vpop.f32.mrf.mxu0
        %v2819 = vadd.f32 %v2714, %v2818
        %v2820 = vpop.f32.mrf.mxu0
        %v2821 = vadd.f32 %v2716, %v2820
        %v2822 = vpop.f32.mrf.mxu0
        %v2823 = vadd.f32 %v2718, %v2822
        %2824 = vdwg.mxu0
        %s2825 = scalar_lea.vmem [#allocation9], 64
        %v2826 = vld [vmem:[%s2825] sm:$0xf]
        %v2827 = vld [vmem:[%s2825 + $0x4] sm:$0xf]
        %v2828 = vld [vmem:[%s2825 + $0x8] sm:$0xf]
        %v2829 = vld [vmem:[%s2825 + $0xc] sm:$0xf]
        %v2830 = vld [vmem:[%s2825 + $0x10] sm:$0xf]
        %v2831 = vld [vmem:[%s2825 + $0x14] sm:$0xf]
        %v2832 = vld [vmem:[%s2825 + $0x18] sm:$0xf]
        %v2833 = vld [vmem:[%s2825 + $0x1c] sm:$0xf]
        %v2842 = vunpack.c.l.b16 %v2826
        %v2843 = vunpack.c.l.b16 %v2827
        %v2844 = vunpack.c.l.b16 %v2828
        %v2845 = vunpack.c.l.b16 %v2829
        %v2846 = vunpack.c.l.b16 %v2830
        %v2847 = vunpack.c.l.b16 %v2831
        %v2848 = vunpack.c.l.b16 %v2832
        %v2849 = vunpack.c.l.b16 %v2833
        %v2850 = vpack.c.b16 %v2843, %v2842
        %v2851 = vpack.c.b16 %v2845, %v2844
        %v2852 = vpack.c.b16 %v2847, %v2846
        %v2853 = vpack.c.b16 %v2849, %v2848
        %2854 = vrot.lane.b32.xlu0 %v2554, 126
        %v2855 = vpop.permute.xlu0 %2854
        %2856 = vrot.lane.b32.xlu0 %v2555, 126
        %v2857 = vpop.permute.xlu0 %2856
        %2858 = vrot.lane.b32.xlu0 %v2556, 126
        %v2859 = vpop.permute.xlu0 %2858
        %2860 = vrot.lane.b32.xlu0 %v2557, 126
        %v2861 = vpop.permute.xlu0 %2860
        %2862 = vrot.lane.b32.xlu0 %v2558, 126
        %v2863 = vpop.permute.xlu0 %2862
        %2864 = vrot.lane.b32.xlu0 %v2559, 126
        %v2865 = vpop.permute.xlu0 %2864
        %2866 = vrot.lane.b32.xlu0 %v2560, 126
        %v2867 = vpop.permute.xlu0 %2866
        %2868 = vrot.lane.b32.xlu0 %v2561, 126
        %v2869 = vpop.permute.xlu0 %2868
        %v2870 = vsel %vm602, %v2855, %v2857
        %v2871 = vsel %vm602, %v2859, %v2861
        %v2872 = vsel %vm602, %v2863, %v2865
        %v2873 = vsel %vm602, %v2867, %v2869
        %v2883 = vsel %vm916, %v2850, 0
        %v2886 = vsel %vm916, %v2851, 0
        %v2889 = vsel %vm916, %v2852, 0
        %v2892 = vsel %vm916, %v2853, 0
        %2894 = vmatprep.subr.bf16.mxu0 0
        %2895 = vmatpush1.bf16.msra.mxu0 0
        %2896 = vmatprep.subr.bf16.mxu0 0
        %2897 = vmatpush1.bf16.msra.mxu0 0
        %2898 = vmatprep.subr.bf16.mxu0 0
        %2899 = vmatpush1.bf16.msra.mxu0 0
        %2900 = vmatprep.subr.bf16.mxu0 0
        %2901 = vmatpush1.bf16.msra.mxu0 0
        %2902 = vmatprep.subr.bf16.mxu0 %v2869
        %2903 = vmatpush1.bf16.msra.mxu0 %v2873
        %2904 = vmatprep.subr.bf16.mxu0 %v2865
        %2905 = vmatpush1.bf16.msra.mxu0 %v2872
        %2906 = vmatprep.subr.bf16.mxu0 %v2861
        %2907 = vmatpush1.bf16.msra.mxu0 %v2871
        %2908 = vmatprep.subr.bf16.mxu0 %v2857
        %2909 = vmatpush1.bf16.msra.mxu0 %v2870
        %2910 = vmatprep.subr.bf16.mxu0 0
        %2911 = vmatpush2.bf16.msra.mxu0 0
        %2912 = vmatprep.subr.bf16.mxu0 0
        %2913 = vmatpush2.bf16.msra.mxu0 0
        %2914 = vmatprep.subr.bf16.mxu0 0
        %2915 = vmatpush2.bf16.msra.mxu0 0
        %2916 = vmatprep.subr.bf16.mxu0 0
        %2917 = vmatpush2.bf16.msra.mxu0 0
        %2918 = vmatprep.subr.bf16.mxu0 0
        %2919 = vmatpush2.bf16.msra.mxu0 0
        %2920 = vmatprep.subr.bf16.mxu0 0
        %2921 = vmatpush2.bf16.msra.mxu0 0
        %2922 = vmatprep.subr.bf16.mxu0 0
        %2923 = vmatpush2.bf16.msra.mxu0 0
        %2924 = vmatprep.subr.bf16.mxu0 0
        %2925 = vmatpush2.bf16.msra.mxu0 0
        %2926 = vmatprep.mubr.bf16.mxu0 0
        %2927 = vmatmul.mubr.bf16.gmra.mxu0 %v2883
        %v2928 = vpop.f32.mrf.mxu0
        %v2929 = vadd.f32 0.0, %v2928
        %v2930 = vpop.f32.mrf.mxu0
        %v2931 = vadd.f32 0.0, %v2930
        %v2932 = vpop.f32.mrf.mxu0
        %v2933 = vadd.f32 0.0, %v2932
        %v2934 = vpop.f32.mrf.mxu0
        %v2935 = vadd.f32 0.0, %v2934
        %2936 = vmatprep.mubr.bf16.mxu0 0
        %2937 = vmatmul.mubr.bf16.gmra.mxu0 %v2886
        %v2938 = vpop.f32.mrf.mxu0
        %v2939 = vadd.f32 0.0, %v2938
        %v2940 = vpop.f32.mrf.mxu0
        %v2941 = vadd.f32 0.0, %v2940
        %v2942 = vpop.f32.mrf.mxu0
        %v2943 = vadd.f32 0.0, %v2942
        %v2944 = vpop.f32.mrf.mxu0
        %v2945 = vadd.f32 0.0, %v2944
        %2946 = vmatprep.mubr.bf16.mxu0 0
        %2947 = vmatmul.mubr.bf16.gmra.mxu0 %v2889
        %v2948 = vpop.f32.mrf.mxu0
        %v2949 = vadd.f32 0.0, %v2948
        %v2950 = vpop.f32.mrf.mxu0
        %v2951 = vadd.f32 0.0, %v2950
        %v2952 = vpop.f32.mrf.mxu0
        %v2953 = vadd.f32 0.0, %v2952
        %v2954 = vpop.f32.mrf.mxu0
        %v2955 = vadd.f32 0.0, %v2954
        %2956 = vmatprep.mubr.bf16.mxu0 0
        %2957 = vmatmul.mubr.bf16.gmra.mxu0 %v2892
        %v2958 = vpop.f32.mrf.mxu0
        %v2959 = vadd.f32 0.0, %v2958
        %v2960 = vpop.f32.mrf.mxu0
        %v2961 = vadd.f32 0.0, %v2960
        %v2962 = vpop.f32.mrf.mxu0
        %v2963 = vadd.f32 0.0, %v2962
        %v2964 = vpop.f32.mrf.mxu0
        %v2965 = vadd.f32 0.0, %v2964
        %2966 = vdwg.mxu0
        %v2967 = vadd.f32 %v2787, %v2929
        %v2968 = vadd.f32 %v2789, %v2931
        %v2969 = vadd.f32 %v2791, %v2933
        %v2970 = vadd.f32 %v2793, %v2935
        %v2971 = vadd.f32 %v2797, %v2939
        %v2972 = vadd.f32 %v2799, %v2941
        %v2973 = vadd.f32 %v2801, %v2943
        %v2974 = vadd.f32 %v2803, %v2945
        %v2975 = vadd.f32 %v2807, %v2949
        %v2976 = vadd.f32 %v2809, %v2951
        %v2977 = vadd.f32 %v2811, %v2953
        %v2978 = vadd.f32 %v2813, %v2955
        %v2979 = vadd.f32 %v2817, %v2959
        %v2980 = vadd.f32 %v2819, %v2961
        %v2981 = vadd.f32 %v2821, %v2963
        %v2982 = vadd.f32 %v2823, %v2965
        %s2983 = scalar_lea.vmem [#allocation9], 96
        %v2984 = vld [vmem:[%s2983] sm:$0xf]
        %v2985 = vld [vmem:[%s2983 + $0x4] sm:$0xf]
        %v2986 = vld [vmem:[%s2983 + $0x8] sm:$0xf]
        %v2987 = vld [vmem:[%s2983 + $0xc] sm:$0xf]
        %v2988 = vld [vmem:[%s2983 + $0x10] sm:$0xf]
        %v2989 = vld [vmem:[%s2983 + $0x14] sm:$0xf]
        %v2990 = vld [vmem:[%s2983 + $0x18] sm:$0xf]
        %v2991 = vld [vmem:[%s2983 + $0x1c] sm:$0xf]
        %v3000 = vunpack.c.l.b16 %v2984
        %v3001 = vunpack.c.l.b16 %v2985
        %v3002 = vunpack.c.l.b16 %v2986
        %v3003 = vunpack.c.l.b16 %v2987
        %v3004 = vunpack.c.l.b16 %v2988
        %v3005 = vunpack.c.l.b16 %v2989
        %v3006 = vunpack.c.l.b16 %v2990
        %v3007 = vunpack.c.l.b16 %v2991
        %v3008 = vpack.c.b16 %v3001, %v3000
        %v3009 = vpack.c.b16 %v3003, %v3002
        %v3010 = vpack.c.b16 %v3005, %v3004
        %v3011 = vpack.c.b16 %v3007, %v3006
        %3012 = vrot.lane.b32.xlu0 %v2554, 125
        %v3013 = vpop.permute.xlu0 %3012
        %3014 = vrot.lane.b32.xlu0 %v2555, 125
        %v3015 = vpop.permute.xlu0 %3014
        %3016 = vrot.lane.b32.xlu0 %v2556, 125
        %v3017 = vpop.permute.xlu0 %3016
        %3018 = vrot.lane.b32.xlu0 %v2557, 125
        %v3019 = vpop.permute.xlu0 %3018
        %3020 = vrot.lane.b32.xlu0 %v2558, 125
        %v3021 = vpop.permute.xlu0 %3020
        %3022 = vrot.lane.b32.xlu0 %v2559, 125
        %v3023 = vpop.permute.xlu0 %3022
        %3024 = vrot.lane.b32.xlu0 %v2560, 125
        %v3025 = vpop.permute.xlu0 %3024
        %3026 = vrot.lane.b32.xlu0 %v2561, 125
        %v3027 = vpop.permute.xlu0 %3026
        %v3028 = vsel %vm610, %v3013, %v3015
        %v3029 = vsel %vm610, %v3017, %v3019
        %v3030 = vsel %vm610, %v3021, %v3023
        %v3031 = vsel %vm610, %v3025, %v3027
        %v3041 = vsel %vm916, %v3008, 0
        %v3044 = vsel %vm916, %v3009, 0
        %v3047 = vsel %vm916, %v3010, 0
        %v3050 = vsel %vm916, %v3011, 0
        %3052 = vmatprep.subr.bf16.mxu0 0
        %3053 = vmatpush1.bf16.msra.mxu0 0
        %3054 = vmatprep.subr.bf16.mxu0 0
        %3055 = vmatpush1.bf16.msra.mxu0 0
        %3056 = vmatprep.subr.bf16.mxu0 0
        %3057 = vmatpush1.bf16.msra.mxu0 0
        %3058 = vmatprep.subr.bf16.mxu0 0
        %3059 = vmatpush1.bf16.msra.mxu0 0
        %3060 = vmatprep.subr.bf16.mxu0 %v3027
        %3061 = vmatpush1.bf16.msra.mxu0 %v3031
        %3062 = vmatprep.subr.bf16.mxu0 %v3023
        %3063 = vmatpush1.bf16.msra.mxu0 %v3030
        %3064 = vmatprep.subr.bf16.mxu0 %v3019
        %3065 = vmatpush1.bf16.msra.mxu0 %v3029
        %3066 = vmatprep.subr.bf16.mxu0 %v3015
        %3067 = vmatpush1.bf16.msra.mxu0 %v3028
        %3068 = vmatprep.subr.bf16.mxu0 0
        %3069 = vmatpush2.bf16.msra.mxu0 0
        %3070 = vmatprep.subr.bf16.mxu0 0
        %3071 = vmatpush2.bf16.msra.mxu0 0
        %3072 = vmatprep.subr.bf16.mxu0 0
        %3073 = vmatpush2.bf16.msra.mxu0 0
        %3074 = vmatprep.subr.bf16.mxu0 0
        %3075 = vmatpush2.bf16.msra.mxu0 0
        %3076 = vmatprep.subr.bf16.mxu0 0
        %3077 = vmatpush2.bf16.msra.mxu0 0
        %3078 = vmatprep.subr.bf16.mxu0 0
        %3079 = vmatpush2.bf16.msra.mxu0 0
        %3080 = vmatprep.subr.bf16.mxu0 0
        %3081 = vmatpush2.bf16.msra.mxu0 0
        %3082 = vmatprep.subr.bf16.mxu0 0
        %3083 = vmatpush2.bf16.msra.mxu0 0
        %3084 = vmatprep.mubr.bf16.mxu0 0
        %3085 = vmatmul.mubr.bf16.gmra.mxu0 %v3041
        %v3086 = vpop.f32.mrf.mxu0
        %v3087 = vadd.f32 0.0, %v3086
        %v3088 = vpop.f32.mrf.mxu0
        %v3089 = vadd.f32 0.0, %v3088
        %v3090 = vpop.f32.mrf.mxu0
        %v3091 = vadd.f32 0.0, %v3090
        %v3092 = vpop.f32.mrf.mxu0
        %v3093 = vadd.f32 0.0, %v3092
        %3094 = vmatprep.mubr.bf16.mxu0 0
        %3095 = vmatmul.mubr.bf16.gmra.mxu0 %v3044
        %v3096 = vpop.f32.mrf.mxu0
        %v3097 = vadd.f32 0.0, %v3096
        %v3098 = vpop.f32.mrf.mxu0
        %v3099 = vadd.f32 0.0, %v3098
        %v3100 = vpop.f32.mrf.mxu0
        %v3101 = vadd.f32 0.0, %v3100
        %v3102 = vpop.f32.mrf.mxu0
        %v3103 = vadd.f32 0.0, %v3102
        %3104 = vmatprep.mubr.bf16.mxu0 0
        %3105 = vmatmul.mubr.bf16.gmra.mxu0 %v3047
        %v3106 = vpop.f32.mrf.mxu0
        %v3107 = vadd.f32 0.0, %v3106
        %v3108 = vpop.f32.mrf.mxu0
        %v3109 = vadd.f32 0.0, %v3108
        %v3110 = vpop.f32.mrf.mxu0
        %v3111 = vadd.f32 0.0, %v3110
        %v3112 = vpop.f32.mrf.mxu0
        %v3113 = vadd.f32 0.0, %v3112
        %3114 = vmatprep.mubr.bf16.mxu0 0
        %3115 = vmatmul.mubr.bf16.gmra.mxu0 %v3050
        %v3116 = vpop.f32.mrf.mxu0
        %v3117 = vadd.f32 0.0, %v3116
        %v3118 = vpop.f32.mrf.mxu0
        %v3119 = vadd.f32 0.0, %v3118
        %v3120 = vpop.f32.mrf.mxu0
        %v3121 = vadd.f32 0.0, %v3120
        %v3122 = vpop.f32.mrf.mxu0
        %v3123 = vadd.f32 0.0, %v3122
        %3124 = vdwg.mxu0
        %v3125 = vadd.f32 %v2967, %v3087
        %v3126 = vadd.f32 %v2968, %v3089
        %v3127 = vadd.f32 %v2969, %v3091
        %v3128 = vadd.f32 %v2970, %v3093
        %v3129 = vadd.f32 %v2971, %v3097
        %v3130 = vadd.f32 %v2972, %v3099
        %v3131 = vadd.f32 %v2973, %v3101
        %v3132 = vadd.f32 %v2974, %v3103
        %v3133 = vadd.f32 %v2975, %v3107
        %v3134 = vadd.f32 %v2976, %v3109
        %v3135 = vadd.f32 %v2977, %v3111
        %v3136 = vadd.f32 %v2978, %v3113
        %v3137 = vadd.f32 %v2979, %v3117
        %v3138 = vadd.f32 %v2980, %v3119
        %v3139 = vadd.f32 %v2981, %v3121
        %v3140 = vadd.f32 %v2982, %v3123
        %s3141 = scalar_lea.vmem [#allocation9], 128
        %v3142 = vld [vmem:[%s3141] sm:$0xf]
        %v3143 = vld [vmem:[%s3141 + $0x4] sm:$0xf]
        %v3144 = vld [vmem:[%s3141 + $0x8] sm:$0xf]
        %v3145 = vld [vmem:[%s3141 + $0xc] sm:$0xf]
        %v3146 = vld [vmem:[%s3141 + $0x10] sm:$0xf]
        %v3147 = vld [vmem:[%s3141 + $0x14] sm:$0xf]
        %v3148 = vld [vmem:[%s3141 + $0x18] sm:$0xf]
        %v3149 = vld [vmem:[%s3141 + $0x1c] sm:$0xf]
        %v3158 = vunpack.c.l.b16 %v3142
        %v3159 = vunpack.c.l.b16 %v3143
        %v3160 = vunpack.c.l.b16 %v3144
        %v3161 = vunpack.c.l.b16 %v3145
        %v3162 = vunpack.c.l.b16 %v3146
        %v3163 = vunpack.c.l.b16 %v3147
        %v3164 = vunpack.c.l.b16 %v3148
        %v3165 = vunpack.c.l.b16 %v3149
        %v3166 = vpack.c.b16 %v3159, %v3158
        %v3167 = vpack.c.b16 %v3161, %v3160
        %v3168 = vpack.c.b16 %v3163, %v3162
        %v3169 = vpack.c.b16 %v3165, %v3164
        %3170 = vrot.lane.b32.xlu0 %v2554, 124
        %v3171 = vpop.permute.xlu0 %3170
        %3172 = vrot.lane.b32.xlu0 %v2555, 124
        %v3173 = vpop.permute.xlu0 %3172
        %3174 = vrot.lane.b32.xlu0 %v2556, 124
        %v3175 = vpop.permute.xlu0 %3174
        %3176 = vrot.lane.b32.xlu0 %v2557, 124
        %v3177 = vpop.permute.xlu0 %3176
        %3178 = vrot.lane.b32.xlu0 %v2558, 124
        %v3179 = vpop.permute.xlu0 %3178
        %3180 = vrot.lane.b32.xlu0 %v2559, 124
        %v3181 = vpop.permute.xlu0 %3180
        %3182 = vrot.lane.b32.xlu0 %v2560, 124
        %v3183 = vpop.permute.xlu0 %3182
        %3184 = vrot.lane.b32.xlu0 %v2561, 124
        %v3185 = vpop.permute.xlu0 %3184
        %v3186 = vsel %vm618, %v3171, %v3173
        %v3187 = vsel %vm618, %v3175, %v3177
        %v3188 = vsel %vm618, %v3179, %v3181
        %v3189 = vsel %vm618, %v3183, %v3185
        %v3199 = vsel %vm916, %v3166, 0
        %v3202 = vsel %vm916, %v3167, 0
        %v3205 = vsel %vm916, %v3168, 0
        %v3208 = vsel %vm916, %v3169, 0
        %3210 = vmatprep.subr.bf16.mxu0 0
        %3211 = vmatpush1.bf16.msra.mxu0 0
        %3212 = vmatprep.subr.bf16.mxu0 0
        %3213 = vmatpush1.bf16.msra.mxu0 0
        %3214 = vmatprep.subr.bf16.mxu0 0
        %3215 = vmatpush1.bf16.msra.mxu0 0
        %3216 = vmatprep.subr.bf16.mxu0 0
        %3217 = vmatpush1.bf16.msra.mxu0 0
        %3218 = vmatprep.subr.bf16.mxu0 %v3185
        %3219 = vmatpush1.bf16.msra.mxu0 %v3189
        %3220 = vmatprep.subr.bf16.mxu0 %v3181
        %3221 = vmatpush1.bf16.msra.mxu0 %v3188
        %3222 = vmatprep.subr.bf16.mxu0 %v3177
        %3223 = vmatpush1.bf16.msra.mxu0 %v3187
        %3224 = vmatprep.subr.bf16.mxu0 %v3173
        %3225 = vmatpush1.bf16.msra.mxu0 %v3186
        %3226 = vmatprep.subr.bf16.mxu0 0
        %3227 = vmatpush2.bf16.msra.mxu0 0
        %3228 = vmatprep.subr.bf16.mxu0 0
        %3229 = vmatpush2.bf16.msra.mxu0 0
        %3230 = vmatprep.subr.bf16.mxu0 0
        %3231 = vmatpush2.bf16.msra.mxu0 0
        %3232 = vmatprep.subr.bf16.mxu0 0
        %3233 = vmatpush2.bf16.msra.mxu0 0
        %3234 = vmatprep.subr.bf16.mxu0 0
        %3235 = vmatpush2.bf16.msra.mxu0 0
        %3236 = vmatprep.subr.bf16.mxu0 0
        %3237 = vmatpush2.bf16.msra.mxu0 0
        %3238 = vmatprep.subr.bf16.mxu0 0
        %3239 = vmatpush2.bf16.msra.mxu0 0
        %3240 = vmatprep.subr.bf16.mxu0 0
        %3241 = vmatpush2.bf16.msra.mxu0 0
        %3242 = vmatprep.mubr.bf16.mxu0 0
        %3243 = vmatmul.mubr.bf16.gmra.mxu0 %v3199
        %v3244 = vpop.f32.mrf.mxu0
        %v3245 = vadd.f32 0.0, %v3244
        %v3246 = vpop.f32.mrf.mxu0
        %v3247 = vadd.f32 0.0, %v3246
        %v3248 = vpop.f32.mrf.mxu0
        %v3249 = vadd.f32 0.0, %v3248
        %v3250 = vpop.f32.mrf.mxu0
        %v3251 = vadd.f32 0.0, %v3250
        %3252 = vmatprep.mubr.bf16.mxu0 0
        %3253 = vmatmul.mubr.bf16.gmra.mxu0 %v3202
        %v3254 = vpop.f32.mrf.mxu0
        %v3255 = vadd.f32 0.0, %v3254
        %v3256 = vpop.f32.mrf.mxu0
        %v3257 = vadd.f32 0.0, %v3256
        %v3258 = vpop.f32.mrf.mxu0
        %v3259 = vadd.f32 0.0, %v3258
        %v3260 = vpop.f32.mrf.mxu0
        %v3261 = vadd.f32 0.0, %v3260
        %3262 = vmatprep.mubr.bf16.mxu0 0
        %3263 = vmatmul.mubr.bf16.gmra.mxu0 %v3205
        %v3264 = vpop.f32.mrf.mxu0
        %v3265 = vadd.f32 0.0, %v3264
        %v3266 = vpop.f32.mrf.mxu0
        %v3267 = vadd.f32 0.0, %v3266
        %v3268 = vpop.f32.mrf.mxu0
        %v3269 = vadd.f32 0.0, %v3268
        %v3270 = vpop.f32.mrf.mxu0
        %v3271 = vadd.f32 0.0, %v3270
        %3272 = vmatprep.mubr.bf16.mxu0 0
        %3273 = vmatmul.mubr.bf16.gmra.mxu0 %v3208
        %v3274 = vpop.f32.mrf.mxu0
        %v3275 = vadd.f32 0.0, %v3274
        %v3276 = vpop.f32.mrf.mxu0
        %v3277 = vadd.f32 0.0, %v3276
        %v3278 = vpop.f32.mrf.mxu0
        %v3279 = vadd.f32 0.0, %v3278
        %v3280 = vpop.f32.mrf.mxu0
        %v3281 = vadd.f32 0.0, %v3280
        %3282 = vdwg.mxu0
        %v3283 = vadd.f32 %v3125, %v3245
        %v3284 = vadd.f32 %v3126, %v3247
        %v3285 = vadd.f32 %v3127, %v3249
        %v3286 = vadd.f32 %v3128, %v3251
        %v3287 = vadd.f32 %v3129, %v3255
        %v3288 = vadd.f32 %v3130, %v3257
        %v3289 = vadd.f32 %v3131, %v3259
        %v3290 = vadd.f32 %v3132, %v3261
        %v3291 = vadd.f32 %v3133, %v3265
        %v3292 = vadd.f32 %v3134, %v3267
        %v3293 = vadd.f32 %v3135, %v3269
        %v3294 = vadd.f32 %v3136, %v3271
        %v3295 = vadd.f32 %v3137, %v3275
        %v3296 = vadd.f32 %v3138, %v3277
        %v3297 = vadd.f32 %v3139, %v3279
        %v3298 = vadd.f32 %v3140, %v3281
        %v3299 = vld [vmem:[%s9] sm:$0xff]
        %v3300 = vld [vmem:[%s9 + $0x8] sm:$0xff]
        %v3301 = vld [vmem:[%s9 + $0x10] sm:$0xff]
        %v3302 = vld [vmem:[%s9 + $0x18] sm:$0xff]
        %v3303 = vld [vmem:[%s9 + $0x20] sm:$0xff]
        %v3304 = vld [vmem:[%s9 + $0x28] sm:$0xff]
        %v3305 = vld [vmem:[%s9 + $0x30] sm:$0xff]
        %v3306 = vld [vmem:[%s9 + $0x38] sm:$0xff]
        %3308 = vset.pattern.permute.xlu0 0
        %3309 = vperm.xlu0 %3308, %v3299
        %v3310 = vpop.permute.xlu0 %3309
        %3313 = vset.pattern.permute.xlu0 0
        %3314 = vperm.xlu0 %3313, %v3300
        %v3315 = vpop.permute.xlu0 %3314
        %3318 = vset.pattern.permute.xlu0 0
        %3319 = vperm.xlu0 %3318, %v3301
        %v3320 = vpop.permute.xlu0 %3319
        %3323 = vset.pattern.permute.xlu0 0
        %3324 = vperm.xlu0 %3323, %v3302
        %v3325 = vpop.permute.xlu0 %3324
        %3328 = vset.pattern.permute.xlu0 0
        %3329 = vperm.xlu0 %3328, %v3303
        %v3330 = vpop.permute.xlu0 %3329
        %3333 = vset.pattern.permute.xlu0 0
        %3334 = vperm.xlu0 %3333, %v3304
        %v3335 = vpop.permute.xlu0 %3334
        %3338 = vset.pattern.permute.xlu0 0
        %3339 = vperm.xlu0 %3338, %v3305
        %v3340 = vpop.permute.xlu0 %3339
        %3343 = vset.pattern.permute.xlu0 0
        %3344 = vperm.xlu0 %3343, %v3306
        %v3345 = vpop.permute.xlu0 %3344
        %v3347 = vadd.f32 %v3283, %v3310
        %v3348 = vadd.f32 %v3284, %v3310
        %v3349 = vadd.f32 %v3285, %v3315
        %v3350 = vadd.f32 %v3286, %v3315
        %v3351 = vadd.f32 %v3287, %v3320
        %v3352 = vadd.f32 %v3288, %v3320
        %v3353 = vadd.f32 %v3289, %v3325
        %v3354 = vadd.f32 %v3290, %v3325
        %v3355 = vadd.f32 %v3291, %v3330
        %v3356 = vadd.f32 %v3292, %v3330
        %v3357 = vadd.f32 %v3293, %v3335
        %v3358 = vadd.f32 %v3294, %v3335
        %v3359 = vadd.f32 %v3295, %v3340
        %v3360 = vadd.f32 %v3296, %v3340
        %v3361 = vadd.f32 %v3297, %v3345
        %v3362 = vadd.f32 %v3298, %v3345
        %v3363 = vtanh.pop %v3347
        %v3364 = vtanh.pop %v3348
        %v3365 = vtanh.pop %v3349
        %v3366 = vtanh.pop %v3350
        %v3367 = vtanh.pop %v3351
        %v3368 = vtanh.pop %v3352
        %v3369 = vtanh.pop %v3353
        %v3370 = vtanh.pop %v3354
        %v3371 = vtanh.pop %v3355
        %v3372 = vtanh.pop %v3356
        %v3373 = vtanh.pop %v3357
        %v3374 = vtanh.pop %v3358
        %v3375 = vtanh.pop %v3359
        %v3376 = vtanh.pop %v3360
        %v3377 = vtanh.pop %v3361
        %v3378 = vtanh.pop %v3362
        %v3379 = vpack.c.bf16 %v3365, %v3363
        %v3380 = vpack.c.bf16 %v3366, %v3364
        %v3381 = vpack.c.bf16 %v3369, %v3367
        %v3382 = vpack.c.bf16 %v3370, %v3368
        %v3383 = vpack.c.bf16 %v3373, %v3371
        %v3384 = vpack.c.bf16 %v3374, %v3372
        %v3385 = vpack.c.bf16 %v3377, %v3375
        %v3386 = vpack.c.bf16 %v3378, %v3376
        %s3387 = ssub.s32 2, %s808
        %s3388 = ssub.s32 302, %s808
        %v3389 = vstv %s3387
        %vm3390 = vcmp.ge.s32.totalorder %v588, %v3389
        %vm3391 = vcmp.ge.s32.totalorder %v589, %v3389
        %v3392 = vstv %s3388
        %vm3393 = vcmp.lt.s32.totalorder %v588, %v3392
        %vm3394 = vcmp.lt.s32.totalorder %v589, %v3392
        %vm3395 = vmand %vm3390, %vm3393
        %vm3396 = vmand %vm3391, %vm3394
        %v3397 = vsel %vm3395, 1, 0
        %v3398 = vsel %vm3396, 1, 0
        %vm3399 = vcmp.eq.s32.totalorder %v3397, 1
        %vm3400 = vcmp.eq.s32.totalorder %v3398, 1
        %vm3401 = vmpackc.low %vm3400, %vm3399
        %v3402 = vsel %vm3401, 65537, 0
        %v3403 = vlaneseq
        %v3404 = vshrl.u32 %v3403, 7
        %v3405 = vsub.s32 0, %v3404
        %v3406 = vrot.slane %v3402, %v3405
        %v3407 = vlaneseq
        %v3408 = vshrl.u32 %v3407, 7
        %v3409 = vsub.s32 4, %v3408
        %v3410 = vrot.slane %v3402, %v3409
        %vm3411 = vcmp.ne.s16.totalorder %v3406, 0
        %vm3412 = vcmp.ne.s16.totalorder %v3410, 0
        %v3413 = vsel %vm3411, %v3379, 0
        %v3414 = vsel %vm3412, %v3380, 0
        %v3415 = vsel %vm3411, %v3381, 0
        %v3416 = vsel %vm3412, %v3382, 0
        %v3417 = vsel %vm3411, %v3383, 0
        %v3418 = vsel %vm3412, %v3384, 0
        %v3419 = vsel %vm3411, %v3385, 0
        %v3420 = vsel %vm3412, %v3386, 0
        %v3421 = vld [vmem:[%s10] sm:$0xf]
        %v3422 = vld [vmem:[%s10 + $0x4] sm:$0xf]
        %s3423 = scalar_lea.vmem %s10, 8
        %v3424 = vld [vmem:[%s3423] sm:$0xf]
        %v3425 = vld [vmem:[%s3423 + $0x4] sm:$0xf]
        %v3428 = vunpack.c.l.b16 %v3424
        %v3429 = vunpack.c.l.b16 %v3425
        %v3430 = vpack.c.b16 %v3429, %v3428
        %3439 = vrot.lane.b32.xlu0 %v3413, 127
        %v3440 = vpop.permute.xlu0 %3439
        %3441 = vrot.lane.b32.xlu0 %v3414, 127
        %v3442 = vpop.permute.xlu0 %3441
        %3443 = vrot.lane.b32.xlu0 %v3415, 127
        %v3444 = vpop.permute.xlu0 %3443
        %3445 = vrot.lane.b32.xlu0 %v3416, 127
        %v3446 = vpop.permute.xlu0 %3445
        %3447 = vrot.lane.b32.xlu0 %v3417, 127
        %v3448 = vpop.permute.xlu0 %3447
        %3449 = vrot.lane.b32.xlu0 %v3418, 127
        %v3450 = vpop.permute.xlu0 %3449
        %3451 = vrot.lane.b32.xlu0 %v3419, 127
        %v3452 = vpop.permute.xlu0 %3451
        %3453 = vrot.lane.b32.xlu0 %v3420, 127
        %v3454 = vpop.permute.xlu0 %3453
        %v3455 = vsel %vm594, %v3440, %v3442
        %v3456 = vsel %vm594, %v3444, %v3446
        %v3457 = vsel %vm594, %v3448, %v3450
        %v3458 = vsel %vm594, %v3452, %v3454
        %v3464 = vsel %vm916, %v3430, 0
        %3466 = vmatprep.subr.bf16.mxu0 0
        %3467 = vmatpush1.bf16.msra.mxu0 0
        %3468 = vmatprep.subr.bf16.mxu0 0
        %3469 = vmatpush1.bf16.msra.mxu0 0
        %3470 = vmatprep.subr.bf16.mxu0 0
        %3471 = vmatpush1.bf16.msra.mxu0 0
        %3472 = vmatprep.subr.bf16.mxu0 0
        %3473 = vmatpush1.bf16.msra.mxu0 0
        %3474 = vmatprep.subr.bf16.mxu0 0
        %3475 = vmatpush1.bf16.msra.mxu0 %v3458
        %3476 = vmatprep.subr.bf16.mxu0 0
        %3477 = vmatpush1.bf16.msra.mxu0 %v3457
        %3478 = vmatprep.subr.bf16.mxu0 0
        %3479 = vmatpush1.bf16.msra.mxu0 %v3456
        %3480 = vmatprep.subr.bf16.mxu0 0
        %3481 = vmatpush1.bf16.msra.mxu0 %v3455
        %3482 = vmatprep.subr.bf16.mxu0 0
        %3483 = vmatpush2.bf16.msra.mxu0 0
        %3484 = vmatprep.subr.bf16.mxu0 0
        %3485 = vmatpush2.bf16.msra.mxu0 0
        %3486 = vmatprep.subr.bf16.mxu0 0
        %3487 = vmatpush2.bf16.msra.mxu0 0
        %3488 = vmatprep.subr.bf16.mxu0 0
        %3489 = vmatpush2.bf16.msra.mxu0 0
        %3490 = vmatprep.subr.bf16.mxu0 0
        %3491 = vmatpush2.bf16.msra.mxu0 0
        %3492 = vmatprep.subr.bf16.mxu0 0
        %3493 = vmatpush2.bf16.msra.mxu0 0
        %3494 = vmatprep.subr.bf16.mxu0 0
        %3495 = vmatpush2.bf16.msra.mxu0 0
        %3496 = vmatprep.subr.bf16.mxu0 0
        %3497 = vmatpush2.bf16.msra.mxu0 0
        %3498 = vmatprep.mubr.bf16.mxu0 0
        %3499 = vmatmul.mubr.bf16.gmra.mxu0 %v3464
        %v3500 = vpop.f32.mrf.mxu0
        %v3501 = vadd.f32 0.0, %v3500
        %v3502 = vpop.f32.mrf.mxu0
        %v3503 = vpop.f32.mrf.mxu0
        %v3504 = vadd.f32 0.0, %v3503
        %v3505 = vpop.f32.mrf.mxu0
        %3506 = vdwg.mxu0
        %v3509 = vunpack.c.l.b16 %v3421
        %v3510 = vunpack.c.l.b16 %v3422
        %v3511 = vpack.c.b16 %v3510, %v3509
        %v3513 = vsel %vm916, %v3511, 0
        %3515 = vmatprep.subr.bf16.mxu0 0
        %3516 = vmatpush1.bf16.msra.mxu0 0
        %3517 = vmatprep.subr.bf16.mxu0 0
        %3518 = vmatpush1.bf16.msra.mxu0 0
        %3519 = vmatprep.subr.bf16.mxu0 0
        %3520 = vmatpush1.bf16.msra.mxu0 0
        %3521 = vmatprep.subr.bf16.mxu0 0
        %3522 = vmatpush1.bf16.msra.mxu0 0
        %3523 = vmatprep.subr.bf16.mxu0 0
        %3524 = vmatpush1.bf16.msra.mxu0 %v3419
        %3525 = vmatprep.subr.bf16.mxu0 0
        %3526 = vmatpush1.bf16.msra.mxu0 %v3417
        %3527 = vmatprep.subr.bf16.mxu0 0
        %3528 = vmatpush1.bf16.msra.mxu0 %v3415
        %3529 = vmatprep.subr.bf16.mxu0 0
        %3530 = vmatpush1.bf16.msra.mxu0 %v3413
        %3531 = vmatprep.subr.bf16.mxu0 0
        %3532 = vmatpush2.bf16.msra.mxu0 0
        %3533 = vmatprep.subr.bf16.mxu0 0
        %3534 = vmatpush2.bf16.msra.mxu0 0
        %3535 = vmatprep.subr.bf16.mxu0 0
        %3536 = vmatpush2.bf16.msra.mxu0 0
        %3537 = vmatprep.subr.bf16.mxu0 0
        %3538 = vmatpush2.bf16.msra.mxu0 0
        %3539 = vmatprep.subr.bf16.mxu0 0
        %3540 = vmatpush2.bf16.msra.mxu0 0
        %3541 = vmatprep.subr.bf16.mxu0 0
        %3542 = vmatpush2.bf16.msra.mxu0 0
        %3543 = vmatprep.subr.bf16.mxu0 0
        %3544 = vmatpush2.bf16.msra.mxu0 0
        %3545 = vmatprep.subr.bf16.mxu0 0
        %3546 = vmatpush2.bf16.msra.mxu0 0
        %3547 = vmatprep.mubr.bf16.mxu0 0
        %3548 = vmatmul.mubr.bf16.gmra.mxu0 %v3513
        %v3549 = vpop.f32.mrf.mxu0
        %v3550 = vadd.f32 %v3501, %v3549
        %v3551 = vpop.f32.mrf.mxu0
        %v3552 = vpop.f32.mrf.mxu0
        %v3553 = vadd.f32 %v3504, %v3552
        %v3554 = vpop.f32.mrf.mxu0
        %3555 = vdwg.mxu0
        %s3556 = scalar_lea.vmem %s10, 16
        %v3557 = vld [vmem:[%s3556] sm:$0xf]
        %v3558 = vld [vmem:[%s3556 + $0x4] sm:$0xf]
        %v3561 = vunpack.c.l.b16 %v3557
        %v3562 = vunpack.c.l.b16 %v3558
        %v3563 = vpack.c.b16 %v3562, %v3561
        %3564 = vrot.lane.b32.xlu0 %v3413, 126
        %v3565 = vpop.permute.xlu0 %3564
        %3566 = vrot.lane.b32.xlu0 %v3414, 126
        %v3567 = vpop.permute.xlu0 %3566
        %3568 = vrot.lane.b32.xlu0 %v3415, 126
        %v3569 = vpop.permute.xlu0 %3568
        %3570 = vrot.lane.b32.xlu0 %v3416, 126
        %v3571 = vpop.permute.xlu0 %3570
        %3572 = vrot.lane.b32.xlu0 %v3417, 126
        %v3573 = vpop.permute.xlu0 %3572
        %3574 = vrot.lane.b32.xlu0 %v3418, 126
        %v3575 = vpop.permute.xlu0 %3574
        %3576 = vrot.lane.b32.xlu0 %v3419, 126
        %v3577 = vpop.permute.xlu0 %3576
        %3578 = vrot.lane.b32.xlu0 %v3420, 126
        %v3579 = vpop.permute.xlu0 %3578
        %v3580 = vsel %vm602, %v3565, %v3567
        %v3581 = vsel %vm602, %v3569, %v3571
        %v3582 = vsel %vm602, %v3573, %v3575
        %v3583 = vsel %vm602, %v3577, %v3579
        %v3589 = vsel %vm916, %v3563, 0
        %3591 = vmatprep.subr.bf16.mxu0 0
        %3592 = vmatpush1.bf16.msra.mxu0 0
        %3593 = vmatprep.subr.bf16.mxu0 0
        %3594 = vmatpush1.bf16.msra.mxu0 0
        %3595 = vmatprep.subr.bf16.mxu0 0
        %3596 = vmatpush1.bf16.msra.mxu0 0
        %3597 = vmatprep.subr.bf16.mxu0 0
        %3598 = vmatpush1.bf16.msra.mxu0 0
        %3599 = vmatprep.subr.bf16.mxu0 0
        %3600 = vmatpush1.bf16.msra.mxu0 %v3583
        %3601 = vmatprep.subr.bf16.mxu0 0
        %3602 = vmatpush1.bf16.msra.mxu0 %v3582
        %3603 = vmatprep.subr.bf16.mxu0 0
        %3604 = vmatpush1.bf16.msra.mxu0 %v3581
        %3605 = vmatprep.subr.bf16.mxu0 0
        %3606 = vmatpush1.bf16.msra.mxu0 %v3580
        %3607 = vmatprep.subr.bf16.mxu0 0
        %3608 = vmatpush2.bf16.msra.mxu0 0
        %3609 = vmatprep.subr.bf16.mxu0 0
        %3610 = vmatpush2.bf16.msra.mxu0 0
        %3611 = vmatprep.subr.bf16.mxu0 0
        %3612 = vmatpush2.bf16.msra.mxu0 0
        %3613 = vmatprep.subr.bf16.mxu0 0
        %3614 = vmatpush2.bf16.msra.mxu0 0
        %3615 = vmatprep.subr.bf16.mxu0 0
        %3616 = vmatpush2.bf16.msra.mxu0 0
        %3617 = vmatprep.subr.bf16.mxu0 0
        %3618 = vmatpush2.bf16.msra.mxu0 0
        %3619 = vmatprep.subr.bf16.mxu0 0
        %3620 = vmatpush2.bf16.msra.mxu0 0
        %3621 = vmatprep.subr.bf16.mxu0 0
        %3622 = vmatpush2.bf16.msra.mxu0 0
        %3623 = vmatprep.mubr.bf16.mxu0 0
        %3624 = vmatmul.mubr.bf16.gmra.mxu0 %v3589
        %v3625 = vpop.f32.mrf.mxu0
        %v3626 = vadd.f32 0.0, %v3625
        %v3627 = vpop.f32.mrf.mxu0
        %v3628 = vpop.f32.mrf.mxu0
        %v3629 = vadd.f32 0.0, %v3628
        %v3630 = vpop.f32.mrf.mxu0
        %3631 = vdwg.mxu0
        %v3632 = vadd.f32 %v3550, %v3626
        %v3633 = vadd.f32 %v3553, %v3629
        %s3634 = scalar_lea.vmem %s10, 24
        %v3635 = vld [vmem:[%s3634] sm:$0xf]
        %v3636 = vld [vmem:[%s3634 + $0x4] sm:$0xf]
        %v3639 = vunpack.c.l.b16 %v3635
        %v3640 = vunpack.c.l.b16 %v3636
        %v3641 = vpack.c.b16 %v3640, %v3639
        %3642 = vrot.lane.b32.xlu0 %v3413, 125
        %v3643 = vpop.permute.xlu0 %3642
        %3644 = vrot.lane.b32.xlu0 %v3414, 125
        %v3645 = vpop.permute.xlu0 %3644
        %3646 = vrot.lane.b32.xlu0 %v3415, 125
        %v3647 = vpop.permute.xlu0 %3646
        %3648 = vrot.lane.b32.xlu0 %v3416, 125
        %v3649 = vpop.permute.xlu0 %3648
        %3650 = vrot.lane.b32.xlu0 %v3417, 125
        %v3651 = vpop.permute.xlu0 %3650
        %3652 = vrot.lane.b32.xlu0 %v3418, 125
        %v3653 = vpop.permute.xlu0 %3652
        %3654 = vrot.lane.b32.xlu0 %v3419, 125
        %v3655 = vpop.permute.xlu0 %3654
        %3656 = vrot.lane.b32.xlu0 %v3420, 125
        %v3657 = vpop.permute.xlu0 %3656
        %v3658 = vsel %vm610, %v3643, %v3645
        %v3659 = vsel %vm610, %v3647, %v3649
        %v3660 = vsel %vm610, %v3651, %v3653
        %v3661 = vsel %vm610, %v3655, %v3657
        %v3667 = vsel %vm916, %v3641, 0
        %3669 = vmatprep.subr.bf16.mxu0 0
        %3670 = vmatpush1.bf16.msra.mxu0 0
        %3671 = vmatprep.subr.bf16.mxu0 0
        %3672 = vmatpush1.bf16.msra.mxu0 0
        %3673 = vmatprep.subr.bf16.mxu0 0
        %3674 = vmatpush1.bf16.msra.mxu0 0
        %3675 = vmatprep.subr.bf16.mxu0 0
        %3676 = vmatpush1.bf16.msra.mxu0 0
        %3677 = vmatprep.subr.bf16.mxu0 0
        %3678 = vmatpush1.bf16.msra.mxu0 %v3661
        %3679 = vmatprep.subr.bf16.mxu0 0
        %3680 = vmatpush1.bf16.msra.mxu0 %v3660
        %3681 = vmatprep.subr.bf16.mxu0 0
        %3682 = vmatpush1.bf16.msra.mxu0 %v3659
        %3683 = vmatprep.subr.bf16.mxu0 0
        %3684 = vmatpush1.bf16.msra.mxu0 %v3658
        %3685 = vmatprep.subr.bf16.mxu0 0
        %3686 = vmatpush2.bf16.msra.mxu0 0
        %3687 = vmatprep.subr.bf16.mxu0 0
        %3688 = vmatpush2.bf16.msra.mxu0 0
        %3689 = vmatprep.subr.bf16.mxu0 0
        %3690 = vmatpush2.bf16.msra.mxu0 0
        %3691 = vmatprep.subr.bf16.mxu0 0
        %3692 = vmatpush2.bf16.msra.mxu0 0
        %3693 = vmatprep.subr.bf16.mxu0 0
        %3694 = vmatpush2.bf16.msra.mxu0 0
        %3695 = vmatprep.subr.bf16.mxu0 0
        %3696 = vmatpush2.bf16.msra.mxu0 0
        %3697 = vmatprep.subr.bf16.mxu0 0
        %3698 = vmatpush2.bf16.msra.mxu0 0
        %3699 = vmatprep.subr.bf16.mxu0 0
        %3700 = vmatpush2.bf16.msra.mxu0 0
        %3701 = vmatprep.mubr.bf16.mxu0 0
        %3702 = vmatmul.mubr.bf16.gmra.mxu0 %v3667
        %v3703 = vpop.f32.mrf.mxu0
        %v3704 = vadd.f32 0.0, %v3703
        %v3705 = vpop.f32.mrf.mxu0
        %v3706 = vpop.f32.mrf.mxu0
        %v3707 = vadd.f32 0.0, %v3706
        %v3708 = vpop.f32.mrf.mxu0
        %3709 = vdwg.mxu0
        %v3710 = vadd.f32 %v3632, %v3704
        %v3711 = vadd.f32 %v3633, %v3707
        %s3712 = scalar_lea.vmem %s10, 32
        %v3713 = vld [vmem:[%s3712] sm:$0xf]
        %v3714 = vld [vmem:[%s3712 + $0x4] sm:$0xf]
        %v3717 = vunpack.c.l.b16 %v3713
        %v3718 = vunpack.c.l.b16 %v3714
        %v3719 = vpack.c.b16 %v3718, %v3717
        %3720 = vrot.lane.b32.xlu0 %v3413, 124
        %v3721 = vpop.permute.xlu0 %3720
        %3722 = vrot.lane.b32.xlu0 %v3414, 124
        %v3723 = vpop.permute.xlu0 %3722
        %3724 = vrot.lane.b32.xlu0 %v3415, 124
        %v3725 = vpop.permute.xlu0 %3724
        %3726 = vrot.lane.b32.xlu0 %v3416, 124
        %v3727 = vpop.permute.xlu0 %3726
        %3728 = vrot.lane.b32.xlu0 %v3417, 124
        %v3729 = vpop.permute.xlu0 %3728
        %3730 = vrot.lane.b32.xlu0 %v3418, 124
        %v3731 = vpop.permute.xlu0 %3730
        %3732 = vrot.lane.b32.xlu0 %v3419, 124
        %v3733 = vpop.permute.xlu0 %3732
        %3734 = vrot.lane.b32.xlu0 %v3420, 124
        %v3735 = vpop.permute.xlu0 %3734
        %v3736 = vsel %vm618, %v3721, %v3723
        %v3737 = vsel %vm618, %v3725, %v3727
        %v3738 = vsel %vm618, %v3729, %v3731
        %v3739 = vsel %vm618, %v3733, %v3735
        %v3745 = vsel %vm916, %v3719, 0
        %3747 = vmatprep.subr.bf16.mxu0 0
        %3748 = vmatpush1.bf16.msra.mxu0 0
        %3749 = vmatprep.subr.bf16.mxu0 0
        %3750 = vmatpush1.bf16.msra.mxu0 0
        %3751 = vmatprep.subr.bf16.mxu0 0
        %3752 = vmatpush1.bf16.msra.mxu0 0
        %3753 = vmatprep.subr.bf16.mxu0 0
        %3754 = vmatpush1.bf16.msra.mxu0 0
        %3755 = vmatprep.subr.bf16.mxu0 0
        %3756 = vmatpush1.bf16.msra.mxu0 %v3739
        %3757 = vmatprep.subr.bf16.mxu0 0
        %3758 = vmatpush1.bf16.msra.mxu0 %v3738
        %3759 = vmatprep.subr.bf16.mxu0 0
        %3760 = vmatpush1.bf16.msra.mxu0 %v3737
        %3761 = vmatprep.subr.bf16.mxu0 0
        %3762 = vmatpush1.bf16.msra.mxu0 %v3736
        %3763 = vmatprep.subr.bf16.mxu0 0
        %3764 = vmatpush2.bf16.msra.mxu0 0
        %3765 = vmatprep.subr.bf16.mxu0 0
        %3766 = vmatpush2.bf16.msra.mxu0 0
        %3767 = vmatprep.subr.bf16.mxu0 0
        %3768 = vmatpush2.bf16.msra.mxu0 0
        %3769 = vmatprep.subr.bf16.mxu0 0
        %3770 = vmatpush2.bf16.msra.mxu0 0
        %3771 = vmatprep.subr.bf16.mxu0 0
        %3772 = vmatpush2.bf16.msra.mxu0 0
        %3773 = vmatprep.subr.bf16.mxu0 0
        %3774 = vmatpush2.bf16.msra.mxu0 0
        %3775 = vmatprep.subr.bf16.mxu0 0
        %3776 = vmatpush2.bf16.msra.mxu0 0
        %3777 = vmatprep.subr.bf16.mxu0 0
        %3778 = vmatpush2.bf16.msra.mxu0 0
        %3779 = vmatprep.mubr.bf16.mxu0 0
        %3780 = vmatmul.mubr.bf16.gmra.mxu0 %v3745
        %v3781 = vpop.f32.mrf.mxu0
        %v3782 = vadd.f32 0.0, %v3781
        %v3783 = vpop.f32.mrf.mxu0
        %v3784 = vpop.f32.mrf.mxu0
        %v3785 = vadd.f32 0.0, %v3784
        %v3786 = vpop.f32.mrf.mxu0
        %3787 = vdwg.mxu0
        %v3788 = vadd.f32 %v3710, %v3782
        %v3789 = vadd.f32 %v3711, %v3785
        %v3790 = vld [vmem:[%s11] sm:$0xff]
        %v3791 = vld [vmem:[%s11 + $0x8] sm:$0xff]
        %3793 = vset.pattern.permute.xlu0 0
        %3794 = vperm.xlu0 %3793, %v3790
        %v3795 = vpop.permute.xlu0 %3794
        %3798 = vset.pattern.permute.xlu0 0
        %3799 = vperm.xlu0 %3798, %v3791
        %v3800 = vpop.permute.xlu0 %3799
        %v3802 = vadd.f32 %v3788, %v3795
        %v3803 = vadd.f32 %v3789, %v3800
        %3804 = vst [vmem:[%s566] sm:$0xff] %v3802
        %3805 = vst [vmem:[%s566 + $0x8] sm:$0xff] %v3803
        %s3806 = sand.u32 %s321, 1
        %s3807 = scalar_lea.sflag [#allocation5], %s3806
        %s3808 = sand.u32 %s321, 1
        %s3809 = smul.addr %s3808, 16
        %s3810 = scalar_lea.vmem [#allocation11], %s3809
        // Predicated region
        $region126: #{tpu_custom_call.1} parent=104 // pred_check
          %p3811 = pneg %p331
        $region127: #{tpu_custom_call.1} parent=104 // pred_check_branch
          %3813 = sbr.rel (%p3811) target = $region129
        $region128: #{tpu_custom_call.1} parent=104 // pred_region
          %s3815 = ssub.s32 256, 256
          %3816 = vsyncadd %s3807, %s3815
          %s3817 = smul.addr %s35, 6
          %s3818 = sadd.s32 %s36, %s3817
          %s3819 = smul.addr %s3818, 128
          %s3820 = scalar_lea.hbm %s12, %s3819
          %s3821 = sshll.u32 %s3810, 4
          %s3822 = int_to_ptr.vmem [resolvable:$true] %s3821
          %3827 = dma.vmem_to_hbm [thread:$0]  %s3822, 256, %s3820, %s3807, 128, 384, 8
        $region129: #{tpu_custom_call.1} parent=104 // pred_fallthru
          _
      $region105: #{tpu_custom_call.1} parent=5 // pred_fallthru
        _
      %p3828 = scmp.le.s32.totalorder 2, %s26
      // Predicated region
      $region130: #{tpu_custom_call.1} parent=5 // pred_check
        %p3829 = pneg %p3828
      $region131: #{tpu_custom_call.1} parent=5 // pred_check_branch
        %3831 = sbr.rel (%p3829) target = $region133
      $region132: #{tpu_custom_call.1} parent=5 // pred_region
        %s3832 = ssub.s32 %s26, 2
        // Predicated region
        $region134: #{tpu_custom_call.1} parent=132 // pred_check
          %p3833 = pneg %p337
        $region135: #{tpu_custom_call.1} parent=132 // pred_check_branch
          %3835 = sbr.rel (%p3833) target = $region137
        $region136: #{tpu_custom_call.1} parent=132 // pred_region
          %s3836 = sand.u32 %s322, 1
          %s3837 = scalar_lea.sflag [#allocation5], %s3836
          %s3838 = sand.u32 %s322, 1
          %s3839 = smul.addr %s3838, 16
          %s3840 = scalar_lea.vmem [#allocation11], %s3839
          %3841 = dma.done %s3837, 256
        $region137: #{tpu_custom_call.1} parent=132 // pred_fallthru
          _
      $region133: #{tpu_custom_call.1} parent=5 // pred_fallthru
        _
    $region6: #{tpu_custom_call.1} parent=1 // loop_footer
      %s30 = sadd.s32 1, %s26
    $region7: #{tpu_custom_call.1} parent=1 // loop_footer_branch
      %25 = sbr.rel target = $region3
    $region8: #{tpu_custom_call.1} parent=1 // loop_exit
      _
    %3842 = vsyncpa [#allocation4], 1
    %s3843 = scalar_lea.sflag [#allocation4], 1
    %3844 = vsyncpa %s3843, 1
    %3845 = vsyncpa [#allocation7], 1
    %3846 = vsyncpa [#allocation10], 1
    %3847 = vsyncpa [#allocation5], 1
    %s3848 = scalar_lea.sflag [#allocation5], 1
    %3849 = vsyncpa %s3848, 1

// kernel: tpu_custom_call.1
$region0: #{tpu_custom_call.1}
  #allocation0 [shape = 'u32[]', space=smem, size = 0x4, offset = 0x4, fixed_abs, tag = 'smem constant byte address 0x4 - core index']
  #allocation1 [shape = 'u32[144,128]{1,0:T(1,128)}', space=vmem, size = 0x12000, scoped, tag = 'internal scratch']
  %s0 = inlined_call_operand.vmem [shape: bf16[2,16,512], index: 0, kind: input, shape index: {}]
  %s1 = inlined_call_operand.hbm [shape: bf16[2,16,512], index: 1, kind: input, shape index: {}]
  %s2 = inlined_call_operand.hbm [shape: bf16[64,80], index: 2, kind: input, shape index: {}]
  %s3 = inlined_call_operand.vmem [shape: f32[64,1], index: 3, kind: input, shape index: {}]
  %s4 = inlined_call_operand.vmem [shape: bf16[5,64,64], index: 4, kind: input, shape index: {}]
  %s5 = inlined_call_operand.vmem [shape: f32[64,1], index: 5, kind: input, shape index: {}]
  %s6 = inlined_call_operand.hbm [shape: bf16[5,64,64], index: 6, kind: input, shape index: {}]
  %s7 = inlined_call_operand.vmem [shape: f32[64,1], index: 7, kind: input, shape index: {}]
  %s8 = inlined_call_operand.hbm [shape: bf16[5,64,64], index: 8, kind: input, shape index: {}]
  %s9 = inlined_call_operand.vmem [shape: f32[64,1], index: 9, kind: input, shape index: {}]
  %s10 = inlined_call_operand.vmem [shape: bf16[5,16,64], index: 10, kind: input, shape index: {}]
  %s11 = inlined_call_operand.vmem [shape: f32[16,1], index: 11, kind: input, shape index: {}]
  %s12 = inlined_call_operand.hbm [shape: f32[2,16,300], index: 12, kind: output, shape index: {}]
  %s13 = sld [smem:[#allocation0]]
  $region138: #{tpu_custom_call.1} parent=0
    _
  %s15 = ssub.s32 1, %s13
  %s16 = scalar_select 0, %s15, %s13
  $region1: #{tpu_custom_call.1} parent=0
    #allocation2 [shape = 'u8[8192]{0}', space=vmem, size = 0x2000, scoped, tag = 'input window, operand 0']
    #allocation3 [shape = 'u8[8192]{0}', space=vmem, size = 0x2000, scoped, tag = 'input window, operand 1']
    #allocation4 [shape = 's32[2]{0}', space=sflag, size = 0x8, scoped, tag = 'scoped memory for tpu_custom_call.1']
    #allocation5 [shape = 's32[2]{0}', space=sflag, size = 0x8, scoped, tag = 'scoped memory for tpu_custom_call.1']
    #allocation6 [shape = 'u8[16384]{0}', space=vmem, size = 0x4000, scoped, tag = 'input window, operand 2, single buffered']
    #allocation7 [shape = 's32[1]{0}', space=sflag, size = 0x4, scoped, tag = 'scoped memory for tpu_custom_call.1']
    #allocation8 [shape = 'u8[81920]{0}', space=vmem, size = 0x14000, scoped, tag = 'input window, operand 6, single buffered']
    #allocation9 [shape = 'u8[81920]{0}', space=vmem, size = 0x14000, scoped, tag = 'input window, operand 8, single buffered']
    #allocation10 [shape = 's32[1]{0}', space=sflag, size = 0x4, scoped, tag = 'scoped memory for tpu_custom_call.1']
    #allocation11 [shape = 'u8[16384]{0}', space=vmem, size = 0x4000, scoped, tag = 'output window, operand 0']
    %17 = vsyncpa [#allocation4], 0
    %s18 = scalar_lea.sflag [#allocation4], 1
    %19 = vsyncpa %s18, 0
    %20 = vsyncpa [#allocation7], 0
    %21 = vsyncpa [#allocation10], 0
    %22 = vsyncpa [#allocation5], 0
    %s23 = scalar_lea.sflag [#allocation5], 1
    %24 = vsyncpa %s23, 0
    loop: start=0, step=1, limit=8
    $region2: #{tpu_custom_call.1} parent=1 // loop_pre_header
      _
    $region3: #{tpu_custom_call.1} parent=1 // loop_header
      %s26 = sphi 0, %s30
      %p27 = scmp.ge.s32.totalorder %s26, 8
      %s33 = sphi 0, %s45
      %s34 = sphi 0, %s41
      %s35 = sphi 0, %s33
      %s36 = sphi 0, %s34
      %s37 = sphi 0, %s35
      %s38 = sphi 0, %s36
      %s50 = sphi 0, %s52
      %s53 = sphi 0, %s50
      %s54 = sphi 0, %s53
      %s70 = sphi 0, %s54
      %s80 = sphi 0, %s82
      %s83 = sphi 0, %s80
      %s84 = sphi 0, %s83
      %s100 = sphi 0, %s84
      %s104 = sphi 0, %s104
      %s106 = sphi 0, %s104
      %s107 = sphi 0, %s106
      %s121 = sphi 0, %s107
      %s125 = sphi 0, %s125
      %s127 = sphi 0, %s125
      %s128 = sphi 0, %s127
      %s142 = sphi 0, %s128
      %s146 = sphi 0, %s146
      %s148 = sphi 0, %s146
      %s149 = sphi 0, %s148
      %s163 = sphi 0, %s149
      %s167 = sphi 0, %s167
      %s169 = sphi 0, %s167
      %s170 = sphi 0, %s169
      %s184 = sphi 0, %s170
      %s188 = sphi 0, %s188
      %s190 = sphi 0, %s188
      %s191 = sphi 0, %s190
      %s205 = sphi 0, %s191
      %s209 = sphi 0, %s209
      %s211 = sphi 0, %s209
      %s212 = sphi 0, %s211
      %s226 = sphi 0, %s212
      %s230 = sphi 0, %s230
      %s232 = sphi 0, %s230
      %s233 = sphi 0, %s232
      %s247 = sphi 0, %s233
      %s251 = sphi 0, %s251
      %s253 = sphi 0, %s251
      %s254 = sphi 0, %s253
      %s268 = sphi 0, %s254
      %s272 = sphi 0, %s272
      %s274 = sphi 0, %s272
      %s275 = sphi 0, %s274
      %s289 = sphi 0, %s275
      %s293 = sphi 0, %s293
      %s295 = sphi 0, %s293
      %s296 = sphi 0, %s295
      %s310 = sphi 0, %s296
      %s318 = sphi 0, %s320
      %s321 = sphi 0, %s318
      %s322 = sphi 0, %s321
      %s338 = sphi 0, %s322
    $region4: #{tpu_custom_call.1} parent=1 // loop_header_branch
      %29 = sbr.rel (%p27) target = $region8
    $region5: #{tpu_custom_call.1} parent=1 // loop_body
      %s31 = ssub.s32 %s26, 1
      %s32 = ssub.s32 %s26, 2
      %s39 = sadd.s32 1, %s34
      %p40 = scmp.ge.s32.totalorder %s39, 3
      %s41 = scalar_select %p40, 0, %s39
      %s42 = sadd.s32 1, %s33
      %s43 = scalar_select %p40, %s42, %s33
      %p44 = scmp.ge.s32.totalorder %s43, 2
      %s45 = scalar_select %p44, 0, %s43
      %s46 = ssub.s32 %s33, %s45
      %s47 = ssub.s32 %s34, %s41
      %s48 = sor.u32 %s46, %s47
      %p49 = scmp.eq.s32.totalorder %s48, 0
      %s51 = sadd.s32 %s50, 1
      %s52 = scalar_select %p49, %s50, %s51
      %p55 = pneg %p49
      %p56 = scmp.eq.s32.totalorder %s26, 5
      %p57 = por %p55, %p56
      %p58 = scmp.ne.s32.totalorder %s50, %s53
      %p59 = scmp.eq.s32.totalorder %s26, 0
      %p60 = por %p58, %p59
      %p61 = scmp.ne.s32.totalorder %s50, %s53
      %p62 = scmp.eq.s32.totalorder %s31, 5
      %p63 = por %p61, %p62
      %p64 = scmp.ne.s32.totalorder %s53, %s54
      %p65 = scmp.eq.s32.totalorder %s31, 0
      %p66 = por %p64, %p65
      %p67 = scmp.ne.s32.totalorder %s53, %s54
      %p68 = scmp.eq.s32.totalorder %s32, 5
      %p69 = por %p67, %p68
      %p71 = scmp.ne.s32.totalorder %s54, %s70
      %p72 = scmp.eq.s32.totalorder %s32, 0
      %p73 = por %p71, %p72
      %s74 = sadd.s32 %s34, 1
      %s75 = sadd.s32 %s41, 1
      %s76 = ssub.s32 %s33, %s45
      %s77 = ssub.s32 %s74, %s75
      %s78 = sor.u32 %s76, %s77
      %p79 = scmp.eq.s32.totalorder %s78, 0
      %s81 = sadd.s32 %s80, 1
      %s82 = scalar_select %p79, %s80, %s81
      %p85 = pneg %p79
      %p86 = scmp.eq.s32.totalorder %s26, 5
      %p87 = por %p85, %p86
      %p88 = scmp.ne.s32.totalorder %s80, %s83
      %p89 = scmp.eq.s32.totalorder %s26, 0
      %p90 = por %p88, %p89
      %p91 = scmp.ne.s32.totalorder %s80, %s83
      %p92 = scmp.eq.s32.totalorder %s31, 5
      %p93 = por %p91, %p92
      %p94 = scmp.ne.s32.totalorder %s83, %s84
      %p95 = scmp.eq.s32.totalorder %s31, 0
      %p96 = por %p94, %p95
      %p97 = scmp.ne.s32.totalorder %s83, %s84
      %p98 = scmp.eq.s32.totalorder %s32, 5
      %p99 = por %p97, %p98
      %p101 = scmp.ne.s32.totalorder %s84, %s100
      %p102 = scmp.eq.s32.totalorder %s32, 0
      %p103 = por %p101, %p102
      %s105 = sadd.s32 %s104, 1
      %p108 = scmp.eq.s32.totalorder %s26, 5
      %p109 = scmp.ne.s32.totalorder %s104, %s106
      %p110 = scmp.eq.s32.totalorder %s26, 0
      %p111 = por %p109, %p110
      %p112 = scmp.ne.s32.totalorder %s104, %s106
      %p113 = scmp.eq.s32.totalorder %s31, 5
      %p114 = por %p112, %p113
      %p115 = scmp.ne.s32.totalorder %s106, %s107
      %p116 = scmp.eq.s32.totalorder %s31, 0
      %p117 = por %p115, %p116
      %p118 = scmp.ne.s32.totalorder %s106, %s107
      %p119 = scmp.eq.s32.totalorder %s32, 5
      %p120 = por %p118, %p119
      %p122 = scmp.ne.s32.totalorder %s107, %s121
      %p123 = scmp.eq.s32.totalorder %s32, 0
      %p124 = por %p122, %p123
      %s126 = sadd.s32 %s125, 1
      %p129 = scmp.eq.s32.totalorder %s26, 5
      %p130 = scmp.ne.s32.totalorder %s125, %s127
      %p131 = scmp.eq.s32.totalorder %s26, 0
      %p132 = por %p130, %p131
      %p133 = scmp.ne.s32.totalorder %s125, %s127
      %p134 = scmp.eq.s32.totalorder %s31, 5
      %p135 = por %p133, %p134
      %p136 = scmp.ne.s32.totalorder %s127, %s128
      %p137 = scmp.eq.s32.totalorder %s31, 0
      %p138 = por %p136, %p137
      %p139 = scmp.ne.s32.totalorder %s127, %s128
      %p140 = scmp.eq.s32.totalorder %s32, 5
      %p141 = por %p139, %p140
      %p143 = scmp.ne.s32.totalorder %s128, %s142
      %p144 = scmp.eq.s32.totalorder %s32, 0
      %p145 = por %p143, %p144
      %s147 = sadd.s32 %s146, 1
      %p150 = scmp.eq.s32.totalorder %s26, 5
      %p151 = scmp.ne.s32.totalorder %s146, %s148
      %p152 = scmp.eq.s32.totalorder %s26, 0
      %p153 = por %p151, %p152
      %p154 = scmp.ne.s32.totalorder %s146, %s148
      %p155 = scmp.eq.s32.totalorder %s31, 5
      %p156 = por %p154, %p155
      %p157 = scmp.ne.s32.totalorder %s148, %s149
      %p158 = scmp.eq.s32.totalorder %s31, 0
      %p159 = por %p157, %p158
      %p160 = scmp.ne.s32.totalorder %s148, %s149
      %p161 = scmp.eq.s32.totalorder %s32, 5
      %p162 = por %p160, %p161
      %p164 = scmp.ne.s32.totalorder %s149, %s163
      %p165 = scmp.eq.s32.totalorder %s32, 0
      %p166 = por %p164, %p165
      %s168 = sadd.s32 %s167, 1
      %p171 = scmp.eq.s32.totalorder %s26, 5
      %p172 = scmp.ne.s32.totalorder %s167, %s169
      %p173 = scmp.eq.s32.totalorder %s26, 0
      %p174 = por %p172, %p173
      %p175 = scmp.ne.s32.totalorder %s167, %s169
      %p176 = scmp.eq.s32.totalorder %s31, 5
      %p177 = por %p175, %p176
      %p178 = scmp.ne.s32.totalorder %s169, %s170
      %p179 = scmp.eq.s32.totalorder %s31, 0
      %p180 = por %p178, %p179
      %p181 = scmp.ne.s32.totalorder %s169, %s170
      %p182 = scmp.eq.s32.totalorder %s32, 5
      %p183 = por %p181, %p182
      %p185 = scmp.ne.s32.totalorder %s170, %s184
      %p186 = scmp.eq.s32.totalorder %s32, 0
      %p187 = por %p185, %p186
      %s189 = sadd.s32 %s188, 1
      %p192 = scmp.eq.s32.totalorder %s26, 5
      %p193 = scmp.ne.s32.totalorder %s188, %s190
      %p194 = scmp.eq.s32.totalorder %s26, 0
      %p195 = por %p193, %p194
      %p196 = scmp.ne.s32.totalorder %s188, %s190
      %p197 = scmp.eq.s32.totalorder %s31, 5
      %p198 = por %p196, %p197
      %p199 = scmp.ne.s32.totalorder %s190, %s191
      %p200 = scmp.eq.s32.totalorder %s31, 0
      %p201 = por %p199, %p200
      %p202 = scmp.ne.s32.totalorder %s190, %s191
      %p203 = scmp.eq.s32.totalorder %s32, 5
      %p204 = por %p202, %p203
      %p206 = scmp.ne.s32.totalorder %s191, %s205
      %p207 = scmp.eq.s32.totalorder %s32, 0
      %p208 = por %p206, %p207
      %s210 = sadd.s32 %s209, 1
      %p213 = scmp.eq.s32.totalorder %s26, 5
      %p214 = scmp.ne.s32.totalorder %s209, %s211
      %p215 = scmp.eq.s32.totalorder %s26, 0
      %p216 = por %p214, %p215
      %p217 = scmp.ne.s32.totalorder %s209, %s211
      %p218 = scmp.eq.s32.totalorder %s31, 5
      %p219 = por %p217, %p218
      %p220 = scmp.ne.s32.totalorder %s211, %s212
      %p221 = scmp.eq.s32.totalorder %s31, 0
      %p222 = por %p220, %p221
      %p223 = scmp.ne.s32.totalorder %s211, %s212
      %p224 = scmp.eq.s32.totalorder %s32, 5
      %p225 = por %p223, %p224
      %p227 = scmp.ne.s32.totalorder %s212, %s226
      %p228 = scmp.eq.s32.totalorder %s32, 0
      %p229 = por %p227, %p228
      %s231 = sadd.s32 %s230, 1
      %p234 = scmp.eq.s32.totalorder %s26, 5
      %p235 = scmp.ne.s32.totalorder %s230, %s232
      %p236 = scmp.eq.s32.totalorder %s26, 0
      %p237 = por %p235, %p236
      %p238 = scmp.ne.s32.totalorder %s230, %s232
      %p239 = scmp.eq.s32.totalorder %s31, 5
      %p240 = por %p238, %p239
      %p241 = scmp.ne.s32.totalorder %s232, %s233
      %p242 = scmp.eq.s32.totalorder %s31, 0
      %p243 = por %p241, %p242
      %p244 = scmp.ne.s32.totalorder %s232, %s233
      %p245 = scmp.eq.s32.totalorder %s32, 5
      %p246 = por %p244, %p245
      %p248 = scmp.ne.s32.totalorder %s233, %s247
      %p249 = scmp.eq.s32.totalorder %s32, 0
      %p250 = por %p248, %p249
      %s252 = sadd.s32 %s251, 1
      %p255 = scmp.eq.s32.totalorder %s26, 5
      %p256 = scmp.ne.s32.totalorder %s251, %s253
      %p257 = scmp.eq.s32.totalorder %s26, 0
      %p258 = por %p256, %p257
      %p259 = scmp.ne.s32.totalorder %s251, %s253
      %p260 = scmp.eq.s32.totalorder %s31, 5
      %p261 = por %p259, %p260
      %p262 = scmp.ne.s32.totalorder %s253, %s254
      %p263 = scmp.eq.s32.totalorder %s31, 0
      %p264 = por %p262, %p263
      %p265 = scmp.ne.s32.totalorder %s253, %s254
      %p266 = scmp.eq.s32.totalorder %s32, 5
      %p267 = por %p265, %p266
      %p269 = scmp.ne.s32.totalorder %s254, %s268
      %p270 = scmp.eq.s32.totalorder %s32, 0
      %p271 = por %p269, %p270
      %s273 = sadd.s32 %s272, 1
      %p276 = scmp.eq.s32.totalorder %s26, 5
      %p277 = scmp.ne.s32.totalorder %s272, %s274
      %p278 = scmp.eq.s32.totalorder %s26, 0
      %p279 = por %p277, %p278
      %p280 = scmp.ne.s32.totalorder %s272, %s274
      %p281 = scmp.eq.s32.totalorder %s31, 5
      %p282 = por %p280, %p281
      %p283 = scmp.ne.s32.totalorder %s274, %s275
      %p284 = scmp.eq.s32.totalorder %s31, 0
      %p285 = por %p283, %p284
      %p286 = scmp.ne.s32.totalorder %s274, %s275
      %p287 = scmp.eq.s32.totalorder %s32, 5
      %p288 = por %p286, %p287
      %p290 = scmp.ne.s32.totalorder %s275, %s289
      %p291 = scmp.eq.s32.totalorder %s32, 0
      %p292 = por %p290, %p291
      %s294 = sadd.s32 %s293, 1
      %p297 = scmp.eq.s32.totalorder %s26, 5
      %p298 = scmp.ne.s32.totalorder %s293, %s295
      %p299 = scmp.eq.s32.totalorder %s26, 0
      %p300 = por %p298, %p299
      %p301 = scmp.ne.s32.totalorder %s293, %s295
      %p302 = scmp.eq.s32.totalorder %s31, 5
      %p303 = por %p301, %p302
      %p304 = scmp.ne.s32.totalorder %s295, %s296
      %p305 = scmp.eq.s32.totalorder %s31, 0
      %p306 = por %p304, %p305
      %p307 = scmp.ne.s32.totalorder %s295, %s296
      %p308 = scmp.eq.s32.totalorder %s32, 5
      %p309 = por %p307, %p308
      %p311 = scmp.ne.s32.totalorder %s296, %s310
      %p312 = scmp.eq.s32.totalorder %s32, 0
      %p313 = por %p311, %p312
      %s314 = ssub.s32 %s33, %s45
      %s315 = ssub.s32 %s34, %s41
      %s316 = sor.u32 %s314, %s315
      %p317 = scmp.eq.s32.totalorder %s316, 0
      %s319 = sadd.s32 %s318, 1
      %s320 = scalar_select %p317, %s318, %s319
      %p323 = pneg %p317
      %p324 = scmp.eq.s32.totalorder %s26, 5
      %p325 = por %p323, %p324
      %p326 = scmp.ne.s32.totalorder %s318, %s321
      %p327 = scmp.eq.s32.totalorder %s26, 0
      %p328 = por %p326, %p327
      %p329 = scmp.ne.s32.totalorder %s318, %s321
      %p330 = scmp.eq.s32.totalorder %s31, 5
      %p331 = por %p329, %p330
      %p332 = scmp.ne.s32.totalorder %s321, %s322
      %p333 = scmp.eq.s32.totalorder %s31, 0
      %p334 = por %p332, %p333
      %p335 = scmp.ne.s32.totalorder %s321, %s322
      %p336 = scmp.eq.s32.totalorder %s32, 5
      %p337 = por %p335, %p336
      %p339 = scmp.ne.s32.totalorder %s322, %s338
      %p340 = scmp.eq.s32.totalorder %s32, 0
      %p341 = por %p339, %p340
      %p342 = scmp.le.s32.totalorder 1, %s26
      %p343 = scmp.lt.s32.totalorder %s26, 7
      %p344 = pnand %p342, %p343
      %p345 = pneg %p344
      // Predicated region
      $region9: #{tpu_custom_call.1} parent=5 // pred_check
        _
      $region10: #{tpu_custom_call.1} parent=5 // pred_check_branch
        %347 = sbr.rel (%p344) target = $region12
      $region11: #{tpu_custom_call.1} parent=5 // pred_region
        %s348 = ssub.s32 %s26, 1
        // Predicated region
        $region13: #{tpu_custom_call.1} parent=11 // pred_check
          %p349 = pneg %p117
        $region14: #{tpu_custom_call.1} parent=11 // pred_check_branch
          %351 = sbr.rel (%p349) target = $region16
        $region15: #{tpu_custom_call.1} parent=11 // pred_region
          %s353 = ssub.s32 512, 512
          %354 = vsyncadd [#allocation7], %s353
          %s355 = sshll.u32 [#allocation6], 4
          %s356 = int_to_ptr.vmem [resolvable:$true] %s355
          %361 = dma.hbm_to_vmem [thread:$0]  %s2, 512, %s356, [#allocation7], 64, 64, 4
        $region16: #{tpu_custom_call.1} parent=11 // pred_fallthru
          _
        // Predicated region
        $region17: #{tpu_custom_call.1} parent=11 // pred_check
          %p362 = pneg %p138
        $region18: #{tpu_custom_call.1} parent=11 // pred_check_branch
          %364 = sbr.rel (%p362) target = $region20
        $region19: #{tpu_custom_call.1} parent=11 // pred_region
          _
        $region20: #{tpu_custom_call.1} parent=11 // pred_fallthru
          _
        // Predicated region
        $region21: #{tpu_custom_call.1} parent=11 // pred_check
          %p365 = pneg %p159
        $region22: #{tpu_custom_call.1} parent=11 // pred_check_branch
          %367 = sbr.rel (%p365) target = $region24
        $region23: #{tpu_custom_call.1} parent=11 // pred_region
          _
        $region24: #{tpu_custom_call.1} parent=11 // pred_fallthru
          _
        // Predicated region
        $region25: #{tpu_custom_call.1} parent=11 // pred_check
          %p368 = pneg %p180
        $region26: #{tpu_custom_call.1} parent=11 // pred_check_branch
          %370 = sbr.rel (%p368) target = $region28
        $region27: #{tpu_custom_call.1} parent=11 // pred_region
          _
        $region28: #{tpu_custom_call.1} parent=11 // pred_fallthru
          _
        // Predicated region
        $region29: #{tpu_custom_call.1} parent=11 // pred_check
          %p371 = pneg %p201
        $region30: #{tpu_custom_call.1} parent=11 // pred_check_branch
          %373 = sbr.rel (%p371) target = $region32
        $region31: #{tpu_custom_call.1} parent=11 // pred_region
          %s375 = ssub.s32 2560, 2560
          %376 = vsyncadd [#allocation7], %s375
          %s377 = sshll.u32 [#allocation8], 4
          %s378 = int_to_ptr.vmem [resolvable:$true] %s377
          %383 = dma.hbm_to_vmem [thread:$0]  %s6, 2560, %s378, [#allocation7], 64, 64, 4
        $region32: #{tpu_custom_call.1} parent=11 // pred_fallthru
          _
        // Predicated region
        $region33: #{tpu_custom_call.1} parent=11 // pred_check
          %p384 = pneg %p222
        $region34: #{tpu_custom_call.1} parent=11 // pred_check_branch
          %386 = sbr.rel (%p384) target = $region36
        $region35: #{tpu_custom_call.1} parent=11 // pred_region
          _
        $region36: #{tpu_custom_call.1} parent=11 // pred_fallthru
          _
        // Predicated region
        $region37: #{tpu_custom_call.1} parent=11 // pred_check
          %p387 = pneg %p243
        $region38: #{tpu_custom_call.1} parent=11 // pred_check_branch
          %389 = sbr.rel (%p387) target = $region40
        $region39: #{tpu_custom_call.1} parent=11 // pred_region
          %s391 = ssub.s32 2560, 2560
          %392 = vsyncadd [#allocation10], %s391
          %s393 = sshll.u32 [#allocation9], 4
          %s394 = int_to_ptr.vmem [resolvable:$true] %s393
          %399 = dma.hbm_to_vmem [thread:$0]  %s8, 2560, %s394, [#allocation10], 64, 64, 4
        $region40: #{tpu_custom_call.1} parent=11 // pred_fallthru
          _
        // Predicated region
        $region41: #{tpu_custom_call.1} parent=11 // pred_check
          %p400 = pneg %p264
        $region42: #{tpu_custom_call.1} parent=11 // pred_check_branch
          %402 = sbr.rel (%p400) target = $region44
        $region43: #{tpu_custom_call.1} parent=11 // pred_region
          _
        $region44: #{tpu_custom_call.1} parent=11 // pred_fallthru
          _
        // Predicated region
        $region45: #{tpu_custom_call.1} parent=11 // pred_check
          %p403 = pneg %p285
        $region46: #{tpu_custom_call.1} parent=11 // pred_check_branch
          %405 = sbr.rel (%p403) target = $region48
        $region47: #{tpu_custom_call.1} parent=11 // pred_region
          _
        $region48: #{tpu_custom_call.1} parent=11 // pred_fallthru
          _
        // Predicated region
        $region49: #{tpu_custom_call.1} parent=11 // pred_check
          %p406 = pneg %p306
        $region50: #{tpu_custom_call.1} parent=11 // pred_check_branch
          %408 = sbr.rel (%p406) target = $region52
        $region51: #{tpu_custom_call.1} parent=11 // pred_region
          _
        $region52: #{tpu_custom_call.1} parent=11 // pred_fallthru
          _
      $region12: #{tpu_custom_call.1} parent=5 // pred_fallthru
        _
      %p409 = scmp.lt.s32.totalorder %s26, 6
      // Predicated region
      $region53: #{tpu_custom_call.1} parent=5 // pred_check
        %p410 = pneg %p409
      $region54: #{tpu_custom_call.1} parent=5 // pred_check_branch
        %412 = sbr.rel (%p410) target = $region56
      $region55: #{tpu_custom_call.1} parent=5 // pred_region
        // Predicated region
        $region57: #{tpu_custom_call.1} parent=55 // pred_check
          %p413 = pneg %p60
        $region58: #{tpu_custom_call.1} parent=55 // pred_check_branch
          %415 = sbr.rel (%p413) target = $region60
        $region59: #{tpu_custom_call.1} parent=55 // pred_region
          %s416 = sand.u32 %s50, 1
          %s417 = sand.u32 %s50, 1
          %s418 = smul.addr %s417, 8
          %s419 = scalar_lea.vmem [#allocation2], %s418
          %s420 = smul.addr %s33, 8
          %s421 = sadd.s32 %s34, %s420
          %s422 = smul.addr %s421, 4
          %s423 = scalar_lea.vmem %s0, %s422
          // Predicated region
          $region61: #{tpu_custom_call.1} parent=59 // pred_check
            _
          $region62: #{tpu_custom_call.1} parent=59 // pred_check_branch
            %425 = sbr.rel (0) target = $region64
          $region63: #{tpu_custom_call.1} parent=59 // pred_region
            // Predicated region
            $region65: #{tpu_custom_call.1} parent=63 // pred_check
              _
            $region66: #{tpu_custom_call.1} parent=63 // pred_check_branch
              %427 = sbr.rel target = $region68
            $region67: #{tpu_custom_call.1} parent=63 // pred_region
              // Predicated region
              $region80: #{tpu_custom_call.1} parent=67 // pred_check
                _
              $region81: #{tpu_custom_call.1} parent=67 // pred_check_branch
                %445 = sbr.rel (0) target = $region83
              $region82: #{tpu_custom_call.1} parent=67 // pred_region
                loop: start=0, step=1, limit=1
                $region84: #{tpu_custom_call.1} parent=82 // loop_pre_header
                  _
                $region85: #{tpu_custom_call.1} parent=82 // loop_header
                  %s447 = sphi 0, %s451
                  %p448 = scmp.ge.s32.totalorder %s447, 1
                  %s452 = sphi %s423, %s423
                  %s453 = sphi %s419, %s419
                $region86: #{tpu_custom_call.1} parent=82 // loop_header_branch
                  %450 = sbr.rel (%p448) target = $region90
                $region87: #{tpu_custom_call.1} parent=82 // loop_body
                  _
                $region88: #{tpu_custom_call.1} parent=82 // loop_footer
                  %s451 = sadd.s32 1, %s447
                $region89: #{tpu_custom_call.1} parent=82 // loop_footer_branch
                  %446 = sbr.rel target = $region85
                $region90: #{tpu_custom_call.1} parent=82 // loop_exit
                  _
                %s455 = ssub.s32 16, 1
                loop: start=0, step=1, limit=1
                $region91: #{tpu_custom_call.1} parent=82 // loop_pre_header
                  _
                $region92: #{tpu_custom_call.1} parent=82 // loop_header
                  %s457 = sphi 0, %s461
                  %p458 = scmp.ge.s32.totalorder %s457, 1
                  %s462 = sphi %s423, %s423
                  %s463 = sphi %s419, %s419
                $region93: #{tpu_custom_call.1} parent=82 // loop_header_branch
                  %460 = sbr.rel (%p458) target = $region97
                $region94: #{tpu_custom_call.1} parent=82 // loop_body
                  %v464 = vld [vmem:[%s462] sm:%s455]
                  %465 = vst [vmem:[%s463] sm:%s455] %v464
                  %v466 = vld [vmem:[%s462 + $0x10] sm:%s455]
                  %467 = vst [vmem:[%s463 + $0x4] sm:%s455] %v466
                $region95: #{tpu_custom_call.1} parent=82 // loop_footer
                  %s461 = sadd.s32 1, %s457
                $region96: #{tpu_custom_call.1} parent=82 // loop_footer_branch
                  %456 = sbr.rel target = $region92
                $region97: #{tpu_custom_call.1} parent=82 // loop_exit
                  _
              $region83: #{tpu_custom_call.1} parent=67 // pred_fallthru
                _
            $region68: #{tpu_custom_call.1} parent=63 // pred_fallthru
              _
            // Predicated region
            $region69: #{tpu_custom_call.1} parent=63 // pred_check
              _
            $region70: #{tpu_custom_call.1} parent=63 // pred_check_branch
              %429 = sbr.rel (0) target = $region72
            $region71: #{tpu_custom_call.1} parent=63 // pred_region
              %s431 = ssub.s32 16, 1
              loop: start=0, step=1, limit=1
              $region73: #{tpu_custom_call.1} parent=71 // loop_pre_header
                _
              $region74: #{tpu_custom_call.1} parent=71 // loop_header
                %s433 = sphi 0, %s437
                %p434 = scmp.ge.s32.totalorder %s433, 1
                %s438 = sphi %s423, %s423
                %s439 = sphi %s419, %s419
              $region75: #{tpu_custom_call.1} parent=71 // loop_header_branch
                %436 = sbr.rel (%p434) target = $region79
              $region76: #{tpu_custom_call.1} parent=71 // loop_body
                %v440 = vld [vmem:[%s438] sm:%s431]
                %441 = vst [vmem:[%s439] sm:%s431] %v440
                %v442 = vld [vmem:[%s438 + $0x10] sm:%s431]
                %443 = vst [vmem:[%s439 + $0x4] sm:%s431] %v442
              $region77: #{tpu_custom_call.1} parent=71 // loop_footer
                %s437 = sadd.s32 1, %s433
              $region78: #{tpu_custom_call.1} parent=71 // loop_footer_branch
                %432 = sbr.rel target = $region74
              $region79: #{tpu_custom_call.1} parent=71 // loop_exit
                _
            $region72: #{tpu_custom_call.1} parent=63 // pred_fallthru
              _
          $region64: #{tpu_custom_call.1} parent=59 // pred_fallthru
            _
          %468 = vnop
        $region60: #{tpu_custom_call.1} parent=55 // pred_fallthru
          _
        // Predicated region
        $region98: #{tpu_custom_call.1} parent=55 // pred_check
          %p469 = pneg %p90
        $region99: #{tpu_custom_call.1} parent=55 // pred_check_branch
          %471 = sbr.rel (%p469) target = $region101
        $region100: #{tpu_custom_call.1} parent=55 // pred_region
          %s472 = sand.u32 %s80, 1
          %s473 = scalar_lea.sflag [#allocation4], %s472
          %s474 = sand.u32 %s80, 1
          %s475 = smul.addr %s474, 8
          %s476 = scalar_lea.vmem [#allocation3], %s475
          %s477 = sadd.s32 %s34, 1
          %s479 = ssub.s32 128, 128
          %480 = vsyncadd %s473, %s479
          %s481 = smul.addr %s33, 8
          %s482 = sadd.s32 %s477, %s481
          %s483 = smul.addr %s482, 64
          %s484 = scalar_lea.hbm %s1, %s483
          %s485 = sshll.u32 %s476, 4
          %s486 = int_to_ptr.vmem [resolvable:$true] %s485
          %491 = dma.hbm_to_vmem [thread:$0]  %s484, 128, %s486, %s473, 256, 64, 4
        $region101: #{tpu_custom_call.1} parent=55 // pred_fallthru
          _
      $region56: #{tpu_custom_call.1} parent=5 // pred_fallthru
        _
      %p492 = scmp.le.s32.totalorder 1, %s26
      %p493 = scmp.lt.s32.totalorder %s26, 7
      %p494 = pnand %p492, %p493
      %p495 = pneg %p494
      // Predicated region
      $region102: #{tpu_custom_call.1} parent=5 // pred_check
        _
      $region103: #{tpu_custom_call.1} parent=5 // pred_check_branch
        %497 = sbr.rel (%p494) target = $region105
      $region104: #{tpu_custom_call.1} parent=5 // pred_region
        %s498 = ssub.s32 %s26, 1
        %s499 = sand.u32 %s53, 1
        %s500 = sand.u32 %s53, 1
        %s501 = smul.addr %s500, 8
        %s502 = scalar_lea.vmem [#allocation2], %s501
        // Predicated region
        $region106: #{tpu_custom_call.1} parent=104 // pred_check
          %p503 = pneg %p66
        $region107: #{tpu_custom_call.1} parent=104 // pred_check_branch
          %505 = sbr.rel (%p503) target = $region109
        $region108: #{tpu_custom_call.1} parent=104 // pred_region
          _
        $region109: #{tpu_custom_call.1} parent=104 // pred_fallthru
          _
        %s506 = sand.u32 %s83, 1
        %s507 = scalar_lea.sflag [#allocation4], %s506
        %s508 = sand.u32 %s83, 1
        %s509 = smul.addr %s508, 8
        %s510 = scalar_lea.vmem [#allocation3], %s509
        // Predicated region
        $region110: #{tpu_custom_call.1} parent=104 // pred_check
          %p511 = pneg %p96
        $region111: #{tpu_custom_call.1} parent=104 // pred_check_branch
          %513 = sbr.rel (%p511) target = $region113
        $region112: #{tpu_custom_call.1} parent=104 // pred_region
          %514 = dma.done %s507, 128
        $region113: #{tpu_custom_call.1} parent=104 // pred_fallthru
          _
        // Predicated region
        $region114: #{tpu_custom_call.1} parent=104 // pred_check
          %p515 = pneg %p117
        $region115: #{tpu_custom_call.1} parent=104 // pred_check_branch
          %517 = sbr.rel (%p515) target = $region117
        $region116: #{tpu_custom_call.1} parent=104 // pred_region
          %518 = dma.done [#allocation7], 512
        $region117: #{tpu_custom_call.1} parent=104 // pred_fallthru
          _
        // Predicated region
        $region118: #{tpu_custom_call.1} parent=104 // pred_check
          %p519 = pneg %p201
        $region119: #{tpu_custom_call.1} parent=104 // pred_check_branch
          %521 = sbr.rel (%p519) target = $region121
        $region120: #{tpu_custom_call.1} parent=104 // pred_region
          %522 = dma.done [#allocation7], 2560
        $region121: #{tpu_custom_call.1} parent=104 // pred_fallthru
          _
        // Predicated region
        $region122: #{tpu_custom_call.1} parent=104 // pred_check
          %p523 = pneg %p243
        $region123: #{tpu_custom_call.1} parent=104 // pred_check_branch
          %525 = sbr.rel (%p523) target = $region125
        $region124: #{tpu_custom_call.1} parent=104 // pred_region
          %526 = dma.done [#allocation10], 2560
        $region125: #{tpu_custom_call.1} parent=104 // pred_fallthru
          _
        %s527 = sand.u32 %s53, 1
        %s528 = sand.u32 %s53, 1
        %s529 = smul.addr %s528, 8
        %s530 = scalar_lea.vmem [#allocation2], %s529
        %p531 = pneg %p66
        %p532 = pneg %p63
        %s533 = sand.u32 %s83, 1
        %s534 = scalar_lea.sflag [#allocation4], %s533
        %s535 = sand.u32 %s83, 1
        %s536 = smul.addr %s535, 8
        %s537 = scalar_lea.vmem [#allocation3], %s536
        %p538 = pneg %p96
        %p539 = pneg %p93
        %p540 = pneg %p117
        %p541 = pneg %p114
        %p542 = pneg %p138
        %p543 = pneg %p135
        %p544 = pneg %p159
        %p545 = pneg %p156
        %p546 = pneg %p180
        %p547 = pneg %p177
        %p548 = pneg %p201
        %p549 = pneg %p198
        %p550 = pneg %p222
        %p551 = pneg %p219
        %p552 = pneg %p243
        %p553 = pneg %p240
        %p554 = pneg %p264
        %p555 = pneg %p261
        %p556 = pneg %p285
        %p557 = pneg %p282
        %p558 = pneg %p306
        %p559 = pneg %p303
        %p560 = pneg %p334
        %p561 = pneg %p331
        %s562 = sand.u32 %s321, 1
        %s563 = scalar_lea.sflag [#allocation5], %s562
        %s564 = sand.u32 %s321, 1
        %s565 = smul.addr %s564, 16
        %s566 = scalar_lea.vmem [#allocation11], %s565
        %s567 = sadd.s32 %s36, 1
        %v571 = vld [vmem:[%s502] sm:$0xf]
        %v572 = vld [vmem:[%s502 + $0x4] sm:$0xf]
        %v573 = vld [vmem:[%s510] sm:$0xf]
        %v574 = vld [vmem:[%s510 + $0x4] sm:$0xf]
        %v577 = vunpack.c.l.b16 %v571
        %v578 = vunpack.c.l.b16 %v572
        %v579 = vpack.c.b16 %v578, %v577
        %v583 = vunpack.c.l.b16 %v573
        %v584 = vunpack.c.l.b16 %v574
        %v585 = vpack.c.b16 %v584, %v583
        %v587 = vlaneseq
        %v588 = vand.u32 %v587, 127
        %v589 = vadd.s32 %v588, 128
        %590 = vrot.lane.b32.xlu0 %v579, 127
        %v591 = vpop.permute.xlu0 %590
        %592 = vrot.lane.b32.xlu0 %v585, 127
        %v593 = vpop.permute.xlu0 %592
        %vm594 = vcmask 1039360
        %v595 = vsel %vm594, %v591, %v593
        %598 = vrot.lane.b32.xlu0 %v579, 126
        %v599 = vpop.permute.xlu0 %598
        %600 = vrot.lane.b32.xlu0 %v585, 126
        %v601 = vpop.permute.xlu0 %600
        %vm602 = vcmask 1031168
        %v603 = vsel %vm602, %v599, %v601
        %606 = vrot.lane.b32.xlu0 %v579, 125
        %v607 = vpop.permute.xlu0 %606
        %608 = vrot.lane.b32.xlu0 %v585, 125
        %v609 = vpop.permute.xlu0 %608
        %vm610 = vcmask 1022976
        %v611 = vsel %vm610, %v607, %v609
        %614 = vrot.lane.b32.xlu0 %v579, 124
        %v615 = vpop.permute.xlu0 %614
        %616 = vrot.lane.b32.xlu0 %v585, 124
        %v617 = vpop.permute.xlu0 %616
        %vm618 = vcmask 1014784
        %v619 = vsel %vm618, %v615, %v617
        %v622 = vld [vmem:[#allocation6] sm:$0xf]
        %v623 = vld [vmem:[#allocation6 + $0x4] sm:$0xf]
        %v624 = vld [vmem:[#allocation6 + $0x8] sm:$0xf]
        %v625 = vld [vmem:[#allocation6 + $0xc] sm:$0xf]
        %v626 = vld [vmem:[#allocation6 + $0x10] sm:$0xf]
        %v627 = vld [vmem:[#allocation6 + $0x14] sm:$0xf]
        %v628 = vld [vmem:[#allocation6 + $0x18] sm:$0xf]
        %v629 = vld [vmem:[#allocation6 + $0x1c] sm:$0xf]
        %v630 = vld [vmem:[%s3] sm:$0xff]
        %v631 = vld [vmem:[%s3 + $0x8] sm:$0xff]
        %v632 = vld [vmem:[%s3 + $0x10] sm:$0xff]
        %v633 = vld [vmem:[%s3 + $0x18] sm:$0xff]
        %v634 = vld [vmem:[%s3 + $0x20] sm:$0xff]
        %v635 = vld [vmem:[%s3 + $0x28] sm:$0xff]
        %v636 = vld [vmem:[%s3 + $0x30] sm:$0xff]
        %v637 = vld [vmem:[%s3 + $0x38] sm:$0xff]
        %639 = vset.pattern.permute.xlu0 0
        %640 = vperm.xlu0 %639, %v630
        %v641 = vpop.permute.xlu0 %640
        %644 = vset.pattern.permute.xlu0 0
        %645 = vperm.xlu0 %644, %v631
        %v646 = vpop.permute.xlu0 %645
        %649 = vset.pattern.permute.xlu0 0
        %650 = vperm.xlu0 %649, %v632
        %v651 = vpop.permute.xlu0 %650
        %654 = vset.pattern.permute.xlu0 0
        %655 = vperm.xlu0 %654, %v633
        %v656 = vpop.permute.xlu0 %655
        %659 = vset.pattern.permute.xlu0 0
        %660 = vperm.xlu0 %659, %v634
        %v661 = vpop.permute.xlu0 %660
        %664 = vset.pattern.permute.xlu0 0
        %665 = vperm.xlu0 %664, %v635
        %v666 = vpop.permute.xlu0 %665
        %669 = vset.pattern.permute.xlu0 0
        %670 = vperm.xlu0 %669, %v636
        %v671 = vpop.permute.xlu0 %670
        %674 = vset.pattern.permute.xlu0 0
        %675 = vperm.xlu0 %674, %v637
        %v676 = vpop.permute.xlu0 %675
        %v686 = vunpack.c.l.b16 %v622
        %v687 = vunpack.c.l.b16 %v623
        %v688 = vunpack.c.l.b16 %v624
        %v689 = vunpack.c.l.b16 %v625
        %v690 = vunpack.c.l.b16 %v626
        %v691 = vunpack.c.l.b16 %v627
        %v692 = vunpack.c.l.b16 %v628
        %v693 = vunpack.c.l.b16 %v629
        %v694 = vpack.c.b16 %v687, %v686
        %v695 = vpack.c.b16 %v689, %v688
        %v696 = vpack.c.b16 %v691, %v690
        %v697 = vpack.c.b16 %v693, %v692
        %vm698 = vcmask 654336
        %v700 = vsel %vm698, %v694, 0
        %v703 = vsel %vm698, %v695, 0
        %v706 = vsel %vm698, %v696, 0
        %v709 = vsel %vm698, %v697, 0
        %711 = vmatprep.subr.bf16.mxu0 0
        %712 = vmatpush1.bf16.msra.mxu0 0
        %713 = vmatprep.subr.bf16.mxu0 0
        %714 = vmatpush1.bf16.msra.mxu0 0
        %715 = vmatprep.subr.bf16.mxu0 0
        %716 = vmatpush1.bf16.msra.mxu0 0
        %717 = vmatprep.subr.bf16.mxu0 %v617
        %718 = vmatpush1.bf16.msra.mxu0 %v619
        %719 = vmatprep.subr.bf16.mxu0 %v609
        %720 = vmatpush1.bf16.msra.mxu0 %v611
        %721 = vmatprep.subr.bf16.mxu0 %v601
        %722 = vmatpush1.bf16.msra.mxu0 %v603
        %723 = vmatprep.subr.bf16.mxu0 %v593
        %724 = vmatpush1.bf16.msra.mxu0 %v595
        %725 = vmatprep.subr.bf16.mxu0 %v585
        %726 = vmatpush1.bf16.msra.mxu0 %v579
        %727 = vmatprep.subr.bf16.mxu0 0
        %728 = vmatpush2.bf16.msra.mxu0 0
        %729 = vmatprep.subr.bf16.mxu0 0
        %730 = vmatpush2.bf16.msra.mxu0 0
        %731 = vmatprep.subr.bf16.mxu0 0
        %732 = vmatpush2.bf16.msra.mxu0 0
        %733 = vmatprep.subr.bf16.mxu0 0
        %734 = vmatpush2.bf16.msra.mxu0 0
        %735 = vmatprep.subr.bf16.mxu0 0
        %736 = vmatpush2.bf16.msra.mxu0 0
        %737 = vmatprep.subr.bf16.mxu0 0
        %738 = vmatpush2.bf16.msra.mxu0 0
        %739 = vmatprep.subr.bf16.mxu0 0
        %740 = vmatpush2.bf16.msra.mxu0 0
        %741 = vmatprep.subr.bf16.mxu0 0
        %742 = vmatpush2.bf16.msra.mxu0 0
        %743 = vmatprep.mubr.bf16.mxu0 0
        %744 = vmatmul.mubr.bf16.gmra.mxu0 %v700
        %v745 = vpop.f32.mrf.mxu0
        %v746 = vadd.f32 %v641, %v745
        %v747 = vpop.f32.mrf.mxu0
        %v748 = vadd.f32 %v641, %v747
        %v749 = vpop.f32.mrf.mxu0
        %v750 = vadd.f32 %v646, %v749
        %v751 = vpop.f32.mrf.mxu0
        %v752 = vadd.f32 %v646, %v751
        %753 = vmatprep.mubr.bf16.mxu0 0
        %754 = vmatmul.mubr.bf16.gmra.mxu0 %v703
        %v755 = vpop.f32.mrf.mxu0
        %v756 = vadd.f32 %v651, %v755
        %v757 = vpop.f32.mrf.mxu0
        %v758 = vadd.f32 %v651, %v757
        %v759 = vpop.f32.mrf.mxu0
        %v760 = vadd.f32 %v656, %v759
        %v761 = vpop.f32.mrf.mxu0
        %v762 = vadd.f32 %v656, %v761
        %763 = vmatprep.mubr.bf16.mxu0 0
        %764 = vmatmul.mubr.bf16.gmra.mxu0 %v706
        %v765 = vpop.f32.mrf.mxu0
        %v766 = vadd.f32 %v661, %v765
        %v767 = vpop.f32.mrf.mxu0
        %v768 = vadd.f32 %v661, %v767
        %v769 = vpop.f32.mrf.mxu0
        %v770 = vadd.f32 %v666, %v769
        %v771 = vpop.f32.mrf.mxu0
        %v772 = vadd.f32 %v666, %v771
        %773 = vmatprep.mubr.bf16.mxu0 0
        %774 = vmatmul.mubr.bf16.gmra.mxu0 %v709
        %v775 = vpop.f32.mrf.mxu0
        %v776 = vadd.f32 %v671, %v775
        %v777 = vpop.f32.mrf.mxu0
        %v778 = vadd.f32 %v671, %v777
        %v779 = vpop.f32.mrf.mxu0
        %v780 = vadd.f32 %v676, %v779
        %v781 = vpop.f32.mrf.mxu0
        %v782 = vadd.f32 %v676, %v781
        %783 = vdwg.mxu0
        %v784 = vtanh.pop %v746
        %v785 = vtanh.pop %v748
        %v786 = vtanh.pop %v750
        %v787 = vtanh.pop %v752
        %v788 = vtanh.pop %v756
        %v789 = vtanh.pop %v758
        %v790 = vtanh.pop %v760
        %v791 = vtanh.pop %v762
        %v792 = vtanh.pop %v766
        %v793 = vtanh.pop %v768
        %v794 = vtanh.pop %v770
        %v795 = vtanh.pop %v772
        %v796 = vtanh.pop %v776
        %v797 = vtanh.pop %v778
        %v798 = vtanh.pop %v780
        %v799 = vtanh.pop %v782
        %v800 = vpack.c.bf16 %v786, %v784
        %v801 = vpack.c.bf16 %v787, %v785
        %v802 = vpack.c.bf16 %v790, %v788
        %v803 = vpack.c.bf16 %v791, %v789
        %v804 = vpack.c.bf16 %v794, %v792
        %v805 = vpack.c.bf16 %v795, %v793
        %v806 = vpack.c.bf16 %v798, %v796
        %v807 = vpack.c.bf16 %v799, %v797
        %s808 = smul.u32 %s36, 128
        %s809 = ssub.s32 8, %s808
        %s810 = ssub.s32 308, %s808
        %v811 = vstv %s809
        %vm812 = vcmp.ge.s32.totalorder %v588, %v811
        %vm813 = vcmp.ge.s32.totalorder %v589, %v811
        %v814 = vstv %s810
        %vm815 = vcmp.lt.s32.totalorder %v588, %v814
        %vm816 = vcmp.lt.s32.totalorder %v589, %v814
        %vm817 = vmand %vm812, %vm815
        %vm818 = vmand %vm813, %vm816
        %v819 = vsel %vm817, 1, 0
        %v820 = vsel %vm818, 1, 0
        %vm821 = vcmp.eq.s32.totalorder %v819, 1
        %vm822 = vcmp.eq.s32.totalorder %v820, 1
        %vm823 = vmpackc.low %vm822, %vm821
        %v824 = vsel %vm823, 65537, 0
        %v825 = vlaneseq
        %v826 = vshrl.u32 %v825, 7
        %v827 = vsub.s32 0, %v826
        %v828 = vrot.slane %v824, %v827
        %v829 = vlaneseq
        %v830 = vshrl.u32 %v829, 7
        %v831 = vsub.s32 4, %v830
        %v832 = vrot.slane %v824, %v831
        %vm833 = vcmp.ne.s16.totalorder %v828, 0
        %vm834 = vcmp.ne.s16.totalorder %v832, 0
        %v835 = vsel %vm833, %v800, 0
        %v836 = vsel %vm834, %v801, 0
        %v837 = vsel %vm833, %v802, 0
        %v838 = vsel %vm834, %v803, 0
        %v839 = vsel %vm833, %v804, 0
        %v840 = vsel %vm834, %v805, 0
        %v841 = vsel %vm833, %v806, 0
        %v842 = vsel %vm834, %v807, 0
        %v843 = vld [vmem:[%s4] sm:$0xf]
        %v844 = vld [vmem:[%s4 + $0x4] sm:$0xf]
        %v845 = vld [vmem:[%s4 + $0x8] sm:$0xf]
        %v846 = vld [vmem:[%s4 + $0xc] sm:$0xf]
        %v847 = vld [vmem:[%s4 + $0x10] sm:$0xf]
        %v848 = vld [vmem:[%s4 + $0x14] sm:$0xf]
        %v849 = vld [vmem:[%s4 + $0x18] sm:$0xf]
        %v850 = vld [vmem:[%s4 + $0x1c] sm:$0xf]
        %s851 = scalar_lea.vmem %s4, 32
        %v852 = vld [vmem:[%s851] sm:$0xf]
        %v853 = vld [vmem:[%s851 + $0x4] sm:$0xf]
        %v854 = vld [vmem:[%s851 + $0x8] sm:$0xf]
        %v855 = vld [vmem:[%s851 + $0xc] sm:$0xf]
        %v856 = vld [vmem:[%s851 + $0x10] sm:$0xf]
        %v857 = vld [vmem:[%s851 + $0x14] sm:$0xf]
        %v858 = vld [vmem:[%s851 + $0x18] sm:$0xf]
        %v859 = vld [vmem:[%s851 + $0x1c] sm:$0xf]
        %v868 = vunpack.c.l.b16 %v852
        %v869 = vunpack.c.l.b16 %v853
        %v870 = vunpack.c.l.b16 %v854
        %v871 = vunpack.c.l.b16 %v855
        %v872 = vunpack.c.l.b16 %v856
        %v873 = vunpack.c.l.b16 %v857
        %v874 = vunpack.c.l.b16 %v858
        %v875 = vunpack.c.l.b16 %v859
        %v876 = vpack.c.b16 %v869, %v868
        %v877 = vpack.c.b16 %v871, %v870
        %v878 = vpack.c.b16 %v873, %v872
        %v879 = vpack.c.b16 %v875, %v874
        %888 = vrot.lane.b32.xlu0 %v835, 127
        %v889 = vpop.permute.xlu0 %888
        %890 = vrot.lane.b32.xlu0 %v836, 127
        %v891 = vpop.permute.xlu0 %890
        %892 = vrot.lane.b32.xlu0 %v837, 127
        %v893 = vpop.permute.xlu0 %892
        %894 = vrot.lane.b32.xlu0 %v838, 127
        %v895 = vpop.permute.xlu0 %894
        %896 = vrot.lane.b32.xlu0 %v839, 127
        %v897 = vpop.permute.xlu0 %896
        %898 = vrot.lane.b32.xlu0 %v840, 127
        %v899 = vpop.permute.xlu0 %898
        %900 = vrot.lane.b32.xlu0 %v841, 127
        %v901 = vpop.permute.xlu0 %900
        %902 = vrot.lane.b32.xlu0 %v842, 127
        %v903 = vpop.permute.xlu0 %902
        %v904 = vsel %vm594, %v889, %v891
        %v905 = vsel %vm594, %v893, %v895
        %v906 = vsel %vm594, %v897, %v899
        %v907 = vsel %vm594, %v901, %v903
        %vm916 = vcmask 523264
        %v918 = vsel %vm916, %v876, 0
        %v921 = vsel %vm916, %v877, 0
        %v924 = vsel %vm916, %v878, 0
        %v927 = vsel %vm916, %v879, 0
        %929 = vmatprep.subr.bf16.mxu0 0
        %930 = vmatpush1.bf16.msra.mxu0 0
        %931 = vmatprep.subr.bf16.mxu0 0
        %932 = vmatpush1.bf16.msra.mxu0 0
        %933 = vmatprep.subr.bf16.mxu0 0
        %934 = vmatpush1.bf16.msra.mxu0 0
        %935 = vmatprep.subr.bf16.mxu0 0
        %936 = vmatpush1.bf16.msra.mxu0 0
        %937 = vmatprep.subr.bf16.mxu0 %v903
        %938 = vmatpush1.bf16.msra.mxu0 %v907
        %939 = vmatprep.subr.bf16.mxu0 %v899
        %940 = vmatpush1.bf16.msra.mxu0 %v906
        %941 = vmatprep.subr.bf16.mxu0 %v895
        %942 = vmatpush1.bf16.msra.mxu0 %v905
        %943 = vmatprep.subr.bf16.mxu0 %v891
        %944 = vmatpush1.bf16.msra.mxu0 %v904
        %945 = vmatprep.subr.bf16.mxu0 0
        %946 = vmatpush2.bf16.msra.mxu0 0
        %947 = vmatprep.subr.bf16.mxu0 0
        %948 = vmatpush2.bf16.msra.mxu0 0
        %949 = vmatprep.subr.bf16.mxu0 0
        %950 = vmatpush2.bf16.msra.mxu0 0
        %951 = vmatprep.subr.bf16.mxu0 0
        %952 = vmatpush2.bf16.msra.mxu0 0
        %953 = vmatprep.subr.bf16.mxu0 0
        %954 = vmatpush2.bf16.msra.mxu0 0
        %955 = vmatprep.subr.bf16.mxu0 0
        %956 = vmatpush2.bf16.msra.mxu0 0
        %957 = vmatprep.subr.bf16.mxu0 0
        %958 = vmatpush2.bf16.msra.mxu0 0
        %959 = vmatprep.subr.bf16.mxu0 0
        %960 = vmatpush2.bf16.msra.mxu0 0
        %961 = vmatprep.mubr.bf16.mxu0 0
        %962 = vmatmul.mubr.bf16.gmra.mxu0 %v918
        %v963 = vpop.f32.mrf.mxu0
        %v964 = vadd.f32 0.0, %v963
        %v965 = vpop.f32.mrf.mxu0
        %v966 = vadd.f32 0.0, %v965
        %v967 = vpop.f32.mrf.mxu0
        %v968 = vadd.f32 0.0, %v967
        %v969 = vpop.f32.mrf.mxu0
        %v970 = vadd.f32 0.0, %v969
        %971 = vmatprep.mubr.bf16.mxu0 0
        %972 = vmatmul.mubr.bf16.gmra.mxu0 %v921
        %v973 = vpop.f32.mrf.mxu0
        %v974 = vadd.f32 0.0, %v973
        %v975 = vpop.f32.mrf.mxu0
        %v976 = vadd.f32 0.0, %v975
        %v977 = vpop.f32.mrf.mxu0
        %v978 = vadd.f32 0.0, %v977
        %v979 = vpop.f32.mrf.mxu0
        %v980 = vadd.f32 0.0, %v979
        %981 = vmatprep.mubr.bf16.mxu0 0
        %982 = vmatmul.mubr.bf16.gmra.mxu0 %v924
        %v983 = vpop.f32.mrf.mxu0
        %v984 = vadd.f32 0.0, %v983
        %v985 = vpop.f32.mrf.mxu0
        %v986 = vadd.f32 0.0, %v985
        %v987 = vpop.f32.mrf.mxu0
        %v988 = vadd.f32 0.0, %v987
        %v989 = vpop.f32.mrf.mxu0
        %v990 = vadd.f32 0.0, %v989
        %991 = vmatprep.mubr.bf16.mxu0 0
        %992 = vmatmul.mubr.bf16.gmra.mxu0 %v927
        %v993 = vpop.f32.mrf.mxu0
        %v994 = vadd.f32 0.0, %v993
        %v995 = vpop.f32.mrf.mxu0
        %v996 = vadd.f32 0.0, %v995
        %v997 = vpop.f32.mrf.mxu0
        %v998 = vadd.f32 0.0, %v997
        %v999 = vpop.f32.mrf.mxu0
        %v1000 = vadd.f32 0.0, %v999
        %1001 = vdwg.mxu0
        %v1010 = vunpack.c.l.b16 %v843
        %v1011 = vunpack.c.l.b16 %v844
        %v1012 = vunpack.c.l.b16 %v845
        %v1013 = vunpack.c.l.b16 %v846
        %v1014 = vunpack.c.l.b16 %v847
        %v1015 = vunpack.c.l.b16 %v848
        %v1016 = vunpack.c.l.b16 %v849
        %v1017 = vunpack.c.l.b16 %v850
        %v1018 = vpack.c.b16 %v1011, %v1010
        %v1019 = vpack.c.b16 %v1013, %v1012
        %v1020 = vpack.c.b16 %v1015, %v1014
        %v1021 = vpack.c.b16 %v1017, %v1016
        %v1023 = vsel %vm916, %v1018, 0
        %v1026 = vsel %vm916, %v1019, 0
        %v1029 = vsel %vm916, %v1020, 0
        %v1032 = vsel %vm916, %v1021, 0
        %1034 = vmatprep.subr.bf16.mxu0 0
        %1035 = vmatpush1.bf16.msra.mxu0 0
        %1036 = vmatprep.subr.bf16.mxu0 0
        %1037 = vmatpush1.bf16.msra.mxu0 0
        %1038 = vmatprep.subr.bf16.mxu0 0
        %1039 = vmatpush1.bf16.msra.mxu0 0
        %1040 = vmatprep.subr.bf16.mxu0 0
        %1041 = vmatpush1.bf16.msra.mxu0 0
        %1042 = vmatprep.subr.bf16.mxu0 %v842
        %1043 = vmatpush1.bf16.msra.mxu0 %v841
        %1044 = vmatprep.subr.bf16.mxu0 %v840
        %1045 = vmatpush1.bf16.msra.mxu0 %v839
        %1046 = vmatprep.subr.bf16.mxu0 %v838
        %1047 = vmatpush1.bf16.msra.mxu0 %v837
        %1048 = vmatprep.subr.bf16.mxu0 %v836
        %1049 = vmatpush1.bf16.msra.mxu0 %v835
        %1050 = vmatprep.subr.bf16.mxu0 0
        %1051 = vmatpush2.bf16.msra.mxu0 0
        %1052 = vmatprep.subr.bf16.mxu0 0
        %1053 = vmatpush2.bf16.msra.mxu0 0
        %1054 = vmatprep.subr.bf16.mxu0 0
        %1055 = vmatpush2.bf16.msra.mxu0 0
        %1056 = vmatprep.subr.bf16.mxu0 0
        %1057 = vmatpush2.bf16.msra.mxu0 0
        %1058 = vmatprep.subr.bf16.mxu0 0
        %1059 = vmatpush2.bf16.msra.mxu0 0
        %1060 = vmatprep.subr.bf16.mxu0 0
        %1061 = vmatpush2.bf16.msra.mxu0 0
        %1062 = vmatprep.subr.bf16.mxu0 0
        %1063 = vmatpush2.bf16.msra.mxu0 0
        %1064 = vmatprep.subr.bf16.mxu0 0
        %1065 = vmatpush2.bf16.msra.mxu0 0
        %1066 = vmatprep.mubr.bf16.mxu0 0
        %1067 = vmatmul.mubr.bf16.gmra.mxu0 %v1023
        %v1068 = vpop.f32.mrf.mxu0
        %v1069 = vadd.f32 %v964, %v1068
        %v1070 = vpop.f32.mrf.mxu0
        %v1071 = vadd.f32 %v966, %v1070
        %v1072 = vpop.f32.mrf.mxu0
        %v1073 = vadd.f32 %v968, %v1072
        %v1074 = vpop.f32.mrf.mxu0
        %v1075 = vadd.f32 %v970, %v1074
        %1076 = vmatprep.mubr.bf16.mxu0 0
        %1077 = vmatmul.mubr.bf16.gmra.mxu0 %v1026
        %v1078 = vpop.f32.mrf.mxu0
        %v1079 = vadd.f32 %v974, %v1078
        %v1080 = vpop.f32.mrf.mxu0
        %v1081 = vadd.f32 %v976, %v1080
        %v1082 = vpop.f32.mrf.mxu0
        %v1083 = vadd.f32 %v978, %v1082
        %v1084 = vpop.f32.mrf.mxu0
        %v1085 = vadd.f32 %v980, %v1084
        %1086 = vmatprep.mubr.bf16.mxu0 0
        %1087 = vmatmul.mubr.bf16.gmra.mxu0 %v1029
        %v1088 = vpop.f32.mrf.mxu0
        %v1089 = vadd.f32 %v984, %v1088
        %v1090 = vpop.f32.mrf.mxu0
        %v1091 = vadd.f32 %v986, %v1090
        %v1092 = vpop.f32.mrf.mxu0
        %v1093 = vadd.f32 %v988, %v1092
        %v1094 = vpop.f32.mrf.mxu0
        %v1095 = vadd.f32 %v990, %v1094
        %1096 = vmatprep.mubr.bf16.mxu0 0
        %1097 = vmatmul.mubr.bf16.gmra.mxu0 %v1032
        %v1098 = vpop.f32.mrf.mxu0
        %v1099 = vadd.f32 %v994, %v1098
        %v1100 = vpop.f32.mrf.mxu0
        %v1101 = vadd.f32 %v996, %v1100
        %v1102 = vpop.f32.mrf.mxu0
        %v1103 = vadd.f32 %v998, %v1102
        %v1104 = vpop.f32.mrf.mxu0
        %v1105 = vadd.f32 %v1000, %v1104
        %1106 = vdwg.mxu0
        %s1107 = scalar_lea.vmem %s4, 64
        %v1108 = vld [vmem:[%s1107] sm:$0xf]
        %v1109 = vld [vmem:[%s1107 + $0x4] sm:$0xf]
        %v1110 = vld [vmem:[%s1107 + $0x8] sm:$0xf]
        %v1111 = vld [vmem:[%s1107 + $0xc] sm:$0xf]
        %v1112 = vld [vmem:[%s1107 + $0x10] sm:$0xf]
        %v1113 = vld [vmem:[%s1107 + $0x14] sm:$0xf]
        %v1114 = vld [vmem:[%s1107 + $0x18] sm:$0xf]
        %v1115 = vld [vmem:[%s1107 + $0x1c] sm:$0xf]
        %v1124 = vunpack.c.l.b16 %v1108
        %v1125 = vunpack.c.l.b16 %v1109
        %v1126 = vunpack.c.l.b16 %v1110
        %v1127 = vunpack.c.l.b16 %v1111
        %v1128 = vunpack.c.l.b16 %v1112
        %v1129 = vunpack.c.l.b16 %v1113
        %v1130 = vunpack.c.l.b16 %v1114
        %v1131 = vunpack.c.l.b16 %v1115
        %v1132 = vpack.c.b16 %v1125, %v1124
        %v1133 = vpack.c.b16 %v1127, %v1126
        %v1134 = vpack.c.b16 %v1129, %v1128
        %v1135 = vpack.c.b16 %v1131, %v1130
        %1136 = vrot.lane.b32.xlu0 %v835, 126
        %v1137 = vpop.permute.xlu0 %1136
        %1138 = vrot.lane.b32.xlu0 %v836, 126
        %v1139 = vpop.permute.xlu0 %1138
        %1140 = vrot.lane.b32.xlu0 %v837, 126
        %v1141 = vpop.permute.xlu0 %1140
        %1142 = vrot.lane.b32.xlu0 %v838, 126
        %v1143 = vpop.permute.xlu0 %1142
        %1144 = vrot.lane.b32.xlu0 %v839, 126
        %v1145 = vpop.permute.xlu0 %1144
        %1146 = vrot.lane.b32.xlu0 %v840, 126
        %v1147 = vpop.permute.xlu0 %1146
        %1148 = vrot.lane.b32.xlu0 %v841, 126
        %v1149 = vpop.permute.xlu0 %1148
        %1150 = vrot.lane.b32.xlu0 %v842, 126
        %v1151 = vpop.permute.xlu0 %1150
        %v1152 = vsel %vm602, %v1137, %v1139
        %v1153 = vsel %vm602, %v1141, %v1143
        %v1154 = vsel %vm602, %v1145, %v1147
        %v1155 = vsel %vm602, %v1149, %v1151
        %v1165 = vsel %vm916, %v1132, 0
        %v1168 = vsel %vm916, %v1133, 0
        %v1171 = vsel %vm916, %v1134, 0
        %v1174 = vsel %vm916, %v1135, 0
        %1176 = vmatprep.subr.bf16.mxu0 0
        %1177 = vmatpush1.bf16.msra.mxu0 0
        %1178 = vmatprep.subr.bf16.mxu0 0
        %1179 = vmatpush1.bf16.msra.mxu0 0
        %1180 = vmatprep.subr.bf16.mxu0 0
        %1181 = vmatpush1.bf16.msra.mxu0 0
        %1182 = vmatprep.subr.bf16.mxu0 0
        %1183 = vmatpush1.bf16.msra.mxu0 0
        %1184 = vmatprep.subr.bf16.mxu0 %v1151
        %1185 = vmatpush1.bf16.msra.mxu0 %v1155
        %1186 = vmatprep.subr.bf16.mxu0 %v1147
        %1187 = vmatpush1.bf16.msra.mxu0 %v1154
        %1188 = vmatprep.subr.bf16.mxu0 %v1143
        %1189 = vmatpush1.bf16.msra.mxu0 %v1153
        %1190 = vmatprep.subr.bf16.mxu0 %v1139
        %1191 = vmatpush1.bf16.msra.mxu0 %v1152
        %1192 = vmatprep.subr.bf16.mxu0 0
        %1193 = vmatpush2.bf16.msra.mxu0 0
        %1194 = vmatprep.subr.bf16.mxu0 0
        %1195 = vmatpush2.bf16.msra.mxu0 0
        %1196 = vmatprep.subr.bf16.mxu0 0
        %1197 = vmatpush2.bf16.msra.mxu0 0
        %1198 = vmatprep.subr.bf16.mxu0 0
        %1199 = vmatpush2.bf16.msra.mxu0 0
        %1200 = vmatprep.subr.bf16.mxu0 0
        %1201 = vmatpush2.bf16.msra.mxu0 0
        %1202 = vmatprep.subr.bf16.mxu0 0
        %1203 = vmatpush2.bf16.msra.mxu0 0
        %1204 = vmatprep.subr.bf16.mxu0 0
        %1205 = vmatpush2.bf16.msra.mxu0 0
        %1206 = vmatprep.subr.bf16.mxu0 0
        %1207 = vmatpush2.bf16.msra.mxu0 0
        %1208 = vmatprep.mubr.bf16.mxu0 0
        %1209 = vmatmul.mubr.bf16.gmra.mxu0 %v1165
        %v1210 = vpop.f32.mrf.mxu0
        %v1211 = vadd.f32 0.0, %v1210
        %v1212 = vpop.f32.mrf.mxu0
        %v1213 = vadd.f32 0.0, %v1212
        %v1214 = vpop.f32.mrf.mxu0
        %v1215 = vadd.f32 0.0, %v1214
        %v1216 = vpop.f32.mrf.mxu0
        %v1217 = vadd.f32 0.0, %v1216
        %1218 = vmatprep.mubr.bf16.mxu0 0
        %1219 = vmatmul.mubr.bf16.gmra.mxu0 %v1168
        %v1220 = vpop.f32.mrf.mxu0
        %v1221 = vadd.f32 0.0, %v1220
        %v1222 = vpop.f32.mrf.mxu0
        %v1223 = vadd.f32 0.0, %v1222
        %v1224 = vpop.f32.mrf.mxu0
        %v1225 = vadd.f32 0.0, %v1224
        %v1226 = vpop.f32.mrf.mxu0
        %v1227 = vadd.f32 0.0, %v1226
        %1228 = vmatprep.mubr.bf16.mxu0 0
        %1229 = vmatmul.mubr.bf16.gmra.mxu0 %v1171
        %v1230 = vpop.f32.mrf.mxu0
        %v1231 = vadd.f32 0.0, %v1230
        %v1232 = vpop.f32.mrf.mxu0
        %v1233 = vadd.f32 0.0, %v1232
        %v1234 = vpop.f32.mrf.mxu0
        %v1235 = vadd.f32 0.0, %v1234
        %v1236 = vpop.f32.mrf.mxu0
        %v1237 = vadd.f32 0.0, %v1236
        %1238 = vmatprep.mubr.bf16.mxu0 0
        %1239 = vmatmul.mubr.bf16.gmra.mxu0 %v1174
        %v1240 = vpop.f32.mrf.mxu0
        %v1241 = vadd.f32 0.0, %v1240
        %v1242 = vpop.f32.mrf.mxu0
        %v1243 = vadd.f32 0.0, %v1242
        %v1244 = vpop.f32.mrf.mxu0
        %v1245 = vadd.f32 0.0, %v1244
        %v1246 = vpop.f32.mrf.mxu0
        %v1247 = vadd.f32 0.0, %v1246
        %1248 = vdwg.mxu0
        %v1249 = vadd.f32 %v1069, %v1211
        %v1250 = vadd.f32 %v1071, %v1213
        %v1251 = vadd.f32 %v1073, %v1215
        %v1252 = vadd.f32 %v1075, %v1217
        %v1253 = vadd.f32 %v1079, %v1221
        %v1254 = vadd.f32 %v1081, %v1223
        %v1255 = vadd.f32 %v1083, %v1225
        %v1256 = vadd.f32 %v1085, %v1227
        %v1257 = vadd.f32 %v1089, %v1231
        %v1258 = vadd.f32 %v1091, %v1233
        %v1259 = vadd.f32 %v1093, %v1235
        %v1260 = vadd.f32 %v1095, %v1237
        %v1261 = vadd.f32 %v1099, %v1241
        %v1262 = vadd.f32 %v1101, %v1243
        %v1263 = vadd.f32 %v1103, %v1245
        %v1264 = vadd.f32 %v1105, %v1247
        %s1265 = scalar_lea.vmem %s4, 96
        %v1266 = vld [vmem:[%s1265] sm:$0xf]
        %v1267 = vld [vmem:[%s1265 + $0x4] sm:$0xf]
        %v1268 = vld [vmem:[%s1265 + $0x8] sm:$0xf]
        %v1269 = vld [vmem:[%s1265 + $0xc] sm:$0xf]
        %v1270 = vld [vmem:[%s1265 + $0x10] sm:$0xf]
        %v1271 = vld [vmem:[%s1265 + $0x14] sm:$0xf]
        %v1272 = vld [vmem:[%s1265 + $0x18] sm:$0xf]
        %v1273 = vld [vmem:[%s1265 + $0x1c] sm:$0xf]
        %v1282 = vunpack.c.l.b16 %v1266
        %v1283 = vunpack.c.l.b16 %v1267
        %v1284 = vunpack.c.l.b16 %v1268
        %v1285 = vunpack.c.l.b16 %v1269
        %v1286 = vunpack.c.l.b16 %v1270
        %v1287 = vunpack.c.l.b16 %v1271
        %v1288 = vunpack.c.l.b16 %v1272
        %v1289 = vunpack.c.l.b16 %v1273
        %v1290 = vpack.c.b16 %v1283, %v1282
        %v1291 = vpack.c.b16 %v1285, %v1284
        %v1292 = vpack.c.b16 %v1287, %v1286
        %v1293 = vpack.c.b16 %v1289, %v1288
        %1294 = vrot.lane.b32.xlu0 %v835, 125
        %v1295 = vpop.permute.xlu0 %1294
        %1296 = vrot.lane.b32.xlu0 %v836, 125
        %v1297 = vpop.permute.xlu0 %1296
        %1298 = vrot.lane.b32.xlu0 %v837, 125
        %v1299 = vpop.permute.xlu0 %1298
        %1300 = vrot.lane.b32.xlu0 %v838, 125
        %v1301 = vpop.permute.xlu0 %1300
        %1302 = vrot.lane.b32.xlu0 %v839, 125
        %v1303 = vpop.permute.xlu0 %1302
        %1304 = vrot.lane.b32.xlu0 %v840, 125
        %v1305 = vpop.permute.xlu0 %1304
        %1306 = vrot.lane.b32.xlu0 %v841, 125
        %v1307 = vpop.permute.xlu0 %1306
        %1308 = vrot.lane.b32.xlu0 %v842, 125
        %v1309 = vpop.permute.xlu0 %1308
        %v1310 = vsel %vm610, %v1295, %v1297
        %v1311 = vsel %vm610, %v1299, %v1301
        %v1312 = vsel %vm610, %v1303, %v1305
        %v1313 = vsel %vm610, %v1307, %v1309
        %v1323 = vsel %vm916, %v1290, 0
        %v1326 = vsel %vm916, %v1291, 0
        %v1329 = vsel %vm916, %v1292, 0
        %v1332 = vsel %vm916, %v1293, 0
        %1334 = vmatprep.subr.bf16.mxu0 0
        %1335 = vmatpush1.bf16.msra.mxu0 0
        %1336 = vmatprep.subr.bf16.mxu0 0
        %1337 = vmatpush1.bf16.msra.mxu0 0
        %1338 = vmatprep.subr.bf16.mxu0 0
        %1339 = vmatpush1.bf16.msra.mxu0 0
        %1340 = vmatprep.subr.bf16.mxu0 0
        %1341 = vmatpush1.bf16.msra.mxu0 0
        %1342 = vmatprep.subr.bf16.mxu0 %v1309
        %1343 = vmatpush1.bf16.msra.mxu0 %v1313
        %1344 = vmatprep.subr.bf16.mxu0 %v1305
        %1345 = vmatpush1.bf16.msra.mxu0 %v1312
        %1346 = vmatprep.subr.bf16.mxu0 %v1301
        %1347 = vmatpush1.bf16.msra.mxu0 %v1311
        %1348 = vmatprep.subr.bf16.mxu0 %v1297
        %1349 = vmatpush1.bf16.msra.mxu0 %v1310
        %1350 = vmatprep.subr.bf16.mxu0 0
        %1351 = vmatpush2.bf16.msra.mxu0 0
        %1352 = vmatprep.subr.bf16.mxu0 0
        %1353 = vmatpush2.bf16.msra.mxu0 0
        %1354 = vmatprep.subr.bf16.mxu0 0
        %1355 = vmatpush2.bf16.msra.mxu0 0
        %1356 = vmatprep.subr.bf16.mxu0 0
        %1357 = vmatpush2.bf16.msra.mxu0 0
        %1358 = vmatprep.subr.bf16.mxu0 0
        %1359 = vmatpush2.bf16.msra.mxu0 0
        %1360 = vmatprep.subr.bf16.mxu0 0
        %1361 = vmatpush2.bf16.msra.mxu0 0
        %1362 = vmatprep.subr.bf16.mxu0 0
        %1363 = vmatpush2.bf16.msra.mxu0 0
        %1364 = vmatprep.subr.bf16.mxu0 0
        %1365 = vmatpush2.bf16.msra.mxu0 0
        %1366 = vmatprep.mubr.bf16.mxu0 0
        %1367 = vmatmul.mubr.bf16.gmra.mxu0 %v1323
        %v1368 = vpop.f32.mrf.mxu0
        %v1369 = vadd.f32 0.0, %v1368
        %v1370 = vpop.f32.mrf.mxu0
        %v1371 = vadd.f32 0.0, %v1370
        %v1372 = vpop.f32.mrf.mxu0
        %v1373 = vadd.f32 0.0, %v1372
        %v1374 = vpop.f32.mrf.mxu0
        %v1375 = vadd.f32 0.0, %v1374
        %1376 = vmatprep.mubr.bf16.mxu0 0
        %1377 = vmatmul.mubr.bf16.gmra.mxu0 %v1326
        %v1378 = vpop.f32.mrf.mxu0
        %v1379 = vadd.f32 0.0, %v1378
        %v1380 = vpop.f32.mrf.mxu0
        %v1381 = vadd.f32 0.0, %v1380
        %v1382 = vpop.f32.mrf.mxu0
        %v1383 = vadd.f32 0.0, %v1382
        %v1384 = vpop.f32.mrf.mxu0
        %v1385 = vadd.f32 0.0, %v1384
        %1386 = vmatprep.mubr.bf16.mxu0 0
        %1387 = vmatmul.mubr.bf16.gmra.mxu0 %v1329
        %v1388 = vpop.f32.mrf.mxu0
        %v1389 = vadd.f32 0.0, %v1388
        %v1390 = vpop.f32.mrf.mxu0
        %v1391 = vadd.f32 0.0, %v1390
        %v1392 = vpop.f32.mrf.mxu0
        %v1393 = vadd.f32 0.0, %v1392
        %v1394 = vpop.f32.mrf.mxu0
        %v1395 = vadd.f32 0.0, %v1394
        %1396 = vmatprep.mubr.bf16.mxu0 0
        %1397 = vmatmul.mubr.bf16.gmra.mxu0 %v1332
        %v1398 = vpop.f32.mrf.mxu0
        %v1399 = vadd.f32 0.0, %v1398
        %v1400 = vpop.f32.mrf.mxu0
        %v1401 = vadd.f32 0.0, %v1400
        %v1402 = vpop.f32.mrf.mxu0
        %v1403 = vadd.f32 0.0, %v1402
        %v1404 = vpop.f32.mrf.mxu0
        %v1405 = vadd.f32 0.0, %v1404
        %1406 = vdwg.mxu0
        %v1407 = vadd.f32 %v1249, %v1369
        %v1408 = vadd.f32 %v1250, %v1371
        %v1409 = vadd.f32 %v1251, %v1373
        %v1410 = vadd.f32 %v1252, %v1375
        %v1411 = vadd.f32 %v1253, %v1379
        %v1412 = vadd.f32 %v1254, %v1381
        %v1413 = vadd.f32 %v1255, %v1383
        %v1414 = vadd.f32 %v1256, %v1385
        %v1415 = vadd.f32 %v1257, %v1389
        %v1416 = vadd.f32 %v1258, %v1391
        %v1417 = vadd.f32 %v1259, %v1393
        %v1418 = vadd.f32 %v1260, %v1395
        %v1419 = vadd.f32 %v1261, %v1399
        %v1420 = vadd.f32 %v1262, %v1401
        %v1421 = vadd.f32 %v1263, %v1403
        %v1422 = vadd.f32 %v1264, %v1405
        %s1423 = scalar_lea.vmem %s4, 128
        %v1424 = vld [vmem:[%s1423] sm:$0xf]
        %v1425 = vld [vmem:[%s1423 + $0x4] sm:$0xf]
        %v1426 = vld [vmem:[%s1423 + $0x8] sm:$0xf]
        %v1427 = vld [vmem:[%s1423 + $0xc] sm:$0xf]
        %v1428 = vld [vmem:[%s1423 + $0x10] sm:$0xf]
        %v1429 = vld [vmem:[%s1423 + $0x14] sm:$0xf]
        %v1430 = vld [vmem:[%s1423 + $0x18] sm:$0xf]
        %v1431 = vld [vmem:[%s1423 + $0x1c] sm:$0xf]
        %v1440 = vunpack.c.l.b16 %v1424
        %v1441 = vunpack.c.l.b16 %v1425
        %v1442 = vunpack.c.l.b16 %v1426
        %v1443 = vunpack.c.l.b16 %v1427
        %v1444 = vunpack.c.l.b16 %v1428
        %v1445 = vunpack.c.l.b16 %v1429
        %v1446 = vunpack.c.l.b16 %v1430
        %v1447 = vunpack.c.l.b16 %v1431
        %v1448 = vpack.c.b16 %v1441, %v1440
        %v1449 = vpack.c.b16 %v1443, %v1442
        %v1450 = vpack.c.b16 %v1445, %v1444
        %v1451 = vpack.c.b16 %v1447, %v1446
        %1452 = vrot.lane.b32.xlu0 %v835, 124
        %v1453 = vpop.permute.xlu0 %1452
        %1454 = vrot.lane.b32.xlu0 %v836, 124
        %v1455 = vpop.permute.xlu0 %1454
        %1456 = vrot.lane.b32.xlu0 %v837, 124
        %v1457 = vpop.permute.xlu0 %1456
        %1458 = vrot.lane.b32.xlu0 %v838, 124
        %v1459 = vpop.permute.xlu0 %1458
        %1460 = vrot.lane.b32.xlu0 %v839, 124
        %v1461 = vpop.permute.xlu0 %1460
        %1462 = vrot.lane.b32.xlu0 %v840, 124
        %v1463 = vpop.permute.xlu0 %1462
        %1464 = vrot.lane.b32.xlu0 %v841, 124
        %v1465 = vpop.permute.xlu0 %1464
        %1466 = vrot.lane.b32.xlu0 %v842, 124
        %v1467 = vpop.permute.xlu0 %1466
        %v1468 = vsel %vm618, %v1453, %v1455
        %v1469 = vsel %vm618, %v1457, %v1459
        %v1470 = vsel %vm618, %v1461, %v1463
        %v1471 = vsel %vm618, %v1465, %v1467
        %v1481 = vsel %vm916, %v1448, 0
        %v1484 = vsel %vm916, %v1449, 0
        %v1487 = vsel %vm916, %v1450, 0
        %v1490 = vsel %vm916, %v1451, 0
        %1492 = vmatprep.subr.bf16.mxu0 0
        %1493 = vmatpush1.bf16.msra.mxu0 0
        %1494 = vmatprep.subr.bf16.mxu0 0
        %1495 = vmatpush1.bf16.msra.mxu0 0
        %1496 = vmatprep.subr.bf16.mxu0 0
        %1497 = vmatpush1.bf16.msra.mxu0 0
        %1498 = vmatprep.subr.bf16.mxu0 0
        %1499 = vmatpush1.bf16.msra.mxu0 0
        %1500 = vmatprep.subr.bf16.mxu0 %v1467
        %1501 = vmatpush1.bf16.msra.mxu0 %v1471
        %1502 = vmatprep.subr.bf16.mxu0 %v1463
        %1503 = vmatpush1.bf16.msra.mxu0 %v1470
        %1504 = vmatprep.subr.bf16.mxu0 %v1459
        %1505 = vmatpush1.bf16.msra.mxu0 %v1469
        %1506 = vmatprep.subr.bf16.mxu0 %v1455
        %1507 = vmatpush1.bf16.msra.mxu0 %v1468
        %1508 = vmatprep.subr.bf16.mxu0 0
        %1509 = vmatpush2.bf16.msra.mxu0 0
        %1510 = vmatprep.subr.bf16.mxu0 0
        %1511 = vmatpush2.bf16.msra.mxu0 0
        %1512 = vmatprep.subr.bf16.mxu0 0
        %1513 = vmatpush2.bf16.msra.mxu0 0
        %1514 = vmatprep.subr.bf16.mxu0 0
        %1515 = vmatpush2.bf16.msra.mxu0 0
        %1516 = vmatprep.subr.bf16.mxu0 0
        %1517 = vmatpush2.bf16.msra.mxu0 0
        %1518 = vmatprep.subr.bf16.mxu0 0
        %1519 = vmatpush2.bf16.msra.mxu0 0
        %1520 = vmatprep.subr.bf16.mxu0 0
        %1521 = vmatpush2.bf16.msra.mxu0 0
        %1522 = vmatprep.subr.bf16.mxu0 0
        %1523 = vmatpush2.bf16.msra.mxu0 0
        %1524 = vmatprep.mubr.bf16.mxu0 0
        %1525 = vmatmul.mubr.bf16.gmra.mxu0 %v1481
        %v1526 = vpop.f32.mrf.mxu0
        %v1527 = vadd.f32 0.0, %v1526
        %v1528 = vpop.f32.mrf.mxu0
        %v1529 = vadd.f32 0.0, %v1528
        %v1530 = vpop.f32.mrf.mxu0
        %v1531 = vadd.f32 0.0, %v1530
        %v1532 = vpop.f32.mrf.mxu0
        %v1533 = vadd.f32 0.0, %v1532
        %1534 = vmatprep.mubr.bf16.mxu0 0
        %1535 = vmatmul.mubr.bf16.gmra.mxu0 %v1484
        %v1536 = vpop.f32.mrf.mxu0
        %v1537 = vadd.f32 0.0, %v1536
        %v1538 = vpop.f32.mrf.mxu0
        %v1539 = vadd.f32 0.0, %v1538
        %v1540 = vpop.f32.mrf.mxu0
        %v1541 = vadd.f32 0.0, %v1540
        %v1542 = vpop.f32.mrf.mxu0
        %v1543 = vadd.f32 0.0, %v1542
        %1544 = vmatprep.mubr.bf16.mxu0 0
        %1545 = vmatmul.mubr.bf16.gmra.mxu0 %v1487
        %v1546 = vpop.f32.mrf.mxu0
        %v1547 = vadd.f32 0.0, %v1546
        %v1548 = vpop.f32.mrf.mxu0
        %v1549 = vadd.f32 0.0, %v1548
        %v1550 = vpop.f32.mrf.mxu0
        %v1551 = vadd.f32 0.0, %v1550
        %v1552 = vpop.f32.mrf.mxu0
        %v1553 = vadd.f32 0.0, %v1552
        %1554 = vmatprep.mubr.bf16.mxu0 0
        %1555 = vmatmul.mubr.bf16.gmra.mxu0 %v1490
        %v1556 = vpop.f32.mrf.mxu0
        %v1557 = vadd.f32 0.0, %v1556
        %v1558 = vpop.f32.mrf.mxu0
        %v1559 = vadd.f32 0.0, %v1558
        %v1560 = vpop.f32.mrf.mxu0
        %v1561 = vadd.f32 0.0, %v1560
        %v1562 = vpop.f32.mrf.mxu0
        %v1563 = vadd.f32 0.0, %v1562
        %1564 = vdwg.mxu0
        %v1565 = vadd.f32 %v1407, %v1527
        %v1566 = vadd.f32 %v1408, %v1529
        %v1567 = vadd.f32 %v1409, %v1531
        %v1568 = vadd.f32 %v1410, %v1533
        %v1569 = vadd.f32 %v1411, %v1537
        %v1570 = vadd.f32 %v1412, %v1539
        %v1571 = vadd.f32 %v1413, %v1541
        %v1572 = vadd.f32 %v1414, %v1543
        %v1573 = vadd.f32 %v1415, %v1547
        %v1574 = vadd.f32 %v1416, %v1549
        %v1575 = vadd.f32 %v1417, %v1551
        %v1576 = vadd.f32 %v1418, %v1553
        %v1577 = vadd.f32 %v1419, %v1557
        %v1578 = vadd.f32 %v1420, %v1559
        %v1579 = vadd.f32 %v1421, %v1561
        %v1580 = vadd.f32 %v1422, %v1563
        %v1581 = vld [vmem:[%s5] sm:$0xff]
        %v1582 = vld [vmem:[%s5 + $0x8] sm:$0xff]
        %v1583 = vld [vmem:[%s5 + $0x10] sm:$0xff]
        %v1584 = vld [vmem:[%s5 + $0x18] sm:$0xff]
        %v1585 = vld [vmem:[%s5 + $0x20] sm:$0xff]
        %v1586 = vld [vmem:[%s5 + $0x28] sm:$0xff]
        %v1587 = vld [vmem:[%s5 + $0x30] sm:$0xff]
        %v1588 = vld [vmem:[%s5 + $0x38] sm:$0xff]
        %1590 = vset.pattern.permute.xlu0 0
        %1591 = vperm.xlu0 %1590, %v1581
        %v1592 = vpop.permute.xlu0 %1591
        %1595 = vset.pattern.permute.xlu0 0
        %1596 = vperm.xlu0 %1595, %v1582
        %v1597 = vpop.permute.xlu0 %1596
        %1600 = vset.pattern.permute.xlu0 0
        %1601 = vperm.xlu0 %1600, %v1583
        %v1602 = vpop.permute.xlu0 %1601
        %1605 = vset.pattern.permute.xlu0 0
        %1606 = vperm.xlu0 %1605, %v1584
        %v1607 = vpop.permute.xlu0 %1606
        %1610 = vset.pattern.permute.xlu0 0
        %1611 = vperm.xlu0 %1610, %v1585
        %v1612 = vpop.permute.xlu0 %1611
        %1615 = vset.pattern.permute.xlu0 0
        %1616 = vperm.xlu0 %1615, %v1586
        %v1617 = vpop.permute.xlu0 %1616
        %1620 = vset.pattern.permute.xlu0 0
        %1621 = vperm.xlu0 %1620, %v1587
        %v1622 = vpop.permute.xlu0 %1621
        %1625 = vset.pattern.permute.xlu0 0
        %1626 = vperm.xlu0 %1625, %v1588
        %v1627 = vpop.permute.xlu0 %1626
        %v1629 = vadd.f32 %v1565, %v1592
        %v1630 = vadd.f32 %v1566, %v1592
        %v1631 = vadd.f32 %v1567, %v1597
        %v1632 = vadd.f32 %v1568, %v1597
        %v1633 = vadd.f32 %v1569, %v1602
        %v1634 = vadd.f32 %v1570, %v1602
        %v1635 = vadd.f32 %v1571, %v1607
        %v1636 = vadd.f32 %v1572, %v1607
        %v1637 = vadd.f32 %v1573, %v1612
        %v1638 = vadd.f32 %v1574, %v1612
        %v1639 = vadd.f32 %v1575, %v1617
        %v1640 = vadd.f32 %v1576, %v1617
        %v1641 = vadd.f32 %v1577, %v1622
        %v1642 = vadd.f32 %v1578, %v1622
        %v1643 = vadd.f32 %v1579, %v1627
        %v1644 = vadd.f32 %v1580, %v1627
        %v1645 = vtanh.pop %v1629
        %v1646 = vtanh.pop %v1630
        %v1647 = vtanh.pop %v1631
        %v1648 = vtanh.pop %v1632
        %v1649 = vtanh.pop %v1633
        %v1650 = vtanh.pop %v1634
        %v1651 = vtanh.pop %v1635
        %v1652 = vtanh.pop %v1636
        %v1653 = vtanh.pop %v1637
        %v1654 = vtanh.pop %v1638
        %v1655 = vtanh.pop %v1639
        %v1656 = vtanh.pop %v1640
        %v1657 = vtanh.pop %v1641
        %v1658 = vtanh.pop %v1642
        %v1659 = vtanh.pop %v1643
        %v1660 = vtanh.pop %v1644
        %v1661 = vpack.c.bf16 %v1647, %v1645
        %v1662 = vpack.c.bf16 %v1648, %v1646
        %v1663 = vpack.c.bf16 %v1651, %v1649
        %v1664 = vpack.c.bf16 %v1652, %v1650
        %v1665 = vpack.c.bf16 %v1655, %v1653
        %v1666 = vpack.c.bf16 %v1656, %v1654
        %v1667 = vpack.c.bf16 %v1659, %v1657
        %v1668 = vpack.c.bf16 %v1660, %v1658
        %s1669 = ssub.s32 6, %s808
        %s1670 = ssub.s32 306, %s808
        %v1671 = vstv %s1669
        %vm1672 = vcmp.ge.s32.totalorder %v588, %v1671
        %vm1673 = vcmp.ge.s32.totalorder %v589, %v1671
        %v1674 = vstv %s1670
        %vm1675 = vcmp.lt.s32.totalorder %v588, %v1674
        %vm1676 = vcmp.lt.s32.totalorder %v589, %v1674
        %vm1677 = vmand %vm1672, %vm1675
        %vm1678 = vmand %vm1673, %vm1676
        %v1679 = vsel %vm1677, 1, 0
        %v1680 = vsel %vm1678, 1, 0
        %vm1681 = vcmp.eq.s32.totalorder %v1679, 1
        %vm1682 = vcmp.eq.s32.totalorder %v1680, 1
        %vm1683 = vmpackc.low %vm1682, %vm1681
        %v1684 = vsel %vm1683, 65537, 0
        %v1685 = vlaneseq
        %v1686 = vshrl.u32 %v1685, 7
        %v1687 = vsub.s32 0, %v1686
        %v1688 = vrot.slane %v1684, %v1687
        %v1689 = vlaneseq
        %v1690 = vshrl.u32 %v1689, 7
        %v1691 = vsub.s32 4, %v1690
        %v1692 = vrot.slane %v1684, %v1691
        %vm1693 = vcmp.ne.s16.totalorder %v1688, 0
        %vm1694 = vcmp.ne.s16.totalorder %v1692, 0
        %v1695 = vsel %vm1693, %v1661, 0
        %v1696 = vsel %vm1694, %v1662, 0
        %v1697 = vsel %vm1693, %v1663, 0
        %v1698 = vsel %vm1694, %v1664, 0
        %v1699 = vsel %vm1693, %v1665, 0
        %v1700 = vsel %vm1694, %v1666, 0
        %v1701 = vsel %vm1693, %v1667, 0
        %v1702 = vsel %vm1694, %v1668, 0
        %v1703 = vld [vmem:[#allocation8] sm:$0xf]
        %v1704 = vld [vmem:[#allocation8 + $0x4] sm:$0xf]
        %v1705 = vld [vmem:[#allocation8 + $0x8] sm:$0xf]
        %v1706 = vld [vmem:[#allocation8 + $0xc] sm:$0xf]
        %v1707 = vld [vmem:[#allocation8 + $0x10] sm:$0xf]
        %v1708 = vld [vmem:[#allocation8 + $0x14] sm:$0xf]
        %v1709 = vld [vmem:[#allocation8 + $0x18] sm:$0xf]
        %v1710 = vld [vmem:[#allocation8 + $0x1c] sm:$0xf]
        %s1711 = scalar_lea.vmem [#allocation8], 32
        %v1712 = vld [vmem:[%s1711] sm:$0xf]
        %v1713 = vld [vmem:[%s1711 + $0x4] sm:$0xf]
        %v1714 = vld [vmem:[%s1711 + $0x8] sm:$0xf]
        %v1715 = vld [vmem:[%s1711 + $0xc] sm:$0xf]
        %v1716 = vld [vmem:[%s1711 + $0x10] sm:$0xf]
        %v1717 = vld [vmem:[%s1711 + $0x14] sm:$0xf]
        %v1718 = vld [vmem:[%s1711 + $0x18] sm:$0xf]
        %v1719 = vld [vmem:[%s1711 + $0x1c] sm:$0xf]
        %v1728 = vunpack.c.l.b16 %v1712
        %v1729 = vunpack.c.l.b16 %v1713
        %v1730 = vunpack.c.l.b16 %v1714
        %v1731 = vunpack.c.l.b16 %v1715
        %v1732 = vunpack.c.l.b16 %v1716
        %v1733 = vunpack.c.l.b16 %v1717
        %v1734 = vunpack.c.l.b16 %v1718
        %v1735 = vunpack.c.l.b16 %v1719
        %v1736 = vpack.c.b16 %v1729, %v1728
        %v1737 = vpack.c.b16 %v1731, %v1730
        %v1738 = vpack.c.b16 %v1733, %v1732
        %v1739 = vpack.c.b16 %v1735, %v1734
        %1748 = vrot.lane.b32.xlu0 %v1695, 127
        %v1749 = vpop.permute.xlu0 %1748
        %1750 = vrot.lane.b32.xlu0 %v1696, 127
        %v1751 = vpop.permute.xlu0 %1750
        %1752 = vrot.lane.b32.xlu0 %v1697, 127
        %v1753 = vpop.permute.xlu0 %1752
        %1754 = vrot.lane.b32.xlu0 %v1698, 127
        %v1755 = vpop.permute.xlu0 %1754
        %1756 = vrot.lane.b32.xlu0 %v1699, 127
        %v1757 = vpop.permute.xlu0 %1756
        %1758 = vrot.lane.b32.xlu0 %v1700, 127
        %v1759 = vpop.permute.xlu0 %1758
        %1760 = vrot.lane.b32.xlu0 %v1701, 127
        %v1761 = vpop.permute.xlu0 %1760
        %1762 = vrot.lane.b32.xlu0 %v1702, 127
        %v1763 = vpop.permute.xlu0 %1762
        %v1764 = vsel %vm594, %v1749, %v1751
        %v1765 = vsel %vm594, %v1753, %v1755
        %v1766 = vsel %vm594, %v1757, %v1759
        %v1767 = vsel %vm594, %v1761, %v1763
        %v1777 = vsel %vm916, %v1736, 0
        %v1780 = vsel %vm916, %v1737, 0
        %v1783 = vsel %vm916, %v1738, 0
        %v1786 = vsel %vm916, %v1739, 0
        %1788 = vmatprep.subr.bf16.mxu0 0
        %1789 = vmatpush1.bf16.msra.mxu0 0
        %1790 = vmatprep.subr.bf16.mxu0 0
        %1791 = vmatpush1.bf16.msra.mxu0 0
        %1792 = vmatprep.subr.bf16.mxu0 0
        %1793 = vmatpush1.bf16.msra.mxu0 0
        %1794 = vmatprep.subr.bf16.mxu0 0
        %1795 = vmatpush1.bf16.msra.mxu0 0
        %1796 = vmatprep.subr.bf16.mxu0 %v1763
        %1797 = vmatpush1.bf16.msra.mxu0 %v1767
        %1798 = vmatprep.subr.bf16.mxu0 %v1759
        %1799 = vmatpush1.bf16.msra.mxu0 %v1766
        %1800 = vmatprep.subr.bf16.mxu0 %v1755
        %1801 = vmatpush1.bf16.msra.mxu0 %v1765
        %1802 = vmatprep.subr.bf16.mxu0 %v1751
        %1803 = vmatpush1.bf16.msra.mxu0 %v1764
        %1804 = vmatprep.subr.bf16.mxu0 0
        %1805 = vmatpush2.bf16.msra.mxu0 0
        %1806 = vmatprep.subr.bf16.mxu0 0
        %1807 = vmatpush2.bf16.msra.mxu0 0
        %1808 = vmatprep.subr.bf16.mxu0 0
        %1809 = vmatpush2.bf16.msra.mxu0 0
        %1810 = vmatprep.subr.bf16.mxu0 0
        %1811 = vmatpush2.bf16.msra.mxu0 0
        %1812 = vmatprep.subr.bf16.mxu0 0
        %1813 = vmatpush2.bf16.msra.mxu0 0
        %1814 = vmatprep.subr.bf16.mxu0 0
        %1815 = vmatpush2.bf16.msra.mxu0 0
        %1816 = vmatprep.subr.bf16.mxu0 0
        %1817 = vmatpush2.bf16.msra.mxu0 0
        %1818 = vmatprep.subr.bf16.mxu0 0
        %1819 = vmatpush2.bf16.msra.mxu0 0
        %1820 = vmatprep.mubr.bf16.mxu0 0
        %1821 = vmatmul.mubr.bf16.gmra.mxu0 %v1777
        %v1822 = vpop.f32.mrf.mxu0
        %v1823 = vadd.f32 0.0, %v1822
        %v1824 = vpop.f32.mrf.mxu0
        %v1825 = vadd.f32 0.0, %v1824
        %v1826 = vpop.f32.mrf.mxu0
        %v1827 = vadd.f32 0.0, %v1826
        %v1828 = vpop.f32.mrf.mxu0
        %v1829 = vadd.f32 0.0, %v1828
        %1830 = vmatprep.mubr.bf16.mxu0 0
        %1831 = vmatmul.mubr.bf16.gmra.mxu0 %v1780
        %v1832 = vpop.f32.mrf.mxu0
        %v1833 = vadd.f32 0.0, %v1832
        %v1834 = vpop.f32.mrf.mxu0
        %v1835 = vadd.f32 0.0, %v1834
        %v1836 = vpop.f32.mrf.mxu0
        %v1837 = vadd.f32 0.0, %v1836
        %v1838 = vpop.f32.mrf.mxu0
        %v1839 = vadd.f32 0.0, %v1838
        %1840 = vmatprep.mubr.bf16.mxu0 0
        %1841 = vmatmul.mubr.bf16.gmra.mxu0 %v1783
        %v1842 = vpop.f32.mrf.mxu0
        %v1843 = vadd.f32 0.0, %v1842
        %v1844 = vpop.f32.mrf.mxu0
        %v1845 = vadd.f32 0.0, %v1844
        %v1846 = vpop.f32.mrf.mxu0
        %v1847 = vadd.f32 0.0, %v1846
        %v1848 = vpop.f32.mrf.mxu0
        %v1849 = vadd.f32 0.0, %v1848
        %1850 = vmatprep.mubr.bf16.mxu0 0
        %1851 = vmatmul.mubr.bf16.gmra.mxu0 %v1786
        %v1852 = vpop.f32.mrf.mxu0
        %v1853 = vadd.f32 0.0, %v1852
        %v1854 = vpop.f32.mrf.mxu0
        %v1855 = vadd.f32 0.0, %v1854
        %v1856 = vpop.f32.mrf.mxu0
        %v1857 = vadd.f32 0.0, %v1856
        %v1858 = vpop.f32.mrf.mxu0
        %v1859 = vadd.f32 0.0, %v1858
        %1860 = vdwg.mxu0
        %v1869 = vunpack.c.l.b16 %v1703
        %v1870 = vunpack.c.l.b16 %v1704
        %v1871 = vunpack.c.l.b16 %v1705
        %v1872 = vunpack.c.l.b16 %v1706
        %v1873 = vunpack.c.l.b16 %v1707
        %v1874 = vunpack.c.l.b16 %v1708
        %v1875 = vunpack.c.l.b16 %v1709
        %v1876 = vunpack.c.l.b16 %v1710
        %v1877 = vpack.c.b16 %v1870, %v1869
        %v1878 = vpack.c.b16 %v1872, %v1871
        %v1879 = vpack.c.b16 %v1874, %v1873
        %v1880 = vpack.c.b16 %v1876, %v1875
        %v1882 = vsel %vm916, %v1877, 0
        %v1885 = vsel %vm916, %v1878, 0
        %v1888 = vsel %vm916, %v1879, 0
        %v1891 = vsel %vm916, %v1880, 0
        %1893 = vmatprep.subr.bf16.mxu0 0
        %1894 = vmatpush1.bf16.msra.mxu0 0
        %1895 = vmatprep.subr.bf16.mxu0 0
        %1896 = vmatpush1.bf16.msra.mxu0 0
        %1897 = vmatprep.subr.bf16.mxu0 0
        %1898 = vmatpush1.bf16.msra.mxu0 0
        %1899 = vmatprep.subr.bf16.mxu0 0
        %1900 = vmatpush1.bf16.msra.mxu0 0
        %1901 = vmatprep.subr.bf16.mxu0 %v1702
        %1902 = vmatpush1.bf16.msra.mxu0 %v1701
        %1903 = vmatprep.subr.bf16.mxu0 %v1700
        %1904 = vmatpush1.bf16.msra.mxu0 %v1699
        %1905 = vmatprep.subr.bf16.mxu0 %v1698
        %1906 = vmatpush1.bf16.msra.mxu0 %v1697
        %1907 = vmatprep.subr.bf16.mxu0 %v1696
        %1908 = vmatpush1.bf16.msra.mxu0 %v1695
        %1909 = vmatprep.subr.bf16.mxu0 0
        %1910 = vmatpush2.bf16.msra.mxu0 0
        %1911 = vmatprep.subr.bf16.mxu0 0
        %1912 = vmatpush2.bf16.msra.mxu0 0
        %1913 = vmatprep.subr.bf16.mxu0 0
        %1914 = vmatpush2.bf16.msra.mxu0 0
        %1915 = vmatprep.subr.bf16.mxu0 0
        %1916 = vmatpush2.bf16.msra.mxu0 0
        %1917 = vmatprep.subr.bf16.mxu0 0
        %1918 = vmatpush2.bf16.msra.mxu0 0
        %1919 = vmatprep.subr.bf16.mxu0 0
        %1920 = vmatpush2.bf16.msra.mxu0 0
        %1921 = vmatprep.subr.bf16.mxu0 0
        %1922 = vmatpush2.bf16.msra.mxu0 0
        %1923 = vmatprep.subr.bf16.mxu0 0
        %1924 = vmatpush2.bf16.msra.mxu0 0
        %1925 = vmatprep.mubr.bf16.mxu0 0
        %1926 = vmatmul.mubr.bf16.gmra.mxu0 %v1882
        %v1927 = vpop.f32.mrf.mxu0
        %v1928 = vadd.f32 %v1823, %v1927
        %v1929 = vpop.f32.mrf.mxu0
        %v1930 = vadd.f32 %v1825, %v1929
        %v1931 = vpop.f32.mrf.mxu0
        %v1932 = vadd.f32 %v1827, %v1931
        %v1933 = vpop.f32.mrf.mxu0
        %v1934 = vadd.f32 %v1829, %v1933
        %1935 = vmatprep.mubr.bf16.mxu0 0
        %1936 = vmatmul.mubr.bf16.gmra.mxu0 %v1885
        %v1937 = vpop.f32.mrf.mxu0
        %v1938 = vadd.f32 %v1833, %v1937
        %v1939 = vpop.f32.mrf.mxu0
        %v1940 = vadd.f32 %v1835, %v1939
        %v1941 = vpop.f32.mrf.mxu0
        %v1942 = vadd.f32 %v1837, %v1941
        %v1943 = vpop.f32.mrf.mxu0
        %v1944 = vadd.f32 %v1839, %v1943
        %1945 = vmatprep.mubr.bf16.mxu0 0
        %1946 = vmatmul.mubr.bf16.gmra.mxu0 %v1888
        %v1947 = vpop.f32.mrf.mxu0
        %v1948 = vadd.f32 %v1843, %v1947
        %v1949 = vpop.f32.mrf.mxu0
        %v1950 = vadd.f32 %v1845, %v1949
        %v1951 = vpop.f32.mrf.mxu0
        %v1952 = vadd.f32 %v1847, %v1951
        %v1953 = vpop.f32.mrf.mxu0
        %v1954 = vadd.f32 %v1849, %v1953
        %1955 = vmatprep.mubr.bf16.mxu0 0
        %1956 = vmatmul.mubr.bf16.gmra.mxu0 %v1891
        %v1957 = vpop.f32.mrf.mxu0
        %v1958 = vadd.f32 %v1853, %v1957
        %v1959 = vpop.f32.mrf.mxu0
        %v1960 = vadd.f32 %v1855, %v1959
        %v1961 = vpop.f32.mrf.mxu0
        %v1962 = vadd.f32 %v1857, %v1961
        %v1963 = vpop.f32.mrf.mxu0
        %v1964 = vadd.f32 %v1859, %v1963
        %1965 = vdwg.mxu0
        %s1966 = scalar_lea.vmem [#allocation8], 64
        %v1967 = vld [vmem:[%s1966] sm:$0xf]
        %v1968 = vld [vmem:[%s1966 + $0x4] sm:$0xf]
        %v1969 = vld [vmem:[%s1966 + $0x8] sm:$0xf]
        %v1970 = vld [vmem:[%s1966 + $0xc] sm:$0xf]
        %v1971 = vld [vmem:[%s1966 + $0x10] sm:$0xf]
        %v1972 = vld [vmem:[%s1966 + $0x14] sm:$0xf]
        %v1973 = vld [vmem:[%s1966 + $0x18] sm:$0xf]
        %v1974 = vld [vmem:[%s1966 + $0x1c] sm:$0xf]
        %v1983 = vunpack.c.l.b16 %v1967
        %v1984 = vunpack.c.l.b16 %v1968
        %v1985 = vunpack.c.l.b16 %v1969
        %v1986 = vunpack.c.l.b16 %v1970
        %v1987 = vunpack.c.l.b16 %v1971
        %v1988 = vunpack.c.l.b16 %v1972
        %v1989 = vunpack.c.l.b16 %v1973
        %v1990 = vunpack.c.l.b16 %v1974
        %v1991 = vpack.c.b16 %v1984, %v1983
        %v1992 = vpack.c.b16 %v1986, %v1985
        %v1993 = vpack.c.b16 %v1988, %v1987
        %v1994 = vpack.c.b16 %v1990, %v1989
        %1995 = vrot.lane.b32.xlu0 %v1695, 126
        %v1996 = vpop.permute.xlu0 %1995
        %1997 = vrot.lane.b32.xlu0 %v1696, 126
        %v1998 = vpop.permute.xlu0 %1997
        %1999 = vrot.lane.b32.xlu0 %v1697, 126
        %v2000 = vpop.permute.xlu0 %1999
        %2001 = vrot.lane.b32.xlu0 %v1698, 126
        %v2002 = vpop.permute.xlu0 %2001
        %2003 = vrot.lane.b32.xlu0 %v1699, 126
        %v2004 = vpop.permute.xlu0 %2003
        %2005 = vrot.lane.b32.xlu0 %v1700, 126
        %v2006 = vpop.permute.xlu0 %2005
        %2007 = vrot.lane.b32.xlu0 %v1701, 126
        %v2008 = vpop.permute.xlu0 %2007
        %2009 = vrot.lane.b32.xlu0 %v1702, 126
        %v2010 = vpop.permute.xlu0 %2009
        %v2011 = vsel %vm602, %v1996, %v1998
        %v2012 = vsel %vm602, %v2000, %v2002
        %v2013 = vsel %vm602, %v2004, %v2006
        %v2014 = vsel %vm602, %v2008, %v2010
        %v2024 = vsel %vm916, %v1991, 0
        %v2027 = vsel %vm916, %v1992, 0
        %v2030 = vsel %vm916, %v1993, 0
        %v2033 = vsel %vm916, %v1994, 0
        %2035 = vmatprep.subr.bf16.mxu0 0
        %2036 = vmatpush1.bf16.msra.mxu0 0
        %2037 = vmatprep.subr.bf16.mxu0 0
        %2038 = vmatpush1.bf16.msra.mxu0 0
        %2039 = vmatprep.subr.bf16.mxu0 0
        %2040 = vmatpush1.bf16.msra.mxu0 0
        %2041 = vmatprep.subr.bf16.mxu0 0
        %2042 = vmatpush1.bf16.msra.mxu0 0
        %2043 = vmatprep.subr.bf16.mxu0 %v2010
        %2044 = vmatpush1.bf16.msra.mxu0 %v2014
        %2045 = vmatprep.subr.bf16.mxu0 %v2006
        %2046 = vmatpush1.bf16.msra.mxu0 %v2013
        %2047 = vmatprep.subr.bf16.mxu0 %v2002
        %2048 = vmatpush1.bf16.msra.mxu0 %v2012
        %2049 = vmatprep.subr.bf16.mxu0 %v1998
        %2050 = vmatpush1.bf16.msra.mxu0 %v2011
        %2051 = vmatprep.subr.bf16.mxu0 0
        %2052 = vmatpush2.bf16.msra.mxu0 0
        %2053 = vmatprep.subr.bf16.mxu0 0
        %2054 = vmatpush2.bf16.msra.mxu0 0
        %2055 = vmatprep.subr.bf16.mxu0 0
        %2056 = vmatpush2.bf16.msra.mxu0 0
        %2057 = vmatprep.subr.bf16.mxu0 0
        %2058 = vmatpush2.bf16.msra.mxu0 0
        %2059 = vmatprep.subr.bf16.mxu0 0
        %2060 = vmatpush2.bf16.msra.mxu0 0
        %2061 = vmatprep.subr.bf16.mxu0 0
        %2062 = vmatpush2.bf16.msra.mxu0 0
        %2063 = vmatprep.subr.bf16.mxu0 0
        %2064 = vmatpush2.bf16.msra.mxu0 0
        %2065 = vmatprep.subr.bf16.mxu0 0
        %2066 = vmatpush2.bf16.msra.mxu0 0
        %2067 = vmatprep.mubr.bf16.mxu0 0
        %2068 = vmatmul.mubr.bf16.gmra.mxu0 %v2024
        %v2069 = vpop.f32.mrf.mxu0
        %v2070 = vadd.f32 0.0, %v2069
        %v2071 = vpop.f32.mrf.mxu0
        %v2072 = vadd.f32 0.0, %v2071
        %v2073 = vpop.f32.mrf.mxu0
        %v2074 = vadd.f32 0.0, %v2073
        %v2075 = vpop.f32.mrf.mxu0
        %v2076 = vadd.f32 0.0, %v2075
        %2077 = vmatprep.mubr.bf16.mxu0 0
        %2078 = vmatmul.mubr.bf16.gmra.mxu0 %v2027
        %v2079 = vpop.f32.mrf.mxu0
        %v2080 = vadd.f32 0.0, %v2079
        %v2081 = vpop.f32.mrf.mxu0
        %v2082 = vadd.f32 0.0, %v2081
        %v2083 = vpop.f32.mrf.mxu0
        %v2084 = vadd.f32 0.0, %v2083
        %v2085 = vpop.f32.mrf.mxu0
        %v2086 = vadd.f32 0.0, %v2085
        %2087 = vmatprep.mubr.bf16.mxu0 0
        %2088 = vmatmul.mubr.bf16.gmra.mxu0 %v2030
        %v2089 = vpop.f32.mrf.mxu0
        %v2090 = vadd.f32 0.0, %v2089
        %v2091 = vpop.f32.mrf.mxu0
        %v2092 = vadd.f32 0.0, %v2091
        %v2093 = vpop.f32.mrf.mxu0
        %v2094 = vadd.f32 0.0, %v2093
        %v2095 = vpop.f32.mrf.mxu0
        %v2096 = vadd.f32 0.0, %v2095
        %2097 = vmatprep.mubr.bf16.mxu0 0
        %2098 = vmatmul.mubr.bf16.gmra.mxu0 %v2033
        %v2099 = vpop.f32.mrf.mxu0
        %v2100 = vadd.f32 0.0, %v2099
        %v2101 = vpop.f32.mrf.mxu0
        %v2102 = vadd.f32 0.0, %v2101
        %v2103 = vpop.f32.mrf.mxu0
        %v2104 = vadd.f32 0.0, %v2103
        %v2105 = vpop.f32.mrf.mxu0
        %v2106 = vadd.f32 0.0, %v2105
        %2107 = vdwg.mxu0
        %v2108 = vadd.f32 %v1928, %v2070
        %v2109 = vadd.f32 %v1930, %v2072
        %v2110 = vadd.f32 %v1932, %v2074
        %v2111 = vadd.f32 %v1934, %v2076
        %v2112 = vadd.f32 %v1938, %v2080
        %v2113 = vadd.f32 %v1940, %v2082
        %v2114 = vadd.f32 %v1942, %v2084
        %v2115 = vadd.f32 %v1944, %v2086
        %v2116 = vadd.f32 %v1948, %v2090
        %v2117 = vadd.f32 %v1950, %v2092
        %v2118 = vadd.f32 %v1952, %v2094
        %v2119 = vadd.f32 %v1954, %v2096
        %v2120 = vadd.f32 %v1958, %v2100
        %v2121 = vadd.f32 %v1960, %v2102
        %v2122 = vadd.f32 %v1962, %v2104
        %v2123 = vadd.f32 %v1964, %v2106
        %s2124 = scalar_lea.vmem [#allocation8], 96
        %v2125 = vld [vmem:[%s2124] sm:$0xf]
        %v2126 = vld [vmem:[%s2124 + $0x4] sm:$0xf]
        %v2127 = vld [vmem:[%s2124 + $0x8] sm:$0xf]
        %v2128 = vld [vmem:[%s2124 + $0xc] sm:$0xf]
        %v2129 = vld [vmem:[%s2124 + $0x10] sm:$0xf]
        %v2130 = vld [vmem:[%s2124 + $0x14] sm:$0xf]
        %v2131 = vld [vmem:[%s2124 + $0x18] sm:$0xf]
        %v2132 = vld [vmem:[%s2124 + $0x1c] sm:$0xf]
        %v2141 = vunpack.c.l.b16 %v2125
        %v2142 = vunpack.c.l.b16 %v2126
        %v2143 = vunpack.c.l.b16 %v2127
        %v2144 = vunpack.c.l.b16 %v2128
        %v2145 = vunpack.c.l.b16 %v2129
        %v2146 = vunpack.c.l.b16 %v2130
        %v2147 = vunpack.c.l.b16 %v2131
        %v2148 = vunpack.c.l.b16 %v2132
        %v2149 = vpack.c.b16 %v2142, %v2141
        %v2150 = vpack.c.b16 %v2144, %v2143
        %v2151 = vpack.c.b16 %v2146, %v2145
        %v2152 = vpack.c.b16 %v2148, %v2147
        %2153 = vrot.lane.b32.xlu0 %v1695, 125
        %v2154 = vpop.permute.xlu0 %2153
        %2155 = vrot.lane.b32.xlu0 %v1696, 125
        %v2156 = vpop.permute.xlu0 %2155
        %2157 = vrot.lane.b32.xlu0 %v1697, 125
        %v2158 = vpop.permute.xlu0 %2157
        %2159 = vrot.lane.b32.xlu0 %v1698, 125
        %v2160 = vpop.permute.xlu0 %2159
        %2161 = vrot.lane.b32.xlu0 %v1699, 125
        %v2162 = vpop.permute.xlu0 %2161
        %2163 = vrot.lane.b32.xlu0 %v1700, 125
        %v2164 = vpop.permute.xlu0 %2163
        %2165 = vrot.lane.b32.xlu0 %v1701, 125
        %v2166 = vpop.permute.xlu0 %2165
        %2167 = vrot.lane.b32.xlu0 %v1702, 125
        %v2168 = vpop.permute.xlu0 %2167
        %v2169 = vsel %vm610, %v2154, %v2156
        %v2170 = vsel %vm610, %v2158, %v2160
        %v2171 = vsel %vm610, %v2162, %v2164
        %v2172 = vsel %vm610, %v2166, %v2168
        %v2182 = vsel %vm916, %v2149, 0
        %v2185 = vsel %vm916, %v2150, 0
        %v2188 = vsel %vm916, %v2151, 0
        %v2191 = vsel %vm916, %v2152, 0
        %2193 = vmatprep.subr.bf16.mxu0 0
        %2194 = vmatpush1.bf16.msra.mxu0 0
        %2195 = vmatprep.subr.bf16.mxu0 0
        %2196 = vmatpush1.bf16.msra.mxu0 0
        %2197 = vmatprep.subr.bf16.mxu0 0
        %2198 = vmatpush1.bf16.msra.mxu0 0
        %2199 = vmatprep.subr.bf16.mxu0 0
        %2200 = vmatpush1.bf16.msra.mxu0 0
        %2201 = vmatprep.subr.bf16.mxu0 %v2168
        %2202 = vmatpush1.bf16.msra.mxu0 %v2172
        %2203 = vmatprep.subr.bf16.mxu0 %v2164
        %2204 = vmatpush1.bf16.msra.mxu0 %v2171
        %2205 = vmatprep.subr.bf16.mxu0 %v2160
        %2206 = vmatpush1.bf16.msra.mxu0 %v2170
        %2207 = vmatprep.subr.bf16.mxu0 %v2156
        %2208 = vmatpush1.bf16.msra.mxu0 %v2169
        %2209 = vmatprep.subr.bf16.mxu0 0
        %2210 = vmatpush2.bf16.msra.mxu0 0
        %2211 = vmatprep.subr.bf16.mxu0 0
        %2212 = vmatpush2.bf16.msra.mxu0 0
        %2213 = vmatprep.subr.bf16.mxu0 0
        %2214 = vmatpush2.bf16.msra.mxu0 0
        %2215 = vmatprep.subr.bf16.mxu0 0
        %2216 = vmatpush2.bf16.msra.mxu0 0
        %2217 = vmatprep.subr.bf16.mxu0 0
        %2218 = vmatpush2.bf16.msra.mxu0 0
        %2219 = vmatprep.subr.bf16.mxu0 0
        %2220 = vmatpush2.bf16.msra.mxu0 0
        %2221 = vmatprep.subr.bf16.mxu0 0
        %2222 = vmatpush2.bf16.msra.mxu0 0
        %2223 = vmatprep.subr.bf16.mxu0 0
        %2224 = vmatpush2.bf16.msra.mxu0 0
        %2225 = vmatprep.mubr.bf16.mxu0 0
        %2226 = vmatmul.mubr.bf16.gmra.mxu0 %v2182
        %v2227 = vpop.f32.mrf.mxu0
        %v2228 = vadd.f32 0.0, %v2227
        %v2229 = vpop.f32.mrf.mxu0
        %v2230 = vadd.f32 0.0, %v2229
        %v2231 = vpop.f32.mrf.mxu0
        %v2232 = vadd.f32 0.0, %v2231
        %v2233 = vpop.f32.mrf.mxu0
        %v2234 = vadd.f32 0.0, %v2233
        %2235 = vmatprep.mubr.bf16.mxu0 0
        %2236 = vmatmul.mubr.bf16.gmra.mxu0 %v2185
        %v2237 = vpop.f32.mrf.mxu0
        %v2238 = vadd.f32 0.0, %v2237
        %v2239 = vpop.f32.mrf.mxu0
        %v2240 = vadd.f32 0.0, %v2239
        %v2241 = vpop.f32.mrf.mxu0
        %v2242 = vadd.f32 0.0, %v2241
        %v2243 = vpop.f32.mrf.mxu0
        %v2244 = vadd.f32 0.0, %v2243
        %2245 = vmatprep.mubr.bf16.mxu0 0
        %2246 = vmatmul.mubr.bf16.gmra.mxu0 %v2188
        %v2247 = vpop.f32.mrf.mxu0
        %v2248 = vadd.f32 0.0, %v2247
        %v2249 = vpop.f32.mrf.mxu0
        %v2250 = vadd.f32 0.0, %v2249
        %v2251 = vpop.f32.mrf.mxu0
        %v2252 = vadd.f32 0.0, %v2251
        %v2253 = vpop.f32.mrf.mxu0
        %v2254 = vadd.f32 0.0, %v2253
        %2255 = vmatprep.mubr.bf16.mxu0 0
        %2256 = vmatmul.mubr.bf16.gmra.mxu0 %v2191
        %v2257 = vpop.f32.mrf.mxu0
        %v2258 = vadd.f32 0.0, %v2257
        %v2259 = vpop.f32.mrf.mxu0
        %v2260 = vadd.f32 0.0, %v2259
        %v2261 = vpop.f32.mrf.mxu0
        %v2262 = vadd.f32 0.0, %v2261
        %v2263 = vpop.f32.mrf.mxu0
        %v2264 = vadd.f32 0.0, %v2263
        %2265 = vdwg.mxu0
        %v2266 = vadd.f32 %v2108, %v2228
        %v2267 = vadd.f32 %v2109, %v2230
        %v2268 = vadd.f32 %v2110, %v2232
        %v2269 = vadd.f32 %v2111, %v2234
        %v2270 = vadd.f32 %v2112, %v2238
        %v2271 = vadd.f32 %v2113, %v2240
        %v2272 = vadd.f32 %v2114, %v2242
        %v2273 = vadd.f32 %v2115, %v2244
        %v2274 = vadd.f32 %v2116, %v2248
        %v2275 = vadd.f32 %v2117, %v2250
        %v2276 = vadd.f32 %v2118, %v2252
        %v2277 = vadd.f32 %v2119, %v2254
        %v2278 = vadd.f32 %v2120, %v2258
        %v2279 = vadd.f32 %v2121, %v2260
        %v2280 = vadd.f32 %v2122, %v2262
        %v2281 = vadd.f32 %v2123, %v2264
        %s2282 = scalar_lea.vmem [#allocation8], 128
        %v2283 = vld [vmem:[%s2282] sm:$0xf]
        %v2284 = vld [vmem:[%s2282 + $0x4] sm:$0xf]
        %v2285 = vld [vmem:[%s2282 + $0x8] sm:$0xf]
        %v2286 = vld [vmem:[%s2282 + $0xc] sm:$0xf]
        %v2287 = vld [vmem:[%s2282 + $0x10] sm:$0xf]
        %v2288 = vld [vmem:[%s2282 + $0x14] sm:$0xf]
        %v2289 = vld [vmem:[%s2282 + $0x18] sm:$0xf]
        %v2290 = vld [vmem:[%s2282 + $0x1c] sm:$0xf]
        %v2299 = vunpack.c.l.b16 %v2283
        %v2300 = vunpack.c.l.b16 %v2284
        %v2301 = vunpack.c.l.b16 %v2285
        %v2302 = vunpack.c.l.b16 %v2286
        %v2303 = vunpack.c.l.b16 %v2287
        %v2304 = vunpack.c.l.b16 %v2288
        %v2305 = vunpack.c.l.b16 %v2289
        %v2306 = vunpack.c.l.b16 %v2290
        %v2307 = vpack.c.b16 %v2300, %v2299
        %v2308 = vpack.c.b16 %v2302, %v2301
        %v2309 = vpack.c.b16 %v2304, %v2303
        %v2310 = vpack.c.b16 %v2306, %v2305
        %2311 = vrot.lane.b32.xlu0 %v1695, 124
        %v2312 = vpop.permute.xlu0 %2311
        %2313 = vrot.lane.b32.xlu0 %v1696, 124
        %v2314 = vpop.permute.xlu0 %2313
        %2315 = vrot.lane.b32.xlu0 %v1697, 124
        %v2316 = vpop.permute.xlu0 %2315
        %2317 = vrot.lane.b32.xlu0 %v1698, 124
        %v2318 = vpop.permute.xlu0 %2317
        %2319 = vrot.lane.b32.xlu0 %v1699, 124
        %v2320 = vpop.permute.xlu0 %2319
        %2321 = vrot.lane.b32.xlu0 %v1700, 124
        %v2322 = vpop.permute.xlu0 %2321
        %2323 = vrot.lane.b32.xlu0 %v1701, 124
        %v2324 = vpop.permute.xlu0 %2323
        %2325 = vrot.lane.b32.xlu0 %v1702, 124
        %v2326 = vpop.permute.xlu0 %2325
        %v2327 = vsel %vm618, %v2312, %v2314
        %v2328 = vsel %vm618, %v2316, %v2318
        %v2329 = vsel %vm618, %v2320, %v2322
        %v2330 = vsel %vm618, %v2324, %v2326
        %v2340 = vsel %vm916, %v2307, 0
        %v2343 = vsel %vm916, %v2308, 0
        %v2346 = vsel %vm916, %v2309, 0
        %v2349 = vsel %vm916, %v2310, 0
        %2351 = vmatprep.subr.bf16.mxu0 0
        %2352 = vmatpush1.bf16.msra.mxu0 0
        %2353 = vmatprep.subr.bf16.mxu0 0
        %2354 = vmatpush1.bf16.msra.mxu0 0
        %2355 = vmatprep.subr.bf16.mxu0 0
        %2356 = vmatpush1.bf16.msra.mxu0 0
        %2357 = vmatprep.subr.bf16.mxu0 0
        %2358 = vmatpush1.bf16.msra.mxu0 0
        %2359 = vmatprep.subr.bf16.mxu0 %v2326
        %2360 = vmatpush1.bf16.msra.mxu0 %v2330
        %2361 = vmatprep.subr.bf16.mxu0 %v2322
        %2362 = vmatpush1.bf16.msra.mxu0 %v2329
        %2363 = vmatprep.subr.bf16.mxu0 %v2318
        %2364 = vmatpush1.bf16.msra.mxu0 %v2328
        %2365 = vmatprep.subr.bf16.mxu0 %v2314
        %2366 = vmatpush1.bf16.msra.mxu0 %v2327
        %2367 = vmatprep.subr.bf16.mxu0 0
        %2368 = vmatpush2.bf16.msra.mxu0 0
        %2369 = vmatprep.subr.bf16.mxu0 0
        %2370 = vmatpush2.bf16.msra.mxu0 0
        %2371 = vmatprep.subr.bf16.mxu0 0
        %2372 = vmatpush2.bf16.msra.mxu0 0
        %2373 = vmatprep.subr.bf16.mxu0 0
        %2374 = vmatpush2.bf16.msra.mxu0 0
        %2375 = vmatprep.subr.bf16.mxu0 0
        %2376 = vmatpush2.bf16.msra.mxu0 0
        %2377 = vmatprep.subr.bf16.mxu0 0
        %2378 = vmatpush2.bf16.msra.mxu0 0
        %2379 = vmatprep.subr.bf16.mxu0 0
        %2380 = vmatpush2.bf16.msra.mxu0 0
        %2381 = vmatprep.subr.bf16.mxu0 0
        %2382 = vmatpush2.bf16.msra.mxu0 0
        %2383 = vmatprep.mubr.bf16.mxu0 0
        %2384 = vmatmul.mubr.bf16.gmra.mxu0 %v2340
        %v2385 = vpop.f32.mrf.mxu0
        %v2386 = vadd.f32 0.0, %v2385
        %v2387 = vpop.f32.mrf.mxu0
        %v2388 = vadd.f32 0.0, %v2387
        %v2389 = vpop.f32.mrf.mxu0
        %v2390 = vadd.f32 0.0, %v2389
        %v2391 = vpop.f32.mrf.mxu0
        %v2392 = vadd.f32 0.0, %v2391
        %2393 = vmatprep.mubr.bf16.mxu0 0
        %2394 = vmatmul.mubr.bf16.gmra.mxu0 %v2343
        %v2395 = vpop.f32.mrf.mxu0
        %v2396 = vadd.f32 0.0, %v2395
        %v2397 = vpop.f32.mrf.mxu0
        %v2398 = vadd.f32 0.0, %v2397
        %v2399 = vpop.f32.mrf.mxu0
        %v2400 = vadd.f32 0.0, %v2399
        %v2401 = vpop.f32.mrf.mxu0
        %v2402 = vadd.f32 0.0, %v2401
        %2403 = vmatprep.mubr.bf16.mxu0 0
        %2404 = vmatmul.mubr.bf16.gmra.mxu0 %v2346
        %v2405 = vpop.f32.mrf.mxu0
        %v2406 = vadd.f32 0.0, %v2405
        %v2407 = vpop.f32.mrf.mxu0
        %v2408 = vadd.f32 0.0, %v2407
        %v2409 = vpop.f32.mrf.mxu0
        %v2410 = vadd.f32 0.0, %v2409
        %v2411 = vpop.f32.mrf.mxu0
        %v2412 = vadd.f32 0.0, %v2411
        %2413 = vmatprep.mubr.bf16.mxu0 0
        %2414 = vmatmul.mubr.bf16.gmra.mxu0 %v2349
        %v2415 = vpop.f32.mrf.mxu0
        %v2416 = vadd.f32 0.0, %v2415
        %v2417 = vpop.f32.mrf.mxu0
        %v2418 = vadd.f32 0.0, %v2417
        %v2419 = vpop.f32.mrf.mxu0
        %v2420 = vadd.f32 0.0, %v2419
        %v2421 = vpop.f32.mrf.mxu0
        %v2422 = vadd.f32 0.0, %v2421
        %2423 = vdwg.mxu0
        %v2424 = vadd.f32 %v2266, %v2386
        %v2425 = vadd.f32 %v2267, %v2388
        %v2426 = vadd.f32 %v2268, %v2390
        %v2427 = vadd.f32 %v2269, %v2392
        %v2428 = vadd.f32 %v2270, %v2396
        %v2429 = vadd.f32 %v2271, %v2398
        %v2430 = vadd.f32 %v2272, %v2400
        %v2431 = vadd.f32 %v2273, %v2402
        %v2432 = vadd.f32 %v2274, %v2406
        %v2433 = vadd.f32 %v2275, %v2408
        %v2434 = vadd.f32 %v2276, %v2410
        %v2435 = vadd.f32 %v2277, %v2412
        %v2436 = vadd.f32 %v2278, %v2416
        %v2437 = vadd.f32 %v2279, %v2418
        %v2438 = vadd.f32 %v2280, %v2420
        %v2439 = vadd.f32 %v2281, %v2422
        %v2440 = vld [vmem:[%s7] sm:$0xff]
        %v2441 = vld [vmem:[%s7 + $0x8] sm:$0xff]
        %v2442 = vld [vmem:[%s7 + $0x10] sm:$0xff]
        %v2443 = vld [vmem:[%s7 + $0x18] sm:$0xff]
        %v2444 = vld [vmem:[%s7 + $0x20] sm:$0xff]
        %v2445 = vld [vmem:[%s7 + $0x28] sm:$0xff]
        %v2446 = vld [vmem:[%s7 + $0x30] sm:$0xff]
        %v2447 = vld [vmem:[%s7 + $0x38] sm:$0xff]
        %2449 = vset.pattern.permute.xlu0 0
        %2450 = vperm.xlu0 %2449, %v2440
        %v2451 = vpop.permute.xlu0 %2450
        %2454 = vset.pattern.permute.xlu0 0
        %2455 = vperm.xlu0 %2454, %v2441
        %v2456 = vpop.permute.xlu0 %2455
        %2459 = vset.pattern.permute.xlu0 0
        %2460 = vperm.xlu0 %2459, %v2442
        %v2461 = vpop.permute.xlu0 %2460
        %2464 = vset.pattern.permute.xlu0 0
        %2465 = vperm.xlu0 %2464, %v2443
        %v2466 = vpop.permute.xlu0 %2465
        %2469 = vset.pattern.permute.xlu0 0
        %2470 = vperm.xlu0 %2469, %v2444
        %v2471 = vpop.permute.xlu0 %2470
        %2474 = vset.pattern.permute.xlu0 0
        %2475 = vperm.xlu0 %2474, %v2445
        %v2476 = vpop.permute.xlu0 %2475
        %2479 = vset.pattern.permute.xlu0 0
        %2480 = vperm.xlu0 %2479, %v2446
        %v2481 = vpop.permute.xlu0 %2480
        %2484 = vset.pattern.permute.xlu0 0
        %2485 = vperm.xlu0 %2484, %v2447
        %v2486 = vpop.permute.xlu0 %2485
        %v2488 = vadd.f32 %v2424, %v2451
        %v2489 = vadd.f32 %v2425, %v2451
        %v2490 = vadd.f32 %v2426, %v2456
        %v2491 = vadd.f32 %v2427, %v2456
        %v2492 = vadd.f32 %v2428, %v2461
        %v2493 = vadd.f32 %v2429, %v2461
        %v2494 = vadd.f32 %v2430, %v2466
        %v2495 = vadd.f32 %v2431, %v2466
        %v2496 = vadd.f32 %v2432, %v2471
        %v2497 = vadd.f32 %v2433, %v2471
        %v2498 = vadd.f32 %v2434, %v2476
        %v2499 = vadd.f32 %v2435, %v2476
        %v2500 = vadd.f32 %v2436, %v2481
        %v2501 = vadd.f32 %v2437, %v2481
        %v2502 = vadd.f32 %v2438, %v2486
        %v2503 = vadd.f32 %v2439, %v2486
        %v2504 = vtanh.pop %v2488
        %v2505 = vtanh.pop %v2489
        %v2506 = vtanh.pop %v2490
        %v2507 = vtanh.pop %v2491
        %v2508 = vtanh.pop %v2492
        %v2509 = vtanh.pop %v2493
        %v2510 = vtanh.pop %v2494
        %v2511 = vtanh.pop %v2495
        %v2512 = vtanh.pop %v2496
        %v2513 = vtanh.pop %v2497
        %v2514 = vtanh.pop %v2498
        %v2515 = vtanh.pop %v2499
        %v2516 = vtanh.pop %v2500
        %v2517 = vtanh.pop %v2501
        %v2518 = vtanh.pop %v2502
        %v2519 = vtanh.pop %v2503
        %v2520 = vpack.c.bf16 %v2506, %v2504
        %v2521 = vpack.c.bf16 %v2507, %v2505
        %v2522 = vpack.c.bf16 %v2510, %v2508
        %v2523 = vpack.c.bf16 %v2511, %v2509
        %v2524 = vpack.c.bf16 %v2514, %v2512
        %v2525 = vpack.c.bf16 %v2515, %v2513
        %v2526 = vpack.c.bf16 %v2518, %v2516
        %v2527 = vpack.c.bf16 %v2519, %v2517
        %s2528 = ssub.s32 4, %s808
        %s2529 = ssub.s32 304, %s808
        %v2530 = vstv %s2528
        %vm2531 = vcmp.ge.s32.totalorder %v588, %v2530
        %vm2532 = vcmp.ge.s32.totalorder %v589, %v2530
        %v2533 = vstv %s2529
        %vm2534 = vcmp.lt.s32.totalorder %v588, %v2533
        %vm2535 = vcmp.lt.s32.totalorder %v589, %v2533
        %vm2536 = vmand %vm2531, %vm2534
        %vm2537 = vmand %vm2532, %vm2535
        %v2538 = vsel %vm2536, 1, 0
        %v2539 = vsel %vm2537, 1, 0
        %vm2540 = vcmp.eq.s32.totalorder %v2538, 1
        %vm2541 = vcmp.eq.s32.totalorder %v2539, 1
        %vm2542 = vmpackc.low %vm2541, %vm2540
        %v2543 = vsel %vm2542, 65537, 0
        %v2544 = vlaneseq
        %v2545 = vshrl.u32 %v2544, 7
        %v2546 = vsub.s32 0, %v2545
        %v2547 = vrot.slane %v2543, %v2546
        %v2548 = vlaneseq
        %v2549 = vshrl.u32 %v2548, 7
        %v2550 = vsub.s32 4, %v2549
        %v2551 = vrot.slane %v2543, %v2550
        %vm2552 = vcmp.ne.s16.totalorder %v2547, 0
        %vm2553 = vcmp.ne.s16.totalorder %v2551, 0
        %v2554 = vsel %vm2552, %v2520, 0
        %v2555 = vsel %vm2553, %v2521, 0
        %v2556 = vsel %vm2552, %v2522, 0
        %v2557 = vsel %vm2553, %v2523, 0
        %v2558 = vsel %vm2552, %v2524, 0
        %v2559 = vsel %vm2553, %v2525, 0
        %v2560 = vsel %vm2552, %v2526, 0
        %v2561 = vsel %vm2553, %v2527, 0
        %v2562 = vld [vmem:[#allocation9] sm:$0xf]
        %v2563 = vld [vmem:[#allocation9 + $0x4] sm:$0xf]
        %v2564 = vld [vmem:[#allocation9 + $0x8] sm:$0xf]
        %v2565 = vld [vmem:[#allocation9 + $0xc] sm:$0xf]
        %v2566 = vld [vmem:[#allocation9 + $0x10] sm:$0xf]
        %v2567 = vld [vmem:[#allocation9 + $0x14] sm:$0xf]
        %v2568 = vld [vmem:[#allocation9 + $0x18] sm:$0xf]
        %v2569 = vld [vmem:[#allocation9 + $0x1c] sm:$0xf]
        %s2570 = scalar_lea.vmem [#allocation9], 32
        %v2571 = vld [vmem:[%s2570] sm:$0xf]
        %v2572 = vld [vmem:[%s2570 + $0x4] sm:$0xf]
        %v2573 = vld [vmem:[%s2570 + $0x8] sm:$0xf]
        %v2574 = vld [vmem:[%s2570 + $0xc] sm:$0xf]
        %v2575 = vld [vmem:[%s2570 + $0x10] sm:$0xf]
        %v2576 = vld [vmem:[%s2570 + $0x14] sm:$0xf]
        %v2577 = vld [vmem:[%s2570 + $0x18] sm:$0xf]
        %v2578 = vld [vmem:[%s2570 + $0x1c] sm:$0xf]
        %v2587 = vunpack.c.l.b16 %v2571
        %v2588 = vunpack.c.l.b16 %v2572
        %v2589 = vunpack.c.l.b16 %v2573
        %v2590 = vunpack.c.l.b16 %v2574
        %v2591 = vunpack.c.l.b16 %v2575
        %v2592 = vunpack.c.l.b16 %v2576
        %v2593 = vunpack.c.l.b16 %v2577
        %v2594 = vunpack.c.l.b16 %v2578
        %v2595 = vpack.c.b16 %v2588, %v2587
        %v2596 = vpack.c.b16 %v2590, %v2589
        %v2597 = vpack.c.b16 %v2592, %v2591
        %v2598 = vpack.c.b16 %v2594, %v2593
        %2607 = vrot.lane.b32.xlu0 %v2554, 127
        %v2608 = vpop.permute.xlu0 %2607
        %2609 = vrot.lane.b32.xlu0 %v2555, 127
        %v2610 = vpop.permute.xlu0 %2609
        %2611 = vrot.lane.b32.xlu0 %v2556, 127
        %v2612 = vpop.permute.xlu0 %2611
        %2613 = vrot.lane.b32.xlu0 %v2557, 127
        %v2614 = vpop.permute.xlu0 %2613
        %2615 = vrot.lane.b32.xlu0 %v2558, 127
        %v2616 = vpop.permute.xlu0 %2615
        %2617 = vrot.lane.b32.xlu0 %v2559, 127
        %v2618 = vpop.permute.xlu0 %2617
        %2619 = vrot.lane.b32.xlu0 %v2560, 127
        %v2620 = vpop.permute.xlu0 %2619
        %2621 = vrot.lane.b32.xlu0 %v2561, 127
        %v2622 = vpop.permute.xlu0 %2621
        %v2623 = vsel %vm594, %v2608, %v2610
        %v2624 = vsel %vm594, %v2612, %v2614
        %v2625 = vsel %vm594, %v2616, %v2618
        %v2626 = vsel %vm594, %v2620, %v2622
        %v2636 = vsel %vm916, %v2595, 0
        %v2639 = vsel %vm916, %v2596, 0
        %v2642 = vsel %vm916, %v2597, 0
        %v2645 = vsel %vm916, %v2598, 0
        %2647 = vmatprep.subr.bf16.mxu0 0
        %2648 = vmatpush1.bf16.msra.mxu0 0
        %2649 = vmatprep.subr.bf16.mxu0 0
        %2650 = vmatpush1.bf16.msra.mxu0 0
        %2651 = vmatprep.subr.bf16.mxu0 0
        %2652 = vmatpush1.bf16.msra.mxu0 0
        %2653 = vmatprep.subr.bf16.mxu0 0
        %2654 = vmatpush1.bf16.msra.mxu0 0
        %2655 = vmatprep.subr.bf16.mxu0 %v2622
        %2656 = vmatpush1.bf16.msra.mxu0 %v2626
        %2657 = vmatprep.subr.bf16.mxu0 %v2618
        %2658 = vmatpush1.bf16.msra.mxu0 %v2625
        %2659 = vmatprep.subr.bf16.mxu0 %v2614
        %2660 = vmatpush1.bf16.msra.mxu0 %v2624
        %2661 = vmatprep.subr.bf16.mxu0 %v2610
        %2662 = vmatpush1.bf16.msra.mxu0 %v2623
        %2663 = vmatprep.subr.bf16.mxu0 0
        %2664 = vmatpush2.bf16.msra.mxu0 0
        %2665 = vmatprep.subr.bf16.mxu0 0
        %2666 = vmatpush2.bf16.msra.mxu0 0
        %2667 = vmatprep.subr.bf16.mxu0 0
        %2668 = vmatpush2.bf16.msra.mxu0 0
        %2669 = vmatprep.subr.bf16.mxu0 0
        %2670 = vmatpush2.bf16.msra.mxu0 0
        %2671 = vmatprep.subr.bf16.mxu0 0
        %2672 = vmatpush2.bf16.msra.mxu0 0
        %2673 = vmatprep.subr.bf16.mxu0 0
        %2674 = vmatpush2.bf16.msra.mxu0 0
        %2675 = vmatprep.subr.bf16.mxu0 0
        %2676 = vmatpush2.bf16.msra.mxu0 0
        %2677 = vmatprep.subr.bf16.mxu0 0
        %2678 = vmatpush2.bf16.msra.mxu0 0
        %2679 = vmatprep.mubr.bf16.mxu0 0
        %2680 = vmatmul.mubr.bf16.gmra.mxu0 %v2636
        %v2681 = vpop.f32.mrf.mxu0
        %v2682 = vadd.f32 0.0, %v2681
        %v2683 = vpop.f32.mrf.mxu0
        %v2684 = vadd.f32 0.0, %v2683
        %v2685 = vpop.f32.mrf.mxu0
        %v2686 = vadd.f32 0.0, %v2685
        %v2687 = vpop.f32.mrf.mxu0
        %v2688 = vadd.f32 0.0, %v2687
        %2689 = vmatprep.mubr.bf16.mxu0 0
        %2690 = vmatmul.mubr.bf16.gmra.mxu0 %v2639
        %v2691 = vpop.f32.mrf.mxu0
        %v2692 = vadd.f32 0.0, %v2691
        %v2693 = vpop.f32.mrf.mxu0
        %v2694 = vadd.f32 0.0, %v2693
        %v2695 = vpop.f32.mrf.mxu0
        %v2696 = vadd.f32 0.0, %v2695
        %v2697 = vpop.f32.mrf.mxu0
        %v2698 = vadd.f32 0.0, %v2697
        %2699 = vmatprep.mubr.bf16.mxu0 0
        %2700 = vmatmul.mubr.bf16.gmra.mxu0 %v2642
        %v2701 = vpop.f32.mrf.mxu0
        %v2702 = vadd.f32 0.0, %v2701
        %v2703 = vpop.f32.mrf.mxu0
        %v2704 = vadd.f32 0.0, %v2703
        %v2705 = vpop.f32.mrf.mxu0
        %v2706 = vadd.f32 0.0, %v2705
        %v2707 = vpop.f32.mrf.mxu0
        %v2708 = vadd.f32 0.0, %v2707
        %2709 = vmatprep.mubr.bf16.mxu0 0
        %2710 = vmatmul.mubr.bf16.gmra.mxu0 %v2645
        %v2711 = vpop.f32.mrf.mxu0
        %v2712 = vadd.f32 0.0, %v2711
        %v2713 = vpop.f32.mrf.mxu0
        %v2714 = vadd.f32 0.0, %v2713
        %v2715 = vpop.f32.mrf.mxu0
        %v2716 = vadd.f32 0.0, %v2715
        %v2717 = vpop.f32.mrf.mxu0
        %v2718 = vadd.f32 0.0, %v2717
        %2719 = vdwg.mxu0
        %v2728 = vunpack.c.l.b16 %v2562
        %v2729 = vunpack.c.l.b16 %v2563
        %v2730 = vunpack.c.l.b16 %v2564
        %v2731 = vunpack.c.l.b16 %v2565
        %v2732 = vunpack.c.l.b16 %v2566
        %v2733 = vunpack.c.l.b16 %v2567
        %v2734 = vunpack.c.l.b16 %v2568
        %v2735 = vunpack.c.l.b16 %v2569
        %v2736 = vpack.c.b16 %v2729, %v2728
        %v2737 = vpack.c.b16 %v2731, %v2730
        %v2738 = vpack.c.b16 %v2733, %v2732
        %v2739 = vpack.c.b16 %v2735, %v2734
        %v2741 = vsel %vm916, %v2736, 0
        %v2744 = vsel %vm916, %v2737, 0
        %v2747 = vsel %vm916, %v2738, 0
        %v2750 = vsel %vm916, %v2739, 0
        %2752 = vmatprep.subr.bf16.mxu0 0
        %2753 = vmatpush1.bf16.msra.mxu0 0
        %2754 = vmatprep.subr.bf16.mxu0 0
        %2755 = vmatpush1.bf16.msra.mxu0 0
        %2756 = vmatprep.subr.bf16.mxu0 0
        %2757 = vmatpush1.bf16.msra.mxu0 0
        %2758 = vmatprep.subr.bf16.mxu0 0
        %2759 = vmatpush1.bf16.msra.mxu0 0
        %2760 = vmatprep.subr.bf16.mxu0 %v2561
        %2761 = vmatpush1.bf16.msra.mxu0 %v2560
        %2762 = vmatprep.subr.bf16.mxu0 %v2559
        %2763 = vmatpush1.bf16.msra.mxu0 %v2558
        %2764 = vmatprep.subr.bf16.mxu0 %v2557
        %2765 = vmatpush1.bf16.msra.mxu0 %v2556
        %2766 = vmatprep.subr.bf16.mxu0 %v2555
        %2767 = vmatpush1.bf16.msra.mxu0 %v2554
        %2768 = vmatprep.subr.bf16.mxu0 0
        %2769 = vmatpush2.bf16.msra.mxu0 0
        %2770 = vmatprep.subr.bf16.mxu0 0
        %2771 = vmatpush2.bf16.msra.mxu0 0
        %2772 = vmatprep.subr.bf16.mxu0 0
        %2773 = vmatpush2.bf16.msra.mxu0 0
        %2774 = vmatprep.subr.bf16.mxu0 0
        %2775 = vmatpush2.bf16.msra.mxu0 0
        %2776 = vmatprep.subr.bf16.mxu0 0
        %2777 = vmatpush2.bf16.msra.mxu0 0
        %2778 = vmatprep.subr.bf16.mxu0 0
        %2779 = vmatpush2.bf16.msra.mxu0 0
        %2780 = vmatprep.subr.bf16.mxu0 0
        %2781 = vmatpush2.bf16.msra.mxu0 0
        %2782 = vmatprep.subr.bf16.mxu0 0
        %2783 = vmatpush2.bf16.msra.mxu0 0
        %2784 = vmatprep.mubr.bf16.mxu0 0
        %2785 = vmatmul.mubr.bf16.gmra.mxu0 %v2741
        %v2786 = vpop.f32.mrf.mxu0
        %v2787 = vadd.f32 %v2682, %v2786
        %v2788 = vpop.f32.mrf.mxu0
        %v2789 = vadd.f32 %v2684, %v2788
        %v2790 = vpop.f32.mrf.mxu0
        %v2791 = vadd.f32 %v2686, %v2790
        %v2792 = vpop.f32.mrf.mxu0
        %v2793 = vadd.f32 %v2688, %v2792
        %2794 = vmatprep.mubr.bf16.mxu0 0
        %2795 = vmatmul.mubr.bf16.gmra.mxu0 %v2744
        %v2796 = vpop.f32.mrf.mxu0
        %v2797 = vadd.f32 %v2692, %v2796
        %v2798 = vpop.f32.mrf.mxu0
        %v2799 = vadd.f32 %v2694, %v2798
        %v2800 = vpop.f32.mrf.mxu0
        %v2801 = vadd.f32 %v2696, %v2800
        %v2802 = vpop.f32.mrf.mxu0
        %v2803 = vadd.f32 %v2698, %v2802
        %2804 = vmatprep.mubr.bf16.mxu0 0
        %2805 = vmatmul.mubr.bf16.gmra.mxu0 %v2747
        %v2806 = vpop.f32.mrf.mxu0
        %v2807 = vadd.f32 %v2702, %v2806
        %v2808 = vpop.f32.mrf.mxu0
        %v2809 = vadd.f32 %v2704, %v2808
        %v2810 = vpop.f32.mrf.mxu0
        %v2811 = vadd.f32 %v2706, %v2810
        %v2812 = vpop.f32.mrf.mxu0
        %v2813 = vadd.f32 %v2708, %v2812
        %2814 = vmatprep.mubr.bf16.mxu0 0
        %2815 = vmatmul.mubr.bf16.gmra.mxu0 %v2750
        %v2816 = vpop.f32.mrf.mxu0
        %v2817 = vadd.f32 %v2712, %v2816
        %v2818 = vpop.f32.mrf.mxu0
        %v2819 = vadd.f32 %v2714, %v2818
        %v2820 = vpop.f32.mrf.mxu0
        %v2821 = vadd.f32 %v2716, %v2820
        %v2822 = vpop.f32.mrf.mxu0
        %v2823 = vadd.f32 %v2718, %v2822
        %2824 = vdwg.mxu0
        %s2825 = scalar_lea.vmem [#allocation9], 64
        %v2826 = vld [vmem:[%s2825] sm:$0xf]
        %v2827 = vld [vmem:[%s2825 + $0x4] sm:$0xf]
        %v2828 = vld [vmem:[%s2825 + $0x8] sm:$0xf]
        %v2829 = vld [vmem:[%s2825 + $0xc] sm:$0xf]
        %v2830 = vld [vmem:[%s2825 + $0x10] sm:$0xf]
        %v2831 = vld [vmem:[%s2825 + $0x14] sm:$0xf]
        %v2832 = vld [vmem:[%s2825 + $0x18] sm:$0xf]
        %v2833 = vld [vmem:[%s2825 + $0x1c] sm:$0xf]
        %v2842 = vunpack.c.l.b16 %v2826
        %v2843 = vunpack.c.l.b16 %v2827
        %v2844 = vunpack.c.l.b16 %v2828
        %v2845 = vunpack.c.l.b16 %v2829
        %v2846 = vunpack.c.l.b16 %v2830
        %v2847 = vunpack.c.l.b16 %v2831
        %v2848 = vunpack.c.l.b16 %v2832
        %v2849 = vunpack.c.l.b16 %v2833
        %v2850 = vpack.c.b16 %v2843, %v2842
        %v2851 = vpack.c.b16 %v2845, %v2844
        %v2852 = vpack.c.b16 %v2847, %v2846
        %v2853 = vpack.c.b16 %v2849, %v2848
        %2854 = vrot.lane.b32.xlu0 %v2554, 126
        %v2855 = vpop.permute.xlu0 %2854
        %2856 = vrot.lane.b32.xlu0 %v2555, 126
        %v2857 = vpop.permute.xlu0 %2856
        %2858 = vrot.lane.b32.xlu0 %v2556, 126
        %v2859 = vpop.permute.xlu0 %2858
        %2860 = vrot.lane.b32.xlu0 %v2557, 126
        %v2861 = vpop.permute.xlu0 %2860
        %2862 = vrot.lane.b32.xlu0 %v2558, 126
        %v2863 = vpop.permute.xlu0 %2862
        %2864 = vrot.lane.b32.xlu0 %v2559, 126
        %v2865 = vpop.permute.xlu0 %2864
        %2866 = vrot.lane.b32.xlu0 %v2560, 126
        %v2867 = vpop.permute.xlu0 %2866
        %2868 = vrot.lane.b32.xlu0 %v2561, 126
        %v2869 = vpop.permute.xlu0 %2868
        %v2870 = vsel %vm602, %v2855, %v2857
        %v2871 = vsel %vm602, %v2859, %v2861
        %v2872 = vsel %vm602, %v2863, %v2865
        %v2873 = vsel %vm602, %v2867, %v2869
        %v2883 = vsel %vm916, %v2850, 0
        %v2886 = vsel %vm916, %v2851, 0
        %v2889 = vsel %vm916, %v2852, 0
        %v2892 = vsel %vm916, %v2853, 0
        %2894 = vmatprep.subr.bf16.mxu0 0
        %2895 = vmatpush1.bf16.msra.mxu0 0
        %2896 = vmatprep.subr.bf16.mxu0 0
        %2897 = vmatpush1.bf16.msra.mxu0 0
        %2898 = vmatprep.subr.bf16.mxu0 0
        %2899 = vmatpush1.bf16.msra.mxu0 0
        %2900 = vmatprep.subr.bf16.mxu0 0
        %2901 = vmatpush1.bf16.msra.mxu0 0
        %2902 = vmatprep.subr.bf16.mxu0 %v2869
        %2903 = vmatpush1.bf16.msra.mxu0 %v2873
        %2904 = vmatprep.subr.bf16.mxu0 %v2865
        %2905 = vmatpush1.bf16.msra.mxu0 %v2872
        %2906 = vmatprep.subr.bf16.mxu0 %v2861
        %2907 = vmatpush1.bf16.msra.mxu0 %v2871
        %2908 = vmatprep.subr.bf16.mxu0 %v2857
        %2909 = vmatpush1.bf16.msra.mxu0 %v2870
        %2910 = vmatprep.subr.bf16.mxu0 0
        %2911 = vmatpush2.bf16.msra.mxu0 0
        %2912 = vmatprep.subr.bf16.mxu0 0
        %2913 = vmatpush2.bf16.msra.mxu0 0
        %2914 = vmatprep.subr.bf16.mxu0 0
        %2915 = vmatpush2.bf16.msra.mxu0 0
        %2916 = vmatprep.subr.bf16.mxu0 0
        %2917 = vmatpush2.bf16.msra.mxu0 0
        %2918 = vmatprep.subr.bf16.mxu0 0
        %2919 = vmatpush2.bf16.msra.mxu0 0
        %2920 = vmatprep.subr.bf16.mxu0 0
        %2921 = vmatpush2.bf16.msra.mxu0 0
        %2922 = vmatprep.subr.bf16.mxu0 0
        %2923 = vmatpush2.bf16.msra.mxu0 0
        %2924 = vmatprep.subr.bf16.mxu0 0
        %2925 = vmatpush2.bf16.msra.mxu0 0
        %2926 = vmatprep.mubr.bf16.mxu0 0
        %2927 = vmatmul.mubr.bf16.gmra.mxu0 %v2883
        %v2928 = vpop.f32.mrf.mxu0
        %v2929 = vadd.f32 0.0, %v2928
        %v2930 = vpop.f32.mrf.mxu0
        %v2931 = vadd.f32 0.0, %v2930
        %v2932 = vpop.f32.mrf.mxu0
        %v2933 = vadd.f32 0.0, %v2932
        %v2934 = vpop.f32.mrf.mxu0
        %v2935 = vadd.f32 0.0, %v2934
        %2936 = vmatprep.mubr.bf16.mxu0 0
        %2937 = vmatmul.mubr.bf16.gmra.mxu0 %v2886
        %v2938 = vpop.f32.mrf.mxu0
        %v2939 = vadd.f32 0.0, %v2938
        %v2940 = vpop.f32.mrf.mxu0
        %v2941 = vadd.f32 0.0, %v2940
        %v2942 = vpop.f32.mrf.mxu0
        %v2943 = vadd.f32 0.0, %v2942
        %v2944 = vpop.f32.mrf.mxu0
        %v2945 = vadd.f32 0.0, %v2944
        %2946 = vmatprep.mubr.bf16.mxu0 0
        %2947 = vmatmul.mubr.bf16.gmra.mxu0 %v2889
        %v2948 = vpop.f32.mrf.mxu0
        %v2949 = vadd.f32 0.0, %v2948
        %v2950 = vpop.f32.mrf.mxu0
        %v2951 = vadd.f32 0.0, %v2950
        %v2952 = vpop.f32.mrf.mxu0
        %v2953 = vadd.f32 0.0, %v2952
        %v2954 = vpop.f32.mrf.mxu0
        %v2955 = vadd.f32 0.0, %v2954
        %2956 = vmatprep.mubr.bf16.mxu0 0
        %2957 = vmatmul.mubr.bf16.gmra.mxu0 %v2892
        %v2958 = vpop.f32.mrf.mxu0
        %v2959 = vadd.f32 0.0, %v2958
        %v2960 = vpop.f32.mrf.mxu0
        %v2961 = vadd.f32 0.0, %v2960
        %v2962 = vpop.f32.mrf.mxu0
        %v2963 = vadd.f32 0.0, %v2962
        %v2964 = vpop.f32.mrf.mxu0
        %v2965 = vadd.f32 0.0, %v2964
        %2966 = vdwg.mxu0
        %v2967 = vadd.f32 %v2787, %v2929
        %v2968 = vadd.f32 %v2789, %v2931
        %v2969 = vadd.f32 %v2791, %v2933
        %v2970 = vadd.f32 %v2793, %v2935
        %v2971 = vadd.f32 %v2797, %v2939
        %v2972 = vadd.f32 %v2799, %v2941
        %v2973 = vadd.f32 %v2801, %v2943
        %v2974 = vadd.f32 %v2803, %v2945
        %v2975 = vadd.f32 %v2807, %v2949
        %v2976 = vadd.f32 %v2809, %v2951
        %v2977 = vadd.f32 %v2811, %v2953
        %v2978 = vadd.f32 %v2813, %v2955
        %v2979 = vadd.f32 %v2817, %v2959
        %v2980 = vadd.f32 %v2819, %v2961
        %v2981 = vadd.f32 %v2821, %v2963
        %v2982 = vadd.f32 %v2823, %v2965
        %s2983 = scalar_lea.vmem [#allocation9], 96
        %v2984 = vld [vmem:[%s2983] sm:$0xf]
        %v2985 = vld [vmem:[%s2983 + $0x4] sm:$0xf]
        %v2986 = vld [vmem:[%s2983 + $0x8] sm:$0xf]
        %v2987 = vld [vmem:[%s2983 + $0xc] sm:$0xf]
        %v2988 = vld [vmem:[%s2983 + $0x10] sm:$0xf]
        %v2989 = vld [vmem:[%s2983 + $0x14] sm:$0xf]
        %v2990 = vld [vmem:[%s2983 + $0x18] sm:$0xf]
        %v2991 = vld [vmem:[%s2983 + $0x1c] sm:$0xf]
        %v3000 = vunpack.c.l.b16 %v2984
        %v3001 = vunpack.c.l.b16 %v2985
        %v3002 = vunpack.c.l.b16 %v2986
        %v3003 = vunpack.c.l.b16 %v2987
        %v3004 = vunpack.c.l.b16 %v2988
        %v3005 = vunpack.c.l.b16 %v2989
        %v3006 = vunpack.c.l.b16 %v2990
        %v3007 = vunpack.c.l.b16 %v2991
        %v3008 = vpack.c.b16 %v3001, %v3000
        %v3009 = vpack.c.b16 %v3003, %v3002
        %v3010 = vpack.c.b16 %v3005, %v3004
        %v3011 = vpack.c.b16 %v3007, %v3006
        %3012 = vrot.lane.b32.xlu0 %v2554, 125
        %v3013 = vpop.permute.xlu0 %3012
        %3014 = vrot.lane.b32.xlu0 %v2555, 125
        %v3015 = vpop.permute.xlu0 %3014
        %3016 = vrot.lane.b32.xlu0 %v2556, 125
        %v3017 = vpop.permute.xlu0 %3016
        %3018 = vrot.lane.b32.xlu0 %v2557, 125
        %v3019 = vpop.permute.xlu0 %3018
        %3020 = vrot.lane.b32.xlu0 %v2558, 125
        %v3021 = vpop.permute.xlu0 %3020
        %3022 = vrot.lane.b32.xlu0 %v2559, 125
        %v3023 = vpop.permute.xlu0 %3022
        %3024 = vrot.lane.b32.xlu0 %v2560, 125
        %v3025 = vpop.permute.xlu0 %3024
        %3026 = vrot.lane.b32.xlu0 %v2561, 125
        %v3027 = vpop.permute.xlu0 %3026
        %v3028 = vsel %vm610, %v3013, %v3015
        %v3029 = vsel %vm610, %v3017, %v3019
        %v3030 = vsel %vm610, %v3021, %v3023
        %v3031 = vsel %vm610, %v3025, %v3027
        %v3041 = vsel %vm916, %v3008, 0
        %v3044 = vsel %vm916, %v3009, 0
        %v3047 = vsel %vm916, %v3010, 0
        %v3050 = vsel %vm916, %v3011, 0
        %3052 = vmatprep.subr.bf16.mxu0 0
        %3053 = vmatpush1.bf16.msra.mxu0 0
        %3054 = vmatprep.subr.bf16.mxu0 0
        %3055 = vmatpush1.bf16.msra.mxu0 0
        %3056 = vmatprep.subr.bf16.mxu0 0
        %3057 = vmatpush1.bf16.msra.mxu0 0
        %3058 = vmatprep.subr.bf16.mxu0 0
        %3059 = vmatpush1.bf16.msra.mxu0 0
        %3060 = vmatprep.subr.bf16.mxu0 %v3027
        %3061 = vmatpush1.bf16.msra.mxu0 %v3031
        %3062 = vmatprep.subr.bf16.mxu0 %v3023
        %3063 = vmatpush1.bf16.msra.mxu0 %v3030
        %3064 = vmatprep.subr.bf16.mxu0 %v3019
        %3065 = vmatpush1.bf16.msra.mxu0 %v3029
        %3066 = vmatprep.subr.bf16.mxu0 %v3015
        %3067 = vmatpush1.bf16.msra.mxu0 %v3028
        %3068 = vmatprep.subr.bf16.mxu0 0
        %3069 = vmatpush2.bf16.msra.mxu0 0
        %3070 = vmatprep.subr.bf16.mxu0 0
        %3071 = vmatpush2.bf16.msra.mxu0 0
        %3072 = vmatprep.subr.bf16.mxu0 0
        %3073 = vmatpush2.bf16.msra.mxu0 0
        %3074 = vmatprep.subr.bf16.mxu0 0
        %3075 = vmatpush2.bf16.msra.mxu0 0
        %3076 = vmatprep.subr.bf16.mxu0 0
        %3077 = vmatpush2.bf16.msra.mxu0 0
        %3078 = vmatprep.subr.bf16.mxu0 0
        %3079 = vmatpush2.bf16.msra.mxu0 0
        %3080 = vmatprep.subr.bf16.mxu0 0
        %3081 = vmatpush2.bf16.msra.mxu0 0
        %3082 = vmatprep.subr.bf16.mxu0 0
        %3083 = vmatpush2.bf16.msra.mxu0 0
        %3084 = vmatprep.mubr.bf16.mxu0 0
        %3085 = vmatmul.mubr.bf16.gmra.mxu0 %v3041
        %v3086 = vpop.f32.mrf.mxu0
        %v3087 = vadd.f32 0.0, %v3086
        %v3088 = vpop.f32.mrf.mxu0
        %v3089 = vadd.f32 0.0, %v3088
        %v3090 = vpop.f32.mrf.mxu0
        %v3091 = vadd.f32 0.0, %v3090
        %v3092 = vpop.f32.mrf.mxu0
        %v3093 = vadd.f32 0.0, %v3092
        %3094 = vmatprep.mubr.bf16.mxu0 0
        %3095 = vmatmul.mubr.bf16.gmra.mxu0 %v3044
        %v3096 = vpop.f32.mrf.mxu0
        %v3097 = vadd.f32 0.0, %v3096
        %v3098 = vpop.f32.mrf.mxu0
        %v3099 = vadd.f32 0.0, %v3098
        %v3100 = vpop.f32.mrf.mxu0
        %v3101 = vadd.f32 0.0, %v3100
        %v3102 = vpop.f32.mrf.mxu0
        %v3103 = vadd.f32 0.0, %v3102
        %3104 = vmatprep.mubr.bf16.mxu0 0
        %3105 = vmatmul.mubr.bf16.gmra.mxu0 %v3047
        %v3106 = vpop.f32.mrf.mxu0
        %v3107 = vadd.f32 0.0, %v3106
        %v3108 = vpop.f32.mrf.mxu0
        %v3109 = vadd.f32 0.0, %v3108
        %v3110 = vpop.f32.mrf.mxu0
        %v3111 = vadd.f32 0.0, %v3110
        %v3112 = vpop.f32.mrf.mxu0
        %v3113 = vadd.f32 0.0, %v3112
        %3114 = vmatprep.mubr.bf16.mxu0 0
        %3115 = vmatmul.mubr.bf16.gmra.mxu0 %v3050
        %v3116 = vpop.f32.mrf.mxu0
        %v3117 = vadd.f32 0.0, %v3116
        %v3118 = vpop.f32.mrf.mxu0
        %v3119 = vadd.f32 0.0, %v3118
        %v3120 = vpop.f32.mrf.mxu0
        %v3121 = vadd.f32 0.0, %v3120
        %v3122 = vpop.f32.mrf.mxu0
        %v3123 = vadd.f32 0.0, %v3122
        %3124 = vdwg.mxu0
        %v3125 = vadd.f32 %v2967, %v3087
        %v3126 = vadd.f32 %v2968, %v3089
        %v3127 = vadd.f32 %v2969, %v3091
        %v3128 = vadd.f32 %v2970, %v3093
        %v3129 = vadd.f32 %v2971, %v3097
        %v3130 = vadd.f32 %v2972, %v3099
        %v3131 = vadd.f32 %v2973, %v3101
        %v3132 = vadd.f32 %v2974, %v3103
        %v3133 = vadd.f32 %v2975, %v3107
        %v3134 = vadd.f32 %v2976, %v3109
        %v3135 = vadd.f32 %v2977, %v3111
        %v3136 = vadd.f32 %v2978, %v3113
        %v3137 = vadd.f32 %v2979, %v3117
        %v3138 = vadd.f32 %v2980, %v3119
        %v3139 = vadd.f32 %v2981, %v3121
        %v3140 = vadd.f32 %v2982, %v3123
        %s3141 = scalar_lea.vmem [#allocation9], 128
        %v3142 = vld [vmem:[%s3141] sm:$0xf]
        %v3143 = vld [vmem:[%s3141 + $0x4] sm:$0xf]
        %v3144 = vld [vmem:[%s3141 + $0x8] sm:$0xf]
        %v3145 = vld [vmem:[%s3141 + $0xc] sm:$0xf]
        %v3146 = vld [vmem:[%s3141 + $0x10] sm:$0xf]
        %v3147 = vld [vmem:[%s3141 + $0x14] sm:$0xf]
        %v3148 = vld [vmem:[%s3141 + $0x18] sm:$0xf]
        %v3149 = vld [vmem:[%s3141 + $0x1c] sm:$0xf]
        %v3158 = vunpack.c.l.b16 %v3142
        %v3159 = vunpack.c.l.b16 %v3143
        %v3160 = vunpack.c.l.b16 %v3144
        %v3161 = vunpack.c.l.b16 %v3145
        %v3162 = vunpack.c.l.b16 %v3146
        %v3163 = vunpack.c.l.b16 %v3147
        %v3164 = vunpack.c.l.b16 %v3148
        %v3165 = vunpack.c.l.b16 %v3149
        %v3166 = vpack.c.b16 %v3159, %v3158
        %v3167 = vpack.c.b16 %v3161, %v3160
        %v3168 = vpack.c.b16 %v3163, %v3162
        %v3169 = vpack.c.b16 %v3165, %v3164
        %3170 = vrot.lane.b32.xlu0 %v2554, 124
        %v3171 = vpop.permute.xlu0 %3170
        %3172 = vrot.lane.b32.xlu0 %v2555, 124
        %v3173 = vpop.permute.xlu0 %3172
        %3174 = vrot.lane.b32.xlu0 %v2556, 124
        %v3175 = vpop.permute.xlu0 %3174
        %3176 = vrot.lane.b32.xlu0 %v2557, 124
        %v3177 = vpop.permute.xlu0 %3176
        %3178 = vrot.lane.b32.xlu0 %v2558, 124
        %v3179 = vpop.permute.xlu0 %3178
        %3180 = vrot.lane.b32.xlu0 %v2559, 124
        %v3181 = vpop.permute.xlu0 %3180
        %3182 = vrot.lane.b32.xlu0 %v2560, 124
        %v3183 = vpop.permute.xlu0 %3182
        %3184 = vrot.lane.b32.xlu0 %v2561, 124
        %v3185 = vpop.permute.xlu0 %3184
        %v3186 = vsel %vm618, %v3171, %v3173
        %v3187 = vsel %vm618, %v3175, %v3177
        %v3188 = vsel %vm618, %v3179, %v3181
        %v3189 = vsel %vm618, %v3183, %v3185
        %v3199 = vsel %vm916, %v3166, 0
        %v3202 = vsel %vm916, %v3167, 0
        %v3205 = vsel %vm916, %v3168, 0
        %v3208 = vsel %vm916, %v3169, 0
        %3210 = vmatprep.subr.bf16.mxu0 0
        %3211 = vmatpush1.bf16.msra.mxu0 0
        %3212 = vmatprep.subr.bf16.mxu0 0
        %3213 = vmatpush1.bf16.msra.mxu0 0
        %3214 = vmatprep.subr.bf16.mxu0 0
        %3215 = vmatpush1.bf16.msra.mxu0 0
        %3216 = vmatprep.subr.bf16.mxu0 0
        %3217 = vmatpush1.bf16.msra.mxu0 0
        %3218 = vmatprep.subr.bf16.mxu0 %v3185
        %3219 = vmatpush1.bf16.msra.mxu0 %v3189
        %3220 = vmatprep.subr.bf16.mxu0 %v3181
        %3221 = vmatpush1.bf16.msra.mxu0 %v3188
        %3222 = vmatprep.subr.bf16.mxu0 %v3177
        %3223 = vmatpush1.bf16.msra.mxu0 %v3187
        %3224 = vmatprep.subr.bf16.mxu0 %v3173
        %3225 = vmatpush1.bf16.msra.mxu0 %v3186
        %3226 = vmatprep.subr.bf16.mxu0 0
        %3227 = vmatpush2.bf16.msra.mxu0 0
        %3228 = vmatprep.subr.bf16.mxu0 0
        %3229 = vmatpush2.bf16.msra.mxu0 0
        %3230 = vmatprep.subr.bf16.mxu0 0
        %3231 = vmatpush2.bf16.msra.mxu0 0
        %3232 = vmatprep.subr.bf16.mxu0 0
        %3233 = vmatpush2.bf16.msra.mxu0 0
        %3234 = vmatprep.subr.bf16.mxu0 0
        %3235 = vmatpush2.bf16.msra.mxu0 0
        %3236 = vmatprep.subr.bf16.mxu0 0
        %3237 = vmatpush2.bf16.msra.mxu0 0
        %3238 = vmatprep.subr.bf16.mxu0 0
        %3239 = vmatpush2.bf16.msra.mxu0 0
        %3240 = vmatprep.subr.bf16.mxu0 0
        %3241 = vmatpush2.bf16.msra.mxu0 0
        %3242 = vmatprep.mubr.bf16.mxu0 0
        %3243 = vmatmul.mubr.bf16.gmra.mxu0 %v3199
        %v3244 = vpop.f32.mrf.mxu0
        %v3245 = vadd.f32 0.0, %v3244
        %v3246 = vpop.f32.mrf.mxu0
        %v3247 = vadd.f32 0.0, %v3246
        %v3248 = vpop.f32.mrf.mxu0
        %v3249 = vadd.f32 0.0, %v3248
        %v3250 = vpop.f32.mrf.mxu0
        %v3251 = vadd.f32 0.0, %v3250
        %3252 = vmatprep.mubr.bf16.mxu0 0
        %3253 = vmatmul.mubr.bf16.gmra.mxu0 %v3202
        %v3254 = vpop.f32.mrf.mxu0
        %v3255 = vadd.f32 0.0, %v3254
        %v3256 = vpop.f32.mrf.mxu0
        %v3257 = vadd.f32 0.0, %v3256
        %v3258 = vpop.f32.mrf.mxu0
        %v3259 = vadd.f32 0.0, %v3258
        %v3260 = vpop.f32.mrf.mxu0
        %v3261 = vadd.f32 0.0, %v3260
        %3262 = vmatprep.mubr.bf16.mxu0 0
        %3263 = vmatmul.mubr.bf16.gmra.mxu0 %v3205
        %v3264 = vpop.f32.mrf.mxu0
        %v3265 = vadd.f32 0.0, %v3264
        %v3266 = vpop.f32.mrf.mxu0
        %v3267 = vadd.f32 0.0, %v3266
        %v3268 = vpop.f32.mrf.mxu0
        %v3269 = vadd.f32 0.0, %v3268
        %v3270 = vpop.f32.mrf.mxu0
        %v3271 = vadd.f32 0.0, %v3270
        %3272 = vmatprep.mubr.bf16.mxu0 0
        %3273 = vmatmul.mubr.bf16.gmra.mxu0 %v3208
        %v3274 = vpop.f32.mrf.mxu0
        %v3275 = vadd.f32 0.0, %v3274
        %v3276 = vpop.f32.mrf.mxu0
        %v3277 = vadd.f32 0.0, %v3276
        %v3278 = vpop.f32.mrf.mxu0
        %v3279 = vadd.f32 0.0, %v3278
        %v3280 = vpop.f32.mrf.mxu0
        %v3281 = vadd.f32 0.0, %v3280
        %3282 = vdwg.mxu0
        %v3283 = vadd.f32 %v3125, %v3245
        %v3284 = vadd.f32 %v3126, %v3247
        %v3285 = vadd.f32 %v3127, %v3249
        %v3286 = vadd.f32 %v3128, %v3251
        %v3287 = vadd.f32 %v3129, %v3255
        %v3288 = vadd.f32 %v3130, %v3257
        %v3289 = vadd.f32 %v3131, %v3259
        %v3290 = vadd.f32 %v3132, %v3261
        %v3291 = vadd.f32 %v3133, %v3265
        %v3292 = vadd.f32 %v3134, %v3267
        %v3293 = vadd.f32 %v3135, %v3269
        %v3294 = vadd.f32 %v3136, %v3271
        %v3295 = vadd.f32 %v3137, %v3275
        %v3296 = vadd.f32 %v3138, %v3277
        %v3297 = vadd.f32 %v3139, %v3279
        %v3298 = vadd.f32 %v3140, %v3281
        %v3299 = vld [vmem:[%s9] sm:$0xff]
        %v3300 = vld [vmem:[%s9 + $0x8] sm:$0xff]
        %v3301 = vld [vmem:[%s9 + $0x10] sm:$0xff]
        %v3302 = vld [vmem:[%s9 + $0x18] sm:$0xff]
        %v3303 = vld [vmem:[%s9 + $0x20] sm:$0xff]
        %v3304 = vld [vmem:[%s9 + $0x28] sm:$0xff]
        %v3305 = vld [vmem:[%s9 + $0x30] sm:$0xff]
        %v3306 = vld [vmem:[%s9 + $0x38] sm:$0xff]
        %3308 = vset.pattern.permute.xlu0 0
        %3309 = vperm.xlu0 %3308, %v3299
        %v3310 = vpop.permute.xlu0 %3309
        %3313 = vset.pattern.permute.xlu0 0
        %3314 = vperm.xlu0 %3313, %v3300
        %v3315 = vpop.permute.xlu0 %3314
        %3318 = vset.pattern.permute.xlu0 0
        %3319 = vperm.xlu0 %3318, %v3301
        %v3320 = vpop.permute.xlu0 %3319
        %3323 = vset.pattern.permute.xlu0 0
        %3324 = vperm.xlu0 %3323, %v3302
        %v3325 = vpop.permute.xlu0 %3324
        %3328 = vset.pattern.permute.xlu0 0
        %3329 = vperm.xlu0 %3328, %v3303
        %v3330 = vpop.permute.xlu0 %3329
        %3333 = vset.pattern.permute.xlu0 0
        %3334 = vperm.xlu0 %3333, %v3304
        %v3335 = vpop.permute.xlu0 %3334
        %3338 = vset.pattern.permute.xlu0 0
        %3339 = vperm.xlu0 %3338, %v3305
        %v3340 = vpop.permute.xlu0 %3339
        %3343 = vset.pattern.permute.xlu0 0
        %3344 = vperm.xlu0 %3343, %v3306
        %v3345 = vpop.permute.xlu0 %3344
        %v3347 = vadd.f32 %v3283, %v3310
        %v3348 = vadd.f32 %v3284, %v3310
        %v3349 = vadd.f32 %v3285, %v3315
        %v3350 = vadd.f32 %v3286, %v3315
        %v3351 = vadd.f32 %v3287, %v3320
        %v3352 = vadd.f32 %v3288, %v3320
        %v3353 = vadd.f32 %v3289, %v3325
        %v3354 = vadd.f32 %v3290, %v3325
        %v3355 = vadd.f32 %v3291, %v3330
        %v3356 = vadd.f32 %v3292, %v3330
        %v3357 = vadd.f32 %v3293, %v3335
        %v3358 = vadd.f32 %v3294, %v3335
        %v3359 = vadd.f32 %v3295, %v3340
        %v3360 = vadd.f32 %v3296, %v3340
        %v3361 = vadd.f32 %v3297, %v3345
        %v3362 = vadd.f32 %v3298, %v3345
        %v3363 = vtanh.pop %v3347
        %v3364 = vtanh.pop %v3348
        %v3365 = vtanh.pop %v3349
        %v3366 = vtanh.pop %v3350
        %v3367 = vtanh.pop %v3351
        %v3368 = vtanh.pop %v3352
        %v3369 = vtanh.pop %v3353
        %v3370 = vtanh.pop %v3354
        %v3371 = vtanh.pop %v3355
        %v3372 = vtanh.pop %v3356
        %v3373 = vtanh.pop %v3357
        %v3374 = vtanh.pop %v3358
        %v3375 = vtanh.pop %v3359
        %v3376 = vtanh.pop %v3360
        %v3377 = vtanh.pop %v3361
        %v3378 = vtanh.pop %v3362
        %v3379 = vpack.c.bf16 %v3365, %v3363
        %v3380 = vpack.c.bf16 %v3366, %v3364
        %v3381 = vpack.c.bf16 %v3369, %v3367
        %v3382 = vpack.c.bf16 %v3370, %v3368
        %v3383 = vpack.c.bf16 %v3373, %v3371
        %v3384 = vpack.c.bf16 %v3374, %v3372
        %v3385 = vpack.c.bf16 %v3377, %v3375
        %v3386 = vpack.c.bf16 %v3378, %v3376
        %s3387 = ssub.s32 2, %s808
        %s3388 = ssub.s32 302, %s808
        %v3389 = vstv %s3387
        %vm3390 = vcmp.ge.s32.totalorder %v588, %v3389
        %vm3391 = vcmp.ge.s32.totalorder %v589, %v3389
        %v3392 = vstv %s3388
        %vm3393 = vcmp.lt.s32.totalorder %v588, %v3392
        %vm3394 = vcmp.lt.s32.totalorder %v589, %v3392
        %vm3395 = vmand %vm3390, %vm3393
        %vm3396 = vmand %vm3391, %vm3394
        %v3397 = vsel %vm3395, 1, 0
        %v3398 = vsel %vm3396, 1, 0
        %vm3399 = vcmp.eq.s32.totalorder %v3397, 1
        %vm3400 = vcmp.eq.s32.totalorder %v3398, 1
        %vm3401 = vmpackc.low %vm3400, %vm3399
        %v3402 = vsel %vm3401, 65537, 0
        %v3403 = vlaneseq
        %v3404 = vshrl.u32 %v3403, 7
        %v3405 = vsub.s32 0, %v3404
        %v3406 = vrot.slane %v3402, %v3405
        %v3407 = vlaneseq
        %v3408 = vshrl.u32 %v3407, 7
        %v3409 = vsub.s32 4, %v3408
        %v3410 = vrot.slane %v3402, %v3409
        %vm3411 = vcmp.ne.s16.totalorder %v3406, 0
        %vm3412 = vcmp.ne.s16.totalorder %v3410, 0
        %v3413 = vsel %vm3411, %v3379, 0
        %v3414 = vsel %vm3412, %v3380, 0
        %v3415 = vsel %vm3411, %v3381, 0
        %v3416 = vsel %vm3412, %v3382, 0
        %v3417 = vsel %vm3411, %v3383, 0
        %v3418 = vsel %vm3412, %v3384, 0
        %v3419 = vsel %vm3411, %v3385, 0
        %v3420 = vsel %vm3412, %v3386, 0
        %v3421 = vld [vmem:[%s10] sm:$0xf]
        %v3422 = vld [vmem:[%s10 + $0x4] sm:$0xf]
        %s3423 = scalar_lea.vmem %s10, 8
        %v3424 = vld [vmem:[%s3423] sm:$0xf]
        %v3425 = vld [vmem:[%s3423 + $0x4] sm:$0xf]
        %v3428 = vunpack.c.l.b16 %v3424
        %v3429 = vunpack.c.l.b16 %v3425
        %v3430 = vpack.c.b16 %v3429, %v3428
        %3439 = vrot.lane.b32.xlu0 %v3413, 127
        %v3440 = vpop.permute.xlu0 %3439
        %3441 = vrot.lane.b32.xlu0 %v3414, 127
        %v3442 = vpop.permute.xlu0 %3441
        %3443 = vrot.lane.b32.xlu0 %v3415, 127
        %v3444 = vpop.permute.xlu0 %3443
        %3445 = vrot.lane.b32.xlu0 %v3416, 127
        %v3446 = vpop.permute.xlu0 %3445
        %3447 = vrot.lane.b32.xlu0 %v3417, 127
        %v3448 = vpop.permute.xlu0 %3447
        %3449 = vrot.lane.b32.xlu0 %v3418, 127
        %v3450 = vpop.permute.xlu0 %3449
        %3451 = vrot.lane.b32.xlu0 %v3419, 127
        %v3452 = vpop.permute.xlu0 %3451
        %3453 = vrot.lane.b32.xlu0 %v3420, 127
        %v3454 = vpop.permute.xlu0 %3453
        %v3455 = vsel %vm594, %v3440, %v3442
        %v3456 = vsel %vm594, %v3444, %v3446
        %v3457 = vsel %vm594, %v3448, %v3450
        %v3458 = vsel %vm594, %v3452, %v3454
        %v3464 = vsel %vm916, %v3430, 0
        %3466 = vmatprep.subr.bf16.mxu0 0
        %3467 = vmatpush1.bf16.msra.mxu0 0
        %3468 = vmatprep.subr.bf16.mxu0 0
        %3469 = vmatpush1.bf16.msra.mxu0 0
        %3470 = vmatprep.subr.bf16.mxu0 0
        %3471 = vmatpush1.bf16.msra.mxu0 0
        %3472 = vmatprep.subr.bf16.mxu0 0
        %3473 = vmatpush1.bf16.msra.mxu0 0
        %3474 = vmatprep.subr.bf16.mxu0 0
        %3475 = vmatpush1.bf16.msra.mxu0 %v3458
        %3476 = vmatprep.subr.bf16.mxu0 0
        %3477 = vmatpush1.bf16.msra.mxu0 %v3457
        %3478 = vmatprep.subr.bf16.mxu0 0
        %3479 = vmatpush1.bf16.msra.mxu0 %v3456
        %3480 = vmatprep.subr.bf16.mxu0 0
        %3481 = vmatpush1.bf16.msra.mxu0 %v3455
        %3482 = vmatprep.subr.bf16.mxu0 0
        %3483 = vmatpush2.bf16.msra.mxu0 0
        %3484 = vmatprep.subr.bf16.mxu0 0
        %3485 = vmatpush2.bf16.msra.mxu0 0
        %3486 = vmatprep.subr.bf16.mxu0 0
        %3487 = vmatpush2.bf16.msra.mxu0 0
        %3488 = vmatprep.subr.bf16.mxu0 0
        %3489 = vmatpush2.bf16.msra.mxu0 0
        %3490 = vmatprep.subr.bf16.mxu0 0
        %3491 = vmatpush2.bf16.msra.mxu0 0
        %3492 = vmatprep.subr.bf16.mxu0 0
        %3493 = vmatpush2.bf16.msra.mxu0 0
        %3494 = vmatprep.subr.bf16.mxu0 0
        %3495 = vmatpush2.bf16.msra.mxu0 0
        %3496 = vmatprep.subr.bf16.mxu0 0
        %3497 = vmatpush2.bf16.msra.mxu0 0
        %3498 = vmatprep.mubr.bf16.mxu0 0
        %3499 = vmatmul.mubr.bf16.gmra.mxu0 %v3464
        %v3500 = vpop.f32.mrf.mxu0
        %v3501 = vadd.f32 0.0, %v3500
        %v3502 = vpop.f32.mrf.mxu0
        %v3503 = vpop.f32.mrf.mxu0
        %v3504 = vadd.f32 0.0, %v3503
        %v3505 = vpop.f32.mrf.mxu0
        %3506 = vdwg.mxu0
        %v3509 = vunpack.c.l.b16 %v3421
        %v3510 = vunpack.c.l.b16 %v3422
        %v3511 = vpack.c.b16 %v3510, %v3509
        %v3513 = vsel %vm916, %v3511, 0
        %3515 = vmatprep.subr.bf16.mxu0 0
        %3516 = vmatpush1.bf16.msra.mxu0 0
        %3517 = vmatprep.subr.bf16.mxu0 0
        %3518 = vmatpush1.bf16.msra.mxu0 0
        %3519 = vmatprep.subr.bf16.mxu0 0
        %3520 = vmatpush1.bf16.msra.mxu0 0
        %3521 = vmatprep.subr.bf16.mxu0 0
        %3522 = vmatpush1.bf16.msra.mxu0 0
        %3523 = vmatprep.subr.bf16.mxu0 0
        %3524 = vmatpush1.bf16.msra.mxu0 %v3419
        %3525 = vmatprep.subr.bf16.mxu0 0
        %3526 = vmatpush1.bf16.msra.mxu0 %v3417
        %3527 = vmatprep.subr.bf16.mxu0 0
        %3528 = vmatpush1.bf16.msra.mxu0 %v3415
        %3529 = vmatprep.subr.bf16.mxu0 0
        %3530 = vmatpush1.bf16.msra.mxu0 %v3413
        %3531 = vmatprep.subr.bf16.mxu0 0
        %3532 = vmatpush2.bf16.msra.mxu0 0
        %3533 = vmatprep.subr.bf16.mxu0 0
        %3534 = vmatpush2.bf16.msra.mxu0 0
        %3535 = vmatprep.subr.bf16.mxu0 0
        %3536 = vmatpush2.bf16.msra.mxu0 0
        %3537 = vmatprep.subr.bf16.mxu0 0
        %3538 = vmatpush2.bf16.msra.mxu0 0
        %3539 = vmatprep.subr.bf16.mxu0 0
        %3540 = vmatpush2.bf16.msra.mxu0 0
        %3541 = vmatprep.subr.bf16.mxu0 0
        %3542 = vmatpush2.bf16.msra.mxu0 0
        %3543 = vmatprep.subr.bf16.mxu0 0
        %3544 = vmatpush2.bf16.msra.mxu0 0
        %3545 = vmatprep.subr.bf16.mxu0 0
        %3546 = vmatpush2.bf16.msra.mxu0 0
        %3547 = vmatprep.mubr.bf16.mxu0 0
        %3548 = vmatmul.mubr.bf16.gmra.mxu0 %v3513
        %v3549 = vpop.f32.mrf.mxu0
        %v3550 = vadd.f32 %v3501, %v3549
        %v3551 = vpop.f32.mrf.mxu0
        %v3552 = vpop.f32.mrf.mxu0
        %v3553 = vadd.f32 %v3504, %v3552
        %v3554 = vpop.f32.mrf.mxu0
        %3555 = vdwg.mxu0
        %s3556 = scalar_lea.vmem %s10, 16
        %v3557 = vld [vmem:[%s3556] sm:$0xf]
        %v3558 = vld [vmem:[%s3556 + $0x4] sm:$0xf]
        %v3561 = vunpack.c.l.b16 %v3557
        %v3562 = vunpack.c.l.b16 %v3558
        %v3563 = vpack.c.b16 %v3562, %v3561
        %3564 = vrot.lane.b32.xlu0 %v3413, 126
        %v3565 = vpop.permute.xlu0 %3564
        %3566 = vrot.lane.b32.xlu0 %v3414, 126
        %v3567 = vpop.permute.xlu0 %3566
        %3568 = vrot.lane.b32.xlu0 %v3415, 126
        %v3569 = vpop.permute.xlu0 %3568
        %3570 = vrot.lane.b32.xlu0 %v3416, 126
        %v3571 = vpop.permute.xlu0 %3570
        %3572 = vrot.lane.b32.xlu0 %v3417, 126
        %v3573 = vpop.permute.xlu0 %3572
        %3574 = vrot.lane.b32.xlu0 %v3418, 126
        %v3575 = vpop.permute.xlu0 %3574
        %3576 = vrot.lane.b32.xlu0 %v3419, 126
        %v3577 = vpop.permute.xlu0 %3576
        %3578 = vrot.lane.b32.xlu0 %v3420, 126
        %v3579 = vpop.permute.xlu0 %3578
        %v3580 = vsel %vm602, %v3565, %v3567
        %v3581 = vsel %vm602, %v3569, %v3571
        %v3582 = vsel %vm602, %v3573, %v3575
        %v3583 = vsel %vm602, %v3577, %v3579
        %v3589 = vsel %vm916, %v3563, 0
        %3591 = vmatprep.subr.bf16.mxu0 0
        %3592 = vmatpush1.bf16.msra.mxu0 0
        %3593 = vmatprep.subr.bf16.mxu0 0
        %3594 = vmatpush1.bf16.msra.mxu0 0
        %3595 = vmatprep.subr.bf16.mxu0 0
        %3596 = vmatpush1.bf16.msra.mxu0 0
        %3597 = vmatprep.subr.bf16.mxu0 0
        %3598 = vmatpush1.bf16.msra.mxu0 0
        %3599 = vmatprep.subr.bf16.mxu0 0
        %3600 = vmatpush1.bf16.msra.mxu0 %v3583
        %3601 = vmatprep.subr.bf16.mxu0 0
        %3602 = vmatpush1.bf16.msra.mxu0 %v3582
        %3603 = vmatprep.subr.bf16.mxu0 0
        %3604 = vmatpush1.bf16.msra.mxu0 %v3581
        %3605 = vmatprep.subr.bf16.mxu0 0
        %3606 = vmatpush1.bf16.msra.mxu0 %v3580
        %3607 = vmatprep.subr.bf16.mxu0 0
        %3608 = vmatpush2.bf16.msra.mxu0 0
        %3609 = vmatprep.subr.bf16.mxu0 0
        %3610 = vmatpush2.bf16.msra.mxu0 0
        %3611 = vmatprep.subr.bf16.mxu0 0
        %3612 = vmatpush2.bf16.msra.mxu0 0
        %3613 = vmatprep.subr.bf16.mxu0 0
        %3614 = vmatpush2.bf16.msra.mxu0 0
        %3615 = vmatprep.subr.bf16.mxu0 0
        %3616 = vmatpush2.bf16.msra.mxu0 0
        %3617 = vmatprep.subr.bf16.mxu0 0
        %3618 = vmatpush2.bf16.msra.mxu0 0
        %3619 = vmatprep.subr.bf16.mxu0 0
        %3620 = vmatpush2.bf16.msra.mxu0 0
        %3621 = vmatprep.subr.bf16.mxu0 0
        %3622 = vmatpush2.bf16.msra.mxu0 0
        %3623 = vmatprep.mubr.bf16.mxu0 0
        %3624 = vmatmul.mubr.bf16.gmra.mxu0 %v3589
        %v3625 = vpop.f32.mrf.mxu0
        %v3626 = vadd.f32 0.0, %v3625
        %v3627 = vpop.f32.mrf.mxu0
        %v3628 = vpop.f32.mrf.mxu0
        %v3629 = vadd.f32 0.0, %v3628
        %v3630 = vpop.f32.mrf.mxu0
        %3631 = vdwg.mxu0
        %v3632 = vadd.f32 %v3550, %v3626
        %v3633 = vadd.f32 %v3553, %v3629
        %s3634 = scalar_lea.vmem %s10, 24
        %v3635 = vld [vmem:[%s3634] sm:$0xf]
        %v3636 = vld [vmem:[%s3634 + $0x4] sm:$0xf]
        %v3639 = vunpack.c.l.b16 %v3635
        %v3640 = vunpack.c.l.b16 %v3636
        %v3641 = vpack.c.b16 %v3640, %v3639
        %3642 = vrot.lane.b32.xlu0 %v3413, 125
        %v3643 = vpop.permute.xlu0 %3642
        %3644 = vrot.lane.b32.xlu0 %v3414, 125
        %v3645 = vpop.permute.xlu0 %3644
        %3646 = vrot.lane.b32.xlu0 %v3415, 125
        %v3647 = vpop.permute.xlu0 %3646
        %3648 = vrot.lane.b32.xlu0 %v3416, 125
        %v3649 = vpop.permute.xlu0 %3648
        %3650 = vrot.lane.b32.xlu0 %v3417, 125
        %v3651 = vpop.permute.xlu0 %3650
        %3652 = vrot.lane.b32.xlu0 %v3418, 125
        %v3653 = vpop.permute.xlu0 %3652
        %3654 = vrot.lane.b32.xlu0 %v3419, 125
        %v3655 = vpop.permute.xlu0 %3654
        %3656 = vrot.lane.b32.xlu0 %v3420, 125
        %v3657 = vpop.permute.xlu0 %3656
        %v3658 = vsel %vm610, %v3643, %v3645
        %v3659 = vsel %vm610, %v3647, %v3649
        %v3660 = vsel %vm610, %v3651, %v3653
        %v3661 = vsel %vm610, %v3655, %v3657
        %v3667 = vsel %vm916, %v3641, 0
        %3669 = vmatprep.subr.bf16.mxu0 0
        %3670 = vmatpush1.bf16.msra.mxu0 0
        %3671 = vmatprep.subr.bf16.mxu0 0
        %3672 = vmatpush1.bf16.msra.mxu0 0
        %3673 = vmatprep.subr.bf16.mxu0 0
        %3674 = vmatpush1.bf16.msra.mxu0 0
        %3675 = vmatprep.subr.bf16.mxu0 0
        %3676 = vmatpush1.bf16.msra.mxu0 0
        %3677 = vmatprep.subr.bf16.mxu0 0
        %3678 = vmatpush1.bf16.msra.mxu0 %v3661
        %3679 = vmatprep.subr.bf16.mxu0 0
        %3680 = vmatpush1.bf16.msra.mxu0 %v3660
        %3681 = vmatprep.subr.bf16.mxu0 0
        %3682 = vmatpush1.bf16.msra.mxu0 %v3659
        %3683 = vmatprep.subr.bf16.mxu0 0
        %3684 = vmatpush1.bf16.msra.mxu0 %v3658
        %3685 = vmatprep.subr.bf16.mxu0 0
        %3686 = vmatpush2.bf16.msra.mxu0 0
        %3687 = vmatprep.subr.bf16.mxu0 0
        %3688 = vmatpush2.bf16.msra.mxu0 0
        %3689 = vmatprep.subr.bf16.mxu0 0
        %3690 = vmatpush2.bf16.msra.mxu0 0
        %3691 = vmatprep.subr.bf16.mxu0 0
        %3692 = vmatpush2.bf16.msra.mxu0 0
        %3693 = vmatprep.subr.bf16.mxu0 0
        %3694 = vmatpush2.bf16.msra.mxu0 0
        %3695 = vmatprep.subr.bf16.mxu0 0
        %3696 = vmatpush2.bf16.msra.mxu0 0
        %3697 = vmatprep.subr.bf16.mxu0 0
        %3698 = vmatpush2.bf16.msra.mxu0 0
        %3699 = vmatprep.subr.bf16.mxu0 0
        %3700 = vmatpush2.bf16.msra.mxu0 0
        %3701 = vmatprep.mubr.bf16.mxu0 0
        %3702 = vmatmul.mubr.bf16.gmra.mxu0 %v3667
        %v3703 = vpop.f32.mrf.mxu0
        %v3704 = vadd.f32 0.0, %v3703
        %v3705 = vpop.f32.mrf.mxu0
        %v3706 = vpop.f32.mrf.mxu0
        %v3707 = vadd.f32 0.0, %v3706
        %v3708 = vpop.f32.mrf.mxu0
        %3709 = vdwg.mxu0
        %v3710 = vadd.f32 %v3632, %v3704
        %v3711 = vadd.f32 %v3633, %v3707
        %s3712 = scalar_lea.vmem %s10, 32
        %v3713 = vld [vmem:[%s3712] sm:$0xf]
        %v3714 = vld [vmem:[%s3712 + $0x4] sm:$0xf]
        %v3717 = vunpack.c.l.b16 %v3713
        %v3718 = vunpack.c.l.b16 %v3714
        %v3719 = vpack.c.b16 %v3718, %v3717
        %3720 = vrot.lane.b32.xlu0 %v3413, 124
        %v3721 = vpop.permute.xlu0 %3720
        %3722 = vrot.lane.b32.xlu0 %v3414, 124
        %v3723 = vpop.permute.xlu0 %3722
        %3724 = vrot.lane.b32.xlu0 %v3415, 124
        %v3725 = vpop.permute.xlu0 %3724
        %3726 = vrot.lane.b32.xlu0 %v3416, 124
        %v3727 = vpop.permute.xlu0 %3726
        %3728 = vrot.lane.b32.xlu0 %v3417, 124
        %v3729 = vpop.permute.xlu0 %3728
        %3730 = vrot.lane.b32.xlu0 %v3418, 124
        %v3731 = vpop.permute.xlu0 %3730
        %3732 = vrot.lane.b32.xlu0 %v3419, 124
        %v3733 = vpop.permute.xlu0 %3732
        %3734 = vrot.lane.b32.xlu0 %v3420, 124
        %v3735 = vpop.permute.xlu0 %3734
        %v3736 = vsel %vm618, %v3721, %v3723
        %v3737 = vsel %vm618, %v3725, %v3727
        %v3738 = vsel %vm618, %v3729, %v3731
        %v3739 = vsel %vm618, %v3733, %v3735
        %v3745 = vsel %vm916, %v3719, 0
        %3747 = vmatprep.subr.bf16.mxu0 0
        %3748 = vmatpush1.bf16.msra.mxu0 0
        %3749 = vmatprep.subr.bf16.mxu0 0
        %3750 = vmatpush1.bf16.msra.mxu0 0
        %3751 = vmatprep.subr.bf16.mxu0 0
        %3752 = vmatpush1.bf16.msra.mxu0 0
        %3753 = vmatprep.subr.bf16.mxu0 0
        %3754 = vmatpush1.bf16.msra.mxu0 0
        %3755 = vmatprep.subr.bf16.mxu0 0
        %3756 = vmatpush1.bf16.msra.mxu0 %v3739
        %3757 = vmatprep.subr.bf16.mxu0 0
        %3758 = vmatpush1.bf16.msra.mxu0 %v3738
        %3759 = vmatprep.subr.bf16.mxu0 0
        %3760 = vmatpush1.bf16.msra.mxu0 %v3737
        %3761 = vmatprep.subr.bf16.mxu0 0
        %3762 = vmatpush1.bf16.msra.mxu0 %v3736
        %3763 = vmatprep.subr.bf16.mxu0 0
        %3764 = vmatpush2.bf16.msra.mxu0 0
        %3765 = vmatprep.subr.bf16.mxu0 0
        %3766 = vmatpush2.bf16.msra.mxu0 0
        %3767 = vmatprep.subr.bf16.mxu0 0
        %3768 = vmatpush2.bf16.msra.mxu0 0
        %3769 = vmatprep.subr.bf16.mxu0 0
        %3770 = vmatpush2.bf16.msra.mxu0 0
        %3771 = vmatprep.subr.bf16.mxu0 0
        %3772 = vmatpush2.bf16.msra.mxu0 0
        %3773 = vmatprep.subr.bf16.mxu0 0
        %3774 = vmatpush2.bf16.msra.mxu0 0
        %3775 = vmatprep.subr.bf16.mxu0 0
        %3776 = vmatpush2.bf16.msra.mxu0 0
        %3777 = vmatprep.subr.bf16.mxu0 0
        %3778 = vmatpush2.bf16.msra.mxu0 0
        %3779 = vmatprep.mubr.bf16.mxu0 0
        %3780 = vmatmul.mubr.bf16.gmra.mxu0 %v3745
        %v3781 = vpop.f32.mrf.mxu0
        %v3782 = vadd.f32 0.0, %v3781
        %v3783 = vpop.f32.mrf.mxu0
        %v3784 = vpop.f32.mrf.mxu0
        %v3785 = vadd.f32 0.0, %v3784
        %v3786 = vpop.f32.mrf.mxu0
        %3787 = vdwg.mxu0
        %v3788 = vadd.f32 %v3710, %v3782
        %v3789 = vadd.f32 %v3711, %v3785
        %v3790 = vld [vmem:[%s11] sm:$0xff]
        %v3791 = vld [vmem:[%s11 + $0x8] sm:$0xff]
        %3793 = vset.pattern.permute.xlu0 0
        %3794 = vperm.xlu0 %3793, %v3790
        %v3795 = vpop.permute.xlu0 %3794
        %3798 = vset.pattern.permute.xlu0 0
        %3799 = vperm.xlu0 %3798, %v3791
        %v3800 = vpop.permute.xlu0 %3799
        %v3802 = vadd.f32 %v3788, %v3795
        %v3803 = vadd.f32 %v3789, %v3800
        %3804 = vst [vmem:[%s566] sm:$0xff] %v3802
        %3805 = vst [vmem:[%s566 + $0x8] sm:$0xff] %v3803
        %s3806 = sand.u32 %s321, 1
        %s3807 = scalar_lea.sflag [#allocation5], %s3806
        %s3808 = sand.u32 %s321, 1
        %s3809 = smul.addr %s3808, 16
        %s3810 = scalar_lea.vmem [#allocation11], %s3809
        // Predicated region
        $region126: #{tpu_custom_call.1} parent=104 // pred_check
          %p3811 = pneg %p331
        $region127: #{tpu_custom_call.1} parent=104 // pred_check_branch
          %3813 = sbr.rel (%p3811) target = $region129
        $region128: #{tpu_custom_call.1} parent=104 // pred_region
          %s3815 = ssub.s32 256, 256
          %3816 = vsyncadd %s3807, %s3815
          %s3817 = smul.addr %s35, 6
          %s3818 = sadd.s32 %s36, %s3817
          %s3819 = smul.addr %s3818, 128
          %s3820 = scalar_lea.hbm %s12, %s3819
          %s3821 = sshll.u32 %s3810, 4
          %s3822 = int_to_ptr.vmem [resolvable:$true] %s3821
          %3827 = dma.vmem_to_hbm [thread:$0]  %s3822, 256, %s3820, %s3807, 128, 384, 8
        $region129: #{tpu_custom_call.1} parent=104 // pred_fallthru
          _
      $region105: #{tpu_custom_call.1} parent=5 // pred_fallthru
        _
      %p3828 = scmp.le.s32.totalorder 2, %s26
      // Predicated region
      $region130: #{tpu_custom_call.1} parent=5 // pred_check
        %p3829 = pneg %p3828
      $region131: #{tpu_custom_call.1} parent=5 // pred_check_branch
        %3831 = sbr.rel (%p3829) target = $region133
      $region132: #{tpu_custom_call.1} parent=5 // pred_region
        %s3832 = ssub.s32 %s26, 2
        // Predicated region
        $region134: #{tpu_custom_call.1} parent=132 // pred_check
          %p3833 = pneg %p337
        $region135: #{tpu_custom_call.1} parent=132 // pred_check_branch
          %3835 = sbr.rel (%p3833) target = $region137
        $region136: #{tpu_custom_call.1} parent=132 // pred_region
          %s3836 = sand.u32 %s322, 1
          %s3837 = scalar_lea.sflag [#allocation5], %s3836
          %s3838 = sand.u32 %s322, 1
          %s3839 = smul.addr %s3838, 16
          %s3840 = scalar_lea.vmem [#allocation11], %s3839
          %3841 = dma.done %s3837, 256
        $region137: #{tpu_custom_call.1} parent=132 // pred_fallthru
          _
      $region133: #{tpu_custom_call.1} parent=5 // pred_fallthru
        _
    $region6: #{tpu_custom_call.1} parent=1 // loop_footer
      %s30 = sadd.s32 1, %s26
    $region7: #{tpu_custom_call.1} parent=1 // loop_footer_branch
      %25 = sbr.rel target = $region3
    $region8: #{tpu_custom_call.1} parent=1 // loop_exit
      _
    %3842 = vsyncpa [#allocation4], 1
    %s3843 = scalar_lea.sflag [#allocation4], 1
    %3844 = vsyncpa %s3843, 1
    %3845 = vsyncpa [#allocation7], 1
    %3846 = vsyncpa [#allocation10], 1
    %3847 = vsyncpa [#allocation5], 1
    %s3848 = scalar_lea.sflag [#allocation5], 1
    %3849 = vsyncpa %s3848, 1

</llo_original>
